<compile_context>
chip_gen: v5e
topology: v5e:2x2
jax: 0.10.0
libtpu: 0.0.40
codegen_flags: <defaults>
</compile_context>

<pallas_src>
import jax
import jax.numpy as jnp
from jax.experimental import pallas as pl
from jax.experimental.pallas import tpu as pltpu


# ----------------------------------------------------------------------------
# In-kernel building blocks (activation layout: (H, C, W); W on the lane axis)
# ----------------------------------------------------------------------------
def _conv1x1(x, w_ref, b_ref):
    """1x1 conv: x (H, Cin, W), w (Cout, Cin), b (1, Cout, 1) -> (H, Cout, W)."""
    h = x.shape[0]
    w = w_ref[...]
    w_b = jnp.broadcast_to(w, (h,) + w.shape)              # (H, Cout, Cin)
    y = jax.lax.dot_general(
        w_b, x,
        dimension_numbers=(((2,), (1,)), ((0,), (0,))),     # contract Cin, batch H
        preferred_element_type=jnp.float32)                 # (H, Cout, W)
    return y + b_ref[...]


def _upsample_w(x, ut_ref):
    """Bilinear x2 along W (lane axis) via one 2D MXU matmul.

    x: (H, C, W); ut_ref: (W, 2W) transposed bilinear matrix."""
    h, c, w = x.shape
    y = jnp.dot(x.reshape(h * c, w), ut_ref[...],
                preferred_element_type=jnp.float32)
    return y.reshape(h, c, 2 * w)


def _upsample_h(x):
    """Bilinear x2 along H (leading axis), align_corners=False, via shift+lerp.

    even rows (2j)   = 0.75*x[j] + 0.25*x[max(j-1, 0)]
    odd  rows (2j+1) = 0.75*x[j] + 0.25*x[min(j+1, H-1)]
    """
    h, c, w = x.shape
    x_prev = jnp.concatenate([x[:1], x[:-1]], axis=0)       # clamp at top edge
    x_next = jnp.concatenate([x[1:], x[-1:]], axis=0)       # clamp at bottom edge
    even = 0.75 * x + 0.25 * x_prev
    odd = 0.75 * x + 0.25 * x_next
    return jnp.stack([even, odd], axis=1).reshape(2 * h, c, w)


def conv_decoder_kernel(x_ref,
                        w1, b1, w2, b2, w3, b3, w4, b4, w5, b5,
                        u1, u2, u3, u4,
                        o_ref):
    x = x_ref[0]                                             # (H, C, W)
    x = _upsample_h(_upsample_w(_conv1x1(x, w1, b1), u1))    # (2H,  C/2, 2W)
    x = _upsample_h(_upsample_w(_conv1x1(x, w2, b2), u2))    # (4H,  C/2, 4W)
    x = _upsample_h(_upsample_w(_conv1x1(x, w3, b3), u3))    # (8H,  C/4, 8W)
    x = _upsample_h(_upsample_w(_conv1x1(x, w4, b4), u4))    # (16H, C/4, 16W)
    y = _conv1x1(x, w5, b5)                                  # (16H, 1,   16W)
    o_ref[0] = y[:, 0, :].astype(o_ref.dtype)                # lane-dense store


# ----------------------------------------------------------------------------
# Wrapper
# ----------------------------------------------------------------------------
def _bilinear_up_matrix_t(n):
    """Transposed (n, 2n) x2 bilinear upsample matrix, align_corners=False
    (exact PyTorch nn.Upsample semantics along one axis)."""
    dst = jnp.arange(2 * n, dtype=jnp.float32)
    src = jnp.maximum((dst + 0.5) * 0.5 - 0.5, 0.0)
    i0 = jnp.clip(jnp.floor(src).astype(jnp.int32), 0, n - 1)
    i1 = jnp.minimum(i0 + 1, n - 1)
    lam = src - i0.astype(jnp.float32)
    cols = jnp.arange(n)[None, :]
    m = ((cols == i0[:, None]).astype(jnp.float32) * (1.0 - lam)[:, None]
         + (cols == i1[:, None]).astype(jnp.float32) * lam[:, None])
    return m.T                                               # (n, 2n)


def _replicated_spec(arr):
    nd = arr.ndim
    return pl.BlockSpec(arr.shape, lambda b, _n=nd: (0,) * _n)


@jax.jit
def conv_decoder_forward(x, params):
    """x: (B, D, H, W) NCHW -> (B, 1, 16H, 16W), like ConvDecoder.forward."""
    B, C, H, W = x.shape
    Ho, Wo = 16 * H, 16 * W
    x_hcw = jnp.transpose(x, (0, 2, 1, 3))                   # (B, H, C, W)

    args = [x_hcw]
    specs = [pl.BlockSpec((1, H, C, W), lambda b: (b, 0, 0, 0))]
    for wmat, bvec in zip(params['weights'], params['biases']):
        b3 = bvec.reshape(1, bvec.shape[0], 1)               # (1, Cout, 1)
        for p in (wmat, b3):
            args.append(p)
            specs.append(_replicated_spec(p))
    for k in range(4):                                       # W upsample matrices
        u = _bilinear_up_matrix_t(W * (2 ** k))
        args.append(u)
        specs.append(_replicated_spec(u))

    out = pl.pallas_call(
        conv_decoder_kernel,
        out_shape=jax.ShapeDtypeStruct((B, Ho, Wo), jnp.float32),
        grid=(B,),
        in_specs=specs,
        out_specs=pl.BlockSpec((1, Ho, Wo), lambda b: (b, 0, 0)),
        compiler_params=pltpu.CompilerParams(
            dimension_semantics=("parallel",),
            vmem_limit_bytes=32 * 1024 * 1024),
    )(*args)
    return out[:, None, :, :]                                # (B, 1, 16H, 16W)


# ----------------------------------------------------------------------------
# Parameter init (mirrors Conv2d(ci, co, kernel_size=1) shapes)
# ----------------------------------------------------------------------------
def init_params(key, input_dim):
    c1 = input_dim // 2
    c2 = input_dim // 4
    in_ch = [input_dim, c1, c1, c2, c2]
    out_ch = [c1, c1, c2, c2, 1]
    weights, biases = [], []
    keys = jax.random.split(key, 2 * len(in_ch))
    for i, (ci, co) in enumerate(zip(in_ch, out_ch)):
        bound = 1.0 / (ci ** 0.5)
        w = jax.random.uniform(keys[2 * i], (co, ci), jnp.float32, -bound, bound)
        b = jax.random.uniform(keys[2 * i + 1], (co,), jnp.float32, -bound, bound)
        weights.append(w)
        biases.append(b)
    return {'weights': weights, 'biases': biases}


# ----------------------------------------------------------------------------
# Pure-JAX reference (independent gather-based bilinear path) for verification
# ----------------------------------------------------------------------------
def _ref_upsample2x(x):
    def axis(n):
        dst = jnp.arange(2 * n, dtype=jnp.float32)
        src = jnp.maximum((dst + 0.5) * 0.5 - 0.5, 0.0)
        i0 = jnp.clip(jnp.floor(src).astype(jnp.int32), 0, n - 1)
        i1 = jnp.minimum(i0 + 1, n - 1)
        lam = src - i0.astype(jnp.float32)
        return i0, i1, lam

    B, C, H, W = x.shape
    i0, i1, lam = axis(H)
    x = (x[:, :, i0, :] * (1.0 - lam)[None, None, :, None]
         + x[:, :, i1, :] * lam[None, None, :, None])
    j0, j1, mu = axis(W)
    x = (x[:, :, :, j0] * (1.0 - mu)[None, None, None, :]
         + x[:, :, :, j1] * mu[None, None, None, :])
    return x


def ref_forward(x, params):
    for i, (w, b) in enumerate(zip(params['weights'], params['biases'])):
        x = jnp.einsum('oc,bchw->bohw', w, x) + b[None, :, None, None]
        if i != 4:
            x = _ref_upsample2x(x)
    return x


# ----------------------------------------------------------------------------
if __name__ == "__main__":
    B, D, H, W = 2, 32, 8, 8          # input_dim=32 -> channels 32/16/16/8/8/1

    key = jax.random.PRNGKey(0)
    kx, kp = jax.random.split(key)
    x = jax.random.normal(kx, (B, D, H, W), jnp.float32)
    params = init_params(kp, D)

    out = conv_decoder_forward(x, params)
    out = jax.block_until_ready(out)
    assert out.shape == (B, 1, 16 * H, 16 * W)

    ref = jax.block_until_ready(ref_forward(x, params))
    err = float(jnp.max(jnp.abs(out - ref)))
    assert err < 1e-3, f"kernel/reference mismatch: max abs err = {err}"

    print("KERNEL_OK")
</pallas_src>

<mosaic_0001>
module attributes {stable_mosaic.version = 11 : i64} {
  func.func @conv_decoder_kernel(%arg0: i32, %arg1: memref<1x8x32x8xf32, #tpu.memory_space<vmem>>, %arg2: memref<16x32xf32, #tpu.memory_space<vmem>>, %arg3: memref<1x16x1xf32, #tpu.memory_space<vmem>>, %arg4: memref<16x16xf32, #tpu.memory_space<vmem>>, %arg5: memref<1x16x1xf32, #tpu.memory_space<vmem>>, %arg6: memref<8x16xf32, #tpu.memory_space<vmem>>, %arg7: memref<1x8x1xf32, #tpu.memory_space<vmem>>, %arg8: memref<8x8xf32, #tpu.memory_space<vmem>>, %arg9: memref<1x8x1xf32, #tpu.memory_space<vmem>>, %arg10: memref<1x8xf32, #tpu.memory_space<vmem>>, %arg11: memref<1x1x1xf32, #tpu.memory_space<vmem>>, %arg12: memref<8x16xf32, #tpu.memory_space<vmem>>, %arg13: memref<16x32xf32, #tpu.memory_space<vmem>>, %arg14: memref<32x64xf32, #tpu.memory_space<vmem>>, %arg15: memref<64x128xf32, #tpu.memory_space<vmem>>, %arg16: memref<1x128x128xf32, #tpu.memory_space<vmem>>) attributes {dimension_semantics = [#tpu.dimension_semantics<parallel>], iteration_bounds = array<i64: 2>, scalar_prefetch = 0 : i64, scratch_operands = 0 : i64, tpu.core_type = #tpu.core_type<tc>, window_params = [{transform_indices = @transform_0, window_bounds = array<i64: 1, 8, 32, 8>}, {pipeline_mode = #tpu.pipeline_mode<synchronous>, transform_indices = @transform_1, window_bounds = array<i64: 16, 32>}, {pipeline_mode = #tpu.pipeline_mode<synchronous>, transform_indices = @transform_2, window_bounds = array<i64: 1, 16, 1>}, {pipeline_mode = #tpu.pipeline_mode<synchronous>, transform_indices = @transform_3, window_bounds = array<i64: 16, 16>}, {pipeline_mode = #tpu.pipeline_mode<synchronous>, transform_indices = @transform_4, window_bounds = array<i64: 1, 16, 1>}, {pipeline_mode = #tpu.pipeline_mode<synchronous>, transform_indices = @transform_5, window_bounds = array<i64: 8, 16>}, {pipeline_mode = #tpu.pipeline_mode<synchronous>, transform_indices = @transform_6, window_bounds = array<i64: 1, 8, 1>}, {pipeline_mode = #tpu.pipeline_mode<synchronous>, transform_indices = @transform_7, window_bounds = array<i64: 8, 8>}, {pipeline_mode = #tpu.pipeline_mode<synchronous>, transform_indices = @transform_8, window_bounds = array<i64: 1, 8, 1>}, {pipeline_mode = #tpu.pipeline_mode<synchronous>, transform_indices = @transform_9, window_bounds = array<i64: 1, 8>}, {pipeline_mode = #tpu.pipeline_mode<synchronous>, transform_indices = @transform_10, window_bounds = array<i64: 1, 1, 1>}, {pipeline_mode = #tpu.pipeline_mode<synchronous>, transform_indices = @transform_11, window_bounds = array<i64: 8, 16>}, {pipeline_mode = #tpu.pipeline_mode<synchronous>, transform_indices = @transform_12, window_bounds = array<i64: 16, 32>}, {pipeline_mode = #tpu.pipeline_mode<synchronous>, transform_indices = @transform_13, window_bounds = array<i64: 32, 64>}, {pipeline_mode = #tpu.pipeline_mode<synchronous>, transform_indices = @transform_14, window_bounds = array<i64: 64, 128>}, {transform_indices = @transform_15, window_bounds = array<i64: 1, 128, 128>}]} {
    %c0 = arith.constant 0 : index
    %c0_0 = arith.constant 0 : index
    %c0_1 = arith.constant 0 : index
    %c0_2 = arith.constant 0 : index
    %0 = vector.load %arg1[%c0, %c0_0, %c0_1, %c0_2] : memref<1x8x32x8xf32, #tpu.memory_space<vmem>>, vector<1x8x32x8xf32>
    %1 = vector.shape_cast %0 : vector<1x8x32x8xf32> to vector<8x32x8xf32>
    %c0_3 = arith.constant 0 : index
    %c0_4 = arith.constant 0 : index
    %2 = vector.load %arg2[%c0_3, %c0_4] : memref<16x32xf32, #tpu.memory_space<vmem>>, vector<16x32xf32>
    %3 = vector.shape_cast %2 : vector<16x32xf32> to vector<1x16x32xf32>
    %4 = vector.broadcast %3 : vector<1x16x32xf32> to vector<8x16x32xf32>
    %cst = arith.constant dense<0.000000e+00> : vector<8x16x8xf32>
    %5 = tpu.matmul %4, %1, %cst {dimension_numbers = #tpu.dot_dimension_numbers<[2], [1], [1], [2], [0, 0, 0, 1, 1, 2], [0], [0]>} : vector<8x16x32xf32>, vector<8x32x8xf32>, vector<8x16x8xf32> -> vector<8x16x8xf32>
    %c0_5 = arith.constant 0 : index
    %c0_6 = arith.constant 0 : index
    %c0_7 = arith.constant 0 : index
    %6 = vector.load %arg3[%c0_5, %c0_6, %c0_7] : memref<1x16x1xf32, #tpu.memory_space<vmem>>, vector<1x16x1xf32>
    %7 = vector.broadcast %6 : vector<1x16x1xf32> to vector<8x16x8xf32>
    %8 = arith.addf %5, %7 : vector<8x16x8xf32>
    %9 = vector.shape_cast %8 : vector<8x16x8xf32> to vector<128x8xf32>
    %c0_8 = arith.constant 0 : index
    %c0_9 = arith.constant 0 : index
    %10 = vector.load %arg12[%c0_8, %c0_9] : memref<8x16xf32, #tpu.memory_space<vmem>>, vector<8x16xf32>
    %cst_10 = arith.constant dense<0.000000e+00> : vector<128x16xf32>
    %11 = tpu.matmul %9, %10, %cst_10 {dimension_numbers = #tpu.dot_dimension_numbers<[1], [0], [0], [1], [0, 0, 1, 1], [], []>} : vector<128x8xf32>, vector<8x16xf32>, vector<128x16xf32> -> vector<128x16xf32>
    %12 = vector.shape_cast %11 : vector<128x16xf32> to vector<8x16x16xf32>
    %13 = vector.extract_strided_slice %12 {offsets = [0, 0, 0], sizes = [1, 16, 16], strides = [1, 1, 1]} : vector<8x16x16xf32> to vector<1x16x16xf32>
    %14 = vector.extract_strided_slice %12 {offsets = [0, 0, 0], sizes = [7, 16, 16], strides = [1, 1, 1]} : vector<8x16x16xf32> to vector<7x16x16xf32>
    %15 = tpu.concatenate %13, %14 in 0 : vector<1x16x16xf32>, vector<7x16x16xf32> -> vector<8x16x16xf32>
    %16 = vector.extract_strided_slice %12 {offsets = [1, 0, 0], sizes = [7, 16, 16], strides = [1, 1, 1]} : vector<8x16x16xf32> to vector<7x16x16xf32>
    %17 = vector.extract_strided_slice %12 {offsets = [7, 0, 0], sizes = [1, 16, 16], strides = [1, 1, 1]} : vector<8x16x16xf32> to vector<1x16x16xf32>
    %18 = tpu.concatenate %16, %17 in 0 : vector<7x16x16xf32>, vector<1x16x16xf32> -> vector<8x16x16xf32>
    %cst_11 = arith.constant 7.500000e-01 : f32
    %19 = vector.broadcast %cst_11 : f32 to vector<8x16x16xf32>
    %20 = arith.mulf %19, %12 : vector<8x16x16xf32>
    %cst_12 = arith.constant 2.500000e-01 : f32
    %21 = vector.broadcast %cst_12 : f32 to vector<8x16x16xf32>
    %22 = arith.mulf %21, %15 : vector<8x16x16xf32>
    %23 = arith.addf %20, %22 : vector<8x16x16xf32>
    %cst_13 = arith.constant 7.500000e-01 : f32
    %24 = vector.broadcast %cst_13 : f32 to vector<8x16x16xf32>
    %25 = arith.mulf %24, %12 : vector<8x16x16xf32>
    %cst_14 = arith.constant 2.500000e-01 : f32
    %26 = vector.broadcast %cst_14 : f32 to vector<8x16x16xf32>
    %27 = arith.mulf %26, %18 : vector<8x16x16xf32>
    %28 = arith.addf %25, %27 : vector<8x16x16xf32>
    %29 = vector.shape_cast %23 : vector<8x16x16xf32> to vector<8x1x16x16xf32>
    %30 = vector.shape_cast %28 : vector<8x16x16xf32> to vector<8x1x16x16xf32>
    %31 = tpu.concatenate %29, %30 in 1 : vector<8x1x16x16xf32>, vector<8x1x16x16xf32> -> vector<8x2x16x16xf32>
    %32 = vector.shape_cast %31 : vector<8x2x16x16xf32> to vector<16x16x16xf32>
    %c0_15 = arith.constant 0 : index
    %c0_16 = arith.constant 0 : index
    %33 = vector.load %arg4[%c0_15, %c0_16] : memref<16x16xf32, #tpu.memory_space<vmem>>, vector<16x16xf32>
    %34 = vector.shape_cast %33 : vector<16x16xf32> to vector<1x16x16xf32>
    %35 = vector.broadcast %34 : vector<1x16x16xf32> to vector<16x16x16xf32>
    %cst_17 = arith.constant dense<0.000000e+00> : vector<16x16x16xf32>
    %36 = tpu.matmul %35, %32, %cst_17 {dimension_numbers = #tpu.dot_dimension_numbers<[2], [1], [1], [2], [0, 0, 0, 1, 1, 2], [0], [0]>} : vector<16x16x16xf32>, vector<16x16x16xf32>, vector<16x16x16xf32> -> vector<16x16x16xf32>
    %c0_18 = arith.constant 0 : index
    %c0_19 = arith.constant 0 : index
    %c0_20 = arith.constant 0 : index
    %37 = vector.load %arg5[%c0_18, %c0_19, %c0_20] : memref<1x16x1xf32, #tpu.memory_space<vmem>>, vector<1x16x1xf32>
    %38 = vector.broadcast %37 : vector<1x16x1xf32> to vector<16x16x16xf32>
    %39 = arith.addf %36, %38 : vector<16x16x16xf32>
    %40 = vector.shape_cast %39 : vector<16x16x16xf32> to vector<256x16xf32>
    %c0_21 = arith.constant 0 : index
    %c0_22 = arith.constant 0 : index
    %41 = vector.load %arg13[%c0_21, %c0_22] : memref<16x32xf32, #tpu.memory_space<vmem>>, vector<16x32xf32>
    %cst_23 = arith.constant dense<0.000000e+00> : vector<256x32xf32>
    %42 = tpu.matmul %40, %41, %cst_23 {dimension_numbers = #tpu.dot_dimension_numbers<[1], [0], [0], [1], [0, 0, 1, 1], [], []>} : vector<256x16xf32>, vector<16x32xf32>, vector<256x32xf32> -> vector<256x32xf32>
    %43 = vector.shape_cast %42 : vector<256x32xf32> to vector<16x16x32xf32>
    %44 = vector.extract_strided_slice %43 {offsets = [0, 0, 0], sizes = [1, 16, 32], strides = [1, 1, 1]} : vector<16x16x32xf32> to vector<1x16x32xf32>
    %45 = vector.extract_strided_slice %43 {offsets = [0, 0, 0], sizes = [15, 16, 32], strides = [1, 1, 1]} : vector<16x16x32xf32> to vector<15x16x32xf32>
    %46 = tpu.concatenate %44, %45 in 0 : vector<1x16x32xf32>, vector<15x16x32xf32> -> vector<16x16x32xf32>
    %47 = vector.extract_strided_slice %43 {offsets = [1, 0, 0], sizes = [15, 16, 32], strides = [1, 1, 1]} : vector<16x16x32xf32> to vector<15x16x32xf32>
    %48 = vector.extract_strided_slice %43 {offsets = [15, 0, 0], sizes = [1, 16, 32], strides = [1, 1, 1]} : vector<16x16x32xf32> to vector<1x16x32xf32>
    %49 = tpu.concatenate %47, %48 in 0 : vector<15x16x32xf32>, vector<1x16x32xf32> -> vector<16x16x32xf32>
    %cst_24 = arith.constant 7.500000e-01 : f32
    %50 = vector.broadcast %cst_24 : f32 to vector<16x16x32xf32>
    %51 = arith.mulf %50, %43 : vector<16x16x32xf32>
    %cst_25 = arith.constant 2.500000e-01 : f32
    %52 = vector.broadcast %cst_25 : f32 to vector<16x16x32xf32>
    %53 = arith.mulf %52, %46 : vector<16x16x32xf32>
    %54 = arith.addf %51, %53 : vector<16x16x32xf32>
    %cst_26 = arith.constant 7.500000e-01 : f32
    %55 = vector.broadcast %cst_26 : f32 to vector<16x16x32xf32>
    %56 = arith.mulf %55, %43 : vector<16x16x32xf32>
    %cst_27 = arith.constant 2.500000e-01 : f32
    %57 = vector.broadcast %cst_27 : f32 to vector<16x16x32xf32>
    %58 = arith.mulf %57, %49 : vector<16x16x32xf32>
    %59 = arith.addf %56, %58 : vector<16x16x32xf32>
    %60 = vector.shape_cast %54 : vector<16x16x32xf32> to vector<16x1x16x32xf32>
    %61 = vector.shape_cast %59 : vector<16x16x32xf32> to vector<16x1x16x32xf32>
    %62 = tpu.concatenate %60, %61 in 1 : vector<16x1x16x32xf32>, vector<16x1x16x32xf32> -> vector<16x2x16x32xf32>
    %63 = vector.shape_cast %62 : vector<16x2x16x32xf32> to vector<32x16x32xf32>
    %c0_28 = arith.constant 0 : index
    %c0_29 = arith.constant 0 : index
    %64 = vector.load %arg6[%c0_28, %c0_29] : memref<8x16xf32, #tpu.memory_space<vmem>>, vector<8x16xf32>
    %65 = vector.shape_cast %64 : vector<8x16xf32> to vector<1x8x16xf32>
    %66 = vector.broadcast %65 : vector<1x8x16xf32> to vector<32x8x16xf32>
    %cst_30 = arith.constant dense<0.000000e+00> : vector<32x8x32xf32>
    %67 = tpu.matmul %66, %63, %cst_30 {dimension_numbers = #tpu.dot_dimension_numbers<[2], [1], [1], [2], [0, 0, 0, 1, 1, 2], [0], [0]>} : vector<32x8x16xf32>, vector<32x16x32xf32>, vector<32x8x32xf32> -> vector<32x8x32xf32>
    %c0_31 = arith.constant 0 : index
    %c0_32 = arith.constant 0 : index
    %c0_33 = arith.constant 0 : index
    %68 = vector.load %arg7[%c0_31, %c0_32, %c0_33] : memref<1x8x1xf32, #tpu.memory_space<vmem>>, vector<1x8x1xf32>
    %69 = vector.broadcast %68 : vector<1x8x1xf32> to vector<32x8x32xf32>
    %70 = arith.addf %67, %69 : vector<32x8x32xf32>
    %71 = vector.shape_cast %70 : vector<32x8x32xf32> to vector<256x32xf32>
    %c0_34 = arith.constant 0 : index
    %c0_35 = arith.constant 0 : index
    %72 = vector.load %arg14[%c0_34, %c0_35] : memref<32x64xf32, #tpu.memory_space<vmem>>, vector<32x64xf32>
    %cst_36 = arith.constant dense<0.000000e+00> : vector<256x64xf32>
    %73 = tpu.matmul %71, %72, %cst_36 {dimension_numbers = #tpu.dot_dimension_numbers<[1], [0], [0], [1], [0, 0, 1, 1], [], []>} : vector<256x32xf32>, vector<32x64xf32>, vector<256x64xf32> -> vector<256x64xf32>
    %74 = vector.shape_cast %73 : vector<256x64xf32> to vector<32x8x64xf32>
    %75 = vector.extract_strided_slice %74 {offsets = [0, 0, 0], sizes = [1, 8, 64], strides = [1, 1, 1]} : vector<32x8x64xf32> to vector<1x8x64xf32>
    %76 = vector.extract_strided_slice %74 {offsets = [0, 0, 0], sizes = [31, 8, 64], strides = [1, 1, 1]} : vector<32x8x64xf32> to vector<31x8x64xf32>
    %77 = tpu.concatenate %75, %76 in 0 : vector<1x8x64xf32>, vector<31x8x64xf32> -> vector<32x8x64xf32>
    %78 = vector.extract_strided_slice %74 {offsets = [1, 0, 0], sizes = [31, 8, 64], strides = [1, 1, 1]} : vector<32x8x64xf32> to vector<31x8x64xf32>
    %79 = vector.extract_strided_slice %74 {offsets = [31, 0, 0], sizes = [1, 8, 64], strides = [1, 1, 1]} : vector<32x8x64xf32> to vector<1x8x64xf32>
    %80 = tpu.concatenate %78, %79 in 0 : vector<31x8x64xf32>, vector<1x8x64xf32> -> vector<32x8x64xf32>
    %cst_37 = arith.constant 7.500000e-01 : f32
    %81 = vector.broadcast %cst_37 : f32 to vector<32x8x64xf32>
    %82 = arith.mulf %81, %74 : vector<32x8x64xf32>
    %cst_38 = arith.constant 2.500000e-01 : f32
    %83 = vector.broadcast %cst_38 : f32 to vector<32x8x64xf32>
    %84 = arith.mulf %83, %77 : vector<32x8x64xf32>
    %85 = arith.addf %82, %84 : vector<32x8x64xf32>
    %cst_39 = arith.constant 7.500000e-01 : f32
    %86 = vector.broadcast %cst_39 : f32 to vector<32x8x64xf32>
    %87 = arith.mulf %86, %74 : vector<32x8x64xf32>
    %cst_40 = arith.constant 2.500000e-01 : f32
    %88 = vector.broadcast %cst_40 : f32 to vector<32x8x64xf32>
    %89 = arith.mulf %88, %80 : vector<32x8x64xf32>
    %90 = arith.addf %87, %89 : vector<32x8x64xf32>
    %91 = vector.shape_cast %85 : vector<32x8x64xf32> to vector<32x1x8x64xf32>
    %92 = vector.shape_cast %90 : vector<32x8x64xf32> to vector<32x1x8x64xf32>
    %93 = tpu.concatenate %91, %92 in 1 : vector<32x1x8x64xf32>, vector<32x1x8x64xf32> -> vector<32x2x8x64xf32>
    %94 = vector.shape_cast %93 : vector<32x2x8x64xf32> to vector<64x8x64xf32>
    %c0_41 = arith.constant 0 : index
    %c0_42 = arith.constant 0 : index
    %95 = vector.load %arg8[%c0_41, %c0_42] : memref<8x8xf32, #tpu.memory_space<vmem>>, vector<8x8xf32>
    %96 = vector.shape_cast %95 : vector<8x8xf32> to vector<1x8x8xf32>
    %97 = vector.broadcast %96 : vector<1x8x8xf32> to vector<64x8x8xf32>
    %cst_43 = arith.constant dense<0.000000e+00> : vector<64x8x64xf32>
    %98 = tpu.matmul %97, %94, %cst_43 {dimension_numbers = #tpu.dot_dimension_numbers<[2], [1], [1], [2], [0, 0, 0, 1, 1, 2], [0], [0]>} : vector<64x8x8xf32>, vector<64x8x64xf32>, vector<64x8x64xf32> -> vector<64x8x64xf32>
    %c0_44 = arith.constant 0 : index
    %c0_45 = arith.constant 0 : index
    %c0_46 = arith.constant 0 : index
    %99 = vector.load %arg9[%c0_44, %c0_45, %c0_46] : memref<1x8x1xf32, #tpu.memory_space<vmem>>, vector<1x8x1xf32>
    %100 = vector.broadcast %99 : vector<1x8x1xf32> to vector<64x8x64xf32>
    %101 = arith.addf %98, %100 : vector<64x8x64xf32>
    %102 = vector.shape_cast %101 : vector<64x8x64xf32> to vector<512x64xf32>
    %c0_47 = arith.constant 0 : index
    %c0_48 = arith.constant 0 : index
    %103 = vector.load %arg15[%c0_47, %c0_48] : memref<64x128xf32, #tpu.memory_space<vmem>>, vector<64x128xf32>
    %cst_49 = arith.constant dense<0.000000e+00> : vector<512x128xf32>
    %104 = tpu.matmul %102, %103, %cst_49 {dimension_numbers = #tpu.dot_dimension_numbers<[1], [0], [0], [1], [0, 0, 1, 1], [], []>} : vector<512x64xf32>, vector<64x128xf32>, vector<512x128xf32> -> vector<512x128xf32>
    %105 = vector.shape_cast %104 : vector<512x128xf32> to vector<64x8x128xf32>
    %106 = vector.extract_strided_slice %105 {offsets = [0, 0, 0], sizes = [1, 8, 128], strides = [1, 1, 1]} : vector<64x8x128xf32> to vector<1x8x128xf32>
    %107 = vector.extract_strided_slice %105 {offsets = [0, 0, 0], sizes = [63, 8, 128], strides = [1, 1, 1]} : vector<64x8x128xf32> to vector<63x8x128xf32>
    %108 = tpu.concatenate %106, %107 in 0 : vector<1x8x128xf32>, vector<63x8x128xf32> -> vector<64x8x128xf32>
    %109 = vector.extract_strided_slice %105 {offsets = [1, 0, 0], sizes = [63, 8, 128], strides = [1, 1, 1]} : vector<64x8x128xf32> to vector<63x8x128xf32>
    %110 = vector.extract_strided_slice %105 {offsets = [63, 0, 0], sizes = [1, 8, 128], strides = [1, 1, 1]} : vector<64x8x128xf32> to vector<1x8x128xf32>
    %111 = tpu.concatenate %109, %110 in 0 : vector<63x8x128xf32>, vector<1x8x128xf32> -> vector<64x8x128xf32>
    %cst_50 = arith.constant 7.500000e-01 : f32
    %112 = vector.broadcast %cst_50 : f32 to vector<64x8x128xf32>
    %113 = arith.mulf %112, %105 : vector<64x8x128xf32>
    %cst_51 = arith.constant 2.500000e-01 : f32
    %114 = vector.broadcast %cst_51 : f32 to vector<64x8x128xf32>
    %115 = arith.mulf %114, %108 : vector<64x8x128xf32>
    %116 = arith.addf %113, %115 : vector<64x8x128xf32>
    %cst_52 = arith.constant 7.500000e-01 : f32
    %117 = vector.broadcast %cst_52 : f32 to vector<64x8x128xf32>
    %118 = arith.mulf %117, %105 : vector<64x8x128xf32>
    %cst_53 = arith.constant 2.500000e-01 : f32
    %119 = vector.broadcast %cst_53 : f32 to vector<64x8x128xf32>
    %120 = arith.mulf %119, %111 : vector<64x8x128xf32>
    %121 = arith.addf %118, %120 : vector<64x8x128xf32>
    %122 = vector.shape_cast %116 : vector<64x8x128xf32> to vector<64x1x8x128xf32>
    %123 = vector.shape_cast %121 : vector<64x8x128xf32> to vector<64x1x8x128xf32>
    %124 = tpu.concatenate %122, %123 in 1 : vector<64x1x8x128xf32>, vector<64x1x8x128xf32> -> vector<64x2x8x128xf32>
    %125 = vector.shape_cast %124 : vector<64x2x8x128xf32> to vector<128x8x128xf32>
    %c0_54 = arith.constant 0 : index
    %c0_55 = arith.constant 0 : index
    %126 = vector.load %arg10[%c0_54, %c0_55] : memref<1x8xf32, #tpu.memory_space<vmem>>, vector<1x8xf32>
    %127 = vector.shape_cast %126 : vector<1x8xf32> to vector<1x1x8xf32>
    %128 = vector.broadcast %127 : vector<1x1x8xf32> to vector<128x1x8xf32>
    %cst_56 = arith.constant dense<0.000000e+00> : vector<128x1x128xf32>
    %129 = tpu.matmul %128, %125, %cst_56 {dimension_numbers = #tpu.dot_dimension_numbers<[2], [1], [1], [2], [0, 0, 0, 1, 1, 2], [0], [0]>} : vector<128x1x8xf32>, vector<128x8x128xf32>, vector<128x1x128xf32> -> vector<128x1x128xf32>
    %c0_57 = arith.constant 0 : index
    %c0_58 = arith.constant 0 : index
    %c0_59 = arith.constant 0 : index
    %130 = vector.load %arg11[%c0_57, %c0_58, %c0_59] : memref<1x1x1xf32, #tpu.memory_space<vmem>>, vector<1x1x1xf32>
    %131 = vector.broadcast %130 : vector<1x1x1xf32> to vector<128x1x128xf32>
    %132 = arith.addf %129, %131 : vector<128x1x128xf32>
    %133 = vector.shape_cast %132 : vector<128x1x128xf32> to vector<128x128xf32>
    %c0_60 = arith.constant 0 : index
    %c0_61 = arith.constant 0 : index
    %c0_62 = arith.constant 0 : index
    %134 = vector.load %arg16[%c0_60, %c0_61, %c0_62] : memref<1x128x128xf32, #tpu.memory_space<vmem>>, vector<1x128x128xf32>
    %135 = vector.shape_cast %134 : vector<1x128x128xf32> to vector<128x128xf32>
    %136 = vector.shape_cast %133 : vector<128x128xf32> to vector<1x128x128xf32>
    tpu.vector_store %arg16[%c0_60, %c0_61, %c0_62], %136 {strides = array<i32>} : memref<1x128x128xf32, #tpu.memory_space<vmem>>, vector<1x128x128xf32>,
    return
  }
  func.func @transform_0(%arg0: i32) -> (i32, i32, i32, i32) {
    %c0_i32 = arith.constant 0 : i32
    %c0_i32_0 = arith.constant 0 : i32
    %c0_i32_1 = arith.constant 0 : i32
    %c0_i32_2 = arith.constant 0 : i32
    return %arg0, %c0_i32, %c0_i32_0, %c0_i32_1 : i32, i32, i32, i32
  }
  func.func @transform_1(%arg0: i32) -> (i32, i32) {
    %c0_i32 = arith.constant 0 : i32
    %c0_i32_0 = arith.constant 0 : i32
    %c0_i32_1 = arith.constant 0 : i32
    return %c0_i32, %c0_i32_0 : i32, i32
  }
  func.func @transform_2(%arg0: i32) -> (i32, i32, i32) {
    %c0_i32 = arith.constant 0 : i32
    %c0_i32_0 = arith.constant 0 : i32
    %c0_i32_1 = arith.constant 0 : i32
    %c0_i32_2 = arith.constant 0 : i32
    return %c0_i32, %c0_i32_0, %c0_i32_1 : i32, i32, i32
  }
  func.func @transform_3(%arg0: i32) -> (i32, i32) {
    %c0_i32 = arith.constant 0 : i32
    %c0_i32_0 = arith.constant 0 : i32
    %c0_i32_1 = arith.constant 0 : i32
    return %c0_i32, %c0_i32_0 : i32, i32
  }
  func.func @transform_4(%arg0: i32) -> (i32, i32, i32) {
    %c0_i32 = arith.constant 0 : i32
    %c0_i32_0 = arith.constant 0 : i32
    %c0_i32_1 = arith.constant 0 : i32
    %c0_i32_2 = arith.constant 0 : i32
    return %c0_i32, %c0_i32_0, %c0_i32_1 : i32, i32, i32
  }
  func.func @transform_5(%arg0: i32) -> (i32, i32) {
    %c0_i32 = arith.constant 0 : i32
    %c0_i32_0 = arith.constant 0 : i32
    %c0_i32_1 = arith.constant 0 : i32
    return %c0_i32, %c0_i32_0 : i32, i32
  }
  func.func @transform_6(%arg0: i32) -> (i32, i32, i32) {
    %c0_i32 = arith.constant 0 : i32
    %c0_i32_0 = arith.constant 0 : i32
    %c0_i32_1 = arith.constant 0 : i32
    %c0_i32_2 = arith.constant 0 : i32
    return %c0_i32, %c0_i32_0, %c0_i32_1 : i32, i32, i32
  }
  func.func @transform_7(%arg0: i32) -> (i32, i32) {
    %c0_i32 = arith.constant 0 : i32
    %c0_i32_0 = arith.constant 0 : i32
    %c0_i32_1 = arith.constant 0 : i32
    return %c0_i32, %c0_i32_0 : i32, i32
  }
  func.func @transform_8(%arg0: i32) -> (i32, i32, i32) {
    %c0_i32 = arith.constant 0 : i32
    %c0_i32_0 = arith.constant 0 : i32
    %c0_i32_1 = arith.constant 0 : i32
    %c0_i32_2 = arith.constant 0 : i32
    return %c0_i32, %c0_i32_0, %c0_i32_1 : i32, i32, i32
  }
  func.func @transform_9(%arg0: i32) -> (i32, i32) {
    %c0_i32 = arith.constant 0 : i32
    %c0_i32_0 = arith.constant 0 : i32
    %c0_i32_1 = arith.constant 0 : i32
    return %c0_i32, %c0_i32_0 : i32, i32
  }
  func.func @transform_10(%arg0: i32) -> (i32, i32, i32) {
    %c0_i32 = arith.constant 0 : i32
    %c0_i32_0 = arith.constant 0 : i32
    %c0_i32_1 = arith.constant 0 : i32
    %c0_i32_2 = arith.constant 0 : i32
    return %c0_i32, %c0_i32_0, %c0_i32_1 : i32, i32, i32
  }
  func.func @transform_11(%arg0: i32) -> (i32, i32) {
    %c0_i32 = arith.constant 0 : i32
    %c0_i32_0 = arith.constant 0 : i32
    %c0_i32_1 = arith.constant 0 : i32
    return %c0_i32, %c0_i32_0 : i32, i32
  }
  func.func @transform_12(%arg0: i32) -> (i32, i32) {
    %c0_i32 = arith.constant 0 : i32
    %c0_i32_0 = arith.constant 0 : i32
    %c0_i32_1 = arith.constant 0 : i32
    return %c0_i32, %c0_i32_0 : i32, i32
  }
  func.func @transform_13(%arg0: i32) -> (i32, i32) {
    %c0_i32 = arith.constant 0 : i32
    %c0_i32_0 = arith.constant 0 : i32
    %c0_i32_1 = arith.constant 0 : i32
    return %c0_i32, %c0_i32_0 : i32, i32
  }
  func.func @transform_14(%arg0: i32) -> (i32, i32) {
    %c0_i32 = arith.constant 0 : i32
    %c0_i32_0 = arith.constant 0 : i32
    %c0_i32_1 = arith.constant 0 : i32
    return %c0_i32, %c0_i32_0 : i32, i32
  }
  func.func @transform_15(%arg0: i32) -> (i32, i32, i32) {
    %c0_i32 = arith.constant 0 : i32
    %c0_i32_0 = arith.constant 0 : i32
    %c0_i32_1 = arith.constant 0 : i32
    return %arg0, %c0_i32, %c0_i32_0 : i32, i32, i32
  }
}

</mosaic_0001>

<llo_original>
// kernel: conv_decoder_forward.1
$region0: #{conv_decoder_forward.1}
  #allocation0 [shape = 'u32[]', space=smem, size = 0x4, offset = 0x4, fixed_abs, tag = 'smem constant byte address 0x4 - core index']
  #allocation1 [shape = 'u32[72,128]{1,0:T(1,128)}', space=vmem, size = 0x9000, scoped, tag = 'internal scratch']
  #allocation2 [shape = 'f32[1,1,1]{2,1,0:T(1,128)S(1)}', space=vmem, size = 0x200, scoped, tag = 'scoped memory for conv_decoder_forward.1']
  %s0 = inlined_call_operand.vmem [shape: f32[2,8,32,8], index: 0, kind: input, shape index: {}]
  %s1 = inlined_call_operand.vmem [shape: f32[16,32], index: 1, kind: input, shape index: {}]
  %s2 = inlined_call_operand.vmem [shape: f32[1,16,1], index: 2, kind: input, shape index: {}]
  %s3 = inlined_call_operand.vmem [shape: f32[16,16], index: 3, kind: input, shape index: {}]
  %s4 = inlined_call_operand.vmem [shape: f32[1,16,1], index: 4, kind: input, shape index: {}]
  %s5 = inlined_call_operand.vmem [shape: f32[8,16], index: 5, kind: input, shape index: {}]
  %s6 = inlined_call_operand.vmem [shape: f32[1,8,1], index: 6, kind: input, shape index: {}]
  %s7 = inlined_call_operand.vmem [shape: f32[8,8], index: 7, kind: input, shape index: {}]
  %s8 = inlined_call_operand.vmem [shape: f32[1,8,1], index: 8, kind: input, shape index: {}]
  %s9 = inlined_call_operand.vmem [shape: f32[1,8], index: 9, kind: input, shape index: {}]
  %s10 = inlined_call_operand.<no memory space> [shape: f32[1,1,1], index: 10, kind: input, shape index: {}]
  %s11 = inlined_call_operand.vmem [shape: f32[8,16], index: 11, kind: input, shape index: {}]
  %s12 = inlined_call_operand.vmem [shape: f32[16,32], index: 12, kind: input, shape index: {}]
  %s13 = inlined_call_operand.vmem [shape: f32[32,64], index: 13, kind: input, shape index: {}]
  %s14 = inlined_call_operand.vmem [shape: f32[64,128], index: 14, kind: input, shape index: {}]
  %s15 = inlined_call_operand.hbm [shape: f32[2,128,128], index: 15, kind: output, shape index: {}]
  %s16 = sld [smem:[#allocation0]]
  $region93: #{conv_decoder_forward.1} parent=0
    _
  %s18 = ssub.s32 1, %s16
  %s19 = scalar_select 0, %s18, %s16
  %v20 = vstv %s10
  %21 = vst [vmem:[#allocation2] sm:$0x1] %v20
  $region1: #{conv_decoder_forward.1} parent=0
    #allocation3 [shape = 'u8[131072]{0}', space=vmem, size = 0x20000, scoped, tag = 'output window, operand 0']
    #allocation4 [shape = 's32[2]{0}', space=sflag, size = 0x8, scoped, tag = 'scoped memory for conv_decoder_forward.1']
    %22 = vsyncpa [#allocation4], 0
    %s23 = scalar_lea.sflag [#allocation4], 1
    %24 = vsyncpa %s23, 0
    loop: start=0, step=1, limit=4
    $region2: #{conv_decoder_forward.1} parent=1 // loop_pre_header
      _
    $region3: #{conv_decoder_forward.1} parent=1 // loop_header
      %s26 = sphi 0, %s30
      %p27 = scmp.ge.s32.totalorder %s26, 4
      %s36 = sphi 0, %s38
      %s39 = sphi 0, %s36
      %s40 = sphi 0, %s39
      %s56 = sphi 0, %s40
      %s60 = sphi 0, %s60
      %s62 = sphi 0, %s60
      %s63 = sphi 0, %s62
      %s77 = sphi 0, %s63
      %s81 = sphi 0, %s81
      %s83 = sphi 0, %s81
      %s84 = sphi 0, %s83
      %s98 = sphi 0, %s84
      %s102 = sphi 0, %s102
      %s104 = sphi 0, %s102
      %s105 = sphi 0, %s104
      %s119 = sphi 0, %s105
      %s123 = sphi 0, %s123
      %s125 = sphi 0, %s123
      %s126 = sphi 0, %s125
      %s140 = sphi 0, %s126
      %s144 = sphi 0, %s144
      %s146 = sphi 0, %s144
      %s147 = sphi 0, %s146
      %s161 = sphi 0, %s147
      %s165 = sphi 0, %s165
      %s167 = sphi 0, %s165
      %s168 = sphi 0, %s167
      %s182 = sphi 0, %s168
      %s186 = sphi 0, %s186
      %s188 = sphi 0, %s186
      %s189 = sphi 0, %s188
      %s203 = sphi 0, %s189
      %s207 = sphi 0, %s207
      %s209 = sphi 0, %s207
      %s210 = sphi 0, %s209
      %s224 = sphi 0, %s210
      %s228 = sphi 0, %s228
      %s230 = sphi 0, %s228
      %s231 = sphi 0, %s230
      %s245 = sphi 0, %s231
      %s249 = sphi 0, %s249
      %s251 = sphi 0, %s249
      %s252 = sphi 0, %s251
      %s266 = sphi 0, %s252
      %s270 = sphi 0, %s270
      %s272 = sphi 0, %s270
      %s273 = sphi 0, %s272
      %s287 = sphi 0, %s273
      %s291 = sphi 0, %s291
      %s293 = sphi 0, %s291
      %s294 = sphi 0, %s293
      %s308 = sphi 0, %s294
      %s312 = sphi 0, %s312
      %s314 = sphi 0, %s312
      %s315 = sphi 0, %s314
      %s329 = sphi 0, %s315
      %s333 = sphi 0, %s333
      %s335 = sphi 0, %s333
      %s336 = sphi 0, %s335
      %s350 = sphi 0, %s336
      %s356 = sphi 0, %s358
      %s359 = sphi 0, %s356
      %s360 = sphi 0, %s359
      %s376 = sphi 0, %s360
    $region4: #{conv_decoder_forward.1} parent=1 // loop_header_branch
      %29 = sbr.rel (%p27) target = $region8
    $region5: #{conv_decoder_forward.1} parent=1 // loop_body
      %s31 = ssub.s32 %s26, 1
      %s32 = ssub.s32 %s26, 2
      %s33 = sadd.s32 %s26, 1
      %s34 = ssub.s32 %s26, %s33
      %p35 = scmp.eq.s32.totalorder %s34, 0
      %s37 = sadd.s32 %s36, 1
      %s38 = scalar_select %p35, %s36, %s37
      %p41 = pneg %p35
      %p42 = scmp.eq.s32.totalorder %s26, 1
      %p43 = por %p41, %p42
      %p44 = scmp.ne.s32.totalorder %s36, %s39
      %p45 = scmp.eq.s32.totalorder %s26, 0
      %p46 = por %p44, %p45
      %p47 = scmp.ne.s32.totalorder %s36, %s39
      %p48 = scmp.eq.s32.totalorder %s31, 1
      %p49 = por %p47, %p48
      %p50 = scmp.ne.s32.totalorder %s39, %s40
      %p51 = scmp.eq.s32.totalorder %s31, 0
      %p52 = por %p50, %p51
      %p53 = scmp.ne.s32.totalorder %s39, %s40
      %p54 = scmp.eq.s32.totalorder %s32, 1
      %p55 = por %p53, %p54
      %p57 = scmp.ne.s32.totalorder %s40, %s56
      %p58 = scmp.eq.s32.totalorder %s32, 0
      %p59 = por %p57, %p58
      %s61 = sadd.s32 %s60, 1
      %p64 = scmp.eq.s32.totalorder %s26, 1
      %p65 = scmp.ne.s32.totalorder %s60, %s62
      %p66 = scmp.eq.s32.totalorder %s26, 0
      %p67 = por %p65, %p66
      %p68 = scmp.ne.s32.totalorder %s60, %s62
      %p69 = scmp.eq.s32.totalorder %s31, 1
      %p70 = por %p68, %p69
      %p71 = scmp.ne.s32.totalorder %s62, %s63
      %p72 = scmp.eq.s32.totalorder %s31, 0
      %p73 = por %p71, %p72
      %p74 = scmp.ne.s32.totalorder %s62, %s63
      %p75 = scmp.eq.s32.totalorder %s32, 1
      %p76 = por %p74, %p75
      %p78 = scmp.ne.s32.totalorder %s63, %s77
      %p79 = scmp.eq.s32.totalorder %s32, 0
      %p80 = por %p78, %p79
      %s82 = sadd.s32 %s81, 1
      %p85 = scmp.eq.s32.totalorder %s26, 1
      %p86 = scmp.ne.s32.totalorder %s81, %s83
      %p87 = scmp.eq.s32.totalorder %s26, 0
      %p88 = por %p86, %p87
      %p89 = scmp.ne.s32.totalorder %s81, %s83
      %p90 = scmp.eq.s32.totalorder %s31, 1
      %p91 = por %p89, %p90
      %p92 = scmp.ne.s32.totalorder %s83, %s84
      %p93 = scmp.eq.s32.totalorder %s31, 0
      %p94 = por %p92, %p93
      %p95 = scmp.ne.s32.totalorder %s83, %s84
      %p96 = scmp.eq.s32.totalorder %s32, 1
      %p97 = por %p95, %p96
      %p99 = scmp.ne.s32.totalorder %s84, %s98
      %p100 = scmp.eq.s32.totalorder %s32, 0
      %p101 = por %p99, %p100
      %s103 = sadd.s32 %s102, 1
      %p106 = scmp.eq.s32.totalorder %s26, 1
      %p107 = scmp.ne.s32.totalorder %s102, %s104
      %p108 = scmp.eq.s32.totalorder %s26, 0
      %p109 = por %p107, %p108
      %p110 = scmp.ne.s32.totalorder %s102, %s104
      %p111 = scmp.eq.s32.totalorder %s31, 1
      %p112 = por %p110, %p111
      %p113 = scmp.ne.s32.totalorder %s104, %s105
      %p114 = scmp.eq.s32.totalorder %s31, 0
      %p115 = por %p113, %p114
      %p116 = scmp.ne.s32.totalorder %s104, %s105
      %p117 = scmp.eq.s32.totalorder %s32, 1
      %p118 = por %p116, %p117
      %p120 = scmp.ne.s32.totalorder %s105, %s119
      %p121 = scmp.eq.s32.totalorder %s32, 0
      %p122 = por %p120, %p121
      %s124 = sadd.s32 %s123, 1
      %p127 = scmp.eq.s32.totalorder %s26, 1
      %p128 = scmp.ne.s32.totalorder %s123, %s125
      %p129 = scmp.eq.s32.totalorder %s26, 0
      %p130 = por %p128, %p129
      %p131 = scmp.ne.s32.totalorder %s123, %s125
      %p132 = scmp.eq.s32.totalorder %s31, 1
      %p133 = por %p131, %p132
      %p134 = scmp.ne.s32.totalorder %s125, %s126
      %p135 = scmp.eq.s32.totalorder %s31, 0
      %p136 = por %p134, %p135
      %p137 = scmp.ne.s32.totalorder %s125, %s126
      %p138 = scmp.eq.s32.totalorder %s32, 1
      %p139 = por %p137, %p138
      %p141 = scmp.ne.s32.totalorder %s126, %s140
      %p142 = scmp.eq.s32.totalorder %s32, 0
      %p143 = por %p141, %p142
      %s145 = sadd.s32 %s144, 1
      %p148 = scmp.eq.s32.totalorder %s26, 1
      %p149 = scmp.ne.s32.totalorder %s144, %s146
      %p150 = scmp.eq.s32.totalorder %s26, 0
      %p151 = por %p149, %p150
      %p152 = scmp.ne.s32.totalorder %s144, %s146
      %p153 = scmp.eq.s32.totalorder %s31, 1
      %p154 = por %p152, %p153
      %p155 = scmp.ne.s32.totalorder %s146, %s147
      %p156 = scmp.eq.s32.totalorder %s31, 0
      %p157 = por %p155, %p156
      %p158 = scmp.ne.s32.totalorder %s146, %s147
      %p159 = scmp.eq.s32.totalorder %s32, 1
      %p160 = por %p158, %p159
      %p162 = scmp.ne.s32.totalorder %s147, %s161
      %p163 = scmp.eq.s32.totalorder %s32, 0
      %p164 = por %p162, %p163
      %s166 = sadd.s32 %s165, 1
      %p169 = scmp.eq.s32.totalorder %s26, 1
      %p170 = scmp.ne.s32.totalorder %s165, %s167
      %p171 = scmp.eq.s32.totalorder %s26, 0
      %p172 = por %p170, %p171
      %p173 = scmp.ne.s32.totalorder %s165, %s167
      %p174 = scmp.eq.s32.totalorder %s31, 1
      %p175 = por %p173, %p174
      %p176 = scmp.ne.s32.totalorder %s167, %s168
      %p177 = scmp.eq.s32.totalorder %s31, 0
      %p178 = por %p176, %p177
      %p179 = scmp.ne.s32.totalorder %s167, %s168
      %p180 = scmp.eq.s32.totalorder %s32, 1
      %p181 = por %p179, %p180
      %p183 = scmp.ne.s32.totalorder %s168, %s182
      %p184 = scmp.eq.s32.totalorder %s32, 0
      %p185 = por %p183, %p184
      %s187 = sadd.s32 %s186, 1
      %p190 = scmp.eq.s32.totalorder %s26, 1
      %p191 = scmp.ne.s32.totalorder %s186, %s188
      %p192 = scmp.eq.s32.totalorder %s26, 0
      %p193 = por %p191, %p192
      %p194 = scmp.ne.s32.totalorder %s186, %s188
      %p195 = scmp.eq.s32.totalorder %s31, 1
      %p196 = por %p194, %p195
      %p197 = scmp.ne.s32.totalorder %s188, %s189
      %p198 = scmp.eq.s32.totalorder %s31, 0
      %p199 = por %p197, %p198
      %p200 = scmp.ne.s32.totalorder %s188, %s189
      %p201 = scmp.eq.s32.totalorder %s32, 1
      %p202 = por %p200, %p201
      %p204 = scmp.ne.s32.totalorder %s189, %s203
      %p205 = scmp.eq.s32.totalorder %s32, 0
      %p206 = por %p204, %p205
      %s208 = sadd.s32 %s207, 1
      %p211 = scmp.eq.s32.totalorder %s26, 1
      %p212 = scmp.ne.s32.totalorder %s207, %s209
      %p213 = scmp.eq.s32.totalorder %s26, 0
      %p214 = por %p212, %p213
      %p215 = scmp.ne.s32.totalorder %s207, %s209
      %p216 = scmp.eq.s32.totalorder %s31, 1
      %p217 = por %p215, %p216
      %p218 = scmp.ne.s32.totalorder %s209, %s210
      %p219 = scmp.eq.s32.totalorder %s31, 0
      %p220 = por %p218, %p219
      %p221 = scmp.ne.s32.totalorder %s209, %s210
      %p222 = scmp.eq.s32.totalorder %s32, 1
      %p223 = por %p221, %p222
      %p225 = scmp.ne.s32.totalorder %s210, %s224
      %p226 = scmp.eq.s32.totalorder %s32, 0
      %p227 = por %p225, %p226
      %s229 = sadd.s32 %s228, 1
      %p232 = scmp.eq.s32.totalorder %s26, 1
      %p233 = scmp.ne.s32.totalorder %s228, %s230
      %p234 = scmp.eq.s32.totalorder %s26, 0
      %p235 = por %p233, %p234
      %p236 = scmp.ne.s32.totalorder %s228, %s230
      %p237 = scmp.eq.s32.totalorder %s31, 1
      %p238 = por %p236, %p237
      %p239 = scmp.ne.s32.totalorder %s230, %s231
      %p240 = scmp.eq.s32.totalorder %s31, 0
      %p241 = por %p239, %p240
      %p242 = scmp.ne.s32.totalorder %s230, %s231
      %p243 = scmp.eq.s32.totalorder %s32, 1
      %p244 = por %p242, %p243
      %p246 = scmp.ne.s32.totalorder %s231, %s245
      %p247 = scmp.eq.s32.totalorder %s32, 0
      %p248 = por %p246, %p247
      %s250 = sadd.s32 %s249, 1
      %p253 = scmp.eq.s32.totalorder %s26, 1
      %p254 = scmp.ne.s32.totalorder %s249, %s251
      %p255 = scmp.eq.s32.totalorder %s26, 0
      %p256 = por %p254, %p255
      %p257 = scmp.ne.s32.totalorder %s249, %s251
      %p258 = scmp.eq.s32.totalorder %s31, 1
      %p259 = por %p257, %p258
      %p260 = scmp.ne.s32.totalorder %s251, %s252
      %p261 = scmp.eq.s32.totalorder %s31, 0
      %p262 = por %p260, %p261
      %p263 = scmp.ne.s32.totalorder %s251, %s252
      %p264 = scmp.eq.s32.totalorder %s32, 1
      %p265 = por %p263, %p264
      %p267 = scmp.ne.s32.totalorder %s252, %s266
      %p268 = scmp.eq.s32.totalorder %s32, 0
      %p269 = por %p267, %p268
      %s271 = sadd.s32 %s270, 1
      %p274 = scmp.eq.s32.totalorder %s26, 1
      %p275 = scmp.ne.s32.totalorder %s270, %s272
      %p276 = scmp.eq.s32.totalorder %s26, 0
      %p277 = por %p275, %p276
      %p278 = scmp.ne.s32.totalorder %s270, %s272
      %p279 = scmp.eq.s32.totalorder %s31, 1
      %p280 = por %p278, %p279
      %p281 = scmp.ne.s32.totalorder %s272, %s273
      %p282 = scmp.eq.s32.totalorder %s31, 0
      %p283 = por %p281, %p282
      %p284 = scmp.ne.s32.totalorder %s272, %s273
      %p285 = scmp.eq.s32.totalorder %s32, 1
      %p286 = por %p284, %p285
      %p288 = scmp.ne.s32.totalorder %s273, %s287
      %p289 = scmp.eq.s32.totalorder %s32, 0
      %p290 = por %p288, %p289
      %s292 = sadd.s32 %s291, 1
      %p295 = scmp.eq.s32.totalorder %s26, 1
      %p296 = scmp.ne.s32.totalorder %s291, %s293
      %p297 = scmp.eq.s32.totalorder %s26, 0
      %p298 = por %p296, %p297
      %p299 = scmp.ne.s32.totalorder %s291, %s293
      %p300 = scmp.eq.s32.totalorder %s31, 1
      %p301 = por %p299, %p300
      %p302 = scmp.ne.s32.totalorder %s293, %s294
      %p303 = scmp.eq.s32.totalorder %s31, 0
      %p304 = por %p302, %p303
      %p305 = scmp.ne.s32.totalorder %s293, %s294
      %p306 = scmp.eq.s32.totalorder %s32, 1
      %p307 = por %p305, %p306
      %p309 = scmp.ne.s32.totalorder %s294, %s308
      %p310 = scmp.eq.s32.totalorder %s32, 0
      %p311 = por %p309, %p310
      %s313 = sadd.s32 %s312, 1
      %p316 = scmp.eq.s32.totalorder %s26, 1
      %p317 = scmp.ne.s32.totalorder %s312, %s314
      %p318 = scmp.eq.s32.totalorder %s26, 0
      %p319 = por %p317, %p318
      %p320 = scmp.ne.s32.totalorder %s312, %s314
      %p321 = scmp.eq.s32.totalorder %s31, 1
      %p322 = por %p320, %p321
      %p323 = scmp.ne.s32.totalorder %s314, %s315
      %p324 = scmp.eq.s32.totalorder %s31, 0
      %p325 = por %p323, %p324
      %p326 = scmp.ne.s32.totalorder %s314, %s315
      %p327 = scmp.eq.s32.totalorder %s32, 1
      %p328 = por %p326, %p327
      %p330 = scmp.ne.s32.totalorder %s315, %s329
      %p331 = scmp.eq.s32.totalorder %s32, 0
      %p332 = por %p330, %p331
      %s334 = sadd.s32 %s333, 1
      %p337 = scmp.eq.s32.totalorder %s26, 1
      %p338 = scmp.ne.s32.totalorder %s333, %s335
      %p339 = scmp.eq.s32.totalorder %s26, 0
      %p340 = por %p338, %p339
      %p341 = scmp.ne.s32.totalorder %s333, %s335
      %p342 = scmp.eq.s32.totalorder %s31, 1
      %p343 = por %p341, %p342
      %p344 = scmp.ne.s32.totalorder %s335, %s336
      %p345 = scmp.eq.s32.totalorder %s31, 0
      %p346 = por %p344, %p345
      %p347 = scmp.ne.s32.totalorder %s335, %s336
      %p348 = scmp.eq.s32.totalorder %s32, 1
      %p349 = por %p347, %p348
      %p351 = scmp.ne.s32.totalorder %s336, %s350
      %p352 = scmp.eq.s32.totalorder %s32, 0
      %p353 = por %p351, %p352
      %s354 = ssub.s32 %s26, %s33
      %p355 = scmp.eq.s32.totalorder %s354, 0
      %s357 = sadd.s32 %s356, 1
      %s358 = scalar_select %p355, %s356, %s357
      %p361 = pneg %p355
      %p362 = scmp.eq.s32.totalorder %s26, 1
      %p363 = por %p361, %p362
      %p364 = scmp.ne.s32.totalorder %s356, %s359
      %p365 = scmp.eq.s32.totalorder %s26, 0
      %p366 = por %p364, %p365
      %p367 = scmp.ne.s32.totalorder %s356, %s359
      %p368 = scmp.eq.s32.totalorder %s31, 1
      %p369 = por %p367, %p368
      %p370 = scmp.ne.s32.totalorder %s359, %s360
      %p371 = scmp.eq.s32.totalorder %s31, 0
      %p372 = por %p370, %p371
      %p373 = scmp.ne.s32.totalorder %s359, %s360
      %p374 = scmp.eq.s32.totalorder %s32, 1
      %p375 = por %p373, %p374
      %p377 = scmp.ne.s32.totalorder %s360, %s376
      %p378 = scmp.eq.s32.totalorder %s32, 0
      %p379 = por %p377, %p378
      %p380 = scmp.le.s32.totalorder 1, %s26
      %p381 = scmp.lt.s32.totalorder %s26, 3
      %p382 = pnand %p380, %p381
      %p383 = pneg %p382
      // Predicated region
      $region9: #{conv_decoder_forward.1} parent=5 // pred_check
        _
      $region10: #{conv_decoder_forward.1} parent=5 // pred_check_branch
        %385 = sbr.rel (%p382) target = $region12
      $region11: #{conv_decoder_forward.1} parent=5 // pred_region
        %s386 = ssub.s32 %s26, 1
        // Predicated region
        $region13: #{conv_decoder_forward.1} parent=11 // pred_check
          %p387 = pneg %p73
        $region14: #{conv_decoder_forward.1} parent=11 // pred_check_branch
          %389 = sbr.rel (%p387) target = $region16
        $region15: #{conv_decoder_forward.1} parent=11 // pred_region
          _
        $region16: #{conv_decoder_forward.1} parent=11 // pred_fallthru
          _
        // Predicated region
        $region17: #{conv_decoder_forward.1} parent=11 // pred_check
          %p390 = pneg %p94
        $region18: #{conv_decoder_forward.1} parent=11 // pred_check_branch
          %392 = sbr.rel (%p390) target = $region20
        $region19: #{conv_decoder_forward.1} parent=11 // pred_region
          _
        $region20: #{conv_decoder_forward.1} parent=11 // pred_fallthru
          _
        // Predicated region
        $region21: #{conv_decoder_forward.1} parent=11 // pred_check
          %p393 = pneg %p115
        $region22: #{conv_decoder_forward.1} parent=11 // pred_check_branch
          %395 = sbr.rel (%p393) target = $region24
        $region23: #{conv_decoder_forward.1} parent=11 // pred_region
          _
        $region24: #{conv_decoder_forward.1} parent=11 // pred_fallthru
          _
        // Predicated region
        $region25: #{conv_decoder_forward.1} parent=11 // pred_check
          %p396 = pneg %p136
        $region26: #{conv_decoder_forward.1} parent=11 // pred_check_branch
          %398 = sbr.rel (%p396) target = $region28
        $region27: #{conv_decoder_forward.1} parent=11 // pred_region
          _
        $region28: #{conv_decoder_forward.1} parent=11 // pred_fallthru
          _
        // Predicated region
        $region29: #{conv_decoder_forward.1} parent=11 // pred_check
          %p399 = pneg %p157
        $region30: #{conv_decoder_forward.1} parent=11 // pred_check_branch
          %401 = sbr.rel (%p399) target = $region32
        $region31: #{conv_decoder_forward.1} parent=11 // pred_region
          _
        $region32: #{conv_decoder_forward.1} parent=11 // pred_fallthru
          _
        // Predicated region
        $region33: #{conv_decoder_forward.1} parent=11 // pred_check
          %p402 = pneg %p178
        $region34: #{conv_decoder_forward.1} parent=11 // pred_check_branch
          %404 = sbr.rel (%p402) target = $region36
        $region35: #{conv_decoder_forward.1} parent=11 // pred_region
          _
        $region36: #{conv_decoder_forward.1} parent=11 // pred_fallthru
          _
        // Predicated region
        $region37: #{conv_decoder_forward.1} parent=11 // pred_check
          %p405 = pneg %p199
        $region38: #{conv_decoder_forward.1} parent=11 // pred_check_branch
          %407 = sbr.rel (%p405) target = $region40
        $region39: #{conv_decoder_forward.1} parent=11 // pred_region
          _
        $region40: #{conv_decoder_forward.1} parent=11 // pred_fallthru
          _
        // Predicated region
        $region41: #{conv_decoder_forward.1} parent=11 // pred_check
          %p408 = pneg %p220
        $region42: #{conv_decoder_forward.1} parent=11 // pred_check_branch
          %410 = sbr.rel (%p408) target = $region44
        $region43: #{conv_decoder_forward.1} parent=11 // pred_region
          _
        $region44: #{conv_decoder_forward.1} parent=11 // pred_fallthru
          _
        // Predicated region
        $region45: #{conv_decoder_forward.1} parent=11 // pred_check
          %p411 = pneg %p241
        $region46: #{conv_decoder_forward.1} parent=11 // pred_check_branch
          %413 = sbr.rel (%p411) target = $region48
        $region47: #{conv_decoder_forward.1} parent=11 // pred_region
          _
        $region48: #{conv_decoder_forward.1} parent=11 // pred_fallthru
          _
        // Predicated region
        $region49: #{conv_decoder_forward.1} parent=11 // pred_check
          %p414 = pneg %p262
        $region50: #{conv_decoder_forward.1} parent=11 // pred_check_branch
          %416 = sbr.rel (%p414) target = $region52
        $region51: #{conv_decoder_forward.1} parent=11 // pred_region
          _
        $region52: #{conv_decoder_forward.1} parent=11 // pred_fallthru
          _
        // Predicated region
        $region53: #{conv_decoder_forward.1} parent=11 // pred_check
          %p417 = pneg %p283
        $region54: #{conv_decoder_forward.1} parent=11 // pred_check_branch
          %419 = sbr.rel (%p417) target = $region56
        $region55: #{conv_decoder_forward.1} parent=11 // pred_region
          _
        $region56: #{conv_decoder_forward.1} parent=11 // pred_fallthru
          _
        // Predicated region
        $region57: #{conv_decoder_forward.1} parent=11 // pred_check
          %p420 = pneg %p304
        $region58: #{conv_decoder_forward.1} parent=11 // pred_check_branch
          %422 = sbr.rel (%p420) target = $region60
        $region59: #{conv_decoder_forward.1} parent=11 // pred_region
          _
        $region60: #{conv_decoder_forward.1} parent=11 // pred_fallthru
          _
        // Predicated region
        $region61: #{conv_decoder_forward.1} parent=11 // pred_check
          %p423 = pneg %p325
        $region62: #{conv_decoder_forward.1} parent=11 // pred_check_branch
          %425 = sbr.rel (%p423) target = $region64
        $region63: #{conv_decoder_forward.1} parent=11 // pred_region
          _
        $region64: #{conv_decoder_forward.1} parent=11 // pred_fallthru
          _
        // Predicated region
        $region65: #{conv_decoder_forward.1} parent=11 // pred_check
          %p426 = pneg %p346
        $region66: #{conv_decoder_forward.1} parent=11 // pred_check_branch
          %428 = sbr.rel (%p426) target = $region68
        $region67: #{conv_decoder_forward.1} parent=11 // pred_region
          _
        $region68: #{conv_decoder_forward.1} parent=11 // pred_fallthru
          _
      $region12: #{conv_decoder_forward.1} parent=5 // pred_fallthru
        _
      %p429 = scmp.lt.s32.totalorder %s26, 2
      // Predicated region
      $region69: #{conv_decoder_forward.1} parent=5 // pred_check
        %p430 = pneg %p429
      $region70: #{conv_decoder_forward.1} parent=5 // pred_check_branch
        %432 = sbr.rel (%p430) target = $region72
      $region71: #{conv_decoder_forward.1} parent=5 // pred_region
        // Predicated region
        $region73: #{conv_decoder_forward.1} parent=71 // pred_check
          %p433 = pneg %p46
        $region74: #{conv_decoder_forward.1} parent=71 // pred_check_branch
          %435 = sbr.rel (%p433) target = $region76
        $region75: #{conv_decoder_forward.1} parent=71 // pred_region
          %p436 = scmp.lt.s32.totalorder %s26, 1
          %s437 = scalar_select %p436, %s26, 1
          %s438 = smul.addr %s437, 32
          %s439 = smul.addr %s438, 8
          %s440 = scalar_lea.vmem %s0, %s439
        $region76: #{conv_decoder_forward.1} parent=71 // pred_fallthru
          _
      $region72: #{conv_decoder_forward.1} parent=5 // pred_fallthru
        _
      %p441 = scmp.le.s32.totalorder 1, %s26
      %p442 = scmp.lt.s32.totalorder %s26, 3
      %p443 = pnand %p441, %p442
      %p444 = pneg %p443
      // Predicated region
      $region77: #{conv_decoder_forward.1} parent=5 // pred_check
        _
      $region78: #{conv_decoder_forward.1} parent=5 // pred_check_branch
        %446 = sbr.rel (%p443) target = $region80
      $region79: #{conv_decoder_forward.1} parent=5 // pred_region
        %s447 = ssub.s32 %s26, 1
        %p448 = scmp.lt.s32.totalorder %s31, 1
        %s449 = scalar_select %p448, %s31, 1
        %s450 = smul.addr %s449, 32
        %s451 = smul.addr %s450, 8
        %s452 = scalar_lea.vmem %s0, %s451
        %p453 = pneg %p52
        %p454 = pneg %p49
        %p455 = pneg %p73
        %p456 = pneg %p70
        %p457 = pneg %p94
        %p458 = pneg %p91
        %p459 = pneg %p115
        %p460 = pneg %p112
        %p461 = pneg %p136
        %p462 = pneg %p133
        %p463 = pneg %p157
        %p464 = pneg %p154
        %p465 = pneg %p178
        %p466 = pneg %p175
        %p467 = pneg %p199
        %p468 = pneg %p196
        %p469 = pneg %p220
        %p470 = pneg %p217
        %p471 = pneg %p241
        %p472 = pneg %p238
        %p473 = pneg %p262
        %p474 = pneg %p259
        %p475 = pneg %p283
        %p476 = pneg %p280
        %p477 = pneg %p304
        %p478 = pneg %p301
        %p479 = pneg %p325
        %p480 = pneg %p322
        %p481 = pneg %p346
        %p482 = pneg %p343
        %p483 = pneg %p372
        %p484 = pneg %p369
        %s485 = sand.u32 %s359, 1
        %s486 = scalar_lea.sflag [#allocation4], %s485
        %s487 = sand.u32 %s359, 1
        %s488 = smul.addr %s487, 128
        %s489 = scalar_lea.vmem [#allocation3], %s488
        %p490 = scmp.lt.s32.totalorder %s31, 1
        %s491 = scalar_select %p490, %s31, 1
        %s492 = smul.addr %s491, 32
        %s493 = smul.addr %s492, 8
        %s494 = scalar_lea.vmem %s0, %s493
        %v495 = vld [vmem:[%s494] sm:$0xff]
        %v496 = vld [vmem:[%s494 + $0x8] sm:$0xff]
        %v497 = vld [vmem:[%s494 + $0x10] sm:$0xff]
        %v498 = vld [vmem:[%s494 + $0x18] sm:$0xff]
        %v499 = vld [vmem:[%s494 + $0x20] sm:$0xff]
        %v500 = vld [vmem:[%s494 + $0x28] sm:$0xff]
        %v501 = vld [vmem:[%s494 + $0x30] sm:$0xff]
        %v502 = vld [vmem:[%s494 + $0x38] sm:$0xff]
        %v503 = vld [vmem:[%s494 + $0x40] sm:$0xff]
        %v504 = vld [vmem:[%s494 + $0x48] sm:$0xff]
        %v505 = vld [vmem:[%s494 + $0x50] sm:$0xff]
        %v506 = vld [vmem:[%s494 + $0x58] sm:$0xff]
        %v507 = vld [vmem:[%s494 + $0x60] sm:$0xff]
        %v508 = vld [vmem:[%s494 + $0x68] sm:$0xff]
        %v509 = vld [vmem:[%s494 + $0x70] sm:$0xff]
        %v510 = vld [vmem:[%s494 + $0x78] sm:$0xff]
        %v511 = vld [vmem:[%s494 + $0x80] sm:$0xff]
        %v512 = vld [vmem:[%s494 + $0x88] sm:$0xff]
        %v513 = vld [vmem:[%s494 + $0x90] sm:$0xff]
        %v514 = vld [vmem:[%s494 + $0x98] sm:$0xff]
        %v515 = vld [vmem:[%s494 + $0xa0] sm:$0xff]
        %v516 = vld [vmem:[%s494 + $0xa8] sm:$0xff]
        %v517 = vld [vmem:[%s494 + $0xb0] sm:$0xff]
        %v518 = vld [vmem:[%s494 + $0xb8] sm:$0xff]
        %v519 = vld [vmem:[%s494 + $0xc0] sm:$0xff]
        %v520 = vld [vmem:[%s494 + $0xc8] sm:$0xff]
        %v521 = vld [vmem:[%s494 + $0xd0] sm:$0xff]
        %v522 = vld [vmem:[%s494 + $0xd8] sm:$0xff]
        %v523 = vld [vmem:[%s494 + $0xe0] sm:$0xff]
        %v524 = vld [vmem:[%s494 + $0xe8] sm:$0xff]
        %v525 = vld [vmem:[%s494 + $0xf0] sm:$0xff]
        %v526 = vld [vmem:[%s494 + $0xf8] sm:$0xff]
        %v527 = vld [vmem:[%s1] sm:$0xff]
        %v528 = vld [vmem:[%s1 + $0x8] sm:$0xff]
        %v529 = vld [vmem:[%s2] sm:$0xff]
        %v530 = vld [vmem:[%s2 + $0x8] sm:$0xff]
        %532 = vset.pattern.permute.xlu0 0
        %533 = vperm.xlu0 %532, %v529
        %v534 = vpop.permute.xlu0 %533
        %537 = vset.pattern.permute.xlu0 0
        %538 = vperm.xlu0 %537, %v530
        %v539 = vpop.permute.xlu0 %538
        %vm541 = vcmask 261120
        %v543 = vsel %vm541, %v527, 0
        %v546 = vsel %vm541, %v528, 0
        %548 = vmatpush.msra.mxu0 0.0
        %549 = vmatpush.msra.mxu0 0.0
        %550 = vmatpush.msra.mxu0 0.0
        %551 = vmatpush.msra.mxu0 0.0
        %552 = vmatpush.msra.mxu0 0.0
        %553 = vmatpush.msra.mxu0 0.0
        %554 = vmatpush.msra.mxu0 0.0
        %555 = vmatpush.msra.mxu0 0.0
        %556 = vmatpush.msra.mxu0 0.0
        %557 = vmatpush.msra.mxu0 0.0
        %558 = vmatpush.msra.mxu0 0.0
        %559 = vmatpush.msra.mxu0 0.0
        %560 = vmatpush.msra.mxu0 %v498
        %561 = vmatpush.msra.mxu0 %v497
        %562 = vmatpush.msra.mxu0 %v496
        %563 = vmatpush.msra.mxu0 %v495
        %564 = vmatmul.f32.gmra.mxu0 %v543
        %v565 = vpop.f32.mrf.mxu0
        %v566 = vadd.f32 %v534, %v565
        %567 = vmatmul.f32.gmra.mxu0 %v546
        %v568 = vpop.f32.mrf.mxu0
        %v569 = vadd.f32 %v539, %v568
        %570 = vdwg.mxu0
        %571 = vmatpush.msra.mxu0 0.0
        %572 = vmatpush.msra.mxu0 0.0
        %573 = vmatpush.msra.mxu0 0.0
        %574 = vmatpush.msra.mxu0 0.0
        %575 = vmatpush.msra.mxu0 0.0
        %576 = vmatpush.msra.mxu0 0.0
        %577 = vmatpush.msra.mxu0 0.0
        %578 = vmatpush.msra.mxu0 0.0
        %579 = vmatpush.msra.mxu0 0.0
        %580 = vmatpush.msra.mxu0 0.0
        %581 = vmatpush.msra.mxu0 0.0
        %582 = vmatpush.msra.mxu0 0.0
        %583 = vmatpush.msra.mxu0 %v502
        %584 = vmatpush.msra.mxu0 %v501
        %585 = vmatpush.msra.mxu0 %v500
        %586 = vmatpush.msra.mxu0 %v499
        %587 = vmatmul.f32.gmra.mxu0 %v543
        %v588 = vpop.f32.mrf.mxu0
        %v589 = vadd.f32 %v534, %v588
        %590 = vmatmul.f32.gmra.mxu0 %v546
        %v591 = vpop.f32.mrf.mxu0
        %v592 = vadd.f32 %v539, %v591
        %593 = vdwg.mxu0
        %594 = vmatpush.msra.mxu0 0.0
        %595 = vmatpush.msra.mxu0 0.0
        %596 = vmatpush.msra.mxu0 0.0
        %597 = vmatpush.msra.mxu0 0.0
        %598 = vmatpush.msra.mxu0 0.0
        %599 = vmatpush.msra.mxu0 0.0
        %600 = vmatpush.msra.mxu0 0.0
        %601 = vmatpush.msra.mxu0 0.0
        %602 = vmatpush.msra.mxu0 0.0
        %603 = vmatpush.msra.mxu0 0.0
        %604 = vmatpush.msra.mxu0 0.0
        %605 = vmatpush.msra.mxu0 0.0
        %606 = vmatpush.msra.mxu0 %v506
        %607 = vmatpush.msra.mxu0 %v505
        %608 = vmatpush.msra.mxu0 %v504
        %609 = vmatpush.msra.mxu0 %v503
        %610 = vmatmul.f32.gmra.mxu0 %v543
        %v611 = vpop.f32.mrf.mxu0
        %v612 = vadd.f32 %v534, %v611
        %613 = vmatmul.f32.gmra.mxu0 %v546
        %v614 = vpop.f32.mrf.mxu0
        %v615 = vadd.f32 %v539, %v614
        %616 = vdwg.mxu0
        %617 = vmatpush.msra.mxu0 0.0
        %618 = vmatpush.msra.mxu0 0.0
        %619 = vmatpush.msra.mxu0 0.0
        %620 = vmatpush.msra.mxu0 0.0
        %621 = vmatpush.msra.mxu0 0.0
        %622 = vmatpush.msra.mxu0 0.0
        %623 = vmatpush.msra.mxu0 0.0
        %624 = vmatpush.msra.mxu0 0.0
        %625 = vmatpush.msra.mxu0 0.0
        %626 = vmatpush.msra.mxu0 0.0
        %627 = vmatpush.msra.mxu0 0.0
        %628 = vmatpush.msra.mxu0 0.0
        %629 = vmatpush.msra.mxu0 %v510
        %630 = vmatpush.msra.mxu0 %v509
        %631 = vmatpush.msra.mxu0 %v508
        %632 = vmatpush.msra.mxu0 %v507
        %633 = vmatmul.f32.gmra.mxu0 %v543
        %v634 = vpop.f32.mrf.mxu0
        %v635 = vadd.f32 %v534, %v634
        %636 = vmatmul.f32.gmra.mxu0 %v546
        %v637 = vpop.f32.mrf.mxu0
        %v638 = vadd.f32 %v539, %v637
        %639 = vdwg.mxu0
        %640 = vmatpush.msra.mxu0 0.0
        %641 = vmatpush.msra.mxu0 0.0
        %642 = vmatpush.msra.mxu0 0.0
        %643 = vmatpush.msra.mxu0 0.0
        %644 = vmatpush.msra.mxu0 0.0
        %645 = vmatpush.msra.mxu0 0.0
        %646 = vmatpush.msra.mxu0 0.0
        %647 = vmatpush.msra.mxu0 0.0
        %648 = vmatpush.msra.mxu0 0.0
        %649 = vmatpush.msra.mxu0 0.0
        %650 = vmatpush.msra.mxu0 0.0
        %651 = vmatpush.msra.mxu0 0.0
        %652 = vmatpush.msra.mxu0 %v514
        %653 = vmatpush.msra.mxu0 %v513
        %654 = vmatpush.msra.mxu0 %v512
        %655 = vmatpush.msra.mxu0 %v511
        %656 = vmatmul.f32.gmra.mxu0 %v543
        %v657 = vpop.f32.mrf.mxu0
        %v658 = vadd.f32 %v534, %v657
        %659 = vmatmul.f32.gmra.mxu0 %v546
        %v660 = vpop.f32.mrf.mxu0
        %v661 = vadd.f32 %v539, %v660
        %662 = vdwg.mxu0
        %663 = vmatpush.msra.mxu0 0.0
        %664 = vmatpush.msra.mxu0 0.0
        %665 = vmatpush.msra.mxu0 0.0
        %666 = vmatpush.msra.mxu0 0.0
        %667 = vmatpush.msra.mxu0 0.0
        %668 = vmatpush.msra.mxu0 0.0
        %669 = vmatpush.msra.mxu0 0.0
        %670 = vmatpush.msra.mxu0 0.0
        %671 = vmatpush.msra.mxu0 0.0
        %672 = vmatpush.msra.mxu0 0.0
        %673 = vmatpush.msra.mxu0 0.0
        %674 = vmatpush.msra.mxu0 0.0
        %675 = vmatpush.msra.mxu0 %v518
        %676 = vmatpush.msra.mxu0 %v517
        %677 = vmatpush.msra.mxu0 %v516
        %678 = vmatpush.msra.mxu0 %v515
        %679 = vmatmul.f32.gmra.mxu0 %v543
        %v680 = vpop.f32.mrf.mxu0
        %v681 = vadd.f32 %v534, %v680
        %682 = vmatmul.f32.gmra.mxu0 %v546
        %v683 = vpop.f32.mrf.mxu0
        %v684 = vadd.f32 %v539, %v683
        %685 = vdwg.mxu0
        %686 = vmatpush.msra.mxu0 0.0
        %687 = vmatpush.msra.mxu0 0.0
        %688 = vmatpush.msra.mxu0 0.0
        %689 = vmatpush.msra.mxu0 0.0
        %690 = vmatpush.msra.mxu0 0.0
        %691 = vmatpush.msra.mxu0 0.0
        %692 = vmatpush.msra.mxu0 0.0
        %693 = vmatpush.msra.mxu0 0.0
        %694 = vmatpush.msra.mxu0 0.0
        %695 = vmatpush.msra.mxu0 0.0
        %696 = vmatpush.msra.mxu0 0.0
        %697 = vmatpush.msra.mxu0 0.0
        %698 = vmatpush.msra.mxu0 %v522
        %699 = vmatpush.msra.mxu0 %v521
        %700 = vmatpush.msra.mxu0 %v520
        %701 = vmatpush.msra.mxu0 %v519
        %702 = vmatmul.f32.gmra.mxu0 %v543
        %v703 = vpop.f32.mrf.mxu0
        %v704 = vadd.f32 %v534, %v703
        %705 = vmatmul.f32.gmra.mxu0 %v546
        %v706 = vpop.f32.mrf.mxu0
        %v707 = vadd.f32 %v539, %v706
        %708 = vdwg.mxu0
        %709 = vmatpush.msra.mxu0 0.0
        %710 = vmatpush.msra.mxu0 0.0
        %711 = vmatpush.msra.mxu0 0.0
        %712 = vmatpush.msra.mxu0 0.0
        %713 = vmatpush.msra.mxu0 0.0
        %714 = vmatpush.msra.mxu0 0.0
        %715 = vmatpush.msra.mxu0 0.0
        %716 = vmatpush.msra.mxu0 0.0
        %717 = vmatpush.msra.mxu0 0.0
        %718 = vmatpush.msra.mxu0 0.0
        %719 = vmatpush.msra.mxu0 0.0
        %720 = vmatpush.msra.mxu0 0.0
        %721 = vmatpush.msra.mxu0 %v526
        %722 = vmatpush.msra.mxu0 %v525
        %723 = vmatpush.msra.mxu0 %v524
        %724 = vmatpush.msra.mxu0 %v523
        %725 = vmatmul.f32.gmra.mxu0 %v543
        %v726 = vpop.f32.mrf.mxu0
        %v727 = vadd.f32 %v534, %v726
        %728 = vmatmul.f32.gmra.mxu0 %v546
        %v729 = vpop.f32.mrf.mxu0
        %v730 = vadd.f32 %v539, %v729
        %731 = vdwg.mxu0
        %v732 = vld [vmem:[%s11] sm:$0xff]
        %vm733 = vcmask 64512
        %v735 = vsel %vm733, %v566, 0
        %v738 = vsel %vm733, %v569, 0
        %v741 = vsel %vm733, %v589, 0
        %v744 = vsel %vm733, %v592, 0
        %v747 = vsel %vm733, %v612, 0
        %v750 = vsel %vm733, %v615, 0
        %v753 = vsel %vm733, %v635, 0
        %v756 = vsel %vm733, %v638, 0
        %v759 = vsel %vm733, %v658, 0
        %v762 = vsel %vm733, %v661, 0
        %v765 = vsel %vm733, %v681, 0
        %v768 = vsel %vm733, %v684, 0
        %v771 = vsel %vm733, %v704, 0
        %v774 = vsel %vm733, %v707, 0
        %v777 = vsel %vm733, %v727, 0
        %v780 = vsel %vm733, %v730, 0
        %782 = vmatpush.msra.mxu0 0.0
        %783 = vmatpush.msra.mxu0 0.0
        %784 = vmatpush.msra.mxu0 0.0
        %785 = vmatpush.msra.mxu0 0.0
        %786 = vmatpush.msra.mxu0 0.0
        %787 = vmatpush.msra.mxu0 0.0
        %788 = vmatpush.msra.mxu0 0.0
        %789 = vmatpush.msra.mxu0 0.0
        %790 = vmatpush.msra.mxu0 0.0
        %791 = vmatpush.msra.mxu0 0.0
        %792 = vmatpush.msra.mxu0 0.0
        %793 = vmatpush.msra.mxu0 0.0
        %794 = vmatpush.msra.mxu0 0.0
        %795 = vmatpush.msra.mxu0 0.0
        %796 = vmatpush.msra.mxu0 0.0
        %797 = vmatpush.msra.mxu0 %v732
        %798 = vmatmul.f32.gmra.mxu0 %v735
        %v799 = vpop.f32.mrf.mxu0
        %v800 = vadd.f32 0.0, %v799
        %801 = vmatmul.f32.gmra.mxu0 %v738
        %v802 = vpop.f32.mrf.mxu0
        %v803 = vadd.f32 0.0, %v802
        %804 = vmatmul.f32.gmra.mxu0 %v741
        %v805 = vpop.f32.mrf.mxu0
        %v806 = vadd.f32 0.0, %v805
        %807 = vmatmul.f32.gmra.mxu0 %v744
        %v808 = vpop.f32.mrf.mxu0
        %v809 = vadd.f32 0.0, %v808
        %810 = vmatmul.f32.gmra.mxu0 %v747
        %v811 = vpop.f32.mrf.mxu0
        %v812 = vadd.f32 0.0, %v811
        %813 = vmatmul.f32.gmra.mxu0 %v750
        %v814 = vpop.f32.mrf.mxu0
        %v815 = vadd.f32 0.0, %v814
        %816 = vmatmul.f32.gmra.mxu0 %v753
        %v817 = vpop.f32.mrf.mxu0
        %v818 = vadd.f32 0.0, %v817
        %819 = vmatmul.f32.gmra.mxu0 %v756
        %v820 = vpop.f32.mrf.mxu0
        %v821 = vadd.f32 0.0, %v820
        %822 = vmatmul.f32.gmra.mxu0 %v759
        %v823 = vpop.f32.mrf.mxu0
        %v824 = vadd.f32 0.0, %v823
        %825 = vmatmul.f32.gmra.mxu0 %v762
        %v826 = vpop.f32.mrf.mxu0
        %v827 = vadd.f32 0.0, %v826
        %828 = vmatmul.f32.gmra.mxu0 %v765
        %v829 = vpop.f32.mrf.mxu0
        %v830 = vadd.f32 0.0, %v829
        %831 = vmatmul.f32.gmra.mxu0 %v768
        %v832 = vpop.f32.mrf.mxu0
        %v833 = vadd.f32 0.0, %v832
        %834 = vmatmul.f32.gmra.mxu0 %v771
        %v835 = vpop.f32.mrf.mxu0
        %v836 = vadd.f32 0.0, %v835
        %837 = vmatmul.f32.gmra.mxu0 %v774
        %v838 = vpop.f32.mrf.mxu0
        %v839 = vadd.f32 0.0, %v838
        %840 = vmatmul.f32.gmra.mxu0 %v777
        %v841 = vpop.f32.mrf.mxu0
        %v842 = vadd.f32 0.0, %v841
        %843 = vmatmul.f32.gmra.mxu0 %v780
        %v844 = vpop.f32.mrf.mxu0
        %v845 = vadd.f32 0.0, %v844
        %846 = vdwg.mxu0
        %v847 = vmul.f32 %v800, 0.75
        %v848 = vmul.f32 %v803, 0.75
        %v849 = vmul.f32 %v806, 0.75
        %v850 = vmul.f32 %v809, 0.75
        %v851 = vmul.f32 %v812, 0.75
        %v852 = vmul.f32 %v815, 0.75
        %v853 = vmul.f32 %v818, 0.75
        %v854 = vmul.f32 %v821, 0.75
        %v855 = vmul.f32 %v824, 0.75
        %v856 = vmul.f32 %v827, 0.75
        %v857 = vmul.f32 %v830, 0.75
        %v858 = vmul.f32 %v833, 0.75
        %v859 = vmul.f32 %v836, 0.75
        %v860 = vmul.f32 %v839, 0.75
        %v861 = vmul.f32 %v842, 0.75
        %v862 = vmul.f32 %v845, 0.75
        %v863 = vmul.f32 %v800, 0.25
        %v864 = vmul.f32 %v803, 0.25
        %v865 = vmul.f32 %v806, 0.25
        %v866 = vmul.f32 %v809, 0.25
        %v867 = vmul.f32 %v812, 0.25
        %v868 = vmul.f32 %v815, 0.25
        %v869 = vmul.f32 %v818, 0.25
        %v870 = vmul.f32 %v821, 0.25
        %v871 = vmul.f32 %v824, 0.25
        %v872 = vmul.f32 %v827, 0.25
        %v873 = vmul.f32 %v830, 0.25
        %v874 = vmul.f32 %v833, 0.25
        %v875 = vmul.f32 %v836, 0.25
        %v876 = vmul.f32 %v839, 0.25
        %v877 = vadd.f32 %v847, %v863
        %v878 = vadd.f32 %v848, %v864
        %v879 = vadd.f32 %v849, %v863
        %v880 = vadd.f32 %v850, %v864
        %v881 = vadd.f32 %v851, %v865
        %v882 = vadd.f32 %v852, %v866
        %v883 = vadd.f32 %v853, %v867
        %v884 = vadd.f32 %v854, %v868
        %v885 = vadd.f32 %v855, %v869
        %v886 = vadd.f32 %v856, %v870
        %v887 = vadd.f32 %v857, %v871
        %v888 = vadd.f32 %v858, %v872
        %v889 = vadd.f32 %v859, %v873
        %v890 = vadd.f32 %v860, %v874
        %v891 = vadd.f32 %v861, %v875
        %v892 = vadd.f32 %v862, %v876
        %v893 = vmul.f32 %v842, 0.25
        %v894 = vmul.f32 %v845, 0.25
        %v895 = vadd.f32 %v847, %v865
        %v896 = vadd.f32 %v848, %v866
        %v897 = vadd.f32 %v849, %v867
        %v898 = vadd.f32 %v850, %v868
        %v899 = vadd.f32 %v851, %v869
        %v900 = vadd.f32 %v852, %v870
        %v901 = vadd.f32 %v853, %v871
        %v902 = vadd.f32 %v854, %v872
        %v903 = vadd.f32 %v855, %v873
        %v904 = vadd.f32 %v856, %v874
        %v905 = vadd.f32 %v857, %v875
        %v906 = vadd.f32 %v858, %v876
        %v907 = vadd.f32 %v859, %v893
        %v908 = vadd.f32 %v860, %v894
        %v909 = vadd.f32 %v861, %v893
        %v910 = vadd.f32 %v862, %v894
        %v911 = vld [vmem:[%s3] sm:$0xff]
        %v912 = vld [vmem:[%s3 + $0x8] sm:$0xff]
        %v913 = vld [vmem:[%s4] sm:$0xff]
        %v914 = vld [vmem:[%s4 + $0x8] sm:$0xff]
        %916 = vset.pattern.permute.xlu0 0
        %917 = vperm.xlu0 %916, %v913
        %v918 = vpop.permute.xlu0 %917
        %921 = vset.pattern.permute.xlu0 0
        %922 = vperm.xlu0 %921, %v914
        %v923 = vpop.permute.xlu0 %922
        %vm925 = vcmask 130048
        %v927 = vsel %vm925, %v911, 0
        %v930 = vsel %vm925, %v912, 0
        %932 = vmatpush.msra.mxu0 0.0
        %933 = vmatpush.msra.mxu0 0.0
        %934 = vmatpush.msra.mxu0 0.0
        %935 = vmatpush.msra.mxu0 0.0
        %936 = vmatpush.msra.mxu0 0.0
        %937 = vmatpush.msra.mxu0 0.0
        %938 = vmatpush.msra.mxu0 0.0
        %939 = vmatpush.msra.mxu0 0.0
        %940 = vmatpush.msra.mxu0 0.0
        %941 = vmatpush.msra.mxu0 0.0
        %942 = vmatpush.msra.mxu0 0.0
        %943 = vmatpush.msra.mxu0 0.0
        %944 = vmatpush.msra.mxu0 0.0
        %945 = vmatpush.msra.mxu0 0.0
        %946 = vmatpush.msra.mxu0 %v878
        %947 = vmatpush.msra.mxu0 %v877
        %948 = vmatmul.f32.gmra.mxu0 %v927
        %v949 = vpop.f32.mrf.mxu0
        %v950 = vadd.f32 %v918, %v949
        %951 = vmatmul.f32.gmra.mxu0 %v930
        %v952 = vpop.f32.mrf.mxu0
        %v953 = vadd.f32 %v923, %v952
        %954 = vdwg.mxu0
        %955 = vmatpush.msra.mxu0 0.0
        %956 = vmatpush.msra.mxu0 0.0
        %957 = vmatpush.msra.mxu0 0.0
        %958 = vmatpush.msra.mxu0 0.0
        %959 = vmatpush.msra.mxu0 0.0
        %960 = vmatpush.msra.mxu0 0.0
        %961 = vmatpush.msra.mxu0 0.0
        %962 = vmatpush.msra.mxu0 0.0
        %963 = vmatpush.msra.mxu0 0.0
        %964 = vmatpush.msra.mxu0 0.0
        %965 = vmatpush.msra.mxu0 0.0
        %966 = vmatpush.msra.mxu0 0.0
        %967 = vmatpush.msra.mxu0 0.0
        %968 = vmatpush.msra.mxu0 0.0
        %969 = vmatpush.msra.mxu0 %v896
        %970 = vmatpush.msra.mxu0 %v895
        %971 = vmatmul.f32.gmra.mxu0 %v927
        %v972 = vpop.f32.mrf.mxu0
        %v973 = vadd.f32 %v918, %v972
        %974 = vmatmul.f32.gmra.mxu0 %v930
        %v975 = vpop.f32.mrf.mxu0
        %v976 = vadd.f32 %v923, %v975
        %977 = vdwg.mxu0
        %978 = vmatpush.msra.mxu0 0.0
        %979 = vmatpush.msra.mxu0 0.0
        %980 = vmatpush.msra.mxu0 0.0
        %981 = vmatpush.msra.mxu0 0.0
        %982 = vmatpush.msra.mxu0 0.0
        %983 = vmatpush.msra.mxu0 0.0
        %984 = vmatpush.msra.mxu0 0.0
        %985 = vmatpush.msra.mxu0 0.0
        %986 = vmatpush.msra.mxu0 0.0
        %987 = vmatpush.msra.mxu0 0.0
        %988 = vmatpush.msra.mxu0 0.0
        %989 = vmatpush.msra.mxu0 0.0
        %990 = vmatpush.msra.mxu0 0.0
        %991 = vmatpush.msra.mxu0 0.0
        %992 = vmatpush.msra.mxu0 %v880
        %993 = vmatpush.msra.mxu0 %v879
        %994 = vmatmul.f32.gmra.mxu0 %v927
        %v995 = vpop.f32.mrf.mxu0
        %v996 = vadd.f32 %v918, %v995
        %997 = vmatmul.f32.gmra.mxu0 %v930
        %v998 = vpop.f32.mrf.mxu0
        %v999 = vadd.f32 %v923, %v998
        %1000 = vdwg.mxu0
        %1001 = vmatpush.msra.mxu0 0.0
        %1002 = vmatpush.msra.mxu0 0.0
        %1003 = vmatpush.msra.mxu0 0.0
        %1004 = vmatpush.msra.mxu0 0.0
        %1005 = vmatpush.msra.mxu0 0.0
        %1006 = vmatpush.msra.mxu0 0.0
        %1007 = vmatpush.msra.mxu0 0.0
        %1008 = vmatpush.msra.mxu0 0.0
        %1009 = vmatpush.msra.mxu0 0.0
        %1010 = vmatpush.msra.mxu0 0.0
        %1011 = vmatpush.msra.mxu0 0.0
        %1012 = vmatpush.msra.mxu0 0.0
        %1013 = vmatpush.msra.mxu0 0.0
        %1014 = vmatpush.msra.mxu0 0.0
        %1015 = vmatpush.msra.mxu0 %v898
        %1016 = vmatpush.msra.mxu0 %v897
        %1017 = vmatmul.f32.gmra.mxu0 %v927
        %v1018 = vpop.f32.mrf.mxu0
        %v1019 = vadd.f32 %v918, %v1018
        %1020 = vmatmul.f32.gmra.mxu0 %v930
        %v1021 = vpop.f32.mrf.mxu0
        %v1022 = vadd.f32 %v923, %v1021
        %1023 = vdwg.mxu0
        %1024 = vmatpush.msra.mxu0 0.0
        %1025 = vmatpush.msra.mxu0 0.0
        %1026 = vmatpush.msra.mxu0 0.0
        %1027 = vmatpush.msra.mxu0 0.0
        %1028 = vmatpush.msra.mxu0 0.0
        %1029 = vmatpush.msra.mxu0 0.0
        %1030 = vmatpush.msra.mxu0 0.0
        %1031 = vmatpush.msra.mxu0 0.0
        %1032 = vmatpush.msra.mxu0 0.0
        %1033 = vmatpush.msra.mxu0 0.0
        %1034 = vmatpush.msra.mxu0 0.0
        %1035 = vmatpush.msra.mxu0 0.0
        %1036 = vmatpush.msra.mxu0 0.0
        %1037 = vmatpush.msra.mxu0 0.0
        %1038 = vmatpush.msra.mxu0 %v882
        %1039 = vmatpush.msra.mxu0 %v881
        %1040 = vmatmul.f32.gmra.mxu0 %v927
        %v1041 = vpop.f32.mrf.mxu0
        %v1042 = vadd.f32 %v918, %v1041
        %1043 = vmatmul.f32.gmra.mxu0 %v930
        %v1044 = vpop.f32.mrf.mxu0
        %v1045 = vadd.f32 %v923, %v1044
        %1046 = vdwg.mxu0
        %1047 = vmatpush.msra.mxu0 0.0
        %1048 = vmatpush.msra.mxu0 0.0
        %1049 = vmatpush.msra.mxu0 0.0
        %1050 = vmatpush.msra.mxu0 0.0
        %1051 = vmatpush.msra.mxu0 0.0
        %1052 = vmatpush.msra.mxu0 0.0
        %1053 = vmatpush.msra.mxu0 0.0
        %1054 = vmatpush.msra.mxu0 0.0
        %1055 = vmatpush.msra.mxu0 0.0
        %1056 = vmatpush.msra.mxu0 0.0
        %1057 = vmatpush.msra.mxu0 0.0
        %1058 = vmatpush.msra.mxu0 0.0
        %1059 = vmatpush.msra.mxu0 0.0
        %1060 = vmatpush.msra.mxu0 0.0
        %1061 = vmatpush.msra.mxu0 %v900
        %1062 = vmatpush.msra.mxu0 %v899
        %1063 = vmatmul.f32.gmra.mxu0 %v927
        %v1064 = vpop.f32.mrf.mxu0
        %v1065 = vadd.f32 %v918, %v1064
        %1066 = vmatmul.f32.gmra.mxu0 %v930
        %v1067 = vpop.f32.mrf.mxu0
        %v1068 = vadd.f32 %v923, %v1067
        %1069 = vdwg.mxu0
        %1070 = vmatpush.msra.mxu0 0.0
        %1071 = vmatpush.msra.mxu0 0.0
        %1072 = vmatpush.msra.mxu0 0.0
        %1073 = vmatpush.msra.mxu0 0.0
        %1074 = vmatpush.msra.mxu0 0.0
        %1075 = vmatpush.msra.mxu0 0.0
        %1076 = vmatpush.msra.mxu0 0.0
        %1077 = vmatpush.msra.mxu0 0.0
        %1078 = vmatpush.msra.mxu0 0.0
        %1079 = vmatpush.msra.mxu0 0.0
        %1080 = vmatpush.msra.mxu0 0.0
        %1081 = vmatpush.msra.mxu0 0.0
        %1082 = vmatpush.msra.mxu0 0.0
        %1083 = vmatpush.msra.mxu0 0.0
        %1084 = vmatpush.msra.mxu0 %v884
        %1085 = vmatpush.msra.mxu0 %v883
        %1086 = vmatmul.f32.gmra.mxu0 %v927
        %v1087 = vpop.f32.mrf.mxu0
        %v1088 = vadd.f32 %v918, %v1087
        %1089 = vmatmul.f32.gmra.mxu0 %v930
        %v1090 = vpop.f32.mrf.mxu0
        %v1091 = vadd.f32 %v923, %v1090
        %1092 = vdwg.mxu0
        %1093 = vmatpush.msra.mxu0 0.0
        %1094 = vmatpush.msra.mxu0 0.0
        %1095 = vmatpush.msra.mxu0 0.0
        %1096 = vmatpush.msra.mxu0 0.0
        %1097 = vmatpush.msra.mxu0 0.0
        %1098 = vmatpush.msra.mxu0 0.0
        %1099 = vmatpush.msra.mxu0 0.0
        %1100 = vmatpush.msra.mxu0 0.0
        %1101 = vmatpush.msra.mxu0 0.0
        %1102 = vmatpush.msra.mxu0 0.0
        %1103 = vmatpush.msra.mxu0 0.0
        %1104 = vmatpush.msra.mxu0 0.0
        %1105 = vmatpush.msra.mxu0 0.0
        %1106 = vmatpush.msra.mxu0 0.0
        %1107 = vmatpush.msra.mxu0 %v902
        %1108 = vmatpush.msra.mxu0 %v901
        %1109 = vmatmul.f32.gmra.mxu0 %v927
        %v1110 = vpop.f32.mrf.mxu0
        %v1111 = vadd.f32 %v918, %v1110
        %1112 = vmatmul.f32.gmra.mxu0 %v930
        %v1113 = vpop.f32.mrf.mxu0
        %v1114 = vadd.f32 %v923, %v1113
        %1115 = vdwg.mxu0
        %1116 = vmatpush.msra.mxu0 0.0
        %1117 = vmatpush.msra.mxu0 0.0
        %1118 = vmatpush.msra.mxu0 0.0
        %1119 = vmatpush.msra.mxu0 0.0
        %1120 = vmatpush.msra.mxu0 0.0
        %1121 = vmatpush.msra.mxu0 0.0
        %1122 = vmatpush.msra.mxu0 0.0
        %1123 = vmatpush.msra.mxu0 0.0
        %1124 = vmatpush.msra.mxu0 0.0
        %1125 = vmatpush.msra.mxu0 0.0
        %1126 = vmatpush.msra.mxu0 0.0
        %1127 = vmatpush.msra.mxu0 0.0
        %1128 = vmatpush.msra.mxu0 0.0
        %1129 = vmatpush.msra.mxu0 0.0
        %1130 = vmatpush.msra.mxu0 %v886
        %1131 = vmatpush.msra.mxu0 %v885
        %1132 = vmatmul.f32.gmra.mxu0 %v927
        %v1133 = vpop.f32.mrf.mxu0
        %v1134 = vadd.f32 %v918, %v1133
        %1135 = vmatmul.f32.gmra.mxu0 %v930
        %v1136 = vpop.f32.mrf.mxu0
        %v1137 = vadd.f32 %v923, %v1136
        %1138 = vdwg.mxu0
        %1139 = vmatpush.msra.mxu0 0.0
        %1140 = vmatpush.msra.mxu0 0.0
        %1141 = vmatpush.msra.mxu0 0.0
        %1142 = vmatpush.msra.mxu0 0.0
        %1143 = vmatpush.msra.mxu0 0.0
        %1144 = vmatpush.msra.mxu0 0.0
        %1145 = vmatpush.msra.mxu0 0.0
        %1146 = vmatpush.msra.mxu0 0.0
        %1147 = vmatpush.msra.mxu0 0.0
        %1148 = vmatpush.msra.mxu0 0.0
        %1149 = vmatpush.msra.mxu0 0.0
        %1150 = vmatpush.msra.mxu0 0.0
        %1151 = vmatpush.msra.mxu0 0.0
        %1152 = vmatpush.msra.mxu0 0.0
        %1153 = vmatpush.msra.mxu0 %v904
        %1154 = vmatpush.msra.mxu0 %v903
        %1155 = vmatmul.f32.gmra.mxu0 %v927
        %v1156 = vpop.f32.mrf.mxu0
        %v1157 = vadd.f32 %v918, %v1156
        %1158 = vmatmul.f32.gmra.mxu0 %v930
        %v1159 = vpop.f32.mrf.mxu0
        %v1160 = vadd.f32 %v923, %v1159
        %1161 = vdwg.mxu0
        %1162 = vmatpush.msra.mxu0 0.0
        %1163 = vmatpush.msra.mxu0 0.0
        %1164 = vmatpush.msra.mxu0 0.0
        %1165 = vmatpush.msra.mxu0 0.0
        %1166 = vmatpush.msra.mxu0 0.0
        %1167 = vmatpush.msra.mxu0 0.0
        %1168 = vmatpush.msra.mxu0 0.0
        %1169 = vmatpush.msra.mxu0 0.0
        %1170 = vmatpush.msra.mxu0 0.0
        %1171 = vmatpush.msra.mxu0 0.0
        %1172 = vmatpush.msra.mxu0 0.0
        %1173 = vmatpush.msra.mxu0 0.0
        %1174 = vmatpush.msra.mxu0 0.0
        %1175 = vmatpush.msra.mxu0 0.0
        %1176 = vmatpush.msra.mxu0 %v888
        %1177 = vmatpush.msra.mxu0 %v887
        %1178 = vmatmul.f32.gmra.mxu0 %v927
        %v1179 = vpop.f32.mrf.mxu0
        %v1180 = vadd.f32 %v918, %v1179
        %1181 = vmatmul.f32.gmra.mxu0 %v930
        %v1182 = vpop.f32.mrf.mxu0
        %v1183 = vadd.f32 %v923, %v1182
        %1184 = vdwg.mxu0
        %1185 = vmatpush.msra.mxu0 0.0
        %1186 = vmatpush.msra.mxu0 0.0
        %1187 = vmatpush.msra.mxu0 0.0
        %1188 = vmatpush.msra.mxu0 0.0
        %1189 = vmatpush.msra.mxu0 0.0
        %1190 = vmatpush.msra.mxu0 0.0
        %1191 = vmatpush.msra.mxu0 0.0
        %1192 = vmatpush.msra.mxu0 0.0
        %1193 = vmatpush.msra.mxu0 0.0
        %1194 = vmatpush.msra.mxu0 0.0
        %1195 = vmatpush.msra.mxu0 0.0
        %1196 = vmatpush.msra.mxu0 0.0
        %1197 = vmatpush.msra.mxu0 0.0
        %1198 = vmatpush.msra.mxu0 0.0
        %1199 = vmatpush.msra.mxu0 %v906
        %1200 = vmatpush.msra.mxu0 %v905
        %1201 = vmatmul.f32.gmra.mxu0 %v927
        %v1202 = vpop.f32.mrf.mxu0
        %v1203 = vadd.f32 %v918, %v1202
        %1204 = vmatmul.f32.gmra.mxu0 %v930
        %v1205 = vpop.f32.mrf.mxu0
        %v1206 = vadd.f32 %v923, %v1205
        %1207 = vdwg.mxu0
        %1208 = vmatpush.msra.mxu0 0.0
        %1209 = vmatpush.msra.mxu0 0.0
        %1210 = vmatpush.msra.mxu0 0.0
        %1211 = vmatpush.msra.mxu0 0.0
        %1212 = vmatpush.msra.mxu0 0.0
        %1213 = vmatpush.msra.mxu0 0.0
        %1214 = vmatpush.msra.mxu0 0.0
        %1215 = vmatpush.msra.mxu0 0.0
        %1216 = vmatpush.msra.mxu0 0.0
        %1217 = vmatpush.msra.mxu0 0.0
        %1218 = vmatpush.msra.mxu0 0.0
        %1219 = vmatpush.msra.mxu0 0.0
        %1220 = vmatpush.msra.mxu0 0.0
        %1221 = vmatpush.msra.mxu0 0.0
        %1222 = vmatpush.msra.mxu0 %v890
        %1223 = vmatpush.msra.mxu0 %v889
        %1224 = vmatmul.f32.gmra.mxu0 %v927
        %v1225 = vpop.f32.mrf.mxu0
        %v1226 = vadd.f32 %v918, %v1225
        %1227 = vmatmul.f32.gmra.mxu0 %v930
        %v1228 = vpop.f32.mrf.mxu0
        %v1229 = vadd.f32 %v923, %v1228
        %1230 = vdwg.mxu0
        %1231 = vmatpush.msra.mxu0 0.0
        %1232 = vmatpush.msra.mxu0 0.0
        %1233 = vmatpush.msra.mxu0 0.0
        %1234 = vmatpush.msra.mxu0 0.0
        %1235 = vmatpush.msra.mxu0 0.0
        %1236 = vmatpush.msra.mxu0 0.0
        %1237 = vmatpush.msra.mxu0 0.0
        %1238 = vmatpush.msra.mxu0 0.0
        %1239 = vmatpush.msra.mxu0 0.0
        %1240 = vmatpush.msra.mxu0 0.0
        %1241 = vmatpush.msra.mxu0 0.0
        %1242 = vmatpush.msra.mxu0 0.0
        %1243 = vmatpush.msra.mxu0 0.0
        %1244 = vmatpush.msra.mxu0 0.0
        %1245 = vmatpush.msra.mxu0 %v908
        %1246 = vmatpush.msra.mxu0 %v907
        %1247 = vmatmul.f32.gmra.mxu0 %v927
        %v1248 = vpop.f32.mrf.mxu0
        %v1249 = vadd.f32 %v918, %v1248
        %1250 = vmatmul.f32.gmra.mxu0 %v930
        %v1251 = vpop.f32.mrf.mxu0
        %v1252 = vadd.f32 %v923, %v1251
        %1253 = vdwg.mxu0
        %1254 = vmatpush.msra.mxu0 0.0
        %1255 = vmatpush.msra.mxu0 0.0
        %1256 = vmatpush.msra.mxu0 0.0
        %1257 = vmatpush.msra.mxu0 0.0
        %1258 = vmatpush.msra.mxu0 0.0
        %1259 = vmatpush.msra.mxu0 0.0
        %1260 = vmatpush.msra.mxu0 0.0
        %1261 = vmatpush.msra.mxu0 0.0
        %1262 = vmatpush.msra.mxu0 0.0
        %1263 = vmatpush.msra.mxu0 0.0
        %1264 = vmatpush.msra.mxu0 0.0
        %1265 = vmatpush.msra.mxu0 0.0
        %1266 = vmatpush.msra.mxu0 0.0
        %1267 = vmatpush.msra.mxu0 0.0
        %1268 = vmatpush.msra.mxu0 %v892
        %1269 = vmatpush.msra.mxu0 %v891
        %1270 = vmatmul.f32.gmra.mxu0 %v927
        %v1271 = vpop.f32.mrf.mxu0
        %v1272 = vadd.f32 %v918, %v1271
        %1273 = vmatmul.f32.gmra.mxu0 %v930
        %v1274 = vpop.f32.mrf.mxu0
        %v1275 = vadd.f32 %v923, %v1274
        %1276 = vdwg.mxu0
        %1277 = vmatpush.msra.mxu0 0.0
        %1278 = vmatpush.msra.mxu0 0.0
        %1279 = vmatpush.msra.mxu0 0.0
        %1280 = vmatpush.msra.mxu0 0.0
        %1281 = vmatpush.msra.mxu0 0.0
        %1282 = vmatpush.msra.mxu0 0.0
        %1283 = vmatpush.msra.mxu0 0.0
        %1284 = vmatpush.msra.mxu0 0.0
        %1285 = vmatpush.msra.mxu0 0.0
        %1286 = vmatpush.msra.mxu0 0.0
        %1287 = vmatpush.msra.mxu0 0.0
        %1288 = vmatpush.msra.mxu0 0.0
        %1289 = vmatpush.msra.mxu0 0.0
        %1290 = vmatpush.msra.mxu0 0.0
        %1291 = vmatpush.msra.mxu0 %v910
        %1292 = vmatpush.msra.mxu0 %v909
        %1293 = vmatmul.f32.gmra.mxu0 %v927
        %v1294 = vpop.f32.mrf.mxu0
        %v1295 = vadd.f32 %v918, %v1294
        %1296 = vmatmul.f32.gmra.mxu0 %v930
        %v1297 = vpop.f32.mrf.mxu0
        %v1298 = vadd.f32 %v923, %v1297
        %1299 = vdwg.mxu0
        %v1300 = vld [vmem:[%s12] sm:$0xff]
        %v1301 = vld [vmem:[%s12 + $0x8] sm:$0xff]
        %v1303 = vsel %vm925, %v950, 0
        %v1306 = vsel %vm925, %v953, 0
        %v1309 = vsel %vm925, %v973, 0
        %v1312 = vsel %vm925, %v976, 0
        %v1315 = vsel %vm925, %v996, 0
        %v1318 = vsel %vm925, %v999, 0
        %v1321 = vsel %vm925, %v1019, 0
        %v1324 = vsel %vm925, %v1022, 0
        %v1327 = vsel %vm925, %v1042, 0
        %v1330 = vsel %vm925, %v1045, 0
        %v1333 = vsel %vm925, %v1065, 0
        %v1336 = vsel %vm925, %v1068, 0
        %v1339 = vsel %vm925, %v1088, 0
        %v1342 = vsel %vm925, %v1091, 0
        %v1345 = vsel %vm925, %v1111, 0
        %v1348 = vsel %vm925, %v1114, 0
        %v1351 = vsel %vm925, %v1134, 0
        %v1354 = vsel %vm925, %v1137, 0
        %v1357 = vsel %vm925, %v1157, 0
        %v1360 = vsel %vm925, %v1160, 0
        %v1363 = vsel %vm925, %v1180, 0
        %v1366 = vsel %vm925, %v1183, 0
        %v1369 = vsel %vm925, %v1203, 0
        %v1372 = vsel %vm925, %v1206, 0
        %v1375 = vsel %vm925, %v1226, 0
        %v1378 = vsel %vm925, %v1229, 0
        %v1381 = vsel %vm925, %v1249, 0
        %v1384 = vsel %vm925, %v1252, 0
        %v1387 = vsel %vm925, %v1272, 0
        %v1390 = vsel %vm925, %v1275, 0
        %v1393 = vsel %vm925, %v1295, 0
        %v1396 = vsel %vm925, %v1298, 0
        %1398 = vmatpush.msra.mxu0 0.0
        %1399 = vmatpush.msra.mxu0 0.0
        %1400 = vmatpush.msra.mxu0 0.0
        %1401 = vmatpush.msra.mxu0 0.0
        %1402 = vmatpush.msra.mxu0 0.0
        %1403 = vmatpush.msra.mxu0 0.0
        %1404 = vmatpush.msra.mxu0 0.0
        %1405 = vmatpush.msra.mxu0 0.0
        %1406 = vmatpush.msra.mxu0 0.0
        %1407 = vmatpush.msra.mxu0 0.0
        %1408 = vmatpush.msra.mxu0 0.0
        %1409 = vmatpush.msra.mxu0 0.0
        %1410 = vmatpush.msra.mxu0 0.0
        %1411 = vmatpush.msra.mxu0 0.0
        %1412 = vmatpush.msra.mxu0 %v1301
        %1413 = vmatpush.msra.mxu0 %v1300
        %1414 = vmatmul.f32.gmra.mxu0 %v1303
        %v1415 = vpop.f32.mrf.mxu0
        %v1416 = vadd.f32 0.0, %v1415
        %1417 = vmatmul.f32.gmra.mxu0 %v1306
        %v1418 = vpop.f32.mrf.mxu0
        %v1419 = vadd.f32 0.0, %v1418
        %1420 = vmatmul.f32.gmra.mxu0 %v1309
        %v1421 = vpop.f32.mrf.mxu0
        %v1422 = vadd.f32 0.0, %v1421
        %1423 = vmatmul.f32.gmra.mxu0 %v1312
        %v1424 = vpop.f32.mrf.mxu0
        %v1425 = vadd.f32 0.0, %v1424
        %1426 = vmatmul.f32.gmra.mxu0 %v1315
        %v1427 = vpop.f32.mrf.mxu0
        %v1428 = vadd.f32 0.0, %v1427
        %1429 = vmatmul.f32.gmra.mxu0 %v1318
        %v1430 = vpop.f32.mrf.mxu0
        %v1431 = vadd.f32 0.0, %v1430
        %1432 = vmatmul.f32.gmra.mxu0 %v1321
        %v1433 = vpop.f32.mrf.mxu0
        %v1434 = vadd.f32 0.0, %v1433
        %1435 = vmatmul.f32.gmra.mxu0 %v1324
        %v1436 = vpop.f32.mrf.mxu0
        %v1437 = vadd.f32 0.0, %v1436
        %1438 = vmatmul.f32.gmra.mxu0 %v1327
        %v1439 = vpop.f32.mrf.mxu0
        %v1440 = vadd.f32 0.0, %v1439
        %1441 = vmatmul.f32.gmra.mxu0 %v1330
        %v1442 = vpop.f32.mrf.mxu0
        %v1443 = vadd.f32 0.0, %v1442
        %1444 = vmatmul.f32.gmra.mxu0 %v1333
        %v1445 = vpop.f32.mrf.mxu0
        %v1446 = vadd.f32 0.0, %v1445
        %1447 = vmatmul.f32.gmra.mxu0 %v1336
        %v1448 = vpop.f32.mrf.mxu0
        %v1449 = vadd.f32 0.0, %v1448
        %1450 = vmatmul.f32.gmra.mxu0 %v1339
        %v1451 = vpop.f32.mrf.mxu0
        %v1452 = vadd.f32 0.0, %v1451
        %1453 = vmatmul.f32.gmra.mxu0 %v1342
        %v1454 = vpop.f32.mrf.mxu0
        %v1455 = vadd.f32 0.0, %v1454
        %1456 = vmatmul.f32.gmra.mxu0 %v1345
        %v1457 = vpop.f32.mrf.mxu0
        %v1458 = vadd.f32 0.0, %v1457
        %1459 = vmatmul.f32.gmra.mxu0 %v1348
        %v1460 = vpop.f32.mrf.mxu0
        %v1461 = vadd.f32 0.0, %v1460
        %1462 = vmatmul.f32.gmra.mxu0 %v1351
        %v1463 = vpop.f32.mrf.mxu0
        %v1464 = vadd.f32 0.0, %v1463
        %1465 = vmatmul.f32.gmra.mxu0 %v1354
        %v1466 = vpop.f32.mrf.mxu0
        %v1467 = vadd.f32 0.0, %v1466
        %1468 = vmatmul.f32.gmra.mxu0 %v1357
        %v1469 = vpop.f32.mrf.mxu0
        %v1470 = vadd.f32 0.0, %v1469
        %1471 = vmatmul.f32.gmra.mxu0 %v1360
        %v1472 = vpop.f32.mrf.mxu0
        %v1473 = vadd.f32 0.0, %v1472
        %1474 = vmatmul.f32.gmra.mxu0 %v1363
        %v1475 = vpop.f32.mrf.mxu0
        %v1476 = vadd.f32 0.0, %v1475
        %1477 = vmatmul.f32.gmra.mxu0 %v1366
        %v1478 = vpop.f32.mrf.mxu0
        %v1479 = vadd.f32 0.0, %v1478
        %1480 = vmatmul.f32.gmra.mxu0 %v1369
        %v1481 = vpop.f32.mrf.mxu0
        %v1482 = vadd.f32 0.0, %v1481
        %1483 = vmatmul.f32.gmra.mxu0 %v1372
        %v1484 = vpop.f32.mrf.mxu0
        %v1485 = vadd.f32 0.0, %v1484
        %1486 = vmatmul.f32.gmra.mxu0 %v1375
        %v1487 = vpop.f32.mrf.mxu0
        %v1488 = vadd.f32 0.0, %v1487
        %1489 = vmatmul.f32.gmra.mxu0 %v1378
        %v1490 = vpop.f32.mrf.mxu0
        %v1491 = vadd.f32 0.0, %v1490
        %1492 = vmatmul.f32.gmra.mxu0 %v1381
        %v1493 = vpop.f32.mrf.mxu0
        %v1494 = vadd.f32 0.0, %v1493
        %1495 = vmatmul.f32.gmra.mxu0 %v1384
        %v1496 = vpop.f32.mrf.mxu0
        %v1497 = vadd.f32 0.0, %v1496
        %1498 = vmatmul.f32.gmra.mxu0 %v1387
        %v1499 = vpop.f32.mrf.mxu0
        %v1500 = vadd.f32 0.0, %v1499
        %1501 = vmatmul.f32.gmra.mxu0 %v1390
        %v1502 = vpop.f32.mrf.mxu0
        %v1503 = vadd.f32 0.0, %v1502
        %1504 = vmatmul.f32.gmra.mxu0 %v1393
        %v1505 = vpop.f32.mrf.mxu0
        %v1506 = vadd.f32 0.0, %v1505
        %1507 = vmatmul.f32.gmra.mxu0 %v1396
        %v1508 = vpop.f32.mrf.mxu0
        %v1509 = vadd.f32 0.0, %v1508
        %1510 = vdwg.mxu0
        %v1511 = vmul.f32 %v1416, 0.75
        %v1512 = vmul.f32 %v1419, 0.75
        %v1513 = vmul.f32 %v1422, 0.75
        %v1514 = vmul.f32 %v1425, 0.75
        %v1515 = vmul.f32 %v1428, 0.75
        %v1516 = vmul.f32 %v1431, 0.75
        %v1517 = vmul.f32 %v1434, 0.75
        %v1518 = vmul.f32 %v1437, 0.75
        %v1519 = vmul.f32 %v1440, 0.75
        %v1520 = vmul.f32 %v1443, 0.75
        %v1521 = vmul.f32 %v1446, 0.75
        %v1522 = vmul.f32 %v1449, 0.75
        %v1523 = vmul.f32 %v1452, 0.75
        %v1524 = vmul.f32 %v1455, 0.75
        %v1525 = vmul.f32 %v1458, 0.75
        %v1526 = vmul.f32 %v1461, 0.75
        %v1527 = vmul.f32 %v1464, 0.75
        %v1528 = vmul.f32 %v1467, 0.75
        %v1529 = vmul.f32 %v1470, 0.75
        %v1530 = vmul.f32 %v1473, 0.75
        %v1531 = vmul.f32 %v1476, 0.75
        %v1532 = vmul.f32 %v1479, 0.75
        %v1533 = vmul.f32 %v1482, 0.75
        %v1534 = vmul.f32 %v1485, 0.75
        %v1535 = vmul.f32 %v1488, 0.75
        %v1536 = vmul.f32 %v1491, 0.75
        %v1537 = vmul.f32 %v1494, 0.75
        %v1538 = vmul.f32 %v1497, 0.75
        %v1539 = vmul.f32 %v1500, 0.75
        %v1540 = vmul.f32 %v1503, 0.75
        %v1541 = vmul.f32 %v1506, 0.75
        %v1542 = vmul.f32 %v1509, 0.75
        %v1543 = vmul.f32 %v1416, 0.25
        %v1544 = vmul.f32 %v1419, 0.25
        %v1545 = vmul.f32 %v1422, 0.25
        %v1546 = vmul.f32 %v1425, 0.25
        %v1547 = vmul.f32 %v1428, 0.25
        %v1548 = vmul.f32 %v1431, 0.25
        %v1549 = vmul.f32 %v1434, 0.25
        %v1550 = vmul.f32 %v1437, 0.25
        %v1551 = vmul.f32 %v1440, 0.25
        %v1552 = vmul.f32 %v1443, 0.25
        %v1553 = vmul.f32 %v1446, 0.25
        %v1554 = vmul.f32 %v1449, 0.25
        %v1555 = vmul.f32 %v1452, 0.25
        %v1556 = vmul.f32 %v1455, 0.25
        %v1557 = vmul.f32 %v1458, 0.25
        %v1558 = vmul.f32 %v1461, 0.25
        %v1559 = vmul.f32 %v1464, 0.25
        %v1560 = vmul.f32 %v1467, 0.25
        %v1561 = vmul.f32 %v1470, 0.25
        %v1562 = vmul.f32 %v1473, 0.25
        %v1563 = vmul.f32 %v1476, 0.25
        %v1564 = vmul.f32 %v1479, 0.25
        %v1565 = vmul.f32 %v1482, 0.25
        %v1566 = vmul.f32 %v1485, 0.25
        %v1567 = vmul.f32 %v1488, 0.25
        %v1568 = vmul.f32 %v1491, 0.25
        %v1569 = vmul.f32 %v1494, 0.25
        %v1570 = vmul.f32 %v1497, 0.25
        %v1571 = vmul.f32 %v1500, 0.25
        %v1572 = vmul.f32 %v1503, 0.25
        %v1573 = vadd.f32 %v1511, %v1543
        %v1574 = vadd.f32 %v1512, %v1544
        %v1575 = vadd.f32 %v1513, %v1543
        %v1576 = vadd.f32 %v1514, %v1544
        %v1577 = vadd.f32 %v1515, %v1545
        %v1578 = vadd.f32 %v1516, %v1546
        %v1579 = vadd.f32 %v1517, %v1547
        %v1580 = vadd.f32 %v1518, %v1548
        %v1581 = vadd.f32 %v1519, %v1549
        %v1582 = vadd.f32 %v1520, %v1550
        %v1583 = vadd.f32 %v1521, %v1551
        %v1584 = vadd.f32 %v1522, %v1552
        %v1585 = vadd.f32 %v1523, %v1553
        %v1586 = vadd.f32 %v1524, %v1554
        %v1587 = vadd.f32 %v1525, %v1555
        %v1588 = vadd.f32 %v1526, %v1556
        %v1589 = vadd.f32 %v1527, %v1557
        %v1590 = vadd.f32 %v1528, %v1558
        %v1591 = vadd.f32 %v1529, %v1559
        %v1592 = vadd.f32 %v1530, %v1560
        %v1593 = vadd.f32 %v1531, %v1561
        %v1594 = vadd.f32 %v1532, %v1562
        %v1595 = vadd.f32 %v1533, %v1563
        %v1596 = vadd.f32 %v1534, %v1564
        %v1597 = vadd.f32 %v1535, %v1565
        %v1598 = vadd.f32 %v1536, %v1566
        %v1599 = vadd.f32 %v1537, %v1567
        %v1600 = vadd.f32 %v1538, %v1568
        %v1601 = vadd.f32 %v1539, %v1569
        %v1602 = vadd.f32 %v1540, %v1570
        %v1603 = vadd.f32 %v1541, %v1571
        %v1604 = vadd.f32 %v1542, %v1572
        %v1605 = vmul.f32 %v1506, 0.25
        %v1606 = vmul.f32 %v1509, 0.25
        %v1607 = vadd.f32 %v1511, %v1545
        %v1608 = vadd.f32 %v1512, %v1546
        %v1609 = vadd.f32 %v1513, %v1547
        %v1610 = vadd.f32 %v1514, %v1548
        %v1611 = vadd.f32 %v1515, %v1549
        %v1612 = vadd.f32 %v1516, %v1550
        %v1613 = vadd.f32 %v1517, %v1551
        %v1614 = vadd.f32 %v1518, %v1552
        %v1615 = vadd.f32 %v1519, %v1553
        %v1616 = vadd.f32 %v1520, %v1554
        %v1617 = vadd.f32 %v1521, %v1555
        %v1618 = vadd.f32 %v1522, %v1556
        %v1619 = vadd.f32 %v1523, %v1557
        %v1620 = vadd.f32 %v1524, %v1558
        %v1621 = vadd.f32 %v1525, %v1559
        %v1622 = vadd.f32 %v1526, %v1560
        %v1623 = vadd.f32 %v1527, %v1561
        %v1624 = vadd.f32 %v1528, %v1562
        %v1625 = vadd.f32 %v1529, %v1563
        %v1626 = vadd.f32 %v1530, %v1564
        %v1627 = vadd.f32 %v1531, %v1565
        %v1628 = vadd.f32 %v1532, %v1566
        %v1629 = vadd.f32 %v1533, %v1567
        %v1630 = vadd.f32 %v1534, %v1568
        %v1631 = vadd.f32 %v1535, %v1569
        %v1632 = vadd.f32 %v1536, %v1570
        %v1633 = vadd.f32 %v1537, %v1571
        %v1634 = vadd.f32 %v1538, %v1572
        %v1635 = vadd.f32 %v1539, %v1605
        %v1636 = vadd.f32 %v1540, %v1606
        %v1637 = vadd.f32 %v1541, %v1605
        %v1638 = vadd.f32 %v1542, %v1606
        %v1639 = vld [vmem:[%s5] sm:$0xff]
        %v1640 = vld [vmem:[%s6] sm:$0xff]
        %1642 = vset.pattern.permute.xlu0 0
        %1643 = vperm.xlu0 %1642, %v1640
        %v1644 = vpop.permute.xlu0 %1643
        %v1647 = vsel %vm925, %v1639, 0
        %1649 = vmatpush.msra.mxu0 0.0
        %1650 = vmatpush.msra.mxu0 0.0
        %1651 = vmatpush.msra.mxu0 0.0
        %1652 = vmatpush.msra.mxu0 0.0
        %1653 = vmatpush.msra.mxu0 0.0
        %1654 = vmatpush.msra.mxu0 0.0
        %1655 = vmatpush.msra.mxu0 0.0
        %1656 = vmatpush.msra.mxu0 0.0
        %1657 = vmatpush.msra.mxu0 0.0
        %1658 = vmatpush.msra.mxu0 0.0
        %1659 = vmatpush.msra.mxu0 0.0
        %1660 = vmatpush.msra.mxu0 0.0
        %1661 = vmatpush.msra.mxu0 0.0
        %1662 = vmatpush.msra.mxu0 0.0
        %1663 = vmatpush.msra.mxu0 %v1574
        %1664 = vmatpush.msra.mxu0 %v1573
        %1665 = vmatmul.f32.gmra.mxu0 %v1647
        %v1666 = vpop.f32.mrf.mxu0
        %v1667 = vadd.f32 %v1644, %v1666
        %1668 = vdwg.mxu0
        %1669 = vmatpush.msra.mxu0 0.0
        %1670 = vmatpush.msra.mxu0 0.0
        %1671 = vmatpush.msra.mxu0 0.0
        %1672 = vmatpush.msra.mxu0 0.0
        %1673 = vmatpush.msra.mxu0 0.0
        %1674 = vmatpush.msra.mxu0 0.0
        %1675 = vmatpush.msra.mxu0 0.0
        %1676 = vmatpush.msra.mxu0 0.0
        %1677 = vmatpush.msra.mxu0 0.0
        %1678 = vmatpush.msra.mxu0 0.0
        %1679 = vmatpush.msra.mxu0 0.0
        %1680 = vmatpush.msra.mxu0 0.0
        %1681 = vmatpush.msra.mxu0 0.0
        %1682 = vmatpush.msra.mxu0 0.0
        %1683 = vmatpush.msra.mxu0 %v1608
        %1684 = vmatpush.msra.mxu0 %v1607
        %1685 = vmatmul.f32.gmra.mxu0 %v1647
        %v1686 = vpop.f32.mrf.mxu0
        %v1687 = vadd.f32 %v1644, %v1686
        %1688 = vdwg.mxu0
        %1689 = vmatpush.msra.mxu0 0.0
        %1690 = vmatpush.msra.mxu0 0.0
        %1691 = vmatpush.msra.mxu0 0.0
        %1692 = vmatpush.msra.mxu0 0.0
        %1693 = vmatpush.msra.mxu0 0.0
        %1694 = vmatpush.msra.mxu0 0.0
        %1695 = vmatpush.msra.mxu0 0.0
        %1696 = vmatpush.msra.mxu0 0.0
        %1697 = vmatpush.msra.mxu0 0.0
        %1698 = vmatpush.msra.mxu0 0.0
        %1699 = vmatpush.msra.mxu0 0.0
        %1700 = vmatpush.msra.mxu0 0.0
        %1701 = vmatpush.msra.mxu0 0.0
        %1702 = vmatpush.msra.mxu0 0.0
        %1703 = vmatpush.msra.mxu0 %v1576
        %1704 = vmatpush.msra.mxu0 %v1575
        %1705 = vmatmul.f32.gmra.mxu0 %v1647
        %v1706 = vpop.f32.mrf.mxu0
        %v1707 = vadd.f32 %v1644, %v1706
        %1708 = vdwg.mxu0
        %1709 = vmatpush.msra.mxu0 0.0
        %1710 = vmatpush.msra.mxu0 0.0
        %1711 = vmatpush.msra.mxu0 0.0
        %1712 = vmatpush.msra.mxu0 0.0
        %1713 = vmatpush.msra.mxu0 0.0
        %1714 = vmatpush.msra.mxu0 0.0
        %1715 = vmatpush.msra.mxu0 0.0
        %1716 = vmatpush.msra.mxu0 0.0
        %1717 = vmatpush.msra.mxu0 0.0
        %1718 = vmatpush.msra.mxu0 0.0
        %1719 = vmatpush.msra.mxu0 0.0
        %1720 = vmatpush.msra.mxu0 0.0
        %1721 = vmatpush.msra.mxu0 0.0
        %1722 = vmatpush.msra.mxu0 0.0
        %1723 = vmatpush.msra.mxu0 %v1610
        %1724 = vmatpush.msra.mxu0 %v1609
        %1725 = vmatmul.f32.gmra.mxu0 %v1647
        %v1726 = vpop.f32.mrf.mxu0
        %v1727 = vadd.f32 %v1644, %v1726
        %1728 = vdwg.mxu0
        %1729 = vmatpush.msra.mxu0 0.0
        %1730 = vmatpush.msra.mxu0 0.0
        %1731 = vmatpush.msra.mxu0 0.0
        %1732 = vmatpush.msra.mxu0 0.0
        %1733 = vmatpush.msra.mxu0 0.0
        %1734 = vmatpush.msra.mxu0 0.0
        %1735 = vmatpush.msra.mxu0 0.0
        %1736 = vmatpush.msra.mxu0 0.0
        %1737 = vmatpush.msra.mxu0 0.0
        %1738 = vmatpush.msra.mxu0 0.0
        %1739 = vmatpush.msra.mxu0 0.0
        %1740 = vmatpush.msra.mxu0 0.0
        %1741 = vmatpush.msra.mxu0 0.0
        %1742 = vmatpush.msra.mxu0 0.0
        %1743 = vmatpush.msra.mxu0 %v1578
        %1744 = vmatpush.msra.mxu0 %v1577
        %1745 = vmatmul.f32.gmra.mxu0 %v1647
        %v1746 = vpop.f32.mrf.mxu0
        %v1747 = vadd.f32 %v1644, %v1746
        %1748 = vdwg.mxu0
        %1749 = vmatpush.msra.mxu0 0.0
        %1750 = vmatpush.msra.mxu0 0.0
        %1751 = vmatpush.msra.mxu0 0.0
        %1752 = vmatpush.msra.mxu0 0.0
        %1753 = vmatpush.msra.mxu0 0.0
        %1754 = vmatpush.msra.mxu0 0.0
        %1755 = vmatpush.msra.mxu0 0.0
        %1756 = vmatpush.msra.mxu0 0.0
        %1757 = vmatpush.msra.mxu0 0.0
        %1758 = vmatpush.msra.mxu0 0.0
        %1759 = vmatpush.msra.mxu0 0.0
        %1760 = vmatpush.msra.mxu0 0.0
        %1761 = vmatpush.msra.mxu0 0.0
        %1762 = vmatpush.msra.mxu0 0.0
        %1763 = vmatpush.msra.mxu0 %v1612
        %1764 = vmatpush.msra.mxu0 %v1611
        %1765 = vmatmul.f32.gmra.mxu0 %v1647
        %v1766 = vpop.f32.mrf.mxu0
        %v1767 = vadd.f32 %v1644, %v1766
        %1768 = vdwg.mxu0
        %1769 = vmatpush.msra.mxu0 0.0
        %1770 = vmatpush.msra.mxu0 0.0
        %1771 = vmatpush.msra.mxu0 0.0
        %1772 = vmatpush.msra.mxu0 0.0
        %1773 = vmatpush.msra.mxu0 0.0
        %1774 = vmatpush.msra.mxu0 0.0
        %1775 = vmatpush.msra.mxu0 0.0
        %1776 = vmatpush.msra.mxu0 0.0
        %1777 = vmatpush.msra.mxu0 0.0
        %1778 = vmatpush.msra.mxu0 0.0
        %1779 = vmatpush.msra.mxu0 0.0
        %1780 = vmatpush.msra.mxu0 0.0
        %1781 = vmatpush.msra.mxu0 0.0
        %1782 = vmatpush.msra.mxu0 0.0
        %1783 = vmatpush.msra.mxu0 %v1580
        %1784 = vmatpush.msra.mxu0 %v1579
        %1785 = vmatmul.f32.gmra.mxu0 %v1647
        %v1786 = vpop.f32.mrf.mxu0
        %v1787 = vadd.f32 %v1644, %v1786
        %1788 = vdwg.mxu0
        %1789 = vmatpush.msra.mxu0 0.0
        %1790 = vmatpush.msra.mxu0 0.0
        %1791 = vmatpush.msra.mxu0 0.0
        %1792 = vmatpush.msra.mxu0 0.0
        %1793 = vmatpush.msra.mxu0 0.0
        %1794 = vmatpush.msra.mxu0 0.0
        %1795 = vmatpush.msra.mxu0 0.0
        %1796 = vmatpush.msra.mxu0 0.0
        %1797 = vmatpush.msra.mxu0 0.0
        %1798 = vmatpush.msra.mxu0 0.0
        %1799 = vmatpush.msra.mxu0 0.0
        %1800 = vmatpush.msra.mxu0 0.0
        %1801 = vmatpush.msra.mxu0 0.0
        %1802 = vmatpush.msra.mxu0 0.0
        %1803 = vmatpush.msra.mxu0 %v1614
        %1804 = vmatpush.msra.mxu0 %v1613
        %1805 = vmatmul.f32.gmra.mxu0 %v1647
        %v1806 = vpop.f32.mrf.mxu0
        %v1807 = vadd.f32 %v1644, %v1806
        %1808 = vdwg.mxu0
        %1809 = vmatpush.msra.mxu0 0.0
        %1810 = vmatpush.msra.mxu0 0.0
        %1811 = vmatpush.msra.mxu0 0.0
        %1812 = vmatpush.msra.mxu0 0.0
        %1813 = vmatpush.msra.mxu0 0.0
        %1814 = vmatpush.msra.mxu0 0.0
        %1815 = vmatpush.msra.mxu0 0.0
        %1816 = vmatpush.msra.mxu0 0.0
        %1817 = vmatpush.msra.mxu0 0.0
        %1818 = vmatpush.msra.mxu0 0.0
        %1819 = vmatpush.msra.mxu0 0.0
        %1820 = vmatpush.msra.mxu0 0.0
        %1821 = vmatpush.msra.mxu0 0.0
        %1822 = vmatpush.msra.mxu0 0.0
        %1823 = vmatpush.msra.mxu0 %v1582
        %1824 = vmatpush.msra.mxu0 %v1581
        %1825 = vmatmul.f32.gmra.mxu0 %v1647
        %v1826 = vpop.f32.mrf.mxu0
        %v1827 = vadd.f32 %v1644, %v1826
        %1828 = vdwg.mxu0
        %1829 = vmatpush.msra.mxu0 0.0
        %1830 = vmatpush.msra.mxu0 0.0
        %1831 = vmatpush.msra.mxu0 0.0
        %1832 = vmatpush.msra.mxu0 0.0
        %1833 = vmatpush.msra.mxu0 0.0
        %1834 = vmatpush.msra.mxu0 0.0
        %1835 = vmatpush.msra.mxu0 0.0
        %1836 = vmatpush.msra.mxu0 0.0
        %1837 = vmatpush.msra.mxu0 0.0
        %1838 = vmatpush.msra.mxu0 0.0
        %1839 = vmatpush.msra.mxu0 0.0
        %1840 = vmatpush.msra.mxu0 0.0
        %1841 = vmatpush.msra.mxu0 0.0
        %1842 = vmatpush.msra.mxu0 0.0
        %1843 = vmatpush.msra.mxu0 %v1616
        %1844 = vmatpush.msra.mxu0 %v1615
        %1845 = vmatmul.f32.gmra.mxu0 %v1647
        %v1846 = vpop.f32.mrf.mxu0
        %v1847 = vadd.f32 %v1644, %v1846
        %1848 = vdwg.mxu0
        %1849 = vmatpush.msra.mxu0 0.0
        %1850 = vmatpush.msra.mxu0 0.0
        %1851 = vmatpush.msra.mxu0 0.0
        %1852 = vmatpush.msra.mxu0 0.0
        %1853 = vmatpush.msra.mxu0 0.0
        %1854 = vmatpush.msra.mxu0 0.0
        %1855 = vmatpush.msra.mxu0 0.0
        %1856 = vmatpush.msra.mxu0 0.0
        %1857 = vmatpush.msra.mxu0 0.0
        %1858 = vmatpush.msra.mxu0 0.0
        %1859 = vmatpush.msra.mxu0 0.0
        %1860 = vmatpush.msra.mxu0 0.0
        %1861 = vmatpush.msra.mxu0 0.0
        %1862 = vmatpush.msra.mxu0 0.0
        %1863 = vmatpush.msra.mxu0 %v1584
        %1864 = vmatpush.msra.mxu0 %v1583
        %1865 = vmatmul.f32.gmra.mxu0 %v1647
        %v1866 = vpop.f32.mrf.mxu0
        %v1867 = vadd.f32 %v1644, %v1866
        %1868 = vdwg.mxu0
        %1869 = vmatpush.msra.mxu0 0.0
        %1870 = vmatpush.msra.mxu0 0.0
        %1871 = vmatpush.msra.mxu0 0.0
        %1872 = vmatpush.msra.mxu0 0.0
        %1873 = vmatpush.msra.mxu0 0.0
        %1874 = vmatpush.msra.mxu0 0.0
        %1875 = vmatpush.msra.mxu0 0.0
        %1876 = vmatpush.msra.mxu0 0.0
        %1877 = vmatpush.msra.mxu0 0.0
        %1878 = vmatpush.msra.mxu0 0.0
        %1879 = vmatpush.msra.mxu0 0.0
        %1880 = vmatpush.msra.mxu0 0.0
        %1881 = vmatpush.msra.mxu0 0.0
        %1882 = vmatpush.msra.mxu0 0.0
        %1883 = vmatpush.msra.mxu0 %v1618
        %1884 = vmatpush.msra.mxu0 %v1617
        %1885 = vmatmul.f32.gmra.mxu0 %v1647
        %v1886 = vpop.f32.mrf.mxu0
        %v1887 = vadd.f32 %v1644, %v1886
        %1888 = vdwg.mxu0
        %1889 = vmatpush.msra.mxu0 0.0
        %1890 = vmatpush.msra.mxu0 0.0
        %1891 = vmatpush.msra.mxu0 0.0
        %1892 = vmatpush.msra.mxu0 0.0
        %1893 = vmatpush.msra.mxu0 0.0
        %1894 = vmatpush.msra.mxu0 0.0
        %1895 = vmatpush.msra.mxu0 0.0
        %1896 = vmatpush.msra.mxu0 0.0
        %1897 = vmatpush.msra.mxu0 0.0
        %1898 = vmatpush.msra.mxu0 0.0
        %1899 = vmatpush.msra.mxu0 0.0
        %1900 = vmatpush.msra.mxu0 0.0
        %1901 = vmatpush.msra.mxu0 0.0
        %1902 = vmatpush.msra.mxu0 0.0
        %1903 = vmatpush.msra.mxu0 %v1586
        %1904 = vmatpush.msra.mxu0 %v1585
        %1905 = vmatmul.f32.gmra.mxu0 %v1647
        %v1906 = vpop.f32.mrf.mxu0
        %v1907 = vadd.f32 %v1644, %v1906
        %1908 = vdwg.mxu0
        %1909 = vmatpush.msra.mxu0 0.0
        %1910 = vmatpush.msra.mxu0 0.0
        %1911 = vmatpush.msra.mxu0 0.0
        %1912 = vmatpush.msra.mxu0 0.0
        %1913 = vmatpush.msra.mxu0 0.0
        %1914 = vmatpush.msra.mxu0 0.0
        %1915 = vmatpush.msra.mxu0 0.0
        %1916 = vmatpush.msra.mxu0 0.0
        %1917 = vmatpush.msra.mxu0 0.0
        %1918 = vmatpush.msra.mxu0 0.0
        %1919 = vmatpush.msra.mxu0 0.0
        %1920 = vmatpush.msra.mxu0 0.0
        %1921 = vmatpush.msra.mxu0 0.0
        %1922 = vmatpush.msra.mxu0 0.0
        %1923 = vmatpush.msra.mxu0 %v1620
        %1924 = vmatpush.msra.mxu0 %v1619
        %1925 = vmatmul.f32.gmra.mxu0 %v1647
        %v1926 = vpop.f32.mrf.mxu0
        %v1927 = vadd.f32 %v1644, %v1926
        %1928 = vdwg.mxu0
        %1929 = vmatpush.msra.mxu0 0.0
        %1930 = vmatpush.msra.mxu0 0.0
        %1931 = vmatpush.msra.mxu0 0.0
        %1932 = vmatpush.msra.mxu0 0.0
        %1933 = vmatpush.msra.mxu0 0.0
        %1934 = vmatpush.msra.mxu0 0.0
        %1935 = vmatpush.msra.mxu0 0.0
        %1936 = vmatpush.msra.mxu0 0.0
        %1937 = vmatpush.msra.mxu0 0.0
        %1938 = vmatpush.msra.mxu0 0.0
        %1939 = vmatpush.msra.mxu0 0.0
        %1940 = vmatpush.msra.mxu0 0.0
        %1941 = vmatpush.msra.mxu0 0.0
        %1942 = vmatpush.msra.mxu0 0.0
        %1943 = vmatpush.msra.mxu0 %v1588
        %1944 = vmatpush.msra.mxu0 %v1587
        %1945 = vmatmul.f32.gmra.mxu0 %v1647
        %v1946 = vpop.f32.mrf.mxu0
        %v1947 = vadd.f32 %v1644, %v1946
        %1948 = vdwg.mxu0
        %1949 = vmatpush.msra.mxu0 0.0
        %1950 = vmatpush.msra.mxu0 0.0
        %1951 = vmatpush.msra.mxu0 0.0
        %1952 = vmatpush.msra.mxu0 0.0
        %1953 = vmatpush.msra.mxu0 0.0
        %1954 = vmatpush.msra.mxu0 0.0
        %1955 = vmatpush.msra.mxu0 0.0
        %1956 = vmatpush.msra.mxu0 0.0
        %1957 = vmatpush.msra.mxu0 0.0
        %1958 = vmatpush.msra.mxu0 0.0
        %1959 = vmatpush.msra.mxu0 0.0
        %1960 = vmatpush.msra.mxu0 0.0
        %1961 = vmatpush.msra.mxu0 0.0
        %1962 = vmatpush.msra.mxu0 0.0
        %1963 = vmatpush.msra.mxu0 %v1622
        %1964 = vmatpush.msra.mxu0 %v1621
        %1965 = vmatmul.f32.gmra.mxu0 %v1647
        %v1966 = vpop.f32.mrf.mxu0
        %v1967 = vadd.f32 %v1644, %v1966
        %1968 = vdwg.mxu0
        %1969 = vmatpush.msra.mxu0 0.0
        %1970 = vmatpush.msra.mxu0 0.0
        %1971 = vmatpush.msra.mxu0 0.0
        %1972 = vmatpush.msra.mxu0 0.0
        %1973 = vmatpush.msra.mxu0 0.0
        %1974 = vmatpush.msra.mxu0 0.0
        %1975 = vmatpush.msra.mxu0 0.0
        %1976 = vmatpush.msra.mxu0 0.0
        %1977 = vmatpush.msra.mxu0 0.0
        %1978 = vmatpush.msra.mxu0 0.0
        %1979 = vmatpush.msra.mxu0 0.0
        %1980 = vmatpush.msra.mxu0 0.0
        %1981 = vmatpush.msra.mxu0 0.0
        %1982 = vmatpush.msra.mxu0 0.0
        %1983 = vmatpush.msra.mxu0 %v1590
        %1984 = vmatpush.msra.mxu0 %v1589
        %1985 = vmatmul.f32.gmra.mxu0 %v1647
        %v1986 = vpop.f32.mrf.mxu0
        %v1987 = vadd.f32 %v1644, %v1986
        %1988 = vdwg.mxu0
        %1989 = vmatpush.msra.mxu0 0.0
        %1990 = vmatpush.msra.mxu0 0.0
        %1991 = vmatpush.msra.mxu0 0.0
        %1992 = vmatpush.msra.mxu0 0.0
        %1993 = vmatpush.msra.mxu0 0.0
        %1994 = vmatpush.msra.mxu0 0.0
        %1995 = vmatpush.msra.mxu0 0.0
        %1996 = vmatpush.msra.mxu0 0.0
        %1997 = vmatpush.msra.mxu0 0.0
        %1998 = vmatpush.msra.mxu0 0.0
        %1999 = vmatpush.msra.mxu0 0.0
        %2000 = vmatpush.msra.mxu0 0.0
        %2001 = vmatpush.msra.mxu0 0.0
        %2002 = vmatpush.msra.mxu0 0.0
        %2003 = vmatpush.msra.mxu0 %v1624
        %2004 = vmatpush.msra.mxu0 %v1623
        %2005 = vmatmul.f32.gmra.mxu0 %v1647
        %v2006 = vpop.f32.mrf.mxu0
        %v2007 = vadd.f32 %v1644, %v2006
        %2008 = vdwg.mxu0
        %2009 = vmatpush.msra.mxu0 0.0
        %2010 = vmatpush.msra.mxu0 0.0
        %2011 = vmatpush.msra.mxu0 0.0
        %2012 = vmatpush.msra.mxu0 0.0
        %2013 = vmatpush.msra.mxu0 0.0
        %2014 = vmatpush.msra.mxu0 0.0
        %2015 = vmatpush.msra.mxu0 0.0
        %2016 = vmatpush.msra.mxu0 0.0
        %2017 = vmatpush.msra.mxu0 0.0
        %2018 = vmatpush.msra.mxu0 0.0
        %2019 = vmatpush.msra.mxu0 0.0
        %2020 = vmatpush.msra.mxu0 0.0
        %2021 = vmatpush.msra.mxu0 0.0
        %2022 = vmatpush.msra.mxu0 0.0
        %2023 = vmatpush.msra.mxu0 %v1592
        %2024 = vmatpush.msra.mxu0 %v1591
        %2025 = vmatmul.f32.gmra.mxu0 %v1647
        %v2026 = vpop.f32.mrf.mxu0
        %v2027 = vadd.f32 %v1644, %v2026
        %2028 = vdwg.mxu0
        %2029 = vmatpush.msra.mxu0 0.0
        %2030 = vmatpush.msra.mxu0 0.0
        %2031 = vmatpush.msra.mxu0 0.0
        %2032 = vmatpush.msra.mxu0 0.0
        %2033 = vmatpush.msra.mxu0 0.0
        %2034 = vmatpush.msra.mxu0 0.0
        %2035 = vmatpush.msra.mxu0 0.0
        %2036 = vmatpush.msra.mxu0 0.0
        %2037 = vmatpush.msra.mxu0 0.0
        %2038 = vmatpush.msra.mxu0 0.0
        %2039 = vmatpush.msra.mxu0 0.0
        %2040 = vmatpush.msra.mxu0 0.0
        %2041 = vmatpush.msra.mxu0 0.0
        %2042 = vmatpush.msra.mxu0 0.0
        %2043 = vmatpush.msra.mxu0 %v1626
        %2044 = vmatpush.msra.mxu0 %v1625
        %2045 = vmatmul.f32.gmra.mxu0 %v1647
        %v2046 = vpop.f32.mrf.mxu0
        %v2047 = vadd.f32 %v1644, %v2046
        %2048 = vdwg.mxu0
        %2049 = vmatpush.msra.mxu0 0.0
        %2050 = vmatpush.msra.mxu0 0.0
        %2051 = vmatpush.msra.mxu0 0.0
        %2052 = vmatpush.msra.mxu0 0.0
        %2053 = vmatpush.msra.mxu0 0.0
        %2054 = vmatpush.msra.mxu0 0.0
        %2055 = vmatpush.msra.mxu0 0.0
        %2056 = vmatpush.msra.mxu0 0.0
        %2057 = vmatpush.msra.mxu0 0.0
        %2058 = vmatpush.msra.mxu0 0.0
        %2059 = vmatpush.msra.mxu0 0.0
        %2060 = vmatpush.msra.mxu0 0.0
        %2061 = vmatpush.msra.mxu0 0.0
        %2062 = vmatpush.msra.mxu0 0.0
        %2063 = vmatpush.msra.mxu0 %v1594
        %2064 = vmatpush.msra.mxu0 %v1593
        %2065 = vmatmul.f32.gmra.mxu0 %v1647
        %v2066 = vpop.f32.mrf.mxu0
        %v2067 = vadd.f32 %v1644, %v2066
        %2068 = vdwg.mxu0
        %2069 = vmatpush.msra.mxu0 0.0
        %2070 = vmatpush.msra.mxu0 0.0
        %2071 = vmatpush.msra.mxu0 0.0
        %2072 = vmatpush.msra.mxu0 0.0
        %2073 = vmatpush.msra.mxu0 0.0
        %2074 = vmatpush.msra.mxu0 0.0
        %2075 = vmatpush.msra.mxu0 0.0
        %2076 = vmatpush.msra.mxu0 0.0
        %2077 = vmatpush.msra.mxu0 0.0
        %2078 = vmatpush.msra.mxu0 0.0
        %2079 = vmatpush.msra.mxu0 0.0
        %2080 = vmatpush.msra.mxu0 0.0
        %2081 = vmatpush.msra.mxu0 0.0
        %2082 = vmatpush.msra.mxu0 0.0
        %2083 = vmatpush.msra.mxu0 %v1628
        %2084 = vmatpush.msra.mxu0 %v1627
        %2085 = vmatmul.f32.gmra.mxu0 %v1647
        %v2086 = vpop.f32.mrf.mxu0
        %v2087 = vadd.f32 %v1644, %v2086
        %2088 = vdwg.mxu0
        %2089 = vmatpush.msra.mxu0 0.0
        %2090 = vmatpush.msra.mxu0 0.0
        %2091 = vmatpush.msra.mxu0 0.0
        %2092 = vmatpush.msra.mxu0 0.0
        %2093 = vmatpush.msra.mxu0 0.0
        %2094 = vmatpush.msra.mxu0 0.0
        %2095 = vmatpush.msra.mxu0 0.0
        %2096 = vmatpush.msra.mxu0 0.0
        %2097 = vmatpush.msra.mxu0 0.0
        %2098 = vmatpush.msra.mxu0 0.0
        %2099 = vmatpush.msra.mxu0 0.0
        %2100 = vmatpush.msra.mxu0 0.0
        %2101 = vmatpush.msra.mxu0 0.0
        %2102 = vmatpush.msra.mxu0 0.0
        %2103 = vmatpush.msra.mxu0 %v1596
        %2104 = vmatpush.msra.mxu0 %v1595
        %2105 = vmatmul.f32.gmra.mxu0 %v1647
        %v2106 = vpop.f32.mrf.mxu0
        %v2107 = vadd.f32 %v1644, %v2106
        %2108 = vdwg.mxu0
        %2109 = vmatpush.msra.mxu0 0.0
        %2110 = vmatpush.msra.mxu0 0.0
        %2111 = vmatpush.msra.mxu0 0.0
        %2112 = vmatpush.msra.mxu0 0.0
        %2113 = vmatpush.msra.mxu0 0.0
        %2114 = vmatpush.msra.mxu0 0.0
        %2115 = vmatpush.msra.mxu0 0.0
        %2116 = vmatpush.msra.mxu0 0.0
        %2117 = vmatpush.msra.mxu0 0.0
        %2118 = vmatpush.msra.mxu0 0.0
        %2119 = vmatpush.msra.mxu0 0.0
        %2120 = vmatpush.msra.mxu0 0.0
        %2121 = vmatpush.msra.mxu0 0.0
        %2122 = vmatpush.msra.mxu0 0.0
        %2123 = vmatpush.msra.mxu0 %v1630
        %2124 = vmatpush.msra.mxu0 %v1629
        %2125 = vmatmul.f32.gmra.mxu0 %v1647
        %v2126 = vpop.f32.mrf.mxu0
        %v2127 = vadd.f32 %v1644, %v2126
        %2128 = vdwg.mxu0
        %2129 = vmatpush.msra.mxu0 0.0
        %2130 = vmatpush.msra.mxu0 0.0
        %2131 = vmatpush.msra.mxu0 0.0
        %2132 = vmatpush.msra.mxu0 0.0
        %2133 = vmatpush.msra.mxu0 0.0
        %2134 = vmatpush.msra.mxu0 0.0
        %2135 = vmatpush.msra.mxu0 0.0
        %2136 = vmatpush.msra.mxu0 0.0
        %2137 = vmatpush.msra.mxu0 0.0
        %2138 = vmatpush.msra.mxu0 0.0
        %2139 = vmatpush.msra.mxu0 0.0
        %2140 = vmatpush.msra.mxu0 0.0
        %2141 = vmatpush.msra.mxu0 0.0
        %2142 = vmatpush.msra.mxu0 0.0
        %2143 = vmatpush.msra.mxu0 %v1598
        %2144 = vmatpush.msra.mxu0 %v1597
        %2145 = vmatmul.f32.gmra.mxu0 %v1647
        %v2146 = vpop.f32.mrf.mxu0
        %v2147 = vadd.f32 %v1644, %v2146
        %2148 = vdwg.mxu0
        %2149 = vmatpush.msra.mxu0 0.0
        %2150 = vmatpush.msra.mxu0 0.0
        %2151 = vmatpush.msra.mxu0 0.0
        %2152 = vmatpush.msra.mxu0 0.0
        %2153 = vmatpush.msra.mxu0 0.0
        %2154 = vmatpush.msra.mxu0 0.0
        %2155 = vmatpush.msra.mxu0 0.0
        %2156 = vmatpush.msra.mxu0 0.0
        %2157 = vmatpush.msra.mxu0 0.0
        %2158 = vmatpush.msra.mxu0 0.0
        %2159 = vmatpush.msra.mxu0 0.0
        %2160 = vmatpush.msra.mxu0 0.0
        %2161 = vmatpush.msra.mxu0 0.0
        %2162 = vmatpush.msra.mxu0 0.0
        %2163 = vmatpush.msra.mxu0 %v1632
        %2164 = vmatpush.msra.mxu0 %v1631
        %2165 = vmatmul.f32.gmra.mxu0 %v1647
        %v2166 = vpop.f32.mrf.mxu0
        %v2167 = vadd.f32 %v1644, %v2166
        %2168 = vdwg.mxu0
        %2169 = vmatpush.msra.mxu0 0.0
        %2170 = vmatpush.msra.mxu0 0.0
        %2171 = vmatpush.msra.mxu0 0.0
        %2172 = vmatpush.msra.mxu0 0.0
        %2173 = vmatpush.msra.mxu0 0.0
        %2174 = vmatpush.msra.mxu0 0.0
        %2175 = vmatpush.msra.mxu0 0.0
        %2176 = vmatpush.msra.mxu0 0.0
        %2177 = vmatpush.msra.mxu0 0.0
        %2178 = vmatpush.msra.mxu0 0.0
        %2179 = vmatpush.msra.mxu0 0.0
        %2180 = vmatpush.msra.mxu0 0.0
        %2181 = vmatpush.msra.mxu0 0.0
        %2182 = vmatpush.msra.mxu0 0.0
        %2183 = vmatpush.msra.mxu0 %v1600
        %2184 = vmatpush.msra.mxu0 %v1599
        %2185 = vmatmul.f32.gmra.mxu0 %v1647
        %v2186 = vpop.f32.mrf.mxu0
        %v2187 = vadd.f32 %v1644, %v2186
        %2188 = vdwg.mxu0
        %2189 = vmatpush.msra.mxu0 0.0
        %2190 = vmatpush.msra.mxu0 0.0
        %2191 = vmatpush.msra.mxu0 0.0
        %2192 = vmatpush.msra.mxu0 0.0
        %2193 = vmatpush.msra.mxu0 0.0
        %2194 = vmatpush.msra.mxu0 0.0
        %2195 = vmatpush.msra.mxu0 0.0
        %2196 = vmatpush.msra.mxu0 0.0
        %2197 = vmatpush.msra.mxu0 0.0
        %2198 = vmatpush.msra.mxu0 0.0
        %2199 = vmatpush.msra.mxu0 0.0
        %2200 = vmatpush.msra.mxu0 0.0
        %2201 = vmatpush.msra.mxu0 0.0
        %2202 = vmatpush.msra.mxu0 0.0
        %2203 = vmatpush.msra.mxu0 %v1634
        %2204 = vmatpush.msra.mxu0 %v1633
        %2205 = vmatmul.f32.gmra.mxu0 %v1647
        %v2206 = vpop.f32.mrf.mxu0
        %v2207 = vadd.f32 %v1644, %v2206
        %2208 = vdwg.mxu0
        %2209 = vmatpush.msra.mxu0 0.0
        %2210 = vmatpush.msra.mxu0 0.0
        %2211 = vmatpush.msra.mxu0 0.0
        %2212 = vmatpush.msra.mxu0 0.0
        %2213 = vmatpush.msra.mxu0 0.0
        %2214 = vmatpush.msra.mxu0 0.0
        %2215 = vmatpush.msra.mxu0 0.0
        %2216 = vmatpush.msra.mxu0 0.0
        %2217 = vmatpush.msra.mxu0 0.0
        %2218 = vmatpush.msra.mxu0 0.0
        %2219 = vmatpush.msra.mxu0 0.0
        %2220 = vmatpush.msra.mxu0 0.0
        %2221 = vmatpush.msra.mxu0 0.0
        %2222 = vmatpush.msra.mxu0 0.0
        %2223 = vmatpush.msra.mxu0 %v1602
        %2224 = vmatpush.msra.mxu0 %v1601
        %2225 = vmatmul.f32.gmra.mxu0 %v1647
        %v2226 = vpop.f32.mrf.mxu0
        %v2227 = vadd.f32 %v1644, %v2226
        %2228 = vdwg.mxu0
        %2229 = vmatpush.msra.mxu0 0.0
        %2230 = vmatpush.msra.mxu0 0.0
        %2231 = vmatpush.msra.mxu0 0.0
        %2232 = vmatpush.msra.mxu0 0.0
        %2233 = vmatpush.msra.mxu0 0.0
        %2234 = vmatpush.msra.mxu0 0.0
        %2235 = vmatpush.msra.mxu0 0.0
        %2236 = vmatpush.msra.mxu0 0.0
        %2237 = vmatpush.msra.mxu0 0.0
        %2238 = vmatpush.msra.mxu0 0.0
        %2239 = vmatpush.msra.mxu0 0.0
        %2240 = vmatpush.msra.mxu0 0.0
        %2241 = vmatpush.msra.mxu0 0.0
        %2242 = vmatpush.msra.mxu0 0.0
        %2243 = vmatpush.msra.mxu0 %v1636
        %2244 = vmatpush.msra.mxu0 %v1635
        %2245 = vmatmul.f32.gmra.mxu0 %v1647
        %v2246 = vpop.f32.mrf.mxu0
        %v2247 = vadd.f32 %v1644, %v2246
        %2248 = vdwg.mxu0
        %2249 = vmatpush.msra.mxu0 0.0
        %2250 = vmatpush.msra.mxu0 0.0
        %2251 = vmatpush.msra.mxu0 0.0
        %2252 = vmatpush.msra.mxu0 0.0
        %2253 = vmatpush.msra.mxu0 0.0
        %2254 = vmatpush.msra.mxu0 0.0
        %2255 = vmatpush.msra.mxu0 0.0
        %2256 = vmatpush.msra.mxu0 0.0
        %2257 = vmatpush.msra.mxu0 0.0
        %2258 = vmatpush.msra.mxu0 0.0
        %2259 = vmatpush.msra.mxu0 0.0
        %2260 = vmatpush.msra.mxu0 0.0
        %2261 = vmatpush.msra.mxu0 0.0
        %2262 = vmatpush.msra.mxu0 0.0
        %2263 = vmatpush.msra.mxu0 %v1604
        %2264 = vmatpush.msra.mxu0 %v1603
        %2265 = vmatmul.f32.gmra.mxu0 %v1647
        %v2266 = vpop.f32.mrf.mxu0
        %v2267 = vadd.f32 %v1644, %v2266
        %2268 = vdwg.mxu0
        %2269 = vmatpush.msra.mxu0 0.0
        %2270 = vmatpush.msra.mxu0 0.0
        %2271 = vmatpush.msra.mxu0 0.0
        %2272 = vmatpush.msra.mxu0 0.0
        %2273 = vmatpush.msra.mxu0 0.0
        %2274 = vmatpush.msra.mxu0 0.0
        %2275 = vmatpush.msra.mxu0 0.0
        %2276 = vmatpush.msra.mxu0 0.0
        %2277 = vmatpush.msra.mxu0 0.0
        %2278 = vmatpush.msra.mxu0 0.0
        %2279 = vmatpush.msra.mxu0 0.0
        %2280 = vmatpush.msra.mxu0 0.0
        %2281 = vmatpush.msra.mxu0 0.0
        %2282 = vmatpush.msra.mxu0 0.0
        %2283 = vmatpush.msra.mxu0 %v1638
        %2284 = vmatpush.msra.mxu0 %v1637
        %2285 = vmatmul.f32.gmra.mxu0 %v1647
        %v2286 = vpop.f32.mrf.mxu0
        %v2287 = vadd.f32 %v1644, %v2286
        %2288 = vdwg.mxu0
        %v2289 = vld [vmem:[%s13] sm:$0xff]
        %v2290 = vld [vmem:[%s13 + $0x8] sm:$0xff]
        %v2291 = vld [vmem:[%s13 + $0x10] sm:$0xff]
        %v2292 = vld [vmem:[%s13 + $0x18] sm:$0xff]
        %v2294 = vsel %vm541, %v1667, 0
        %v2297 = vsel %vm541, %v1687, 0
        %v2300 = vsel %vm541, %v1707, 0
        %v2303 = vsel %vm541, %v1727, 0
        %v2306 = vsel %vm541, %v1747, 0
        %v2309 = vsel %vm541, %v1767, 0
        %v2312 = vsel %vm541, %v1787, 0
        %v2315 = vsel %vm541, %v1807, 0
        %v2318 = vsel %vm541, %v1827, 0
        %v2321 = vsel %vm541, %v1847, 0
        %v2324 = vsel %vm541, %v1867, 0
        %v2327 = vsel %vm541, %v1887, 0
        %v2330 = vsel %vm541, %v1907, 0
        %v2333 = vsel %vm541, %v1927, 0
        %v2336 = vsel %vm541, %v1947, 0
        %v2339 = vsel %vm541, %v1967, 0
        %v2342 = vsel %vm541, %v1987, 0
        %v2345 = vsel %vm541, %v2007, 0
        %v2348 = vsel %vm541, %v2027, 0
        %v2351 = vsel %vm541, %v2047, 0
        %v2354 = vsel %vm541, %v2067, 0
        %v2357 = vsel %vm541, %v2087, 0
        %v2360 = vsel %vm541, %v2107, 0
        %v2363 = vsel %vm541, %v2127, 0
        %v2366 = vsel %vm541, %v2147, 0
        %v2369 = vsel %vm541, %v2167, 0
        %v2372 = vsel %vm541, %v2187, 0
        %v2375 = vsel %vm541, %v2207, 0
        %v2378 = vsel %vm541, %v2227, 0
        %v2381 = vsel %vm541, %v2247, 0
        %v2384 = vsel %vm541, %v2267, 0
        %v2387 = vsel %vm541, %v2287, 0
        %2389 = vmatpush.msra.mxu0 0.0
        %2390 = vmatpush.msra.mxu0 0.0
        %2391 = vmatpush.msra.mxu0 0.0
        %2392 = vmatpush.msra.mxu0 0.0
        %2393 = vmatpush.msra.mxu0 0.0
        %2394 = vmatpush.msra.mxu0 0.0
        %2395 = vmatpush.msra.mxu0 0.0
        %2396 = vmatpush.msra.mxu0 0.0
        %2397 = vmatpush.msra.mxu0 0.0
        %2398 = vmatpush.msra.mxu0 0.0
        %2399 = vmatpush.msra.mxu0 0.0
        %2400 = vmatpush.msra.mxu0 0.0
        %2401 = vmatpush.msra.mxu0 %v2292
        %2402 = vmatpush.msra.mxu0 %v2291
        %2403 = vmatpush.msra.mxu0 %v2290
        %2404 = vmatpush.msra.mxu0 %v2289
        %2405 = vmatmul.f32.gmra.mxu0 %v2294
        %v2406 = vpop.f32.mrf.mxu0
        %v2407 = vadd.f32 0.0, %v2406
        %2408 = vmatmul.f32.gmra.mxu0 %v2297
        %v2409 = vpop.f32.mrf.mxu0
        %v2410 = vadd.f32 0.0, %v2409
        %2411 = vmatmul.f32.gmra.mxu0 %v2300
        %v2412 = vpop.f32.mrf.mxu0
        %v2413 = vadd.f32 0.0, %v2412
        %2414 = vmatmul.f32.gmra.mxu0 %v2303
        %v2415 = vpop.f32.mrf.mxu0
        %v2416 = vadd.f32 0.0, %v2415
        %2417 = vmatmul.f32.gmra.mxu0 %v2306
        %v2418 = vpop.f32.mrf.mxu0
        %v2419 = vadd.f32 0.0, %v2418
        %2420 = vmatmul.f32.gmra.mxu0 %v2309
        %v2421 = vpop.f32.mrf.mxu0
        %v2422 = vadd.f32 0.0, %v2421
        %2423 = vmatmul.f32.gmra.mxu0 %v2312
        %v2424 = vpop.f32.mrf.mxu0
        %v2425 = vadd.f32 0.0, %v2424
        %2426 = vmatmul.f32.gmra.mxu0 %v2315
        %v2427 = vpop.f32.mrf.mxu0
        %v2428 = vadd.f32 0.0, %v2427
        %2429 = vmatmul.f32.gmra.mxu0 %v2318
        %v2430 = vpop.f32.mrf.mxu0
        %v2431 = vadd.f32 0.0, %v2430
        %2432 = vmatmul.f32.gmra.mxu0 %v2321
        %v2433 = vpop.f32.mrf.mxu0
        %v2434 = vadd.f32 0.0, %v2433
        %2435 = vmatmul.f32.gmra.mxu0 %v2324
        %v2436 = vpop.f32.mrf.mxu0
        %v2437 = vadd.f32 0.0, %v2436
        %2438 = vmatmul.f32.gmra.mxu0 %v2327
        %v2439 = vpop.f32.mrf.mxu0
        %v2440 = vadd.f32 0.0, %v2439
        %2441 = vmatmul.f32.gmra.mxu0 %v2330
        %v2442 = vpop.f32.mrf.mxu0
        %v2443 = vadd.f32 0.0, %v2442
        %2444 = vmatmul.f32.gmra.mxu0 %v2333
        %v2445 = vpop.f32.mrf.mxu0
        %v2446 = vadd.f32 0.0, %v2445
        %2447 = vmatmul.f32.gmra.mxu0 %v2336
        %v2448 = vpop.f32.mrf.mxu0
        %v2449 = vadd.f32 0.0, %v2448
        %2450 = vmatmul.f32.gmra.mxu0 %v2339
        %v2451 = vpop.f32.mrf.mxu0
        %v2452 = vadd.f32 0.0, %v2451
        %2453 = vmatmul.f32.gmra.mxu0 %v2342
        %v2454 = vpop.f32.mrf.mxu0
        %v2455 = vadd.f32 0.0, %v2454
        %2456 = vmatmul.f32.gmra.mxu0 %v2345
        %v2457 = vpop.f32.mrf.mxu0
        %v2458 = vadd.f32 0.0, %v2457
        %2459 = vmatmul.f32.gmra.mxu0 %v2348
        %v2460 = vpop.f32.mrf.mxu0
        %v2461 = vadd.f32 0.0, %v2460
        %2462 = vmatmul.f32.gmra.mxu0 %v2351
        %v2463 = vpop.f32.mrf.mxu0
        %v2464 = vadd.f32 0.0, %v2463
        %2465 = vmatmul.f32.gmra.mxu0 %v2354
        %v2466 = vpop.f32.mrf.mxu0
        %v2467 = vadd.f32 0.0, %v2466
        %2468 = vmatmul.f32.gmra.mxu0 %v2357
        %v2469 = vpop.f32.mrf.mxu0
        %v2470 = vadd.f32 0.0, %v2469
        %2471 = vmatmul.f32.gmra.mxu0 %v2360
        %v2472 = vpop.f32.mrf.mxu0
        %v2473 = vadd.f32 0.0, %v2472
        %2474 = vmatmul.f32.gmra.mxu0 %v2363
        %v2475 = vpop.f32.mrf.mxu0
        %v2476 = vadd.f32 0.0, %v2475
        %2477 = vmatmul.f32.gmra.mxu0 %v2366
        %v2478 = vpop.f32.mrf.mxu0
        %v2479 = vadd.f32 0.0, %v2478
        %2480 = vmatmul.f32.gmra.mxu0 %v2369
        %v2481 = vpop.f32.mrf.mxu0
        %v2482 = vadd.f32 0.0, %v2481
        %2483 = vmatmul.f32.gmra.mxu0 %v2372
        %v2484 = vpop.f32.mrf.mxu0
        %v2485 = vadd.f32 0.0, %v2484
        %2486 = vmatmul.f32.gmra.mxu0 %v2375
        %v2487 = vpop.f32.mrf.mxu0
        %v2488 = vadd.f32 0.0, %v2487
        %2489 = vmatmul.f32.gmra.mxu0 %v2378
        %v2490 = vpop.f32.mrf.mxu0
        %v2491 = vadd.f32 0.0, %v2490
        %2492 = vmatmul.f32.gmra.mxu0 %v2381
        %v2493 = vpop.f32.mrf.mxu0
        %v2494 = vadd.f32 0.0, %v2493
        %2495 = vmatmul.f32.gmra.mxu0 %v2384
        %v2496 = vpop.f32.mrf.mxu0
        %v2497 = vadd.f32 0.0, %v2496
        %2498 = vmatmul.f32.gmra.mxu0 %v2387
        %v2499 = vpop.f32.mrf.mxu0
        %v2500 = vadd.f32 0.0, %v2499
        %2501 = vdwg.mxu0
        %v2502 = vmul.f32 %v2407, 0.75
        %v2503 = vmul.f32 %v2410, 0.75
        %v2504 = vmul.f32 %v2413, 0.75
        %v2505 = vmul.f32 %v2416, 0.75
        %v2506 = vmul.f32 %v2419, 0.75
        %v2507 = vmul.f32 %v2422, 0.75
        %v2508 = vmul.f32 %v2425, 0.75
        %v2509 = vmul.f32 %v2428, 0.75
        %v2510 = vmul.f32 %v2431, 0.75
        %v2511 = vmul.f32 %v2434, 0.75
        %v2512 = vmul.f32 %v2437, 0.75
        %v2513 = vmul.f32 %v2440, 0.75
        %v2514 = vmul.f32 %v2443, 0.75
        %v2515 = vmul.f32 %v2446, 0.75
        %v2516 = vmul.f32 %v2449, 0.75
        %v2517 = vmul.f32 %v2452, 0.75
        %v2518 = vmul.f32 %v2455, 0.75
        %v2519 = vmul.f32 %v2458, 0.75
        %v2520 = vmul.f32 %v2461, 0.75
        %v2521 = vmul.f32 %v2464, 0.75
        %v2522 = vmul.f32 %v2467, 0.75
        %v2523 = vmul.f32 %v2470, 0.75
        %v2524 = vmul.f32 %v2473, 0.75
        %v2525 = vmul.f32 %v2476, 0.75
        %v2526 = vmul.f32 %v2479, 0.75
        %v2527 = vmul.f32 %v2482, 0.75
        %v2528 = vmul.f32 %v2485, 0.75
        %v2529 = vmul.f32 %v2488, 0.75
        %v2530 = vmul.f32 %v2491, 0.75
        %v2531 = vmul.f32 %v2494, 0.75
        %v2532 = vmul.f32 %v2497, 0.75
        %v2533 = vmul.f32 %v2500, 0.75
        %v2534 = vmul.f32 %v2407, 0.25
        %v2535 = vmul.f32 %v2410, 0.25
        %v2536 = vmul.f32 %v2413, 0.25
        %v2537 = vmul.f32 %v2416, 0.25
        %v2538 = vmul.f32 %v2419, 0.25
        %v2539 = vmul.f32 %v2422, 0.25
        %v2540 = vmul.f32 %v2425, 0.25
        %v2541 = vmul.f32 %v2428, 0.25
        %v2542 = vmul.f32 %v2431, 0.25
        %v2543 = vmul.f32 %v2434, 0.25
        %v2544 = vmul.f32 %v2437, 0.25
        %v2545 = vmul.f32 %v2440, 0.25
        %v2546 = vmul.f32 %v2443, 0.25
        %v2547 = vmul.f32 %v2446, 0.25
        %v2548 = vmul.f32 %v2449, 0.25
        %v2549 = vmul.f32 %v2452, 0.25
        %v2550 = vmul.f32 %v2455, 0.25
        %v2551 = vmul.f32 %v2458, 0.25
        %v2552 = vmul.f32 %v2461, 0.25
        %v2553 = vmul.f32 %v2464, 0.25
        %v2554 = vmul.f32 %v2467, 0.25
        %v2555 = vmul.f32 %v2470, 0.25
        %v2556 = vmul.f32 %v2473, 0.25
        %v2557 = vmul.f32 %v2476, 0.25
        %v2558 = vmul.f32 %v2479, 0.25
        %v2559 = vmul.f32 %v2482, 0.25
        %v2560 = vmul.f32 %v2485, 0.25
        %v2561 = vmul.f32 %v2488, 0.25
        %v2562 = vmul.f32 %v2491, 0.25
        %v2563 = vmul.f32 %v2494, 0.25
        %v2564 = vmul.f32 %v2497, 0.25
        %v2565 = vadd.f32 %v2502, %v2534
        %v2566 = vadd.f32 %v2503, %v2534
        %v2567 = vadd.f32 %v2504, %v2535
        %v2568 = vadd.f32 %v2505, %v2536
        %v2569 = vadd.f32 %v2506, %v2537
        %v2570 = vadd.f32 %v2507, %v2538
        %v2571 = vadd.f32 %v2508, %v2539
        %v2572 = vadd.f32 %v2509, %v2540
        %v2573 = vadd.f32 %v2510, %v2541
        %v2574 = vadd.f32 %v2511, %v2542
        %v2575 = vadd.f32 %v2512, %v2543
        %v2576 = vadd.f32 %v2513, %v2544
        %v2577 = vadd.f32 %v2514, %v2545
        %v2578 = vadd.f32 %v2515, %v2546
        %v2579 = vadd.f32 %v2516, %v2547
        %v2580 = vadd.f32 %v2517, %v2548
        %v2581 = vadd.f32 %v2518, %v2549
        %v2582 = vadd.f32 %v2519, %v2550
        %v2583 = vadd.f32 %v2520, %v2551
        %v2584 = vadd.f32 %v2521, %v2552
        %v2585 = vadd.f32 %v2522, %v2553
        %v2586 = vadd.f32 %v2523, %v2554
        %v2587 = vadd.f32 %v2524, %v2555
        %v2588 = vadd.f32 %v2525, %v2556
        %v2589 = vadd.f32 %v2526, %v2557
        %v2590 = vadd.f32 %v2527, %v2558
        %v2591 = vadd.f32 %v2528, %v2559
        %v2592 = vadd.f32 %v2529, %v2560
        %v2593 = vadd.f32 %v2530, %v2561
        %v2594 = vadd.f32 %v2531, %v2562
        %v2595 = vadd.f32 %v2532, %v2563
        %v2596 = vadd.f32 %v2533, %v2564
        %v2597 = vmul.f32 %v2500, 0.25
        %v2598 = vadd.f32 %v2502, %v2535
        %v2599 = vadd.f32 %v2503, %v2536
        %v2600 = vadd.f32 %v2504, %v2537
        %v2601 = vadd.f32 %v2505, %v2538
        %v2602 = vadd.f32 %v2506, %v2539
        %v2603 = vadd.f32 %v2507, %v2540
        %v2604 = vadd.f32 %v2508, %v2541
        %v2605 = vadd.f32 %v2509, %v2542
        %v2606 = vadd.f32 %v2510, %v2543
        %v2607 = vadd.f32 %v2511, %v2544
        %v2608 = vadd.f32 %v2512, %v2545
        %v2609 = vadd.f32 %v2513, %v2546
        %v2610 = vadd.f32 %v2514, %v2547
        %v2611 = vadd.f32 %v2515, %v2548
        %v2612 = vadd.f32 %v2516, %v2549
        %v2613 = vadd.f32 %v2517, %v2550
        %v2614 = vadd.f32 %v2518, %v2551
        %v2615 = vadd.f32 %v2519, %v2552
        %v2616 = vadd.f32 %v2520, %v2553
        %v2617 = vadd.f32 %v2521, %v2554
        %v2618 = vadd.f32 %v2522, %v2555
        %v2619 = vadd.f32 %v2523, %v2556
        %v2620 = vadd.f32 %v2524, %v2557
        %v2621 = vadd.f32 %v2525, %v2558
        %v2622 = vadd.f32 %v2526, %v2559
        %v2623 = vadd.f32 %v2527, %v2560
        %v2624 = vadd.f32 %v2528, %v2561
        %v2625 = vadd.f32 %v2529, %v2562
        %v2626 = vadd.f32 %v2530, %v2563
        %v2627 = vadd.f32 %v2531, %v2564
        %v2628 = vadd.f32 %v2532, %v2597
        %v2629 = vadd.f32 %v2533, %v2597
        %v2630 = vld [vmem:[%s7] sm:$0xff]
        %v2631 = vld [vmem:[%s8] sm:$0xff]
        %2633 = vset.pattern.permute.xlu0 0
        %2634 = vperm.xlu0 %2633, %v2631
        %v2635 = vpop.permute.xlu0 %2634
        %v2638 = vsel %vm733, %v2630, 0
        %2640 = vmatpush.msra.mxu0 0.0
        %2641 = vmatpush.msra.mxu0 0.0
        %2642 = vmatpush.msra.mxu0 0.0
        %2643 = vmatpush.msra.mxu0 0.0
        %2644 = vmatpush.msra.mxu0 0.0
        %2645 = vmatpush.msra.mxu0 0.0
        %2646 = vmatpush.msra.mxu0 0.0
        %2647 = vmatpush.msra.mxu0 0.0
        %2648 = vmatpush.msra.mxu0 0.0
        %2649 = vmatpush.msra.mxu0 0.0
        %2650 = vmatpush.msra.mxu0 0.0
        %2651 = vmatpush.msra.mxu0 0.0
        %2652 = vmatpush.msra.mxu0 0.0
        %2653 = vmatpush.msra.mxu0 0.0
        %2654 = vmatpush.msra.mxu0 0.0
        %2655 = vmatpush.msra.mxu0 %v2565
        %2656 = vmatmul.f32.gmra.mxu0 %v2638
        %v2657 = vpop.f32.mrf.mxu0
        %v2658 = vadd.f32 %v2635, %v2657
        %2659 = vdwg.mxu0
        %2660 = vmatpush.msra.mxu0 0.0
        %2661 = vmatpush.msra.mxu0 0.0
        %2662 = vmatpush.msra.mxu0 0.0
        %2663 = vmatpush.msra.mxu0 0.0
        %2664 = vmatpush.msra.mxu0 0.0
        %2665 = vmatpush.msra.mxu0 0.0
        %2666 = vmatpush.msra.mxu0 0.0
        %2667 = vmatpush.msra.mxu0 0.0
        %2668 = vmatpush.msra.mxu0 0.0
        %2669 = vmatpush.msra.mxu0 0.0
        %2670 = vmatpush.msra.mxu0 0.0
        %2671 = vmatpush.msra.mxu0 0.0
        %2672 = vmatpush.msra.mxu0 0.0
        %2673 = vmatpush.msra.mxu0 0.0
        %2674 = vmatpush.msra.mxu0 0.0
        %2675 = vmatpush.msra.mxu0 %v2598
        %2676 = vmatmul.f32.gmra.mxu0 %v2638
        %v2677 = vpop.f32.mrf.mxu0
        %v2678 = vadd.f32 %v2635, %v2677
        %2679 = vdwg.mxu0
        %2680 = vmatpush.msra.mxu0 0.0
        %2681 = vmatpush.msra.mxu0 0.0
        %2682 = vmatpush.msra.mxu0 0.0
        %2683 = vmatpush.msra.mxu0 0.0
        %2684 = vmatpush.msra.mxu0 0.0
        %2685 = vmatpush.msra.mxu0 0.0
        %2686 = vmatpush.msra.mxu0 0.0
        %2687 = vmatpush.msra.mxu0 0.0
        %2688 = vmatpush.msra.mxu0 0.0
        %2689 = vmatpush.msra.mxu0 0.0
        %2690 = vmatpush.msra.mxu0 0.0
        %2691 = vmatpush.msra.mxu0 0.0
        %2692 = vmatpush.msra.mxu0 0.0
        %2693 = vmatpush.msra.mxu0 0.0
        %2694 = vmatpush.msra.mxu0 0.0
        %2695 = vmatpush.msra.mxu0 %v2566
        %2696 = vmatmul.f32.gmra.mxu0 %v2638
        %v2697 = vpop.f32.mrf.mxu0
        %v2698 = vadd.f32 %v2635, %v2697
        %2699 = vdwg.mxu0
        %2700 = vmatpush.msra.mxu0 0.0
        %2701 = vmatpush.msra.mxu0 0.0
        %2702 = vmatpush.msra.mxu0 0.0
        %2703 = vmatpush.msra.mxu0 0.0
        %2704 = vmatpush.msra.mxu0 0.0
        %2705 = vmatpush.msra.mxu0 0.0
        %2706 = vmatpush.msra.mxu0 0.0
        %2707 = vmatpush.msra.mxu0 0.0
        %2708 = vmatpush.msra.mxu0 0.0
        %2709 = vmatpush.msra.mxu0 0.0
        %2710 = vmatpush.msra.mxu0 0.0
        %2711 = vmatpush.msra.mxu0 0.0
        %2712 = vmatpush.msra.mxu0 0.0
        %2713 = vmatpush.msra.mxu0 0.0
        %2714 = vmatpush.msra.mxu0 0.0
        %2715 = vmatpush.msra.mxu0 %v2599
        %2716 = vmatmul.f32.gmra.mxu0 %v2638
        %v2717 = vpop.f32.mrf.mxu0
        %v2718 = vadd.f32 %v2635, %v2717
        %2719 = vdwg.mxu0
        %2720 = vmatpush.msra.mxu0 0.0
        %2721 = vmatpush.msra.mxu0 0.0
        %2722 = vmatpush.msra.mxu0 0.0
        %2723 = vmatpush.msra.mxu0 0.0
        %2724 = vmatpush.msra.mxu0 0.0
        %2725 = vmatpush.msra.mxu0 0.0
        %2726 = vmatpush.msra.mxu0 0.0
        %2727 = vmatpush.msra.mxu0 0.0
        %2728 = vmatpush.msra.mxu0 0.0
        %2729 = vmatpush.msra.mxu0 0.0
        %2730 = vmatpush.msra.mxu0 0.0
        %2731 = vmatpush.msra.mxu0 0.0
        %2732 = vmatpush.msra.mxu0 0.0
        %2733 = vmatpush.msra.mxu0 0.0
        %2734 = vmatpush.msra.mxu0 0.0
        %2735 = vmatpush.msra.mxu0 %v2567
        %2736 = vmatmul.f32.gmra.mxu0 %v2638
        %v2737 = vpop.f32.mrf.mxu0
        %v2738 = vadd.f32 %v2635, %v2737
        %2739 = vdwg.mxu0
        %2740 = vmatpush.msra.mxu0 0.0
        %2741 = vmatpush.msra.mxu0 0.0
        %2742 = vmatpush.msra.mxu0 0.0
        %2743 = vmatpush.msra.mxu0 0.0
        %2744 = vmatpush.msra.mxu0 0.0
        %2745 = vmatpush.msra.mxu0 0.0
        %2746 = vmatpush.msra.mxu0 0.0
        %2747 = vmatpush.msra.mxu0 0.0
        %2748 = vmatpush.msra.mxu0 0.0
        %2749 = vmatpush.msra.mxu0 0.0
        %2750 = vmatpush.msra.mxu0 0.0
        %2751 = vmatpush.msra.mxu0 0.0
        %2752 = vmatpush.msra.mxu0 0.0
        %2753 = vmatpush.msra.mxu0 0.0
        %2754 = vmatpush.msra.mxu0 0.0
        %2755 = vmatpush.msra.mxu0 %v2600
        %2756 = vmatmul.f32.gmra.mxu0 %v2638
        %v2757 = vpop.f32.mrf.mxu0
        %v2758 = vadd.f32 %v2635, %v2757
        %2759 = vdwg.mxu0
        %2760 = vmatpush.msra.mxu0 0.0
        %2761 = vmatpush.msra.mxu0 0.0
        %2762 = vmatpush.msra.mxu0 0.0
        %2763 = vmatpush.msra.mxu0 0.0
        %2764 = vmatpush.msra.mxu0 0.0
        %2765 = vmatpush.msra.mxu0 0.0
        %2766 = vmatpush.msra.mxu0 0.0
        %2767 = vmatpush.msra.mxu0 0.0
        %2768 = vmatpush.msra.mxu0 0.0
        %2769 = vmatpush.msra.mxu0 0.0
        %2770 = vmatpush.msra.mxu0 0.0
        %2771 = vmatpush.msra.mxu0 0.0
        %2772 = vmatpush.msra.mxu0 0.0
        %2773 = vmatpush.msra.mxu0 0.0
        %2774 = vmatpush.msra.mxu0 0.0
        %2775 = vmatpush.msra.mxu0 %v2568
        %2776 = vmatmul.f32.gmra.mxu0 %v2638
        %v2777 = vpop.f32.mrf.mxu0
        %v2778 = vadd.f32 %v2635, %v2777
        %2779 = vdwg.mxu0
        %2780 = vmatpush.msra.mxu0 0.0
        %2781 = vmatpush.msra.mxu0 0.0
        %2782 = vmatpush.msra.mxu0 0.0
        %2783 = vmatpush.msra.mxu0 0.0
        %2784 = vmatpush.msra.mxu0 0.0
        %2785 = vmatpush.msra.mxu0 0.0
        %2786 = vmatpush.msra.mxu0 0.0
        %2787 = vmatpush.msra.mxu0 0.0
        %2788 = vmatpush.msra.mxu0 0.0
        %2789 = vmatpush.msra.mxu0 0.0
        %2790 = vmatpush.msra.mxu0 0.0
        %2791 = vmatpush.msra.mxu0 0.0
        %2792 = vmatpush.msra.mxu0 0.0
        %2793 = vmatpush.msra.mxu0 0.0
        %2794 = vmatpush.msra.mxu0 0.0
        %2795 = vmatpush.msra.mxu0 %v2601
        %2796 = vmatmul.f32.gmra.mxu0 %v2638
        %v2797 = vpop.f32.mrf.mxu0
        %v2798 = vadd.f32 %v2635, %v2797
        %2799 = vdwg.mxu0
        %2800 = vmatpush.msra.mxu0 0.0
        %2801 = vmatpush.msra.mxu0 0.0
        %2802 = vmatpush.msra.mxu0 0.0
        %2803 = vmatpush.msra.mxu0 0.0
        %2804 = vmatpush.msra.mxu0 0.0
        %2805 = vmatpush.msra.mxu0 0.0
        %2806 = vmatpush.msra.mxu0 0.0
        %2807 = vmatpush.msra.mxu0 0.0
        %2808 = vmatpush.msra.mxu0 0.0
        %2809 = vmatpush.msra.mxu0 0.0
        %2810 = vmatpush.msra.mxu0 0.0
        %2811 = vmatpush.msra.mxu0 0.0
        %2812 = vmatpush.msra.mxu0 0.0
        %2813 = vmatpush.msra.mxu0 0.0
        %2814 = vmatpush.msra.mxu0 0.0
        %2815 = vmatpush.msra.mxu0 %v2569
        %2816 = vmatmul.f32.gmra.mxu0 %v2638
        %v2817 = vpop.f32.mrf.mxu0
        %v2818 = vadd.f32 %v2635, %v2817
        %2819 = vdwg.mxu0
        %2820 = vmatpush.msra.mxu0 0.0
        %2821 = vmatpush.msra.mxu0 0.0
        %2822 = vmatpush.msra.mxu0 0.0
        %2823 = vmatpush.msra.mxu0 0.0
        %2824 = vmatpush.msra.mxu0 0.0
        %2825 = vmatpush.msra.mxu0 0.0
        %2826 = vmatpush.msra.mxu0 0.0
        %2827 = vmatpush.msra.mxu0 0.0
        %2828 = vmatpush.msra.mxu0 0.0
        %2829 = vmatpush.msra.mxu0 0.0
        %2830 = vmatpush.msra.mxu0 0.0
        %2831 = vmatpush.msra.mxu0 0.0
        %2832 = vmatpush.msra.mxu0 0.0
        %2833 = vmatpush.msra.mxu0 0.0
        %2834 = vmatpush.msra.mxu0 0.0
        %2835 = vmatpush.msra.mxu0 %v2602
        %2836 = vmatmul.f32.gmra.mxu0 %v2638
        %v2837 = vpop.f32.mrf.mxu0
        %v2838 = vadd.f32 %v2635, %v2837
        %2839 = vdwg.mxu0
        %2840 = vmatpush.msra.mxu0 0.0
        %2841 = vmatpush.msra.mxu0 0.0
        %2842 = vmatpush.msra.mxu0 0.0
        %2843 = vmatpush.msra.mxu0 0.0
        %2844 = vmatpush.msra.mxu0 0.0
        %2845 = vmatpush.msra.mxu0 0.0
        %2846 = vmatpush.msra.mxu0 0.0
        %2847 = vmatpush.msra.mxu0 0.0
        %2848 = vmatpush.msra.mxu0 0.0
        %2849 = vmatpush.msra.mxu0 0.0
        %2850 = vmatpush.msra.mxu0 0.0
        %2851 = vmatpush.msra.mxu0 0.0
        %2852 = vmatpush.msra.mxu0 0.0
        %2853 = vmatpush.msra.mxu0 0.0
        %2854 = vmatpush.msra.mxu0 0.0
        %2855 = vmatpush.msra.mxu0 %v2570
        %2856 = vmatmul.f32.gmra.mxu0 %v2638
        %v2857 = vpop.f32.mrf.mxu0
        %v2858 = vadd.f32 %v2635, %v2857
        %2859 = vdwg.mxu0
        %2860 = vmatpush.msra.mxu0 0.0
        %2861 = vmatpush.msra.mxu0 0.0
        %2862 = vmatpush.msra.mxu0 0.0
        %2863 = vmatpush.msra.mxu0 0.0
        %2864 = vmatpush.msra.mxu0 0.0
        %2865 = vmatpush.msra.mxu0 0.0
        %2866 = vmatpush.msra.mxu0 0.0
        %2867 = vmatpush.msra.mxu0 0.0
        %2868 = vmatpush.msra.mxu0 0.0
        %2869 = vmatpush.msra.mxu0 0.0
        %2870 = vmatpush.msra.mxu0 0.0
        %2871 = vmatpush.msra.mxu0 0.0
        %2872 = vmatpush.msra.mxu0 0.0
        %2873 = vmatpush.msra.mxu0 0.0
        %2874 = vmatpush.msra.mxu0 0.0
        %2875 = vmatpush.msra.mxu0 %v2603
        %2876 = vmatmul.f32.gmra.mxu0 %v2638
        %v2877 = vpop.f32.mrf.mxu0
        %v2878 = vadd.f32 %v2635, %v2877
        %2879 = vdwg.mxu0
        %2880 = vmatpush.msra.mxu0 0.0
        %2881 = vmatpush.msra.mxu0 0.0
        %2882 = vmatpush.msra.mxu0 0.0
        %2883 = vmatpush.msra.mxu0 0.0
        %2884 = vmatpush.msra.mxu0 0.0
        %2885 = vmatpush.msra.mxu0 0.0
        %2886 = vmatpush.msra.mxu0 0.0
        %2887 = vmatpush.msra.mxu0 0.0
        %2888 = vmatpush.msra.mxu0 0.0
        %2889 = vmatpush.msra.mxu0 0.0
        %2890 = vmatpush.msra.mxu0 0.0
        %2891 = vmatpush.msra.mxu0 0.0
        %2892 = vmatpush.msra.mxu0 0.0
        %2893 = vmatpush.msra.mxu0 0.0
        %2894 = vmatpush.msra.mxu0 0.0
        %2895 = vmatpush.msra.mxu0 %v2571
        %2896 = vmatmul.f32.gmra.mxu0 %v2638
        %v2897 = vpop.f32.mrf.mxu0
        %v2898 = vadd.f32 %v2635, %v2897
        %2899 = vdwg.mxu0
        %2900 = vmatpush.msra.mxu0 0.0
        %2901 = vmatpush.msra.mxu0 0.0
        %2902 = vmatpush.msra.mxu0 0.0
        %2903 = vmatpush.msra.mxu0 0.0
        %2904 = vmatpush.msra.mxu0 0.0
        %2905 = vmatpush.msra.mxu0 0.0
        %2906 = vmatpush.msra.mxu0 0.0
        %2907 = vmatpush.msra.mxu0 0.0
        %2908 = vmatpush.msra.mxu0 0.0
        %2909 = vmatpush.msra.mxu0 0.0
        %2910 = vmatpush.msra.mxu0 0.0
        %2911 = vmatpush.msra.mxu0 0.0
        %2912 = vmatpush.msra.mxu0 0.0
        %2913 = vmatpush.msra.mxu0 0.0
        %2914 = vmatpush.msra.mxu0 0.0
        %2915 = vmatpush.msra.mxu0 %v2604
        %2916 = vmatmul.f32.gmra.mxu0 %v2638
        %v2917 = vpop.f32.mrf.mxu0
        %v2918 = vadd.f32 %v2635, %v2917
        %2919 = vdwg.mxu0
        %2920 = vmatpush.msra.mxu0 0.0
        %2921 = vmatpush.msra.mxu0 0.0
        %2922 = vmatpush.msra.mxu0 0.0
        %2923 = vmatpush.msra.mxu0 0.0
        %2924 = vmatpush.msra.mxu0 0.0
        %2925 = vmatpush.msra.mxu0 0.0
        %2926 = vmatpush.msra.mxu0 0.0
        %2927 = vmatpush.msra.mxu0 0.0
        %2928 = vmatpush.msra.mxu0 0.0
        %2929 = vmatpush.msra.mxu0 0.0
        %2930 = vmatpush.msra.mxu0 0.0
        %2931 = vmatpush.msra.mxu0 0.0
        %2932 = vmatpush.msra.mxu0 0.0
        %2933 = vmatpush.msra.mxu0 0.0
        %2934 = vmatpush.msra.mxu0 0.0
        %2935 = vmatpush.msra.mxu0 %v2572
        %2936 = vmatmul.f32.gmra.mxu0 %v2638
        %v2937 = vpop.f32.mrf.mxu0
        %v2938 = vadd.f32 %v2635, %v2937
        %2939 = vdwg.mxu0
        %2940 = vmatpush.msra.mxu0 0.0
        %2941 = vmatpush.msra.mxu0 0.0
        %2942 = vmatpush.msra.mxu0 0.0
        %2943 = vmatpush.msra.mxu0 0.0
        %2944 = vmatpush.msra.mxu0 0.0
        %2945 = vmatpush.msra.mxu0 0.0
        %2946 = vmatpush.msra.mxu0 0.0
        %2947 = vmatpush.msra.mxu0 0.0
        %2948 = vmatpush.msra.mxu0 0.0
        %2949 = vmatpush.msra.mxu0 0.0
        %2950 = vmatpush.msra.mxu0 0.0
        %2951 = vmatpush.msra.mxu0 0.0
        %2952 = vmatpush.msra.mxu0 0.0
        %2953 = vmatpush.msra.mxu0 0.0
        %2954 = vmatpush.msra.mxu0 0.0
        %2955 = vmatpush.msra.mxu0 %v2605
        %2956 = vmatmul.f32.gmra.mxu0 %v2638
        %v2957 = vpop.f32.mrf.mxu0
        %v2958 = vadd.f32 %v2635, %v2957
        %2959 = vdwg.mxu0
        %2960 = vmatpush.msra.mxu0 0.0
        %2961 = vmatpush.msra.mxu0 0.0
        %2962 = vmatpush.msra.mxu0 0.0
        %2963 = vmatpush.msra.mxu0 0.0
        %2964 = vmatpush.msra.mxu0 0.0
        %2965 = vmatpush.msra.mxu0 0.0
        %2966 = vmatpush.msra.mxu0 0.0
        %2967 = vmatpush.msra.mxu0 0.0
        %2968 = vmatpush.msra.mxu0 0.0
        %2969 = vmatpush.msra.mxu0 0.0
        %2970 = vmatpush.msra.mxu0 0.0
        %2971 = vmatpush.msra.mxu0 0.0
        %2972 = vmatpush.msra.mxu0 0.0
        %2973 = vmatpush.msra.mxu0 0.0
        %2974 = vmatpush.msra.mxu0 0.0
        %2975 = vmatpush.msra.mxu0 %v2573
        %2976 = vmatmul.f32.gmra.mxu0 %v2638
        %v2977 = vpop.f32.mrf.mxu0
        %v2978 = vadd.f32 %v2635, %v2977
        %2979 = vdwg.mxu0
        %2980 = vmatpush.msra.mxu0 0.0
        %2981 = vmatpush.msra.mxu0 0.0
        %2982 = vmatpush.msra.mxu0 0.0
        %2983 = vmatpush.msra.mxu0 0.0
        %2984 = vmatpush.msra.mxu0 0.0
        %2985 = vmatpush.msra.mxu0 0.0
        %2986 = vmatpush.msra.mxu0 0.0
        %2987 = vmatpush.msra.mxu0 0.0
        %2988 = vmatpush.msra.mxu0 0.0
        %2989 = vmatpush.msra.mxu0 0.0
        %2990 = vmatpush.msra.mxu0 0.0
        %2991 = vmatpush.msra.mxu0 0.0
        %2992 = vmatpush.msra.mxu0 0.0
        %2993 = vmatpush.msra.mxu0 0.0
        %2994 = vmatpush.msra.mxu0 0.0
        %2995 = vmatpush.msra.mxu0 %v2606
        %2996 = vmatmul.f32.gmra.mxu0 %v2638
        %v2997 = vpop.f32.mrf.mxu0
        %v2998 = vadd.f32 %v2635, %v2997
        %2999 = vdwg.mxu0
        %3000 = vmatpush.msra.mxu0 0.0
        %3001 = vmatpush.msra.mxu0 0.0
        %3002 = vmatpush.msra.mxu0 0.0
        %3003 = vmatpush.msra.mxu0 0.0
        %3004 = vmatpush.msra.mxu0 0.0
        %3005 = vmatpush.msra.mxu0 0.0
        %3006 = vmatpush.msra.mxu0 0.0
        %3007 = vmatpush.msra.mxu0 0.0
        %3008 = vmatpush.msra.mxu0 0.0
        %3009 = vmatpush.msra.mxu0 0.0
        %3010 = vmatpush.msra.mxu0 0.0
        %3011 = vmatpush.msra.mxu0 0.0
        %3012 = vmatpush.msra.mxu0 0.0
        %3013 = vmatpush.msra.mxu0 0.0
        %3014 = vmatpush.msra.mxu0 0.0
        %3015 = vmatpush.msra.mxu0 %v2574
        %3016 = vmatmul.f32.gmra.mxu0 %v2638
        %v3017 = vpop.f32.mrf.mxu0
        %v3018 = vadd.f32 %v2635, %v3017
        %3019 = vdwg.mxu0
        %3020 = vmatpush.msra.mxu0 0.0
        %3021 = vmatpush.msra.mxu0 0.0
        %3022 = vmatpush.msra.mxu0 0.0
        %3023 = vmatpush.msra.mxu0 0.0
        %3024 = vmatpush.msra.mxu0 0.0
        %3025 = vmatpush.msra.mxu0 0.0
        %3026 = vmatpush.msra.mxu0 0.0
        %3027 = vmatpush.msra.mxu0 0.0
        %3028 = vmatpush.msra.mxu0 0.0
        %3029 = vmatpush.msra.mxu0 0.0
        %3030 = vmatpush.msra.mxu0 0.0
        %3031 = vmatpush.msra.mxu0 0.0
        %3032 = vmatpush.msra.mxu0 0.0
        %3033 = vmatpush.msra.mxu0 0.0
        %3034 = vmatpush.msra.mxu0 0.0
        %3035 = vmatpush.msra.mxu0 %v2607
        %3036 = vmatmul.f32.gmra.mxu0 %v2638
        %v3037 = vpop.f32.mrf.mxu0
        %v3038 = vadd.f32 %v2635, %v3037
        %3039 = vdwg.mxu0
        %3040 = vmatpush.msra.mxu0 0.0
        %3041 = vmatpush.msra.mxu0 0.0
        %3042 = vmatpush.msra.mxu0 0.0
        %3043 = vmatpush.msra.mxu0 0.0
        %3044 = vmatpush.msra.mxu0 0.0
        %3045 = vmatpush.msra.mxu0 0.0
        %3046 = vmatpush.msra.mxu0 0.0
        %3047 = vmatpush.msra.mxu0 0.0
        %3048 = vmatpush.msra.mxu0 0.0
        %3049 = vmatpush.msra.mxu0 0.0
        %3050 = vmatpush.msra.mxu0 0.0
        %3051 = vmatpush.msra.mxu0 0.0
        %3052 = vmatpush.msra.mxu0 0.0
        %3053 = vmatpush.msra.mxu0 0.0
        %3054 = vmatpush.msra.mxu0 0.0
        %3055 = vmatpush.msra.mxu0 %v2575
        %3056 = vmatmul.f32.gmra.mxu0 %v2638
        %v3057 = vpop.f32.mrf.mxu0
        %v3058 = vadd.f32 %v2635, %v3057
        %3059 = vdwg.mxu0
        %3060 = vmatpush.msra.mxu0 0.0
        %3061 = vmatpush.msra.mxu0 0.0
        %3062 = vmatpush.msra.mxu0 0.0
        %3063 = vmatpush.msra.mxu0 0.0
        %3064 = vmatpush.msra.mxu0 0.0
        %3065 = vmatpush.msra.mxu0 0.0
        %3066 = vmatpush.msra.mxu0 0.0
        %3067 = vmatpush.msra.mxu0 0.0
        %3068 = vmatpush.msra.mxu0 0.0
        %3069 = vmatpush.msra.mxu0 0.0
        %3070 = vmatpush.msra.mxu0 0.0
        %3071 = vmatpush.msra.mxu0 0.0
        %3072 = vmatpush.msra.mxu0 0.0
        %3073 = vmatpush.msra.mxu0 0.0
        %3074 = vmatpush.msra.mxu0 0.0
        %3075 = vmatpush.msra.mxu0 %v2608
        %3076 = vmatmul.f32.gmra.mxu0 %v2638
        %v3077 = vpop.f32.mrf.mxu0
        %v3078 = vadd.f32 %v2635, %v3077
        %3079 = vdwg.mxu0
        %3080 = vmatpush.msra.mxu0 0.0
        %3081 = vmatpush.msra.mxu0 0.0
        %3082 = vmatpush.msra.mxu0 0.0
        %3083 = vmatpush.msra.mxu0 0.0
        %3084 = vmatpush.msra.mxu0 0.0
        %3085 = vmatpush.msra.mxu0 0.0
        %3086 = vmatpush.msra.mxu0 0.0
        %3087 = vmatpush.msra.mxu0 0.0
        %3088 = vmatpush.msra.mxu0 0.0
        %3089 = vmatpush.msra.mxu0 0.0
        %3090 = vmatpush.msra.mxu0 0.0
        %3091 = vmatpush.msra.mxu0 0.0
        %3092 = vmatpush.msra.mxu0 0.0
        %3093 = vmatpush.msra.mxu0 0.0
        %3094 = vmatpush.msra.mxu0 0.0
        %3095 = vmatpush.msra.mxu0 %v2576
        %3096 = vmatmul.f32.gmra.mxu0 %v2638
        %v3097 = vpop.f32.mrf.mxu0
        %v3098 = vadd.f32 %v2635, %v3097
        %3099 = vdwg.mxu0
        %3100 = vmatpush.msra.mxu0 0.0
        %3101 = vmatpush.msra.mxu0 0.0
        %3102 = vmatpush.msra.mxu0 0.0
        %3103 = vmatpush.msra.mxu0 0.0
        %3104 = vmatpush.msra.mxu0 0.0
        %3105 = vmatpush.msra.mxu0 0.0
        %3106 = vmatpush.msra.mxu0 0.0
        %3107 = vmatpush.msra.mxu0 0.0
        %3108 = vmatpush.msra.mxu0 0.0
        %3109 = vmatpush.msra.mxu0 0.0
        %3110 = vmatpush.msra.mxu0 0.0
        %3111 = vmatpush.msra.mxu0 0.0
        %3112 = vmatpush.msra.mxu0 0.0
        %3113 = vmatpush.msra.mxu0 0.0
        %3114 = vmatpush.msra.mxu0 0.0
        %3115 = vmatpush.msra.mxu0 %v2609
        %3116 = vmatmul.f32.gmra.mxu0 %v2638
        %v3117 = vpop.f32.mrf.mxu0
        %v3118 = vadd.f32 %v2635, %v3117
        %3119 = vdwg.mxu0
        %3120 = vmatpush.msra.mxu0 0.0
        %3121 = vmatpush.msra.mxu0 0.0
        %3122 = vmatpush.msra.mxu0 0.0
        %3123 = vmatpush.msra.mxu0 0.0
        %3124 = vmatpush.msra.mxu0 0.0
        %3125 = vmatpush.msra.mxu0 0.0
        %3126 = vmatpush.msra.mxu0 0.0
        %3127 = vmatpush.msra.mxu0 0.0
        %3128 = vmatpush.msra.mxu0 0.0
        %3129 = vmatpush.msra.mxu0 0.0
        %3130 = vmatpush.msra.mxu0 0.0
        %3131 = vmatpush.msra.mxu0 0.0
        %3132 = vmatpush.msra.mxu0 0.0
        %3133 = vmatpush.msra.mxu0 0.0
        %3134 = vmatpush.msra.mxu0 0.0
        %3135 = vmatpush.msra.mxu0 %v2577
        %3136 = vmatmul.f32.gmra.mxu0 %v2638
        %v3137 = vpop.f32.mrf.mxu0
        %v3138 = vadd.f32 %v2635, %v3137
        %3139 = vdwg.mxu0
        %3140 = vmatpush.msra.mxu0 0.0
        %3141 = vmatpush.msra.mxu0 0.0
        %3142 = vmatpush.msra.mxu0 0.0
        %3143 = vmatpush.msra.mxu0 0.0
        %3144 = vmatpush.msra.mxu0 0.0
        %3145 = vmatpush.msra.mxu0 0.0
        %3146 = vmatpush.msra.mxu0 0.0
        %3147 = vmatpush.msra.mxu0 0.0
        %3148 = vmatpush.msra.mxu0 0.0
        %3149 = vmatpush.msra.mxu0 0.0
        %3150 = vmatpush.msra.mxu0 0.0
        %3151 = vmatpush.msra.mxu0 0.0
        %3152 = vmatpush.msra.mxu0 0.0
        %3153 = vmatpush.msra.mxu0 0.0
        %3154 = vmatpush.msra.mxu0 0.0
        %3155 = vmatpush.msra.mxu0 %v2610
        %3156 = vmatmul.f32.gmra.mxu0 %v2638
        %v3157 = vpop.f32.mrf.mxu0
        %v3158 = vadd.f32 %v2635, %v3157
        %3159 = vdwg.mxu0
        %3160 = vmatpush.msra.mxu0 0.0
        %3161 = vmatpush.msra.mxu0 0.0
        %3162 = vmatpush.msra.mxu0 0.0
        %3163 = vmatpush.msra.mxu0 0.0
        %3164 = vmatpush.msra.mxu0 0.0
        %3165 = vmatpush.msra.mxu0 0.0
        %3166 = vmatpush.msra.mxu0 0.0
        %3167 = vmatpush.msra.mxu0 0.0
        %3168 = vmatpush.msra.mxu0 0.0
        %3169 = vmatpush.msra.mxu0 0.0
        %3170 = vmatpush.msra.mxu0 0.0
        %3171 = vmatpush.msra.mxu0 0.0
        %3172 = vmatpush.msra.mxu0 0.0
        %3173 = vmatpush.msra.mxu0 0.0
        %3174 = vmatpush.msra.mxu0 0.0
        %3175 = vmatpush.msra.mxu0 %v2578
        %3176 = vmatmul.f32.gmra.mxu0 %v2638
        %v3177 = vpop.f32.mrf.mxu0
        %v3178 = vadd.f32 %v2635, %v3177
        %3179 = vdwg.mxu0
        %3180 = vmatpush.msra.mxu0 0.0
        %3181 = vmatpush.msra.mxu0 0.0
        %3182 = vmatpush.msra.mxu0 0.0
        %3183 = vmatpush.msra.mxu0 0.0
        %3184 = vmatpush.msra.mxu0 0.0
        %3185 = vmatpush.msra.mxu0 0.0
        %3186 = vmatpush.msra.mxu0 0.0
        %3187 = vmatpush.msra.mxu0 0.0
        %3188 = vmatpush.msra.mxu0 0.0
        %3189 = vmatpush.msra.mxu0 0.0
        %3190 = vmatpush.msra.mxu0 0.0
        %3191 = vmatpush.msra.mxu0 0.0
        %3192 = vmatpush.msra.mxu0 0.0
        %3193 = vmatpush.msra.mxu0 0.0
        %3194 = vmatpush.msra.mxu0 0.0
        %3195 = vmatpush.msra.mxu0 %v2611
        %3196 = vmatmul.f32.gmra.mxu0 %v2638
        %v3197 = vpop.f32.mrf.mxu0
        %v3198 = vadd.f32 %v2635, %v3197
        %3199 = vdwg.mxu0
        %3200 = vmatpush.msra.mxu0 0.0
        %3201 = vmatpush.msra.mxu0 0.0
        %3202 = vmatpush.msra.mxu0 0.0
        %3203 = vmatpush.msra.mxu0 0.0
        %3204 = vmatpush.msra.mxu0 0.0
        %3205 = vmatpush.msra.mxu0 0.0
        %3206 = vmatpush.msra.mxu0 0.0
        %3207 = vmatpush.msra.mxu0 0.0
        %3208 = vmatpush.msra.mxu0 0.0
        %3209 = vmatpush.msra.mxu0 0.0
        %3210 = vmatpush.msra.mxu0 0.0
        %3211 = vmatpush.msra.mxu0 0.0
        %3212 = vmatpush.msra.mxu0 0.0
        %3213 = vmatpush.msra.mxu0 0.0
        %3214 = vmatpush.msra.mxu0 0.0
        %3215 = vmatpush.msra.mxu0 %v2579
        %3216 = vmatmul.f32.gmra.mxu0 %v2638
        %v3217 = vpop.f32.mrf.mxu0
        %v3218 = vadd.f32 %v2635, %v3217
        %3219 = vdwg.mxu0
        %3220 = vmatpush.msra.mxu0 0.0
        %3221 = vmatpush.msra.mxu0 0.0
        %3222 = vmatpush.msra.mxu0 0.0
        %3223 = vmatpush.msra.mxu0 0.0
        %3224 = vmatpush.msra.mxu0 0.0
        %3225 = vmatpush.msra.mxu0 0.0
        %3226 = vmatpush.msra.mxu0 0.0
        %3227 = vmatpush.msra.mxu0 0.0
        %3228 = vmatpush.msra.mxu0 0.0
        %3229 = vmatpush.msra.mxu0 0.0
        %3230 = vmatpush.msra.mxu0 0.0
        %3231 = vmatpush.msra.mxu0 0.0
        %3232 = vmatpush.msra.mxu0 0.0
        %3233 = vmatpush.msra.mxu0 0.0
        %3234 = vmatpush.msra.mxu0 0.0
        %3235 = vmatpush.msra.mxu0 %v2612
        %3236 = vmatmul.f32.gmra.mxu0 %v2638
        %v3237 = vpop.f32.mrf.mxu0
        %v3238 = vadd.f32 %v2635, %v3237
        %3239 = vdwg.mxu0
        %3240 = vmatpush.msra.mxu0 0.0
        %3241 = vmatpush.msra.mxu0 0.0
        %3242 = vmatpush.msra.mxu0 0.0
        %3243 = vmatpush.msra.mxu0 0.0
        %3244 = vmatpush.msra.mxu0 0.0
        %3245 = vmatpush.msra.mxu0 0.0
        %3246 = vmatpush.msra.mxu0 0.0
        %3247 = vmatpush.msra.mxu0 0.0
        %3248 = vmatpush.msra.mxu0 0.0
        %3249 = vmatpush.msra.mxu0 0.0
        %3250 = vmatpush.msra.mxu0 0.0
        %3251 = vmatpush.msra.mxu0 0.0
        %3252 = vmatpush.msra.mxu0 0.0
        %3253 = vmatpush.msra.mxu0 0.0
        %3254 = vmatpush.msra.mxu0 0.0
        %3255 = vmatpush.msra.mxu0 %v2580
        %3256 = vmatmul.f32.gmra.mxu0 %v2638
        %v3257 = vpop.f32.mrf.mxu0
        %v3258 = vadd.f32 %v2635, %v3257
        %3259 = vdwg.mxu0
        %3260 = vmatpush.msra.mxu0 0.0
        %3261 = vmatpush.msra.mxu0 0.0
        %3262 = vmatpush.msra.mxu0 0.0
        %3263 = vmatpush.msra.mxu0 0.0
        %3264 = vmatpush.msra.mxu0 0.0
        %3265 = vmatpush.msra.mxu0 0.0
        %3266 = vmatpush.msra.mxu0 0.0
        %3267 = vmatpush.msra.mxu0 0.0
        %3268 = vmatpush.msra.mxu0 0.0
        %3269 = vmatpush.msra.mxu0 0.0
        %3270 = vmatpush.msra.mxu0 0.0
        %3271 = vmatpush.msra.mxu0 0.0
        %3272 = vmatpush.msra.mxu0 0.0
        %3273 = vmatpush.msra.mxu0 0.0
        %3274 = vmatpush.msra.mxu0 0.0
        %3275 = vmatpush.msra.mxu0 %v2613
        %3276 = vmatmul.f32.gmra.mxu0 %v2638
        %v3277 = vpop.f32.mrf.mxu0
        %v3278 = vadd.f32 %v2635, %v3277
        %3279 = vdwg.mxu0
        %3280 = vmatpush.msra.mxu0 0.0
        %3281 = vmatpush.msra.mxu0 0.0
        %3282 = vmatpush.msra.mxu0 0.0
        %3283 = vmatpush.msra.mxu0 0.0
        %3284 = vmatpush.msra.mxu0 0.0
        %3285 = vmatpush.msra.mxu0 0.0
        %3286 = vmatpush.msra.mxu0 0.0
        %3287 = vmatpush.msra.mxu0 0.0
        %3288 = vmatpush.msra.mxu0 0.0
        %3289 = vmatpush.msra.mxu0 0.0
        %3290 = vmatpush.msra.mxu0 0.0
        %3291 = vmatpush.msra.mxu0 0.0
        %3292 = vmatpush.msra.mxu0 0.0
        %3293 = vmatpush.msra.mxu0 0.0
        %3294 = vmatpush.msra.mxu0 0.0
        %3295 = vmatpush.msra.mxu0 %v2581
        %3296 = vmatmul.f32.gmra.mxu0 %v2638
        %v3297 = vpop.f32.mrf.mxu0
        %v3298 = vadd.f32 %v2635, %v3297
        %3299 = vdwg.mxu0
        %3300 = vmatpush.msra.mxu0 0.0
        %3301 = vmatpush.msra.mxu0 0.0
        %3302 = vmatpush.msra.mxu0 0.0
        %3303 = vmatpush.msra.mxu0 0.0
        %3304 = vmatpush.msra.mxu0 0.0
        %3305 = vmatpush.msra.mxu0 0.0
        %3306 = vmatpush.msra.mxu0 0.0
        %3307 = vmatpush.msra.mxu0 0.0
        %3308 = vmatpush.msra.mxu0 0.0
        %3309 = vmatpush.msra.mxu0 0.0
        %3310 = vmatpush.msra.mxu0 0.0
        %3311 = vmatpush.msra.mxu0 0.0
        %3312 = vmatpush.msra.mxu0 0.0
        %3313 = vmatpush.msra.mxu0 0.0
        %3314 = vmatpush.msra.mxu0 0.0
        %3315 = vmatpush.msra.mxu0 %v2614
        %3316 = vmatmul.f32.gmra.mxu0 %v2638
        %v3317 = vpop.f32.mrf.mxu0
        %v3318 = vadd.f32 %v2635, %v3317
        %3319 = vdwg.mxu0
        %3320 = vmatpush.msra.mxu0 0.0
        %3321 = vmatpush.msra.mxu0 0.0
        %3322 = vmatpush.msra.mxu0 0.0
        %3323 = vmatpush.msra.mxu0 0.0
        %3324 = vmatpush.msra.mxu0 0.0
        %3325 = vmatpush.msra.mxu0 0.0
        %3326 = vmatpush.msra.mxu0 0.0
        %3327 = vmatpush.msra.mxu0 0.0
        %3328 = vmatpush.msra.mxu0 0.0
        %3329 = vmatpush.msra.mxu0 0.0
        %3330 = vmatpush.msra.mxu0 0.0
        %3331 = vmatpush.msra.mxu0 0.0
        %3332 = vmatpush.msra.mxu0 0.0
        %3333 = vmatpush.msra.mxu0 0.0
        %3334 = vmatpush.msra.mxu0 0.0
        %3335 = vmatpush.msra.mxu0 %v2582
        %3336 = vmatmul.f32.gmra.mxu0 %v2638
        %v3337 = vpop.f32.mrf.mxu0
        %v3338 = vadd.f32 %v2635, %v3337
        %3339 = vdwg.mxu0
        %3340 = vmatpush.msra.mxu0 0.0
        %3341 = vmatpush.msra.mxu0 0.0
        %3342 = vmatpush.msra.mxu0 0.0
        %3343 = vmatpush.msra.mxu0 0.0
        %3344 = vmatpush.msra.mxu0 0.0
        %3345 = vmatpush.msra.mxu0 0.0
        %3346 = vmatpush.msra.mxu0 0.0
        %3347 = vmatpush.msra.mxu0 0.0
        %3348 = vmatpush.msra.mxu0 0.0
        %3349 = vmatpush.msra.mxu0 0.0
        %3350 = vmatpush.msra.mxu0 0.0
        %3351 = vmatpush.msra.mxu0 0.0
        %3352 = vmatpush.msra.mxu0 0.0
        %3353 = vmatpush.msra.mxu0 0.0
        %3354 = vmatpush.msra.mxu0 0.0
        %3355 = vmatpush.msra.mxu0 %v2615
        %3356 = vmatmul.f32.gmra.mxu0 %v2638
        %v3357 = vpop.f32.mrf.mxu0
        %v3358 = vadd.f32 %v2635, %v3357
        %3359 = vdwg.mxu0
        %3360 = vmatpush.msra.mxu0 0.0
        %3361 = vmatpush.msra.mxu0 0.0
        %3362 = vmatpush.msra.mxu0 0.0
        %3363 = vmatpush.msra.mxu0 0.0
        %3364 = vmatpush.msra.mxu0 0.0
        %3365 = vmatpush.msra.mxu0 0.0
        %3366 = vmatpush.msra.mxu0 0.0
        %3367 = vmatpush.msra.mxu0 0.0
        %3368 = vmatpush.msra.mxu0 0.0
        %3369 = vmatpush.msra.mxu0 0.0
        %3370 = vmatpush.msra.mxu0 0.0
        %3371 = vmatpush.msra.mxu0 0.0
        %3372 = vmatpush.msra.mxu0 0.0
        %3373 = vmatpush.msra.mxu0 0.0
        %3374 = vmatpush.msra.mxu0 0.0
        %3375 = vmatpush.msra.mxu0 %v2583
        %3376 = vmatmul.f32.gmra.mxu0 %v2638
        %v3377 = vpop.f32.mrf.mxu0
        %v3378 = vadd.f32 %v2635, %v3377
        %3379 = vdwg.mxu0
        %3380 = vmatpush.msra.mxu0 0.0
        %3381 = vmatpush.msra.mxu0 0.0
        %3382 = vmatpush.msra.mxu0 0.0
        %3383 = vmatpush.msra.mxu0 0.0
        %3384 = vmatpush.msra.mxu0 0.0
        %3385 = vmatpush.msra.mxu0 0.0
        %3386 = vmatpush.msra.mxu0 0.0
        %3387 = vmatpush.msra.mxu0 0.0
        %3388 = vmatpush.msra.mxu0 0.0
        %3389 = vmatpush.msra.mxu0 0.0
        %3390 = vmatpush.msra.mxu0 0.0
        %3391 = vmatpush.msra.mxu0 0.0
        %3392 = vmatpush.msra.mxu0 0.0
        %3393 = vmatpush.msra.mxu0 0.0
        %3394 = vmatpush.msra.mxu0 0.0
        %3395 = vmatpush.msra.mxu0 %v2616
        %3396 = vmatmul.f32.gmra.mxu0 %v2638
        %v3397 = vpop.f32.mrf.mxu0
        %v3398 = vadd.f32 %v2635, %v3397
        %3399 = vdwg.mxu0
        %3400 = vmatpush.msra.mxu0 0.0
        %3401 = vmatpush.msra.mxu0 0.0
        %3402 = vmatpush.msra.mxu0 0.0
        %3403 = vmatpush.msra.mxu0 0.0
        %3404 = vmatpush.msra.mxu0 0.0
        %3405 = vmatpush.msra.mxu0 0.0
        %3406 = vmatpush.msra.mxu0 0.0
        %3407 = vmatpush.msra.mxu0 0.0
        %3408 = vmatpush.msra.mxu0 0.0
        %3409 = vmatpush.msra.mxu0 0.0
        %3410 = vmatpush.msra.mxu0 0.0
        %3411 = vmatpush.msra.mxu0 0.0
        %3412 = vmatpush.msra.mxu0 0.0
        %3413 = vmatpush.msra.mxu0 0.0
        %3414 = vmatpush.msra.mxu0 0.0
        %3415 = vmatpush.msra.mxu0 %v2584
        %3416 = vmatmul.f32.gmra.mxu0 %v2638
        %v3417 = vpop.f32.mrf.mxu0
        %v3418 = vadd.f32 %v2635, %v3417
        %3419 = vdwg.mxu0
        %3420 = vmatpush.msra.mxu0 0.0
        %3421 = vmatpush.msra.mxu0 0.0
        %3422 = vmatpush.msra.mxu0 0.0
        %3423 = vmatpush.msra.mxu0 0.0
        %3424 = vmatpush.msra.mxu0 0.0
        %3425 = vmatpush.msra.mxu0 0.0
        %3426 = vmatpush.msra.mxu0 0.0
        %3427 = vmatpush.msra.mxu0 0.0
        %3428 = vmatpush.msra.mxu0 0.0
        %3429 = vmatpush.msra.mxu0 0.0
        %3430 = vmatpush.msra.mxu0 0.0
        %3431 = vmatpush.msra.mxu0 0.0
        %3432 = vmatpush.msra.mxu0 0.0
        %3433 = vmatpush.msra.mxu0 0.0
        %3434 = vmatpush.msra.mxu0 0.0
        %3435 = vmatpush.msra.mxu0 %v2617
        %3436 = vmatmul.f32.gmra.mxu0 %v2638
        %v3437 = vpop.f32.mrf.mxu0
        %v3438 = vadd.f32 %v2635, %v3437
        %3439 = vdwg.mxu0
        %3440 = vmatpush.msra.mxu0 0.0
        %3441 = vmatpush.msra.mxu0 0.0
        %3442 = vmatpush.msra.mxu0 0.0
        %3443 = vmatpush.msra.mxu0 0.0
        %3444 = vmatpush.msra.mxu0 0.0
        %3445 = vmatpush.msra.mxu0 0.0
        %3446 = vmatpush.msra.mxu0 0.0
        %3447 = vmatpush.msra.mxu0 0.0
        %3448 = vmatpush.msra.mxu0 0.0
        %3449 = vmatpush.msra.mxu0 0.0
        %3450 = vmatpush.msra.mxu0 0.0
        %3451 = vmatpush.msra.mxu0 0.0
        %3452 = vmatpush.msra.mxu0 0.0
        %3453 = vmatpush.msra.mxu0 0.0
        %3454 = vmatpush.msra.mxu0 0.0
        %3455 = vmatpush.msra.mxu0 %v2585
        %3456 = vmatmul.f32.gmra.mxu0 %v2638
        %v3457 = vpop.f32.mrf.mxu0
        %v3458 = vadd.f32 %v2635, %v3457
        %3459 = vdwg.mxu0
        %3460 = vmatpush.msra.mxu0 0.0
        %3461 = vmatpush.msra.mxu0 0.0
        %3462 = vmatpush.msra.mxu0 0.0
        %3463 = vmatpush.msra.mxu0 0.0
        %3464 = vmatpush.msra.mxu0 0.0
        %3465 = vmatpush.msra.mxu0 0.0
        %3466 = vmatpush.msra.mxu0 0.0
        %3467 = vmatpush.msra.mxu0 0.0
        %3468 = vmatpush.msra.mxu0 0.0
        %3469 = vmatpush.msra.mxu0 0.0
        %3470 = vmatpush.msra.mxu0 0.0
        %3471 = vmatpush.msra.mxu0 0.0
        %3472 = vmatpush.msra.mxu0 0.0
        %3473 = vmatpush.msra.mxu0 0.0
        %3474 = vmatpush.msra.mxu0 0.0
        %3475 = vmatpush.msra.mxu0 %v2618
        %3476 = vmatmul.f32.gmra.mxu0 %v2638
        %v3477 = vpop.f32.mrf.mxu0
        %v3478 = vadd.f32 %v2635, %v3477
        %3479 = vdwg.mxu0
        %3480 = vmatpush.msra.mxu0 0.0
        %3481 = vmatpush.msra.mxu0 0.0
        %3482 = vmatpush.msra.mxu0 0.0
        %3483 = vmatpush.msra.mxu0 0.0
        %3484 = vmatpush.msra.mxu0 0.0
        %3485 = vmatpush.msra.mxu0 0.0
        %3486 = vmatpush.msra.mxu0 0.0
        %3487 = vmatpush.msra.mxu0 0.0
        %3488 = vmatpush.msra.mxu0 0.0
        %3489 = vmatpush.msra.mxu0 0.0
        %3490 = vmatpush.msra.mxu0 0.0
        %3491 = vmatpush.msra.mxu0 0.0
        %3492 = vmatpush.msra.mxu0 0.0
        %3493 = vmatpush.msra.mxu0 0.0
        %3494 = vmatpush.msra.mxu0 0.0
        %3495 = vmatpush.msra.mxu0 %v2586
        %3496 = vmatmul.f32.gmra.mxu0 %v2638
        %v3497 = vpop.f32.mrf.mxu0
        %v3498 = vadd.f32 %v2635, %v3497
        %3499 = vdwg.mxu0
        %3500 = vmatpush.msra.mxu0 0.0
        %3501 = vmatpush.msra.mxu0 0.0
        %3502 = vmatpush.msra.mxu0 0.0
        %3503 = vmatpush.msra.mxu0 0.0
        %3504 = vmatpush.msra.mxu0 0.0
        %3505 = vmatpush.msra.mxu0 0.0
        %3506 = vmatpush.msra.mxu0 0.0
        %3507 = vmatpush.msra.mxu0 0.0
        %3508 = vmatpush.msra.mxu0 0.0
        %3509 = vmatpush.msra.mxu0 0.0
        %3510 = vmatpush.msra.mxu0 0.0
        %3511 = vmatpush.msra.mxu0 0.0
        %3512 = vmatpush.msra.mxu0 0.0
        %3513 = vmatpush.msra.mxu0 0.0
        %3514 = vmatpush.msra.mxu0 0.0
        %3515 = vmatpush.msra.mxu0 %v2619
        %3516 = vmatmul.f32.gmra.mxu0 %v2638
        %v3517 = vpop.f32.mrf.mxu0
        %v3518 = vadd.f32 %v2635, %v3517
        %3519 = vdwg.mxu0
        %3520 = vmatpush.msra.mxu0 0.0
        %3521 = vmatpush.msra.mxu0 0.0
        %3522 = vmatpush.msra.mxu0 0.0
        %3523 = vmatpush.msra.mxu0 0.0
        %3524 = vmatpush.msra.mxu0 0.0
        %3525 = vmatpush.msra.mxu0 0.0
        %3526 = vmatpush.msra.mxu0 0.0
        %3527 = vmatpush.msra.mxu0 0.0
        %3528 = vmatpush.msra.mxu0 0.0
        %3529 = vmatpush.msra.mxu0 0.0
        %3530 = vmatpush.msra.mxu0 0.0
        %3531 = vmatpush.msra.mxu0 0.0
        %3532 = vmatpush.msra.mxu0 0.0
        %3533 = vmatpush.msra.mxu0 0.0
        %3534 = vmatpush.msra.mxu0 0.0
        %3535 = vmatpush.msra.mxu0 %v2587
        %3536 = vmatmul.f32.gmra.mxu0 %v2638
        %v3537 = vpop.f32.mrf.mxu0
        %v3538 = vadd.f32 %v2635, %v3537
        %3539 = vdwg.mxu0
        %3540 = vmatpush.msra.mxu0 0.0
        %3541 = vmatpush.msra.mxu0 0.0
        %3542 = vmatpush.msra.mxu0 0.0
        %3543 = vmatpush.msra.mxu0 0.0
        %3544 = vmatpush.msra.mxu0 0.0
        %3545 = vmatpush.msra.mxu0 0.0
        %3546 = vmatpush.msra.mxu0 0.0
        %3547 = vmatpush.msra.mxu0 0.0
        %3548 = vmatpush.msra.mxu0 0.0
        %3549 = vmatpush.msra.mxu0 0.0
        %3550 = vmatpush.msra.mxu0 0.0
        %3551 = vmatpush.msra.mxu0 0.0
        %3552 = vmatpush.msra.mxu0 0.0
        %3553 = vmatpush.msra.mxu0 0.0
        %3554 = vmatpush.msra.mxu0 0.0
        %3555 = vmatpush.msra.mxu0 %v2620
        %3556 = vmatmul.f32.gmra.mxu0 %v2638
        %v3557 = vpop.f32.mrf.mxu0
        %v3558 = vadd.f32 %v2635, %v3557
        %3559 = vdwg.mxu0
        %3560 = vmatpush.msra.mxu0 0.0
        %3561 = vmatpush.msra.mxu0 0.0
        %3562 = vmatpush.msra.mxu0 0.0
        %3563 = vmatpush.msra.mxu0 0.0
        %3564 = vmatpush.msra.mxu0 0.0
        %3565 = vmatpush.msra.mxu0 0.0
        %3566 = vmatpush.msra.mxu0 0.0
        %3567 = vmatpush.msra.mxu0 0.0
        %3568 = vmatpush.msra.mxu0 0.0
        %3569 = vmatpush.msra.mxu0 0.0
        %3570 = vmatpush.msra.mxu0 0.0
        %3571 = vmatpush.msra.mxu0 0.0
        %3572 = vmatpush.msra.mxu0 0.0
        %3573 = vmatpush.msra.mxu0 0.0
        %3574 = vmatpush.msra.mxu0 0.0
        %3575 = vmatpush.msra.mxu0 %v2588
        %3576 = vmatmul.f32.gmra.mxu0 %v2638
        %v3577 = vpop.f32.mrf.mxu0
        %v3578 = vadd.f32 %v2635, %v3577
        %3579 = vdwg.mxu0
        %3580 = vmatpush.msra.mxu0 0.0
        %3581 = vmatpush.msra.mxu0 0.0
        %3582 = vmatpush.msra.mxu0 0.0
        %3583 = vmatpush.msra.mxu0 0.0
        %3584 = vmatpush.msra.mxu0 0.0
        %3585 = vmatpush.msra.mxu0 0.0
        %3586 = vmatpush.msra.mxu0 0.0
        %3587 = vmatpush.msra.mxu0 0.0
        %3588 = vmatpush.msra.mxu0 0.0
        %3589 = vmatpush.msra.mxu0 0.0
        %3590 = vmatpush.msra.mxu0 0.0
        %3591 = vmatpush.msra.mxu0 0.0
        %3592 = vmatpush.msra.mxu0 0.0
        %3593 = vmatpush.msra.mxu0 0.0
        %3594 = vmatpush.msra.mxu0 0.0
        %3595 = vmatpush.msra.mxu0 %v2621
        %3596 = vmatmul.f32.gmra.mxu0 %v2638
        %v3597 = vpop.f32.mrf.mxu0
        %v3598 = vadd.f32 %v2635, %v3597
        %3599 = vdwg.mxu0
        %3600 = vmatpush.msra.mxu0 0.0
        %3601 = vmatpush.msra.mxu0 0.0
        %3602 = vmatpush.msra.mxu0 0.0
        %3603 = vmatpush.msra.mxu0 0.0
        %3604 = vmatpush.msra.mxu0 0.0
        %3605 = vmatpush.msra.mxu0 0.0
        %3606 = vmatpush.msra.mxu0 0.0
        %3607 = vmatpush.msra.mxu0 0.0
        %3608 = vmatpush.msra.mxu0 0.0
        %3609 = vmatpush.msra.mxu0 0.0
        %3610 = vmatpush.msra.mxu0 0.0
        %3611 = vmatpush.msra.mxu0 0.0
        %3612 = vmatpush.msra.mxu0 0.0
        %3613 = vmatpush.msra.mxu0 0.0
        %3614 = vmatpush.msra.mxu0 0.0
        %3615 = vmatpush.msra.mxu0 %v2589
        %3616 = vmatmul.f32.gmra.mxu0 %v2638
        %v3617 = vpop.f32.mrf.mxu0
        %v3618 = vadd.f32 %v2635, %v3617
        %3619 = vdwg.mxu0
        %3620 = vmatpush.msra.mxu0 0.0
        %3621 = vmatpush.msra.mxu0 0.0
        %3622 = vmatpush.msra.mxu0 0.0
        %3623 = vmatpush.msra.mxu0 0.0
        %3624 = vmatpush.msra.mxu0 0.0
        %3625 = vmatpush.msra.mxu0 0.0
        %3626 = vmatpush.msra.mxu0 0.0
        %3627 = vmatpush.msra.mxu0 0.0
        %3628 = vmatpush.msra.mxu0 0.0
        %3629 = vmatpush.msra.mxu0 0.0
        %3630 = vmatpush.msra.mxu0 0.0
        %3631 = vmatpush.msra.mxu0 0.0
        %3632 = vmatpush.msra.mxu0 0.0
        %3633 = vmatpush.msra.mxu0 0.0
        %3634 = vmatpush.msra.mxu0 0.0
        %3635 = vmatpush.msra.mxu0 %v2622
        %3636 = vmatmul.f32.gmra.mxu0 %v2638
        %v3637 = vpop.f32.mrf.mxu0
        %v3638 = vadd.f32 %v2635, %v3637
        %3639 = vdwg.mxu0
        %3640 = vmatpush.msra.mxu0 0.0
        %3641 = vmatpush.msra.mxu0 0.0
        %3642 = vmatpush.msra.mxu0 0.0
        %3643 = vmatpush.msra.mxu0 0.0
        %3644 = vmatpush.msra.mxu0 0.0
        %3645 = vmatpush.msra.mxu0 0.0
        %3646 = vmatpush.msra.mxu0 0.0
        %3647 = vmatpush.msra.mxu0 0.0
        %3648 = vmatpush.msra.mxu0 0.0
        %3649 = vmatpush.msra.mxu0 0.0
        %3650 = vmatpush.msra.mxu0 0.0
        %3651 = vmatpush.msra.mxu0 0.0
        %3652 = vmatpush.msra.mxu0 0.0
        %3653 = vmatpush.msra.mxu0 0.0
        %3654 = vmatpush.msra.mxu0 0.0
        %3655 = vmatpush.msra.mxu0 %v2590
        %3656 = vmatmul.f32.gmra.mxu0 %v2638
        %v3657 = vpop.f32.mrf.mxu0
        %v3658 = vadd.f32 %v2635, %v3657
        %3659 = vdwg.mxu0
        %3660 = vmatpush.msra.mxu0 0.0
        %3661 = vmatpush.msra.mxu0 0.0
        %3662 = vmatpush.msra.mxu0 0.0
        %3663 = vmatpush.msra.mxu0 0.0
        %3664 = vmatpush.msra.mxu0 0.0
        %3665 = vmatpush.msra.mxu0 0.0
        %3666 = vmatpush.msra.mxu0 0.0
        %3667 = vmatpush.msra.mxu0 0.0
        %3668 = vmatpush.msra.mxu0 0.0
        %3669 = vmatpush.msra.mxu0 0.0
        %3670 = vmatpush.msra.mxu0 0.0
        %3671 = vmatpush.msra.mxu0 0.0
        %3672 = vmatpush.msra.mxu0 0.0
        %3673 = vmatpush.msra.mxu0 0.0
        %3674 = vmatpush.msra.mxu0 0.0
        %3675 = vmatpush.msra.mxu0 %v2623
        %3676 = vmatmul.f32.gmra.mxu0 %v2638
        %v3677 = vpop.f32.mrf.mxu0
        %v3678 = vadd.f32 %v2635, %v3677
        %3679 = vdwg.mxu0
        %3680 = vmatpush.msra.mxu0 0.0
        %3681 = vmatpush.msra.mxu0 0.0
        %3682 = vmatpush.msra.mxu0 0.0
        %3683 = vmatpush.msra.mxu0 0.0
        %3684 = vmatpush.msra.mxu0 0.0
        %3685 = vmatpush.msra.mxu0 0.0
        %3686 = vmatpush.msra.mxu0 0.0
        %3687 = vmatpush.msra.mxu0 0.0
        %3688 = vmatpush.msra.mxu0 0.0
        %3689 = vmatpush.msra.mxu0 0.0
        %3690 = vmatpush.msra.mxu0 0.0
        %3691 = vmatpush.msra.mxu0 0.0
        %3692 = vmatpush.msra.mxu0 0.0
        %3693 = vmatpush.msra.mxu0 0.0
        %3694 = vmatpush.msra.mxu0 0.0
        %3695 = vmatpush.msra.mxu0 %v2591
        %3696 = vmatmul.f32.gmra.mxu0 %v2638
        %v3697 = vpop.f32.mrf.mxu0
        %v3698 = vadd.f32 %v2635, %v3697
        %3699 = vdwg.mxu0
        %3700 = vmatpush.msra.mxu0 0.0
        %3701 = vmatpush.msra.mxu0 0.0
        %3702 = vmatpush.msra.mxu0 0.0
        %3703 = vmatpush.msra.mxu0 0.0
        %3704 = vmatpush.msra.mxu0 0.0
        %3705 = vmatpush.msra.mxu0 0.0
        %3706 = vmatpush.msra.mxu0 0.0
        %3707 = vmatpush.msra.mxu0 0.0
        %3708 = vmatpush.msra.mxu0 0.0
        %3709 = vmatpush.msra.mxu0 0.0
        %3710 = vmatpush.msra.mxu0 0.0
        %3711 = vmatpush.msra.mxu0 0.0
        %3712 = vmatpush.msra.mxu0 0.0
        %3713 = vmatpush.msra.mxu0 0.0
        %3714 = vmatpush.msra.mxu0 0.0
        %3715 = vmatpush.msra.mxu0 %v2624
        %3716 = vmatmul.f32.gmra.mxu0 %v2638
        %v3717 = vpop.f32.mrf.mxu0
        %v3718 = vadd.f32 %v2635, %v3717
        %3719 = vdwg.mxu0
        %3720 = vmatpush.msra.mxu0 0.0
        %3721 = vmatpush.msra.mxu0 0.0
        %3722 = vmatpush.msra.mxu0 0.0
        %3723 = vmatpush.msra.mxu0 0.0
        %3724 = vmatpush.msra.mxu0 0.0
        %3725 = vmatpush.msra.mxu0 0.0
        %3726 = vmatpush.msra.mxu0 0.0
        %3727 = vmatpush.msra.mxu0 0.0
        %3728 = vmatpush.msra.mxu0 0.0
        %3729 = vmatpush.msra.mxu0 0.0
        %3730 = vmatpush.msra.mxu0 0.0
        %3731 = vmatpush.msra.mxu0 0.0
        %3732 = vmatpush.msra.mxu0 0.0
        %3733 = vmatpush.msra.mxu0 0.0
        %3734 = vmatpush.msra.mxu0 0.0
        %3735 = vmatpush.msra.mxu0 %v2592
        %3736 = vmatmul.f32.gmra.mxu0 %v2638
        %v3737 = vpop.f32.mrf.mxu0
        %v3738 = vadd.f32 %v2635, %v3737
        %3739 = vdwg.mxu0
        %3740 = vmatpush.msra.mxu0 0.0
        %3741 = vmatpush.msra.mxu0 0.0
        %3742 = vmatpush.msra.mxu0 0.0
        %3743 = vmatpush.msra.mxu0 0.0
        %3744 = vmatpush.msra.mxu0 0.0
        %3745 = vmatpush.msra.mxu0 0.0
        %3746 = vmatpush.msra.mxu0 0.0
        %3747 = vmatpush.msra.mxu0 0.0
        %3748 = vmatpush.msra.mxu0 0.0
        %3749 = vmatpush.msra.mxu0 0.0
        %3750 = vmatpush.msra.mxu0 0.0
        %3751 = vmatpush.msra.mxu0 0.0
        %3752 = vmatpush.msra.mxu0 0.0
        %3753 = vmatpush.msra.mxu0 0.0
        %3754 = vmatpush.msra.mxu0 0.0
        %3755 = vmatpush.msra.mxu0 %v2625
        %3756 = vmatmul.f32.gmra.mxu0 %v2638
        %v3757 = vpop.f32.mrf.mxu0
        %v3758 = vadd.f32 %v2635, %v3757
        %3759 = vdwg.mxu0
        %3760 = vmatpush.msra.mxu0 0.0
        %3761 = vmatpush.msra.mxu0 0.0
        %3762 = vmatpush.msra.mxu0 0.0
        %3763 = vmatpush.msra.mxu0 0.0
        %3764 = vmatpush.msra.mxu0 0.0
        %3765 = vmatpush.msra.mxu0 0.0
        %3766 = vmatpush.msra.mxu0 0.0
        %3767 = vmatpush.msra.mxu0 0.0
        %3768 = vmatpush.msra.mxu0 0.0
        %3769 = vmatpush.msra.mxu0 0.0
        %3770 = vmatpush.msra.mxu0 0.0
        %3771 = vmatpush.msra.mxu0 0.0
        %3772 = vmatpush.msra.mxu0 0.0
        %3773 = vmatpush.msra.mxu0 0.0
        %3774 = vmatpush.msra.mxu0 0.0
        %3775 = vmatpush.msra.mxu0 %v2593
        %3776 = vmatmul.f32.gmra.mxu0 %v2638
        %v3777 = vpop.f32.mrf.mxu0
        %v3778 = vadd.f32 %v2635, %v3777
        %3779 = vdwg.mxu0
        %3780 = vmatpush.msra.mxu0 0.0
        %3781 = vmatpush.msra.mxu0 0.0
        %3782 = vmatpush.msra.mxu0 0.0
        %3783 = vmatpush.msra.mxu0 0.0
        %3784 = vmatpush.msra.mxu0 0.0
        %3785 = vmatpush.msra.mxu0 0.0
        %3786 = vmatpush.msra.mxu0 0.0
        %3787 = vmatpush.msra.mxu0 0.0
        %3788 = vmatpush.msra.mxu0 0.0
        %3789 = vmatpush.msra.mxu0 0.0
        %3790 = vmatpush.msra.mxu0 0.0
        %3791 = vmatpush.msra.mxu0 0.0
        %3792 = vmatpush.msra.mxu0 0.0
        %3793 = vmatpush.msra.mxu0 0.0
        %3794 = vmatpush.msra.mxu0 0.0
        %3795 = vmatpush.msra.mxu0 %v2626
        %3796 = vmatmul.f32.gmra.mxu0 %v2638
        %v3797 = vpop.f32.mrf.mxu0
        %v3798 = vadd.f32 %v2635, %v3797
        %3799 = vdwg.mxu0
        %3800 = vmatpush.msra.mxu0 0.0
        %3801 = vmatpush.msra.mxu0 0.0
        %3802 = vmatpush.msra.mxu0 0.0
        %3803 = vmatpush.msra.mxu0 0.0
        %3804 = vmatpush.msra.mxu0 0.0
        %3805 = vmatpush.msra.mxu0 0.0
        %3806 = vmatpush.msra.mxu0 0.0
        %3807 = vmatpush.msra.mxu0 0.0
        %3808 = vmatpush.msra.mxu0 0.0
        %3809 = vmatpush.msra.mxu0 0.0
        %3810 = vmatpush.msra.mxu0 0.0
        %3811 = vmatpush.msra.mxu0 0.0
        %3812 = vmatpush.msra.mxu0 0.0
        %3813 = vmatpush.msra.mxu0 0.0
        %3814 = vmatpush.msra.mxu0 0.0
        %3815 = vmatpush.msra.mxu0 %v2594
        %3816 = vmatmul.f32.gmra.mxu0 %v2638
        %v3817 = vpop.f32.mrf.mxu0
        %v3818 = vadd.f32 %v2635, %v3817
        %3819 = vdwg.mxu0
        %3820 = vmatpush.msra.mxu0 0.0
        %3821 = vmatpush.msra.mxu0 0.0
        %3822 = vmatpush.msra.mxu0 0.0
        %3823 = vmatpush.msra.mxu0 0.0
        %3824 = vmatpush.msra.mxu0 0.0
        %3825 = vmatpush.msra.mxu0 0.0
        %3826 = vmatpush.msra.mxu0 0.0
        %3827 = vmatpush.msra.mxu0 0.0
        %3828 = vmatpush.msra.mxu0 0.0
        %3829 = vmatpush.msra.mxu0 0.0
        %3830 = vmatpush.msra.mxu0 0.0
        %3831 = vmatpush.msra.mxu0 0.0
        %3832 = vmatpush.msra.mxu0 0.0
        %3833 = vmatpush.msra.mxu0 0.0
        %3834 = vmatpush.msra.mxu0 0.0
        %3835 = vmatpush.msra.mxu0 %v2627
        %3836 = vmatmul.f32.gmra.mxu0 %v2638
        %v3837 = vpop.f32.mrf.mxu0
        %v3838 = vadd.f32 %v2635, %v3837
        %3839 = vdwg.mxu0
        %3840 = vmatpush.msra.mxu0 0.0
        %3841 = vmatpush.msra.mxu0 0.0
        %3842 = vmatpush.msra.mxu0 0.0
        %3843 = vmatpush.msra.mxu0 0.0
        %3844 = vmatpush.msra.mxu0 0.0
        %3845 = vmatpush.msra.mxu0 0.0
        %3846 = vmatpush.msra.mxu0 0.0
        %3847 = vmatpush.msra.mxu0 0.0
        %3848 = vmatpush.msra.mxu0 0.0
        %3849 = vmatpush.msra.mxu0 0.0
        %3850 = vmatpush.msra.mxu0 0.0
        %3851 = vmatpush.msra.mxu0 0.0
        %3852 = vmatpush.msra.mxu0 0.0
        %3853 = vmatpush.msra.mxu0 0.0
        %3854 = vmatpush.msra.mxu0 0.0
        %3855 = vmatpush.msra.mxu0 %v2595
        %3856 = vmatmul.f32.gmra.mxu0 %v2638
        %v3857 = vpop.f32.mrf.mxu0
        %v3858 = vadd.f32 %v2635, %v3857
        %3859 = vdwg.mxu0
        %3860 = vmatpush.msra.mxu0 0.0
        %3861 = vmatpush.msra.mxu0 0.0
        %3862 = vmatpush.msra.mxu0 0.0
        %3863 = vmatpush.msra.mxu0 0.0
        %3864 = vmatpush.msra.mxu0 0.0
        %3865 = vmatpush.msra.mxu0 0.0
        %3866 = vmatpush.msra.mxu0 0.0
        %3867 = vmatpush.msra.mxu0 0.0
        %3868 = vmatpush.msra.mxu0 0.0
        %3869 = vmatpush.msra.mxu0 0.0
        %3870 = vmatpush.msra.mxu0 0.0
        %3871 = vmatpush.msra.mxu0 0.0
        %3872 = vmatpush.msra.mxu0 0.0
        %3873 = vmatpush.msra.mxu0 0.0
        %3874 = vmatpush.msra.mxu0 0.0
        %3875 = vmatpush.msra.mxu0 %v2628
        %3876 = vmatmul.f32.gmra.mxu0 %v2638
        %v3877 = vpop.f32.mrf.mxu0
        %v3878 = vadd.f32 %v2635, %v3877
        %3879 = vdwg.mxu0
        %3880 = vmatpush.msra.mxu0 0.0
        %3881 = vmatpush.msra.mxu0 0.0
        %3882 = vmatpush.msra.mxu0 0.0
        %3883 = vmatpush.msra.mxu0 0.0
        %3884 = vmatpush.msra.mxu0 0.0
        %3885 = vmatpush.msra.mxu0 0.0
        %3886 = vmatpush.msra.mxu0 0.0
        %3887 = vmatpush.msra.mxu0 0.0
        %3888 = vmatpush.msra.mxu0 0.0
        %3889 = vmatpush.msra.mxu0 0.0
        %3890 = vmatpush.msra.mxu0 0.0
        %3891 = vmatpush.msra.mxu0 0.0
        %3892 = vmatpush.msra.mxu0 0.0
        %3893 = vmatpush.msra.mxu0 0.0
        %3894 = vmatpush.msra.mxu0 0.0
        %3895 = vmatpush.msra.mxu0 %v2596
        %3896 = vmatmul.f32.gmra.mxu0 %v2638
        %v3897 = vpop.f32.mrf.mxu0
        %v3898 = vadd.f32 %v2635, %v3897
        %3899 = vdwg.mxu0
        %3900 = vmatpush.msra.mxu0 0.0
        %3901 = vmatpush.msra.mxu0 0.0
        %3902 = vmatpush.msra.mxu0 0.0
        %3903 = vmatpush.msra.mxu0 0.0
        %3904 = vmatpush.msra.mxu0 0.0
        %3905 = vmatpush.msra.mxu0 0.0
        %3906 = vmatpush.msra.mxu0 0.0
        %3907 = vmatpush.msra.mxu0 0.0
        %3908 = vmatpush.msra.mxu0 0.0
        %3909 = vmatpush.msra.mxu0 0.0
        %3910 = vmatpush.msra.mxu0 0.0
        %3911 = vmatpush.msra.mxu0 0.0
        %3912 = vmatpush.msra.mxu0 0.0
        %3913 = vmatpush.msra.mxu0 0.0
        %3914 = vmatpush.msra.mxu0 0.0
        %3915 = vmatpush.msra.mxu0 %v2629
        %3916 = vmatmul.f32.gmra.mxu0 %v2638
        %v3917 = vpop.f32.mrf.mxu0
        %v3918 = vadd.f32 %v2635, %v3917
        %3919 = vdwg.mxu0
        %v3920 = vld [vmem:[%s14] sm:$0xff]
        %v3921 = vld [vmem:[%s14 + $0x8] sm:$0xff]
        %v3922 = vld [vmem:[%s14 + $0x10] sm:$0xff]
        %v3923 = vld [vmem:[%s14 + $0x18] sm:$0xff]
        %v3924 = vld [vmem:[%s14 + $0x20] sm:$0xff]
        %v3925 = vld [vmem:[%s14 + $0x28] sm:$0xff]
        %v3926 = vld [vmem:[%s14 + $0x30] sm:$0xff]
        %v3927 = vld [vmem:[%s14 + $0x38] sm:$0xff]
        %vm3928 = vcmask 523264
        %v3930 = vsel %vm3928, %v2658, 0
        %v3933 = vsel %vm3928, %v2678, 0
        %v3936 = vsel %vm3928, %v2698, 0
        %v3939 = vsel %vm3928, %v2718, 0
        %v3942 = vsel %vm3928, %v2738, 0
        %v3945 = vsel %vm3928, %v2758, 0
        %v3948 = vsel %vm3928, %v2778, 0
        %v3951 = vsel %vm3928, %v2798, 0
        %v3954 = vsel %vm3928, %v2818, 0
        %v3957 = vsel %vm3928, %v2838, 0
        %v3960 = vsel %vm3928, %v2858, 0
        %v3963 = vsel %vm3928, %v2878, 0
        %v3966 = vsel %vm3928, %v2898, 0
        %v3969 = vsel %vm3928, %v2918, 0
        %v3972 = vsel %vm3928, %v2938, 0
        %v3975 = vsel %vm3928, %v2958, 0
        %v3978 = vsel %vm3928, %v2978, 0
        %v3981 = vsel %vm3928, %v2998, 0
        %v3984 = vsel %vm3928, %v3018, 0
        %v3987 = vsel %vm3928, %v3038, 0
        %v3990 = vsel %vm3928, %v3058, 0
        %v3993 = vsel %vm3928, %v3078, 0
        %v3996 = vsel %vm3928, %v3098, 0
        %v3999 = vsel %vm3928, %v3118, 0
        %v4002 = vsel %vm3928, %v3138, 0
        %v4005 = vsel %vm3928, %v3158, 0
        %v4008 = vsel %vm3928, %v3178, 0
        %v4011 = vsel %vm3928, %v3198, 0
        %v4014 = vsel %vm3928, %v3218, 0
        %v4017 = vsel %vm3928, %v3238, 0
        %v4020 = vsel %vm3928, %v3258, 0
        %v4023 = vsel %vm3928, %v3278, 0
        %v4026 = vsel %vm3928, %v3298, 0
        %v4029 = vsel %vm3928, %v3318, 0
        %v4032 = vsel %vm3928, %v3338, 0
        %v4035 = vsel %vm3928, %v3358, 0
        %v4038 = vsel %vm3928, %v3378, 0
        %v4041 = vsel %vm3928, %v3398, 0
        %v4044 = vsel %vm3928, %v3418, 0
        %v4047 = vsel %vm3928, %v3438, 0
        %v4050 = vsel %vm3928, %v3458, 0
        %v4053 = vsel %vm3928, %v3478, 0
        %v4056 = vsel %vm3928, %v3498, 0
        %v4059 = vsel %vm3928, %v3518, 0
        %v4062 = vsel %vm3928, %v3538, 0
        %v4065 = vsel %vm3928, %v3558, 0
        %v4068 = vsel %vm3928, %v3578, 0
        %v4071 = vsel %vm3928, %v3598, 0
        %v4074 = vsel %vm3928, %v3618, 0
        %v4077 = vsel %vm3928, %v3638, 0
        %v4080 = vsel %vm3928, %v3658, 0
        %v4083 = vsel %vm3928, %v3678, 0
        %v4086 = vsel %vm3928, %v3698, 0
        %v4089 = vsel %vm3928, %v3718, 0
        %v4092 = vsel %vm3928, %v3738, 0
        %v4095 = vsel %vm3928, %v3758, 0
        %v4098 = vsel %vm3928, %v3778, 0
        %v4101 = vsel %vm3928, %v3798, 0
        %v4104 = vsel %vm3928, %v3818, 0
        %v4107 = vsel %vm3928, %v3838, 0
        %v4110 = vsel %vm3928, %v3858, 0
        %v4113 = vsel %vm3928, %v3878, 0
        %v4116 = vsel %vm3928, %v3898, 0
        %v4119 = vsel %vm3928, %v3918, 0
        %4121 = vmatpush.msra.mxu0 0.0
        %4122 = vmatpush.msra.mxu0 0.0
        %4123 = vmatpush.msra.mxu0 0.0
        %4124 = vmatpush.msra.mxu0 0.0
        %4125 = vmatpush.msra.mxu0 0.0
        %4126 = vmatpush.msra.mxu0 0.0
        %4127 = vmatpush.msra.mxu0 0.0
        %4128 = vmatpush.msra.mxu0 0.0
        %4129 = vmatpush.msra.mxu0 %v3927
        %4130 = vmatpush.msra.mxu0 %v3926
        %4131 = vmatpush.msra.mxu0 %v3925
        %4132 = vmatpush.msra.mxu0 %v3924
        %4133 = vmatpush.msra.mxu0 %v3923
        %4134 = vmatpush.msra.mxu0 %v3922
        %4135 = vmatpush.msra.mxu0 %v3921
        %4136 = vmatpush.msra.mxu0 %v3920
        %4137 = vmatmul.f32.gmra.mxu0 %v3930
        %v4138 = vpop.f32.mrf.mxu0
        %v4139 = vadd.f32 0.0, %v4138
        %4140 = vmatmul.f32.gmra.mxu0 %v3933
        %v4141 = vpop.f32.mrf.mxu0
        %v4142 = vadd.f32 0.0, %v4141
        %4143 = vmatmul.f32.gmra.mxu0 %v3936
        %v4144 = vpop.f32.mrf.mxu0
        %v4145 = vadd.f32 0.0, %v4144
        %4146 = vmatmul.f32.gmra.mxu0 %v3939
        %v4147 = vpop.f32.mrf.mxu0
        %v4148 = vadd.f32 0.0, %v4147
        %4149 = vmatmul.f32.gmra.mxu0 %v3942
        %v4150 = vpop.f32.mrf.mxu0
        %v4151 = vadd.f32 0.0, %v4150
        %4152 = vmatmul.f32.gmra.mxu0 %v3945
        %v4153 = vpop.f32.mrf.mxu0
        %v4154 = vadd.f32 0.0, %v4153
        %4155 = vmatmul.f32.gmra.mxu0 %v3948
        %v4156 = vpop.f32.mrf.mxu0
        %v4157 = vadd.f32 0.0, %v4156
        %4158 = vmatmul.f32.gmra.mxu0 %v3951
        %v4159 = vpop.f32.mrf.mxu0
        %v4160 = vadd.f32 0.0, %v4159
        %4161 = vmatmul.f32.gmra.mxu0 %v3954
        %v4162 = vpop.f32.mrf.mxu0
        %v4163 = vadd.f32 0.0, %v4162
        %4164 = vmatmul.f32.gmra.mxu0 %v3957
        %v4165 = vpop.f32.mrf.mxu0
        %v4166 = vadd.f32 0.0, %v4165
        %4167 = vmatmul.f32.gmra.mxu0 %v3960
        %v4168 = vpop.f32.mrf.mxu0
        %v4169 = vadd.f32 0.0, %v4168
        %4170 = vmatmul.f32.gmra.mxu0 %v3963
        %v4171 = vpop.f32.mrf.mxu0
        %v4172 = vadd.f32 0.0, %v4171
        %4173 = vmatmul.f32.gmra.mxu0 %v3966
        %v4174 = vpop.f32.mrf.mxu0
        %v4175 = vadd.f32 0.0, %v4174
        %4176 = vmatmul.f32.gmra.mxu0 %v3969
        %v4177 = vpop.f32.mrf.mxu0
        %v4178 = vadd.f32 0.0, %v4177
        %4179 = vmatmul.f32.gmra.mxu0 %v3972
        %v4180 = vpop.f32.mrf.mxu0
        %v4181 = vadd.f32 0.0, %v4180
        %4182 = vmatmul.f32.gmra.mxu0 %v3975
        %v4183 = vpop.f32.mrf.mxu0
        %v4184 = vadd.f32 0.0, %v4183
        %4185 = vmatmul.f32.gmra.mxu0 %v3978
        %v4186 = vpop.f32.mrf.mxu0
        %v4187 = vadd.f32 0.0, %v4186
        %4188 = vmatmul.f32.gmra.mxu0 %v3981
        %v4189 = vpop.f32.mrf.mxu0
        %v4190 = vadd.f32 0.0, %v4189
        %4191 = vmatmul.f32.gmra.mxu0 %v3984
        %v4192 = vpop.f32.mrf.mxu0
        %v4193 = vadd.f32 0.0, %v4192
        %4194 = vmatmul.f32.gmra.mxu0 %v3987
        %v4195 = vpop.f32.mrf.mxu0
        %v4196 = vadd.f32 0.0, %v4195
        %4197 = vmatmul.f32.gmra.mxu0 %v3990
        %v4198 = vpop.f32.mrf.mxu0
        %v4199 = vadd.f32 0.0, %v4198
        %4200 = vmatmul.f32.gmra.mxu0 %v3993
        %v4201 = vpop.f32.mrf.mxu0
        %v4202 = vadd.f32 0.0, %v4201
        %4203 = vmatmul.f32.gmra.mxu0 %v3996
        %v4204 = vpop.f32.mrf.mxu0
        %v4205 = vadd.f32 0.0, %v4204
        %4206 = vmatmul.f32.gmra.mxu0 %v3999
        %v4207 = vpop.f32.mrf.mxu0
        %v4208 = vadd.f32 0.0, %v4207
        %4209 = vmatmul.f32.gmra.mxu0 %v4002
        %v4210 = vpop.f32.mrf.mxu0
        %v4211 = vadd.f32 0.0, %v4210
        %4212 = vmatmul.f32.gmra.mxu0 %v4005
        %v4213 = vpop.f32.mrf.mxu0
        %v4214 = vadd.f32 0.0, %v4213
        %4215 = vmatmul.f32.gmra.mxu0 %v4008
        %v4216 = vpop.f32.mrf.mxu0
        %v4217 = vadd.f32 0.0, %v4216
        %4218 = vmatmul.f32.gmra.mxu0 %v4011
        %v4219 = vpop.f32.mrf.mxu0
        %v4220 = vadd.f32 0.0, %v4219
        %4221 = vmatmul.f32.gmra.mxu0 %v4014
        %v4222 = vpop.f32.mrf.mxu0
        %v4223 = vadd.f32 0.0, %v4222
        %4224 = vmatmul.f32.gmra.mxu0 %v4017
        %v4225 = vpop.f32.mrf.mxu0
        %v4226 = vadd.f32 0.0, %v4225
        %4227 = vmatmul.f32.gmra.mxu0 %v4020
        %v4228 = vpop.f32.mrf.mxu0
        %v4229 = vadd.f32 0.0, %v4228
        %4230 = vmatmul.f32.gmra.mxu0 %v4023
        %v4231 = vpop.f32.mrf.mxu0
        %v4232 = vadd.f32 0.0, %v4231
        %4233 = vmatmul.f32.gmra.mxu0 %v4026
        %v4234 = vpop.f32.mrf.mxu0
        %v4235 = vadd.f32 0.0, %v4234
        %4236 = vmatmul.f32.gmra.mxu0 %v4029
        %v4237 = vpop.f32.mrf.mxu0
        %v4238 = vadd.f32 0.0, %v4237
        %4239 = vmatmul.f32.gmra.mxu0 %v4032
        %v4240 = vpop.f32.mrf.mxu0
        %v4241 = vadd.f32 0.0, %v4240
        %4242 = vmatmul.f32.gmra.mxu0 %v4035
        %v4243 = vpop.f32.mrf.mxu0
        %v4244 = vadd.f32 0.0, %v4243
        %4245 = vmatmul.f32.gmra.mxu0 %v4038
        %v4246 = vpop.f32.mrf.mxu0
        %v4247 = vadd.f32 0.0, %v4246
        %4248 = vmatmul.f32.gmra.mxu0 %v4041
        %v4249 = vpop.f32.mrf.mxu0
        %v4250 = vadd.f32 0.0, %v4249
        %4251 = vmatmul.f32.gmra.mxu0 %v4044
        %v4252 = vpop.f32.mrf.mxu0
        %v4253 = vadd.f32 0.0, %v4252
        %4254 = vmatmul.f32.gmra.mxu0 %v4047
        %v4255 = vpop.f32.mrf.mxu0
        %v4256 = vadd.f32 0.0, %v4255
        %4257 = vmatmul.f32.gmra.mxu0 %v4050
        %v4258 = vpop.f32.mrf.mxu0
        %v4259 = vadd.f32 0.0, %v4258
        %4260 = vmatmul.f32.gmra.mxu0 %v4053
        %v4261 = vpop.f32.mrf.mxu0
        %v4262 = vadd.f32 0.0, %v4261
        %4263 = vmatmul.f32.gmra.mxu0 %v4056
        %v4264 = vpop.f32.mrf.mxu0
        %v4265 = vadd.f32 0.0, %v4264
        %4266 = vmatmul.f32.gmra.mxu0 %v4059
        %v4267 = vpop.f32.mrf.mxu0
        %v4268 = vadd.f32 0.0, %v4267
        %4269 = vmatmul.f32.gmra.mxu0 %v4062
        %v4270 = vpop.f32.mrf.mxu0
        %v4271 = vadd.f32 0.0, %v4270
        %4272 = vmatmul.f32.gmra.mxu0 %v4065
        %v4273 = vpop.f32.mrf.mxu0
        %v4274 = vadd.f32 0.0, %v4273
        %4275 = vmatmul.f32.gmra.mxu0 %v4068
        %v4276 = vpop.f32.mrf.mxu0
        %v4277 = vadd.f32 0.0, %v4276
        %4278 = vmatmul.f32.gmra.mxu0 %v4071
        %v4279 = vpop.f32.mrf.mxu0
        %v4280 = vadd.f32 0.0, %v4279
        %4281 = vmatmul.f32.gmra.mxu0 %v4074
        %v4282 = vpop.f32.mrf.mxu0
        %v4283 = vadd.f32 0.0, %v4282
        %4284 = vmatmul.f32.gmra.mxu0 %v4077
        %v4285 = vpop.f32.mrf.mxu0
        %v4286 = vadd.f32 0.0, %v4285
        %4287 = vmatmul.f32.gmra.mxu0 %v4080
        %v4288 = vpop.f32.mrf.mxu0
        %v4289 = vadd.f32 0.0, %v4288
        %4290 = vmatmul.f32.gmra.mxu0 %v4083
        %v4291 = vpop.f32.mrf.mxu0
        %v4292 = vadd.f32 0.0, %v4291
        %4293 = vmatmul.f32.gmra.mxu0 %v4086
        %v4294 = vpop.f32.mrf.mxu0
        %v4295 = vadd.f32 0.0, %v4294
        %4296 = vmatmul.f32.gmra.mxu0 %v4089
        %v4297 = vpop.f32.mrf.mxu0
        %v4298 = vadd.f32 0.0, %v4297
        %4299 = vmatmul.f32.gmra.mxu0 %v4092
        %v4300 = vpop.f32.mrf.mxu0
        %v4301 = vadd.f32 0.0, %v4300
        %4302 = vmatmul.f32.gmra.mxu0 %v4095
        %v4303 = vpop.f32.mrf.mxu0
        %v4304 = vadd.f32 0.0, %v4303
        %4305 = vmatmul.f32.gmra.mxu0 %v4098
        %v4306 = vpop.f32.mrf.mxu0
        %v4307 = vadd.f32 0.0, %v4306
        %4308 = vmatmul.f32.gmra.mxu0 %v4101
        %v4309 = vpop.f32.mrf.mxu0
        %v4310 = vadd.f32 0.0, %v4309
        %4311 = vmatmul.f32.gmra.mxu0 %v4104
        %v4312 = vpop.f32.mrf.mxu0
        %v4313 = vadd.f32 0.0, %v4312
        %4314 = vmatmul.f32.gmra.mxu0 %v4107
        %v4315 = vpop.f32.mrf.mxu0
        %v4316 = vadd.f32 0.0, %v4315
        %4317 = vmatmul.f32.gmra.mxu0 %v4110
        %v4318 = vpop.f32.mrf.mxu0
        %v4319 = vadd.f32 0.0, %v4318
        %4320 = vmatmul.f32.gmra.mxu0 %v4113
        %v4321 = vpop.f32.mrf.mxu0
        %v4322 = vadd.f32 0.0, %v4321
        %4323 = vmatmul.f32.gmra.mxu0 %v4116
        %v4324 = vpop.f32.mrf.mxu0
        %v4325 = vadd.f32 0.0, %v4324
        %4326 = vmatmul.f32.gmra.mxu0 %v4119
        %v4327 = vpop.f32.mrf.mxu0
        %v4328 = vadd.f32 0.0, %v4327
        %4329 = vdwg.mxu0
        %v4330 = vmul.f32 %v4139, 0.75
        %v4331 = vmul.f32 %v4142, 0.75
        %v4332 = vmul.f32 %v4145, 0.75
        %v4333 = vmul.f32 %v4148, 0.75
        %v4334 = vmul.f32 %v4151, 0.75
        %v4335 = vmul.f32 %v4154, 0.75
        %v4336 = vmul.f32 %v4157, 0.75
        %v4337 = vmul.f32 %v4160, 0.75
        %v4338 = vmul.f32 %v4163, 0.75
        %v4339 = vmul.f32 %v4166, 0.75
        %v4340 = vmul.f32 %v4169, 0.75
        %v4341 = vmul.f32 %v4172, 0.75
        %v4342 = vmul.f32 %v4175, 0.75
        %v4343 = vmul.f32 %v4178, 0.75
        %v4344 = vmul.f32 %v4181, 0.75
        %v4345 = vmul.f32 %v4184, 0.75
        %v4346 = vmul.f32 %v4187, 0.75
        %v4347 = vmul.f32 %v4190, 0.75
        %v4348 = vmul.f32 %v4193, 0.75
        %v4349 = vmul.f32 %v4196, 0.75
        %v4350 = vmul.f32 %v4199, 0.75
        %v4351 = vmul.f32 %v4202, 0.75
        %v4352 = vmul.f32 %v4205, 0.75
        %v4353 = vmul.f32 %v4208, 0.75
        %v4354 = vmul.f32 %v4211, 0.75
        %v4355 = vmul.f32 %v4214, 0.75
        %v4356 = vmul.f32 %v4217, 0.75
        %v4357 = vmul.f32 %v4220, 0.75
        %v4358 = vmul.f32 %v4223, 0.75
        %v4359 = vmul.f32 %v4226, 0.75
        %v4360 = vmul.f32 %v4229, 0.75
        %v4361 = vmul.f32 %v4232, 0.75
        %v4362 = vmul.f32 %v4235, 0.75
        %v4363 = vmul.f32 %v4238, 0.75
        %v4364 = vmul.f32 %v4241, 0.75
        %v4365 = vmul.f32 %v4244, 0.75
        %v4366 = vmul.f32 %v4247, 0.75
        %v4367 = vmul.f32 %v4250, 0.75
        %v4368 = vmul.f32 %v4253, 0.75
        %v4369 = vmul.f32 %v4256, 0.75
        %v4370 = vmul.f32 %v4259, 0.75
        %v4371 = vmul.f32 %v4262, 0.75
        %v4372 = vmul.f32 %v4265, 0.75
        %v4373 = vmul.f32 %v4268, 0.75
        %v4374 = vmul.f32 %v4271, 0.75
        %v4375 = vmul.f32 %v4274, 0.75
        %v4376 = vmul.f32 %v4277, 0.75
        %v4377 = vmul.f32 %v4280, 0.75
        %v4378 = vmul.f32 %v4283, 0.75
        %v4379 = vmul.f32 %v4286, 0.75
        %v4380 = vmul.f32 %v4289, 0.75
        %v4381 = vmul.f32 %v4292, 0.75
        %v4382 = vmul.f32 %v4295, 0.75
        %v4383 = vmul.f32 %v4298, 0.75
        %v4384 = vmul.f32 %v4301, 0.75
        %v4385 = vmul.f32 %v4304, 0.75
        %v4386 = vmul.f32 %v4307, 0.75
        %v4387 = vmul.f32 %v4310, 0.75
        %v4388 = vmul.f32 %v4313, 0.75
        %v4389 = vmul.f32 %v4316, 0.75
        %v4390 = vmul.f32 %v4319, 0.75
        %v4391 = vmul.f32 %v4322, 0.75
        %v4392 = vmul.f32 %v4325, 0.75
        %v4393 = vmul.f32 %v4328, 0.75
        %v4394 = vmul.f32 %v4139, 0.25
        %v4395 = vmul.f32 %v4142, 0.25
        %v4396 = vmul.f32 %v4145, 0.25
        %v4397 = vmul.f32 %v4148, 0.25
        %v4398 = vmul.f32 %v4151, 0.25
        %v4399 = vmul.f32 %v4154, 0.25
        %v4400 = vmul.f32 %v4157, 0.25
        %v4401 = vmul.f32 %v4160, 0.25
        %v4402 = vmul.f32 %v4163, 0.25
        %v4403 = vmul.f32 %v4166, 0.25
        %v4404 = vmul.f32 %v4169, 0.25
        %v4405 = vmul.f32 %v4172, 0.25
        %v4406 = vmul.f32 %v4175, 0.25
        %v4407 = vmul.f32 %v4178, 0.25
        %v4408 = vmul.f32 %v4181, 0.25
        %v4409 = vmul.f32 %v4184, 0.25
        %v4410 = vmul.f32 %v4187, 0.25
        %v4411 = vmul.f32 %v4190, 0.25
        %v4412 = vmul.f32 %v4193, 0.25
        %v4413 = vmul.f32 %v4196, 0.25
        %v4414 = vmul.f32 %v4199, 0.25
        %v4415 = vmul.f32 %v4202, 0.25
        %v4416 = vmul.f32 %v4205, 0.25
        %v4417 = vmul.f32 %v4208, 0.25
        %v4418 = vmul.f32 %v4211, 0.25
        %v4419 = vmul.f32 %v4214, 0.25
        %v4420 = vmul.f32 %v4217, 0.25
        %v4421 = vmul.f32 %v4220, 0.25
        %v4422 = vmul.f32 %v4223, 0.25
        %v4423 = vmul.f32 %v4226, 0.25
        %v4424 = vmul.f32 %v4229, 0.25
        %v4425 = vmul.f32 %v4232, 0.25
        %v4426 = vmul.f32 %v4235, 0.25
        %v4427 = vmul.f32 %v4238, 0.25
        %v4428 = vmul.f32 %v4241, 0.25
        %v4429 = vmul.f32 %v4244, 0.25
        %v4430 = vmul.f32 %v4247, 0.25
        %v4431 = vmul.f32 %v4250, 0.25
        %v4432 = vmul.f32 %v4253, 0.25
        %v4433 = vmul.f32 %v4256, 0.25
        %v4434 = vmul.f32 %v4259, 0.25
        %v4435 = vmul.f32 %v4262, 0.25
        %v4436 = vmul.f32 %v4265, 0.25
        %v4437 = vmul.f32 %v4268, 0.25
        %v4438 = vmul.f32 %v4271, 0.25
        %v4439 = vmul.f32 %v4274, 0.25
        %v4440 = vmul.f32 %v4277, 0.25
        %v4441 = vmul.f32 %v4280, 0.25
        %v4442 = vmul.f32 %v4283, 0.25
        %v4443 = vmul.f32 %v4286, 0.25
        %v4444 = vmul.f32 %v4289, 0.25
        %v4445 = vmul.f32 %v4292, 0.25
        %v4446 = vmul.f32 %v4295, 0.25
        %v4447 = vmul.f32 %v4298, 0.25
        %v4448 = vmul.f32 %v4301, 0.25
        %v4449 = vmul.f32 %v4304, 0.25
        %v4450 = vmul.f32 %v4307, 0.25
        %v4451 = vmul.f32 %v4310, 0.25
        %v4452 = vmul.f32 %v4313, 0.25
        %v4453 = vmul.f32 %v4316, 0.25
        %v4454 = vmul.f32 %v4319, 0.25
        %v4455 = vmul.f32 %v4322, 0.25
        %v4456 = vmul.f32 %v4325, 0.25
        %v4457 = vadd.f32 %v4330, %v4394
        %v4458 = vadd.f32 %v4331, %v4394
        %v4459 = vadd.f32 %v4332, %v4395
        %v4460 = vadd.f32 %v4333, %v4396
        %v4461 = vadd.f32 %v4334, %v4397
        %v4462 = vadd.f32 %v4335, %v4398
        %v4463 = vadd.f32 %v4336, %v4399
        %v4464 = vadd.f32 %v4337, %v4400
        %v4465 = vadd.f32 %v4338, %v4401
        %v4466 = vadd.f32 %v4339, %v4402
        %v4467 = vadd.f32 %v4340, %v4403
        %v4468 = vadd.f32 %v4341, %v4404
        %v4469 = vadd.f32 %v4342, %v4405
        %v4470 = vadd.f32 %v4343, %v4406
        %v4471 = vadd.f32 %v4344, %v4407
        %v4472 = vadd.f32 %v4345, %v4408
        %v4473 = vadd.f32 %v4346, %v4409
        %v4474 = vadd.f32 %v4347, %v4410
        %v4475 = vadd.f32 %v4348, %v4411
        %v4476 = vadd.f32 %v4349, %v4412
        %v4477 = vadd.f32 %v4350, %v4413
        %v4478 = vadd.f32 %v4351, %v4414
        %v4479 = vadd.f32 %v4352, %v4415
        %v4480 = vadd.f32 %v4353, %v4416
        %v4481 = vadd.f32 %v4354, %v4417
        %v4482 = vadd.f32 %v4355, %v4418
        %v4483 = vadd.f32 %v4356, %v4419
        %v4484 = vadd.f32 %v4357, %v4420
        %v4485 = vadd.f32 %v4358, %v4421
        %v4486 = vadd.f32 %v4359, %v4422
        %v4487 = vadd.f32 %v4360, %v4423
        %v4488 = vadd.f32 %v4361, %v4424
        %v4489 = vadd.f32 %v4362, %v4425
        %v4490 = vadd.f32 %v4363, %v4426
        %v4491 = vadd.f32 %v4364, %v4427
        %v4492 = vadd.f32 %v4365, %v4428
        %v4493 = vadd.f32 %v4366, %v4429
        %v4494 = vadd.f32 %v4367, %v4430
        %v4495 = vadd.f32 %v4368, %v4431
        %v4496 = vadd.f32 %v4369, %v4432
        %v4497 = vadd.f32 %v4370, %v4433
        %v4498 = vadd.f32 %v4371, %v4434
        %v4499 = vadd.f32 %v4372, %v4435
        %v4500 = vadd.f32 %v4373, %v4436
        %v4501 = vadd.f32 %v4374, %v4437
        %v4502 = vadd.f32 %v4375, %v4438
        %v4503 = vadd.f32 %v4376, %v4439
        %v4504 = vadd.f32 %v4377, %v4440
        %v4505 = vadd.f32 %v4378, %v4441
        %v4506 = vadd.f32 %v4379, %v4442
        %v4507 = vadd.f32 %v4380, %v4443
        %v4508 = vadd.f32 %v4381, %v4444
        %v4509 = vadd.f32 %v4382, %v4445
        %v4510 = vadd.f32 %v4383, %v4446
        %v4511 = vadd.f32 %v4384, %v4447
        %v4512 = vadd.f32 %v4385, %v4448
        %v4513 = vadd.f32 %v4386, %v4449
        %v4514 = vadd.f32 %v4387, %v4450
        %v4515 = vadd.f32 %v4388, %v4451
        %v4516 = vadd.f32 %v4389, %v4452
        %v4517 = vadd.f32 %v4390, %v4453
        %v4518 = vadd.f32 %v4391, %v4454
        %v4519 = vadd.f32 %v4392, %v4455
        %v4520 = vadd.f32 %v4393, %v4456
        %v4521 = vmul.f32 %v4328, 0.25
        %v4522 = vadd.f32 %v4330, %v4395
        %v4523 = vadd.f32 %v4331, %v4396
        %v4524 = vadd.f32 %v4332, %v4397
        %v4525 = vadd.f32 %v4333, %v4398
        %v4526 = vadd.f32 %v4334, %v4399
        %v4527 = vadd.f32 %v4335, %v4400
        %v4528 = vadd.f32 %v4336, %v4401
        %v4529 = vadd.f32 %v4337, %v4402
        %v4530 = vadd.f32 %v4338, %v4403
        %v4531 = vadd.f32 %v4339, %v4404
        %v4532 = vadd.f32 %v4340, %v4405
        %v4533 = vadd.f32 %v4341, %v4406
        %v4534 = vadd.f32 %v4342, %v4407
        %v4535 = vadd.f32 %v4343, %v4408
        %v4536 = vadd.f32 %v4344, %v4409
        %v4537 = vadd.f32 %v4345, %v4410
        %v4538 = vadd.f32 %v4346, %v4411
        %v4539 = vadd.f32 %v4347, %v4412
        %v4540 = vadd.f32 %v4348, %v4413
        %v4541 = vadd.f32 %v4349, %v4414
        %v4542 = vadd.f32 %v4350, %v4415
        %v4543 = vadd.f32 %v4351, %v4416
        %v4544 = vadd.f32 %v4352, %v4417
        %v4545 = vadd.f32 %v4353, %v4418
        %v4546 = vadd.f32 %v4354, %v4419
        %v4547 = vadd.f32 %v4355, %v4420
        %v4548 = vadd.f32 %v4356, %v4421
        %v4549 = vadd.f32 %v4357, %v4422
        %v4550 = vadd.f32 %v4358, %v4423
        %v4551 = vadd.f32 %v4359, %v4424
        %v4552 = vadd.f32 %v4360, %v4425
        %v4553 = vadd.f32 %v4361, %v4426
        %v4554 = vadd.f32 %v4362, %v4427
        %v4555 = vadd.f32 %v4363, %v4428
        %v4556 = vadd.f32 %v4364, %v4429
        %v4557 = vadd.f32 %v4365, %v4430
        %v4558 = vadd.f32 %v4366, %v4431
        %v4559 = vadd.f32 %v4367, %v4432
        %v4560 = vadd.f32 %v4368, %v4433
        %v4561 = vadd.f32 %v4369, %v4434
        %v4562 = vadd.f32 %v4370, %v4435
        %v4563 = vadd.f32 %v4371, %v4436
        %v4564 = vadd.f32 %v4372, %v4437
        %v4565 = vadd.f32 %v4373, %v4438
        %v4566 = vadd.f32 %v4374, %v4439
        %v4567 = vadd.f32 %v4375, %v4440
        %v4568 = vadd.f32 %v4376, %v4441
        %v4569 = vadd.f32 %v4377, %v4442
        %v4570 = vadd.f32 %v4378, %v4443
        %v4571 = vadd.f32 %v4379, %v4444
        %v4572 = vadd.f32 %v4380, %v4445
        %v4573 = vadd.f32 %v4381, %v4446
        %v4574 = vadd.f32 %v4382, %v4447
        %v4575 = vadd.f32 %v4383, %v4448
        %v4576 = vadd.f32 %v4384, %v4449
        %v4577 = vadd.f32 %v4385, %v4450
        %v4578 = vadd.f32 %v4386, %v4451
        %v4579 = vadd.f32 %v4387, %v4452
        %v4580 = vadd.f32 %v4388, %v4453
        %v4581 = vadd.f32 %v4389, %v4454
        %v4582 = vadd.f32 %v4390, %v4455
        %v4583 = vadd.f32 %v4391, %v4456
        %v4584 = vadd.f32 %v4392, %v4521
        %v4585 = vadd.f32 %v4393, %v4521
        %v4586 = vld [vmem:[%s9] sm:$0x1]
        %v4587 = vld [vmem:[#allocation2] sm:$0x1]
        %4589 = vset.pattern.permute.xlu0 0
        %4590 = vperm.xlu0 %4589, %v4587
        %v4591 = vpop.permute.xlu0 %4590
        %v4593 = vperm.slane %v4591, 0
        %v4595 = vsel %vm733, %v4586, 0
        %4597 = vmatpush.msra.mxu0 0.0
        %4598 = vmatpush.msra.mxu0 0.0
        %4599 = vmatpush.msra.mxu0 0.0
        %4600 = vmatpush.msra.mxu0 0.0
        %4601 = vmatpush.msra.mxu0 0.0
        %4602 = vmatpush.msra.mxu0 0.0
        %4603 = vmatpush.msra.mxu0 0.0
        %4604 = vmatpush.msra.mxu0 0.0
        %4605 = vmatpush.msra.mxu0 0.0
        %4606 = vmatpush.msra.mxu0 0.0
        %4607 = vmatpush.msra.mxu0 0.0
        %4608 = vmatpush.msra.mxu0 0.0
        %4609 = vmatpush.msra.mxu0 0.0
        %4610 = vmatpush.msra.mxu0 0.0
        %4611 = vmatpush.msra.mxu0 0.0
        %4612 = vmatpush.msra.mxu0 %v4457
        %4613 = vmatmul.f32.gmra.mxu0 %v4595
        %v4614 = vpop.f32.mrf.mxu0
        %v4615 = vadd.f32 %v4593, %v4614
        %4616 = vdwg.mxu0
        %4617 = vmatpush.msra.mxu0 0.0
        %4618 = vmatpush.msra.mxu0 0.0
        %4619 = vmatpush.msra.mxu0 0.0
        %4620 = vmatpush.msra.mxu0 0.0
        %4621 = vmatpush.msra.mxu0 0.0
        %4622 = vmatpush.msra.mxu0 0.0
        %4623 = vmatpush.msra.mxu0 0.0
        %4624 = vmatpush.msra.mxu0 0.0
        %4625 = vmatpush.msra.mxu0 0.0
        %4626 = vmatpush.msra.mxu0 0.0
        %4627 = vmatpush.msra.mxu0 0.0
        %4628 = vmatpush.msra.mxu0 0.0
        %4629 = vmatpush.msra.mxu0 0.0
        %4630 = vmatpush.msra.mxu0 0.0
        %4631 = vmatpush.msra.mxu0 0.0
        %4632 = vmatpush.msra.mxu0 %v4522
        %4633 = vmatmul.f32.gmra.mxu0 %v4595
        %v4634 = vpop.f32.mrf.mxu0
        %v4635 = vadd.f32 %v4593, %v4634
        %4636 = vdwg.mxu0
        %4637 = vmatpush.msra.mxu0 0.0
        %4638 = vmatpush.msra.mxu0 0.0
        %4639 = vmatpush.msra.mxu0 0.0
        %4640 = vmatpush.msra.mxu0 0.0
        %4641 = vmatpush.msra.mxu0 0.0
        %4642 = vmatpush.msra.mxu0 0.0
        %4643 = vmatpush.msra.mxu0 0.0
        %4644 = vmatpush.msra.mxu0 0.0
        %4645 = vmatpush.msra.mxu0 0.0
        %4646 = vmatpush.msra.mxu0 0.0
        %4647 = vmatpush.msra.mxu0 0.0
        %4648 = vmatpush.msra.mxu0 0.0
        %4649 = vmatpush.msra.mxu0 0.0
        %4650 = vmatpush.msra.mxu0 0.0
        %4651 = vmatpush.msra.mxu0 0.0
        %4652 = vmatpush.msra.mxu0 %v4458
        %4653 = vmatmul.f32.gmra.mxu0 %v4595
        %v4654 = vpop.f32.mrf.mxu0
        %v4655 = vadd.f32 %v4593, %v4654
        %4656 = vdwg.mxu0
        %4657 = vmatpush.msra.mxu0 0.0
        %4658 = vmatpush.msra.mxu0 0.0
        %4659 = vmatpush.msra.mxu0 0.0
        %4660 = vmatpush.msra.mxu0 0.0
        %4661 = vmatpush.msra.mxu0 0.0
        %4662 = vmatpush.msra.mxu0 0.0
        %4663 = vmatpush.msra.mxu0 0.0
        %4664 = vmatpush.msra.mxu0 0.0
        %4665 = vmatpush.msra.mxu0 0.0
        %4666 = vmatpush.msra.mxu0 0.0
        %4667 = vmatpush.msra.mxu0 0.0
        %4668 = vmatpush.msra.mxu0 0.0
        %4669 = vmatpush.msra.mxu0 0.0
        %4670 = vmatpush.msra.mxu0 0.0
        %4671 = vmatpush.msra.mxu0 0.0
        %4672 = vmatpush.msra.mxu0 %v4523
        %4673 = vmatmul.f32.gmra.mxu0 %v4595
        %v4674 = vpop.f32.mrf.mxu0
        %v4675 = vadd.f32 %v4593, %v4674
        %4676 = vdwg.mxu0
        %4677 = vmatpush.msra.mxu0 0.0
        %4678 = vmatpush.msra.mxu0 0.0
        %4679 = vmatpush.msra.mxu0 0.0
        %4680 = vmatpush.msra.mxu0 0.0
        %4681 = vmatpush.msra.mxu0 0.0
        %4682 = vmatpush.msra.mxu0 0.0
        %4683 = vmatpush.msra.mxu0 0.0
        %4684 = vmatpush.msra.mxu0 0.0
        %4685 = vmatpush.msra.mxu0 0.0
        %4686 = vmatpush.msra.mxu0 0.0
        %4687 = vmatpush.msra.mxu0 0.0
        %4688 = vmatpush.msra.mxu0 0.0
        %4689 = vmatpush.msra.mxu0 0.0
        %4690 = vmatpush.msra.mxu0 0.0
        %4691 = vmatpush.msra.mxu0 0.0
        %4692 = vmatpush.msra.mxu0 %v4459
        %4693 = vmatmul.f32.gmra.mxu0 %v4595
        %v4694 = vpop.f32.mrf.mxu0
        %v4695 = vadd.f32 %v4593, %v4694
        %4696 = vdwg.mxu0
        %4697 = vmatpush.msra.mxu0 0.0
        %4698 = vmatpush.msra.mxu0 0.0
        %4699 = vmatpush.msra.mxu0 0.0
        %4700 = vmatpush.msra.mxu0 0.0
        %4701 = vmatpush.msra.mxu0 0.0
        %4702 = vmatpush.msra.mxu0 0.0
        %4703 = vmatpush.msra.mxu0 0.0
        %4704 = vmatpush.msra.mxu0 0.0
        %4705 = vmatpush.msra.mxu0 0.0
        %4706 = vmatpush.msra.mxu0 0.0
        %4707 = vmatpush.msra.mxu0 0.0
        %4708 = vmatpush.msra.mxu0 0.0
        %4709 = vmatpush.msra.mxu0 0.0
        %4710 = vmatpush.msra.mxu0 0.0
        %4711 = vmatpush.msra.mxu0 0.0
        %4712 = vmatpush.msra.mxu0 %v4524
        %4713 = vmatmul.f32.gmra.mxu0 %v4595
        %v4714 = vpop.f32.mrf.mxu0
        %v4715 = vadd.f32 %v4593, %v4714
        %4716 = vdwg.mxu0
        %4717 = vmatpush.msra.mxu0 0.0
        %4718 = vmatpush.msra.mxu0 0.0
        %4719 = vmatpush.msra.mxu0 0.0
        %4720 = vmatpush.msra.mxu0 0.0
        %4721 = vmatpush.msra.mxu0 0.0
        %4722 = vmatpush.msra.mxu0 0.0
        %4723 = vmatpush.msra.mxu0 0.0
        %4724 = vmatpush.msra.mxu0 0.0
        %4725 = vmatpush.msra.mxu0 0.0
        %4726 = vmatpush.msra.mxu0 0.0
        %4727 = vmatpush.msra.mxu0 0.0
        %4728 = vmatpush.msra.mxu0 0.0
        %4729 = vmatpush.msra.mxu0 0.0
        %4730 = vmatpush.msra.mxu0 0.0
        %4731 = vmatpush.msra.mxu0 0.0
        %4732 = vmatpush.msra.mxu0 %v4460
        %4733 = vmatmul.f32.gmra.mxu0 %v4595
        %v4734 = vpop.f32.mrf.mxu0
        %v4735 = vadd.f32 %v4593, %v4734
        %4736 = vdwg.mxu0
        %4737 = vmatpush.msra.mxu0 0.0
        %4738 = vmatpush.msra.mxu0 0.0
        %4739 = vmatpush.msra.mxu0 0.0
        %4740 = vmatpush.msra.mxu0 0.0
        %4741 = vmatpush.msra.mxu0 0.0
        %4742 = vmatpush.msra.mxu0 0.0
        %4743 = vmatpush.msra.mxu0 0.0
        %4744 = vmatpush.msra.mxu0 0.0
        %4745 = vmatpush.msra.mxu0 0.0
        %4746 = vmatpush.msra.mxu0 0.0
        %4747 = vmatpush.msra.mxu0 0.0
        %4748 = vmatpush.msra.mxu0 0.0
        %4749 = vmatpush.msra.mxu0 0.0
        %4750 = vmatpush.msra.mxu0 0.0
        %4751 = vmatpush.msra.mxu0 0.0
        %4752 = vmatpush.msra.mxu0 %v4525
        %4753 = vmatmul.f32.gmra.mxu0 %v4595
        %v4754 = vpop.f32.mrf.mxu0
        %v4755 = vadd.f32 %v4593, %v4754
        %4756 = vdwg.mxu0
        %4757 = vmatpush.msra.mxu0 0.0
        %4758 = vmatpush.msra.mxu0 0.0
        %4759 = vmatpush.msra.mxu0 0.0
        %4760 = vmatpush.msra.mxu0 0.0
        %4761 = vmatpush.msra.mxu0 0.0
        %4762 = vmatpush.msra.mxu0 0.0
        %4763 = vmatpush.msra.mxu0 0.0
        %4764 = vmatpush.msra.mxu0 0.0
        %4765 = vmatpush.msra.mxu0 0.0
        %4766 = vmatpush.msra.mxu0 0.0
        %4767 = vmatpush.msra.mxu0 0.0
        %4768 = vmatpush.msra.mxu0 0.0
        %4769 = vmatpush.msra.mxu0 0.0
        %4770 = vmatpush.msra.mxu0 0.0
        %4771 = vmatpush.msra.mxu0 0.0
        %4772 = vmatpush.msra.mxu0 %v4461
        %4773 = vmatmul.f32.gmra.mxu0 %v4595
        %v4774 = vpop.f32.mrf.mxu0
        %v4775 = vadd.f32 %v4593, %v4774
        %4776 = vdwg.mxu0
        %4777 = vmatpush.msra.mxu0 0.0
        %4778 = vmatpush.msra.mxu0 0.0
        %4779 = vmatpush.msra.mxu0 0.0
        %4780 = vmatpush.msra.mxu0 0.0
        %4781 = vmatpush.msra.mxu0 0.0
        %4782 = vmatpush.msra.mxu0 0.0
        %4783 = vmatpush.msra.mxu0 0.0
        %4784 = vmatpush.msra.mxu0 0.0
        %4785 = vmatpush.msra.mxu0 0.0
        %4786 = vmatpush.msra.mxu0 0.0
        %4787 = vmatpush.msra.mxu0 0.0
        %4788 = vmatpush.msra.mxu0 0.0
        %4789 = vmatpush.msra.mxu0 0.0
        %4790 = vmatpush.msra.mxu0 0.0
        %4791 = vmatpush.msra.mxu0 0.0
        %4792 = vmatpush.msra.mxu0 %v4526
        %4793 = vmatmul.f32.gmra.mxu0 %v4595
        %v4794 = vpop.f32.mrf.mxu0
        %v4795 = vadd.f32 %v4593, %v4794
        %4796 = vdwg.mxu0
        %4797 = vmatpush.msra.mxu0 0.0
        %4798 = vmatpush.msra.mxu0 0.0
        %4799 = vmatpush.msra.mxu0 0.0
        %4800 = vmatpush.msra.mxu0 0.0
        %4801 = vmatpush.msra.mxu0 0.0
        %4802 = vmatpush.msra.mxu0 0.0
        %4803 = vmatpush.msra.mxu0 0.0
        %4804 = vmatpush.msra.mxu0 0.0
        %4805 = vmatpush.msra.mxu0 0.0
        %4806 = vmatpush.msra.mxu0 0.0
        %4807 = vmatpush.msra.mxu0 0.0
        %4808 = vmatpush.msra.mxu0 0.0
        %4809 = vmatpush.msra.mxu0 0.0
        %4810 = vmatpush.msra.mxu0 0.0
        %4811 = vmatpush.msra.mxu0 0.0
        %4812 = vmatpush.msra.mxu0 %v4462
        %4813 = vmatmul.f32.gmra.mxu0 %v4595
        %v4814 = vpop.f32.mrf.mxu0
        %v4815 = vadd.f32 %v4593, %v4814
        %4816 = vdwg.mxu0
        %4817 = vmatpush.msra.mxu0 0.0
        %4818 = vmatpush.msra.mxu0 0.0
        %4819 = vmatpush.msra.mxu0 0.0
        %4820 = vmatpush.msra.mxu0 0.0
        %4821 = vmatpush.msra.mxu0 0.0
        %4822 = vmatpush.msra.mxu0 0.0
        %4823 = vmatpush.msra.mxu0 0.0
        %4824 = vmatpush.msra.mxu0 0.0
        %4825 = vmatpush.msra.mxu0 0.0
        %4826 = vmatpush.msra.mxu0 0.0
        %4827 = vmatpush.msra.mxu0 0.0
        %4828 = vmatpush.msra.mxu0 0.0
        %4829 = vmatpush.msra.mxu0 0.0
        %4830 = vmatpush.msra.mxu0 0.0
        %4831 = vmatpush.msra.mxu0 0.0
        %4832 = vmatpush.msra.mxu0 %v4527
        %4833 = vmatmul.f32.gmra.mxu0 %v4595
        %v4834 = vpop.f32.mrf.mxu0
        %v4835 = vadd.f32 %v4593, %v4834
        %4836 = vdwg.mxu0
        %4837 = vmatpush.msra.mxu0 0.0
        %4838 = vmatpush.msra.mxu0 0.0
        %4839 = vmatpush.msra.mxu0 0.0
        %4840 = vmatpush.msra.mxu0 0.0
        %4841 = vmatpush.msra.mxu0 0.0
        %4842 = vmatpush.msra.mxu0 0.0
        %4843 = vmatpush.msra.mxu0 0.0
        %4844 = vmatpush.msra.mxu0 0.0
        %4845 = vmatpush.msra.mxu0 0.0
        %4846 = vmatpush.msra.mxu0 0.0
        %4847 = vmatpush.msra.mxu0 0.0
        %4848 = vmatpush.msra.mxu0 0.0
        %4849 = vmatpush.msra.mxu0 0.0
        %4850 = vmatpush.msra.mxu0 0.0
        %4851 = vmatpush.msra.mxu0 0.0
        %4852 = vmatpush.msra.mxu0 %v4463
        %4853 = vmatmul.f32.gmra.mxu0 %v4595
        %v4854 = vpop.f32.mrf.mxu0
        %v4855 = vadd.f32 %v4593, %v4854
        %4856 = vdwg.mxu0
        %4857 = vmatpush.msra.mxu0 0.0
        %4858 = vmatpush.msra.mxu0 0.0
        %4859 = vmatpush.msra.mxu0 0.0
        %4860 = vmatpush.msra.mxu0 0.0
        %4861 = vmatpush.msra.mxu0 0.0
        %4862 = vmatpush.msra.mxu0 0.0
        %4863 = vmatpush.msra.mxu0 0.0
        %4864 = vmatpush.msra.mxu0 0.0
        %4865 = vmatpush.msra.mxu0 0.0
        %4866 = vmatpush.msra.mxu0 0.0
        %4867 = vmatpush.msra.mxu0 0.0
        %4868 = vmatpush.msra.mxu0 0.0
        %4869 = vmatpush.msra.mxu0 0.0
        %4870 = vmatpush.msra.mxu0 0.0
        %4871 = vmatpush.msra.mxu0 0.0
        %4872 = vmatpush.msra.mxu0 %v4528
        %4873 = vmatmul.f32.gmra.mxu0 %v4595
        %v4874 = vpop.f32.mrf.mxu0
        %v4875 = vadd.f32 %v4593, %v4874
        %4876 = vdwg.mxu0
        %4877 = vmatpush.msra.mxu0 0.0
        %4878 = vmatpush.msra.mxu0 0.0
        %4879 = vmatpush.msra.mxu0 0.0
        %4880 = vmatpush.msra.mxu0 0.0
        %4881 = vmatpush.msra.mxu0 0.0
        %4882 = vmatpush.msra.mxu0 0.0
        %4883 = vmatpush.msra.mxu0 0.0
        %4884 = vmatpush.msra.mxu0 0.0
        %4885 = vmatpush.msra.mxu0 0.0
        %4886 = vmatpush.msra.mxu0 0.0
        %4887 = vmatpush.msra.mxu0 0.0
        %4888 = vmatpush.msra.mxu0 0.0
        %4889 = vmatpush.msra.mxu0 0.0
        %4890 = vmatpush.msra.mxu0 0.0
        %4891 = vmatpush.msra.mxu0 0.0
        %4892 = vmatpush.msra.mxu0 %v4464
        %4893 = vmatmul.f32.gmra.mxu0 %v4595
        %v4894 = vpop.f32.mrf.mxu0
        %v4895 = vadd.f32 %v4593, %v4894
        %4896 = vdwg.mxu0
        %4897 = vmatpush.msra.mxu0 0.0
        %4898 = vmatpush.msra.mxu0 0.0
        %4899 = vmatpush.msra.mxu0 0.0
        %4900 = vmatpush.msra.mxu0 0.0
        %4901 = vmatpush.msra.mxu0 0.0
        %4902 = vmatpush.msra.mxu0 0.0
        %4903 = vmatpush.msra.mxu0 0.0
        %4904 = vmatpush.msra.mxu0 0.0
        %4905 = vmatpush.msra.mxu0 0.0
        %4906 = vmatpush.msra.mxu0 0.0
        %4907 = vmatpush.msra.mxu0 0.0
        %4908 = vmatpush.msra.mxu0 0.0
        %4909 = vmatpush.msra.mxu0 0.0
        %4910 = vmatpush.msra.mxu0 0.0
        %4911 = vmatpush.msra.mxu0 0.0
        %4912 = vmatpush.msra.mxu0 %v4529
        %4913 = vmatmul.f32.gmra.mxu0 %v4595
        %v4914 = vpop.f32.mrf.mxu0
        %v4915 = vadd.f32 %v4593, %v4914
        %4916 = vdwg.mxu0
        %4917 = vmatpush.msra.mxu0 0.0
        %4918 = vmatpush.msra.mxu0 0.0
        %4919 = vmatpush.msra.mxu0 0.0
        %4920 = vmatpush.msra.mxu0 0.0
        %4921 = vmatpush.msra.mxu0 0.0
        %4922 = vmatpush.msra.mxu0 0.0
        %4923 = vmatpush.msra.mxu0 0.0
        %4924 = vmatpush.msra.mxu0 0.0
        %4925 = vmatpush.msra.mxu0 0.0
        %4926 = vmatpush.msra.mxu0 0.0
        %4927 = vmatpush.msra.mxu0 0.0
        %4928 = vmatpush.msra.mxu0 0.0
        %4929 = vmatpush.msra.mxu0 0.0
        %4930 = vmatpush.msra.mxu0 0.0
        %4931 = vmatpush.msra.mxu0 0.0
        %4932 = vmatpush.msra.mxu0 %v4465
        %4933 = vmatmul.f32.gmra.mxu0 %v4595
        %v4934 = vpop.f32.mrf.mxu0
        %v4935 = vadd.f32 %v4593, %v4934
        %4936 = vdwg.mxu0
        %4937 = vmatpush.msra.mxu0 0.0
        %4938 = vmatpush.msra.mxu0 0.0
        %4939 = vmatpush.msra.mxu0 0.0
        %4940 = vmatpush.msra.mxu0 0.0
        %4941 = vmatpush.msra.mxu0 0.0
        %4942 = vmatpush.msra.mxu0 0.0
        %4943 = vmatpush.msra.mxu0 0.0
        %4944 = vmatpush.msra.mxu0 0.0
        %4945 = vmatpush.msra.mxu0 0.0
        %4946 = vmatpush.msra.mxu0 0.0
        %4947 = vmatpush.msra.mxu0 0.0
        %4948 = vmatpush.msra.mxu0 0.0
        %4949 = vmatpush.msra.mxu0 0.0
        %4950 = vmatpush.msra.mxu0 0.0
        %4951 = vmatpush.msra.mxu0 0.0
        %4952 = vmatpush.msra.mxu0 %v4530
        %4953 = vmatmul.f32.gmra.mxu0 %v4595
        %v4954 = vpop.f32.mrf.mxu0
        %v4955 = vadd.f32 %v4593, %v4954
        %4956 = vdwg.mxu0
        %4957 = vmatpush.msra.mxu0 0.0
        %4958 = vmatpush.msra.mxu0 0.0
        %4959 = vmatpush.msra.mxu0 0.0
        %4960 = vmatpush.msra.mxu0 0.0
        %4961 = vmatpush.msra.mxu0 0.0
        %4962 = vmatpush.msra.mxu0 0.0
        %4963 = vmatpush.msra.mxu0 0.0
        %4964 = vmatpush.msra.mxu0 0.0
        %4965 = vmatpush.msra.mxu0 0.0
        %4966 = vmatpush.msra.mxu0 0.0
        %4967 = vmatpush.msra.mxu0 0.0
        %4968 = vmatpush.msra.mxu0 0.0
        %4969 = vmatpush.msra.mxu0 0.0
        %4970 = vmatpush.msra.mxu0 0.0
        %4971 = vmatpush.msra.mxu0 0.0
        %4972 = vmatpush.msra.mxu0 %v4466
        %4973 = vmatmul.f32.gmra.mxu0 %v4595
        %v4974 = vpop.f32.mrf.mxu0
        %v4975 = vadd.f32 %v4593, %v4974
        %4976 = vdwg.mxu0
        %4977 = vmatpush.msra.mxu0 0.0
        %4978 = vmatpush.msra.mxu0 0.0
        %4979 = vmatpush.msra.mxu0 0.0
        %4980 = vmatpush.msra.mxu0 0.0
        %4981 = vmatpush.msra.mxu0 0.0
        %4982 = vmatpush.msra.mxu0 0.0
        %4983 = vmatpush.msra.mxu0 0.0
        %4984 = vmatpush.msra.mxu0 0.0
        %4985 = vmatpush.msra.mxu0 0.0
        %4986 = vmatpush.msra.mxu0 0.0
        %4987 = vmatpush.msra.mxu0 0.0
        %4988 = vmatpush.msra.mxu0 0.0
        %4989 = vmatpush.msra.mxu0 0.0
        %4990 = vmatpush.msra.mxu0 0.0
        %4991 = vmatpush.msra.mxu0 0.0
        %4992 = vmatpush.msra.mxu0 %v4531
        %4993 = vmatmul.f32.gmra.mxu0 %v4595
        %v4994 = vpop.f32.mrf.mxu0
        %v4995 = vadd.f32 %v4593, %v4994
        %4996 = vdwg.mxu0
        %4997 = vmatpush.msra.mxu0 0.0
        %4998 = vmatpush.msra.mxu0 0.0
        %4999 = vmatpush.msra.mxu0 0.0
        %5000 = vmatpush.msra.mxu0 0.0
        %5001 = vmatpush.msra.mxu0 0.0
        %5002 = vmatpush.msra.mxu0 0.0
        %5003 = vmatpush.msra.mxu0 0.0
        %5004 = vmatpush.msra.mxu0 0.0
        %5005 = vmatpush.msra.mxu0 0.0
        %5006 = vmatpush.msra.mxu0 0.0
        %5007 = vmatpush.msra.mxu0 0.0
        %5008 = vmatpush.msra.mxu0 0.0
        %5009 = vmatpush.msra.mxu0 0.0
        %5010 = vmatpush.msra.mxu0 0.0
        %5011 = vmatpush.msra.mxu0 0.0
        %5012 = vmatpush.msra.mxu0 %v4467
        %5013 = vmatmul.f32.gmra.mxu0 %v4595
        %v5014 = vpop.f32.mrf.mxu0
        %v5015 = vadd.f32 %v4593, %v5014
        %5016 = vdwg.mxu0
        %5017 = vmatpush.msra.mxu0 0.0
        %5018 = vmatpush.msra.mxu0 0.0
        %5019 = vmatpush.msra.mxu0 0.0
        %5020 = vmatpush.msra.mxu0 0.0
        %5021 = vmatpush.msra.mxu0 0.0
        %5022 = vmatpush.msra.mxu0 0.0
        %5023 = vmatpush.msra.mxu0 0.0
        %5024 = vmatpush.msra.mxu0 0.0
        %5025 = vmatpush.msra.mxu0 0.0
        %5026 = vmatpush.msra.mxu0 0.0
        %5027 = vmatpush.msra.mxu0 0.0
        %5028 = vmatpush.msra.mxu0 0.0
        %5029 = vmatpush.msra.mxu0 0.0
        %5030 = vmatpush.msra.mxu0 0.0
        %5031 = vmatpush.msra.mxu0 0.0
        %5032 = vmatpush.msra.mxu0 %v4532
        %5033 = vmatmul.f32.gmra.mxu0 %v4595
        %v5034 = vpop.f32.mrf.mxu0
        %v5035 = vadd.f32 %v4593, %v5034
        %5036 = vdwg.mxu0
        %5037 = vmatpush.msra.mxu0 0.0
        %5038 = vmatpush.msra.mxu0 0.0
        %5039 = vmatpush.msra.mxu0 0.0
        %5040 = vmatpush.msra.mxu0 0.0
        %5041 = vmatpush.msra.mxu0 0.0
        %5042 = vmatpush.msra.mxu0 0.0
        %5043 = vmatpush.msra.mxu0 0.0
        %5044 = vmatpush.msra.mxu0 0.0
        %5045 = vmatpush.msra.mxu0 0.0
        %5046 = vmatpush.msra.mxu0 0.0
        %5047 = vmatpush.msra.mxu0 0.0
        %5048 = vmatpush.msra.mxu0 0.0
        %5049 = vmatpush.msra.mxu0 0.0
        %5050 = vmatpush.msra.mxu0 0.0
        %5051 = vmatpush.msra.mxu0 0.0
        %5052 = vmatpush.msra.mxu0 %v4468
        %5053 = vmatmul.f32.gmra.mxu0 %v4595
        %v5054 = vpop.f32.mrf.mxu0
        %v5055 = vadd.f32 %v4593, %v5054
        %5056 = vdwg.mxu0
        %5057 = vmatpush.msra.mxu0 0.0
        %5058 = vmatpush.msra.mxu0 0.0
        %5059 = vmatpush.msra.mxu0 0.0
        %5060 = vmatpush.msra.mxu0 0.0
        %5061 = vmatpush.msra.mxu0 0.0
        %5062 = vmatpush.msra.mxu0 0.0
        %5063 = vmatpush.msra.mxu0 0.0
        %5064 = vmatpush.msra.mxu0 0.0
        %5065 = vmatpush.msra.mxu0 0.0
        %5066 = vmatpush.msra.mxu0 0.0
        %5067 = vmatpush.msra.mxu0 0.0
        %5068 = vmatpush.msra.mxu0 0.0
        %5069 = vmatpush.msra.mxu0 0.0
        %5070 = vmatpush.msra.mxu0 0.0
        %5071 = vmatpush.msra.mxu0 0.0
        %5072 = vmatpush.msra.mxu0 %v4533
        %5073 = vmatmul.f32.gmra.mxu0 %v4595
        %v5074 = vpop.f32.mrf.mxu0
        %v5075 = vadd.f32 %v4593, %v5074
        %5076 = vdwg.mxu0
        %5077 = vmatpush.msra.mxu0 0.0
        %5078 = vmatpush.msra.mxu0 0.0
        %5079 = vmatpush.msra.mxu0 0.0
        %5080 = vmatpush.msra.mxu0 0.0
        %5081 = vmatpush.msra.mxu0 0.0
        %5082 = vmatpush.msra.mxu0 0.0
        %5083 = vmatpush.msra.mxu0 0.0
        %5084 = vmatpush.msra.mxu0 0.0
        %5085 = vmatpush.msra.mxu0 0.0
        %5086 = vmatpush.msra.mxu0 0.0
        %5087 = vmatpush.msra.mxu0 0.0
        %5088 = vmatpush.msra.mxu0 0.0
        %5089 = vmatpush.msra.mxu0 0.0
        %5090 = vmatpush.msra.mxu0 0.0
        %5091 = vmatpush.msra.mxu0 0.0
        %5092 = vmatpush.msra.mxu0 %v4469
        %5093 = vmatmul.f32.gmra.mxu0 %v4595
        %v5094 = vpop.f32.mrf.mxu0
        %v5095 = vadd.f32 %v4593, %v5094
        %5096 = vdwg.mxu0
        %5097 = vmatpush.msra.mxu0 0.0
        %5098 = vmatpush.msra.mxu0 0.0
        %5099 = vmatpush.msra.mxu0 0.0
        %5100 = vmatpush.msra.mxu0 0.0
        %5101 = vmatpush.msra.mxu0 0.0
        %5102 = vmatpush.msra.mxu0 0.0
        %5103 = vmatpush.msra.mxu0 0.0
        %5104 = vmatpush.msra.mxu0 0.0
        %5105 = vmatpush.msra.mxu0 0.0
        %5106 = vmatpush.msra.mxu0 0.0
        %5107 = vmatpush.msra.mxu0 0.0
        %5108 = vmatpush.msra.mxu0 0.0
        %5109 = vmatpush.msra.mxu0 0.0
        %5110 = vmatpush.msra.mxu0 0.0
        %5111 = vmatpush.msra.mxu0 0.0
        %5112 = vmatpush.msra.mxu0 %v4534
        %5113 = vmatmul.f32.gmra.mxu0 %v4595
        %v5114 = vpop.f32.mrf.mxu0
        %v5115 = vadd.f32 %v4593, %v5114
        %5116 = vdwg.mxu0
        %5117 = vmatpush.msra.mxu0 0.0
        %5118 = vmatpush.msra.mxu0 0.0
        %5119 = vmatpush.msra.mxu0 0.0
        %5120 = vmatpush.msra.mxu0 0.0
        %5121 = vmatpush.msra.mxu0 0.0
        %5122 = vmatpush.msra.mxu0 0.0
        %5123 = vmatpush.msra.mxu0 0.0
        %5124 = vmatpush.msra.mxu0 0.0
        %5125 = vmatpush.msra.mxu0 0.0
        %5126 = vmatpush.msra.mxu0 0.0
        %5127 = vmatpush.msra.mxu0 0.0
        %5128 = vmatpush.msra.mxu0 0.0
        %5129 = vmatpush.msra.mxu0 0.0
        %5130 = vmatpush.msra.mxu0 0.0
        %5131 = vmatpush.msra.mxu0 0.0
        %5132 = vmatpush.msra.mxu0 %v4470
        %5133 = vmatmul.f32.gmra.mxu0 %v4595
        %v5134 = vpop.f32.mrf.mxu0
        %v5135 = vadd.f32 %v4593, %v5134
        %5136 = vdwg.mxu0
        %5137 = vmatpush.msra.mxu0 0.0
        %5138 = vmatpush.msra.mxu0 0.0
        %5139 = vmatpush.msra.mxu0 0.0
        %5140 = vmatpush.msra.mxu0 0.0
        %5141 = vmatpush.msra.mxu0 0.0
        %5142 = vmatpush.msra.mxu0 0.0
        %5143 = vmatpush.msra.mxu0 0.0
        %5144 = vmatpush.msra.mxu0 0.0
        %5145 = vmatpush.msra.mxu0 0.0
        %5146 = vmatpush.msra.mxu0 0.0
        %5147 = vmatpush.msra.mxu0 0.0
        %5148 = vmatpush.msra.mxu0 0.0
        %5149 = vmatpush.msra.mxu0 0.0
        %5150 = vmatpush.msra.mxu0 0.0
        %5151 = vmatpush.msra.mxu0 0.0
        %5152 = vmatpush.msra.mxu0 %v4535
        %5153 = vmatmul.f32.gmra.mxu0 %v4595
        %v5154 = vpop.f32.mrf.mxu0
        %v5155 = vadd.f32 %v4593, %v5154
        %5156 = vdwg.mxu0
        %5157 = vmatpush.msra.mxu0 0.0
        %5158 = vmatpush.msra.mxu0 0.0
        %5159 = vmatpush.msra.mxu0 0.0
        %5160 = vmatpush.msra.mxu0 0.0
        %5161 = vmatpush.msra.mxu0 0.0
        %5162 = vmatpush.msra.mxu0 0.0
        %5163 = vmatpush.msra.mxu0 0.0
        %5164 = vmatpush.msra.mxu0 0.0
        %5165 = vmatpush.msra.mxu0 0.0
        %5166 = vmatpush.msra.mxu0 0.0
        %5167 = vmatpush.msra.mxu0 0.0
        %5168 = vmatpush.msra.mxu0 0.0
        %5169 = vmatpush.msra.mxu0 0.0
        %5170 = vmatpush.msra.mxu0 0.0
        %5171 = vmatpush.msra.mxu0 0.0
        %5172 = vmatpush.msra.mxu0 %v4471
        %5173 = vmatmul.f32.gmra.mxu0 %v4595
        %v5174 = vpop.f32.mrf.mxu0
        %v5175 = vadd.f32 %v4593, %v5174
        %5176 = vdwg.mxu0
        %5177 = vmatpush.msra.mxu0 0.0
        %5178 = vmatpush.msra.mxu0 0.0
        %5179 = vmatpush.msra.mxu0 0.0
        %5180 = vmatpush.msra.mxu0 0.0
        %5181 = vmatpush.msra.mxu0 0.0
        %5182 = vmatpush.msra.mxu0 0.0
        %5183 = vmatpush.msra.mxu0 0.0
        %5184 = vmatpush.msra.mxu0 0.0
        %5185 = vmatpush.msra.mxu0 0.0
        %5186 = vmatpush.msra.mxu0 0.0
        %5187 = vmatpush.msra.mxu0 0.0
        %5188 = vmatpush.msra.mxu0 0.0
        %5189 = vmatpush.msra.mxu0 0.0
        %5190 = vmatpush.msra.mxu0 0.0
        %5191 = vmatpush.msra.mxu0 0.0
        %5192 = vmatpush.msra.mxu0 %v4536
        %5193 = vmatmul.f32.gmra.mxu0 %v4595
        %v5194 = vpop.f32.mrf.mxu0
        %v5195 = vadd.f32 %v4593, %v5194
        %5196 = vdwg.mxu0
        %5197 = vmatpush.msra.mxu0 0.0
        %5198 = vmatpush.msra.mxu0 0.0
        %5199 = vmatpush.msra.mxu0 0.0
        %5200 = vmatpush.msra.mxu0 0.0
        %5201 = vmatpush.msra.mxu0 0.0
        %5202 = vmatpush.msra.mxu0 0.0
        %5203 = vmatpush.msra.mxu0 0.0
        %5204 = vmatpush.msra.mxu0 0.0
        %5205 = vmatpush.msra.mxu0 0.0
        %5206 = vmatpush.msra.mxu0 0.0
        %5207 = vmatpush.msra.mxu0 0.0
        %5208 = vmatpush.msra.mxu0 0.0
        %5209 = vmatpush.msra.mxu0 0.0
        %5210 = vmatpush.msra.mxu0 0.0
        %5211 = vmatpush.msra.mxu0 0.0
        %5212 = vmatpush.msra.mxu0 %v4472
        %5213 = vmatmul.f32.gmra.mxu0 %v4595
        %v5214 = vpop.f32.mrf.mxu0
        %v5215 = vadd.f32 %v4593, %v5214
        %5216 = vdwg.mxu0
        %5217 = vmatpush.msra.mxu0 0.0
        %5218 = vmatpush.msra.mxu0 0.0
        %5219 = vmatpush.msra.mxu0 0.0
        %5220 = vmatpush.msra.mxu0 0.0
        %5221 = vmatpush.msra.mxu0 0.0
        %5222 = vmatpush.msra.mxu0 0.0
        %5223 = vmatpush.msra.mxu0 0.0
        %5224 = vmatpush.msra.mxu0 0.0
        %5225 = vmatpush.msra.mxu0 0.0
        %5226 = vmatpush.msra.mxu0 0.0
        %5227 = vmatpush.msra.mxu0 0.0
        %5228 = vmatpush.msra.mxu0 0.0
        %5229 = vmatpush.msra.mxu0 0.0
        %5230 = vmatpush.msra.mxu0 0.0
        %5231 = vmatpush.msra.mxu0 0.0
        %5232 = vmatpush.msra.mxu0 %v4537
        %5233 = vmatmul.f32.gmra.mxu0 %v4595
        %v5234 = vpop.f32.mrf.mxu0
        %v5235 = vadd.f32 %v4593, %v5234
        %5236 = vdwg.mxu0
        %5237 = vmatpush.msra.mxu0 0.0
        %5238 = vmatpush.msra.mxu0 0.0
        %5239 = vmatpush.msra.mxu0 0.0
        %5240 = vmatpush.msra.mxu0 0.0
        %5241 = vmatpush.msra.mxu0 0.0
        %5242 = vmatpush.msra.mxu0 0.0
        %5243 = vmatpush.msra.mxu0 0.0
        %5244 = vmatpush.msra.mxu0 0.0
        %5245 = vmatpush.msra.mxu0 0.0
        %5246 = vmatpush.msra.mxu0 0.0
        %5247 = vmatpush.msra.mxu0 0.0
        %5248 = vmatpush.msra.mxu0 0.0
        %5249 = vmatpush.msra.mxu0 0.0
        %5250 = vmatpush.msra.mxu0 0.0
        %5251 = vmatpush.msra.mxu0 0.0
        %5252 = vmatpush.msra.mxu0 %v4473
        %5253 = vmatmul.f32.gmra.mxu0 %v4595
        %v5254 = vpop.f32.mrf.mxu0
        %v5255 = vadd.f32 %v4593, %v5254
        %5256 = vdwg.mxu0
        %5257 = vmatpush.msra.mxu0 0.0
        %5258 = vmatpush.msra.mxu0 0.0
        %5259 = vmatpush.msra.mxu0 0.0
        %5260 = vmatpush.msra.mxu0 0.0
        %5261 = vmatpush.msra.mxu0 0.0
        %5262 = vmatpush.msra.mxu0 0.0
        %5263 = vmatpush.msra.mxu0 0.0
        %5264 = vmatpush.msra.mxu0 0.0
        %5265 = vmatpush.msra.mxu0 0.0
        %5266 = vmatpush.msra.mxu0 0.0
        %5267 = vmatpush.msra.mxu0 0.0
        %5268 = vmatpush.msra.mxu0 0.0
        %5269 = vmatpush.msra.mxu0 0.0
        %5270 = vmatpush.msra.mxu0 0.0
        %5271 = vmatpush.msra.mxu0 0.0
        %5272 = vmatpush.msra.mxu0 %v4538
        %5273 = vmatmul.f32.gmra.mxu0 %v4595
        %v5274 = vpop.f32.mrf.mxu0
        %v5275 = vadd.f32 %v4593, %v5274
        %5276 = vdwg.mxu0
        %5277 = vmatpush.msra.mxu0 0.0
        %5278 = vmatpush.msra.mxu0 0.0
        %5279 = vmatpush.msra.mxu0 0.0
        %5280 = vmatpush.msra.mxu0 0.0
        %5281 = vmatpush.msra.mxu0 0.0
        %5282 = vmatpush.msra.mxu0 0.0
        %5283 = vmatpush.msra.mxu0 0.0
        %5284 = vmatpush.msra.mxu0 0.0
        %5285 = vmatpush.msra.mxu0 0.0
        %5286 = vmatpush.msra.mxu0 0.0
        %5287 = vmatpush.msra.mxu0 0.0
        %5288 = vmatpush.msra.mxu0 0.0
        %5289 = vmatpush.msra.mxu0 0.0
        %5290 = vmatpush.msra.mxu0 0.0
        %5291 = vmatpush.msra.mxu0 0.0
        %5292 = vmatpush.msra.mxu0 %v4474
        %5293 = vmatmul.f32.gmra.mxu0 %v4595
        %v5294 = vpop.f32.mrf.mxu0
        %v5295 = vadd.f32 %v4593, %v5294
        %5296 = vdwg.mxu0
        %5297 = vmatpush.msra.mxu0 0.0
        %5298 = vmatpush.msra.mxu0 0.0
        %5299 = vmatpush.msra.mxu0 0.0
        %5300 = vmatpush.msra.mxu0 0.0
        %5301 = vmatpush.msra.mxu0 0.0
        %5302 = vmatpush.msra.mxu0 0.0
        %5303 = vmatpush.msra.mxu0 0.0
        %5304 = vmatpush.msra.mxu0 0.0
        %5305 = vmatpush.msra.mxu0 0.0
        %5306 = vmatpush.msra.mxu0 0.0
        %5307 = vmatpush.msra.mxu0 0.0
        %5308 = vmatpush.msra.mxu0 0.0
        %5309 = vmatpush.msra.mxu0 0.0
        %5310 = vmatpush.msra.mxu0 0.0
        %5311 = vmatpush.msra.mxu0 0.0
        %5312 = vmatpush.msra.mxu0 %v4539
        %5313 = vmatmul.f32.gmra.mxu0 %v4595
        %v5314 = vpop.f32.mrf.mxu0
        %v5315 = vadd.f32 %v4593, %v5314
        %5316 = vdwg.mxu0
        %5317 = vmatpush.msra.mxu0 0.0
        %5318 = vmatpush.msra.mxu0 0.0
        %5319 = vmatpush.msra.mxu0 0.0
        %5320 = vmatpush.msra.mxu0 0.0
        %5321 = vmatpush.msra.mxu0 0.0
        %5322 = vmatpush.msra.mxu0 0.0
        %5323 = vmatpush.msra.mxu0 0.0
        %5324 = vmatpush.msra.mxu0 0.0
        %5325 = vmatpush.msra.mxu0 0.0
        %5326 = vmatpush.msra.mxu0 0.0
        %5327 = vmatpush.msra.mxu0 0.0
        %5328 = vmatpush.msra.mxu0 0.0
        %5329 = vmatpush.msra.mxu0 0.0
        %5330 = vmatpush.msra.mxu0 0.0
        %5331 = vmatpush.msra.mxu0 0.0
        %5332 = vmatpush.msra.mxu0 %v4475
        %5333 = vmatmul.f32.gmra.mxu0 %v4595
        %v5334 = vpop.f32.mrf.mxu0
        %v5335 = vadd.f32 %v4593, %v5334
        %5336 = vdwg.mxu0
        %5337 = vmatpush.msra.mxu0 0.0
        %5338 = vmatpush.msra.mxu0 0.0
        %5339 = vmatpush.msra.mxu0 0.0
        %5340 = vmatpush.msra.mxu0 0.0
        %5341 = vmatpush.msra.mxu0 0.0
        %5342 = vmatpush.msra.mxu0 0.0
        %5343 = vmatpush.msra.mxu0 0.0
        %5344 = vmatpush.msra.mxu0 0.0
        %5345 = vmatpush.msra.mxu0 0.0
        %5346 = vmatpush.msra.mxu0 0.0
        %5347 = vmatpush.msra.mxu0 0.0
        %5348 = vmatpush.msra.mxu0 0.0
        %5349 = vmatpush.msra.mxu0 0.0
        %5350 = vmatpush.msra.mxu0 0.0
        %5351 = vmatpush.msra.mxu0 0.0
        %5352 = vmatpush.msra.mxu0 %v4540
        %5353 = vmatmul.f32.gmra.mxu0 %v4595
        %v5354 = vpop.f32.mrf.mxu0
        %v5355 = vadd.f32 %v4593, %v5354
        %5356 = vdwg.mxu0
        %5357 = vmatpush.msra.mxu0 0.0
        %5358 = vmatpush.msra.mxu0 0.0
        %5359 = vmatpush.msra.mxu0 0.0
        %5360 = vmatpush.msra.mxu0 0.0
        %5361 = vmatpush.msra.mxu0 0.0
        %5362 = vmatpush.msra.mxu0 0.0
        %5363 = vmatpush.msra.mxu0 0.0
        %5364 = vmatpush.msra.mxu0 0.0
        %5365 = vmatpush.msra.mxu0 0.0
        %5366 = vmatpush.msra.mxu0 0.0
        %5367 = vmatpush.msra.mxu0 0.0
        %5368 = vmatpush.msra.mxu0 0.0
        %5369 = vmatpush.msra.mxu0 0.0
        %5370 = vmatpush.msra.mxu0 0.0
        %5371 = vmatpush.msra.mxu0 0.0
        %5372 = vmatpush.msra.mxu0 %v4476
        %5373 = vmatmul.f32.gmra.mxu0 %v4595
        %v5374 = vpop.f32.mrf.mxu0
        %v5375 = vadd.f32 %v4593, %v5374
        %5376 = vdwg.mxu0
        %5377 = vmatpush.msra.mxu0 0.0
        %5378 = vmatpush.msra.mxu0 0.0
        %5379 = vmatpush.msra.mxu0 0.0
        %5380 = vmatpush.msra.mxu0 0.0
        %5381 = vmatpush.msra.mxu0 0.0
        %5382 = vmatpush.msra.mxu0 0.0
        %5383 = vmatpush.msra.mxu0 0.0
        %5384 = vmatpush.msra.mxu0 0.0
        %5385 = vmatpush.msra.mxu0 0.0
        %5386 = vmatpush.msra.mxu0 0.0
        %5387 = vmatpush.msra.mxu0 0.0
        %5388 = vmatpush.msra.mxu0 0.0
        %5389 = vmatpush.msra.mxu0 0.0
        %5390 = vmatpush.msra.mxu0 0.0
        %5391 = vmatpush.msra.mxu0 0.0
        %5392 = vmatpush.msra.mxu0 %v4541
        %5393 = vmatmul.f32.gmra.mxu0 %v4595
        %v5394 = vpop.f32.mrf.mxu0
        %v5395 = vadd.f32 %v4593, %v5394
        %5396 = vdwg.mxu0
        %5397 = vmatpush.msra.mxu0 0.0
        %5398 = vmatpush.msra.mxu0 0.0
        %5399 = vmatpush.msra.mxu0 0.0
        %5400 = vmatpush.msra.mxu0 0.0
        %5401 = vmatpush.msra.mxu0 0.0
        %5402 = vmatpush.msra.mxu0 0.0
        %5403 = vmatpush.msra.mxu0 0.0
        %5404 = vmatpush.msra.mxu0 0.0
        %5405 = vmatpush.msra.mxu0 0.0
        %5406 = vmatpush.msra.mxu0 0.0
        %5407 = vmatpush.msra.mxu0 0.0
        %5408 = vmatpush.msra.mxu0 0.0
        %5409 = vmatpush.msra.mxu0 0.0
        %5410 = vmatpush.msra.mxu0 0.0
        %5411 = vmatpush.msra.mxu0 0.0
        %5412 = vmatpush.msra.mxu0 %v4477
        %5413 = vmatmul.f32.gmra.mxu0 %v4595
        %v5414 = vpop.f32.mrf.mxu0
        %v5415 = vadd.f32 %v4593, %v5414
        %5416 = vdwg.mxu0
        %5417 = vmatpush.msra.mxu0 0.0
        %5418 = vmatpush.msra.mxu0 0.0
        %5419 = vmatpush.msra.mxu0 0.0
        %5420 = vmatpush.msra.mxu0 0.0
        %5421 = vmatpush.msra.mxu0 0.0
        %5422 = vmatpush.msra.mxu0 0.0
        %5423 = vmatpush.msra.mxu0 0.0
        %5424 = vmatpush.msra.mxu0 0.0
        %5425 = vmatpush.msra.mxu0 0.0
        %5426 = vmatpush.msra.mxu0 0.0
        %5427 = vmatpush.msra.mxu0 0.0
        %5428 = vmatpush.msra.mxu0 0.0
        %5429 = vmatpush.msra.mxu0 0.0
        %5430 = vmatpush.msra.mxu0 0.0
        %5431 = vmatpush.msra.mxu0 0.0
        %5432 = vmatpush.msra.mxu0 %v4542
        %5433 = vmatmul.f32.gmra.mxu0 %v4595
        %v5434 = vpop.f32.mrf.mxu0
        %v5435 = vadd.f32 %v4593, %v5434
        %5436 = vdwg.mxu0
        %5437 = vmatpush.msra.mxu0 0.0
        %5438 = vmatpush.msra.mxu0 0.0
        %5439 = vmatpush.msra.mxu0 0.0
        %5440 = vmatpush.msra.mxu0 0.0
        %5441 = vmatpush.msra.mxu0 0.0
        %5442 = vmatpush.msra.mxu0 0.0
        %5443 = vmatpush.msra.mxu0 0.0
        %5444 = vmatpush.msra.mxu0 0.0
        %5445 = vmatpush.msra.mxu0 0.0
        %5446 = vmatpush.msra.mxu0 0.0
        %5447 = vmatpush.msra.mxu0 0.0
        %5448 = vmatpush.msra.mxu0 0.0
        %5449 = vmatpush.msra.mxu0 0.0
        %5450 = vmatpush.msra.mxu0 0.0
        %5451 = vmatpush.msra.mxu0 0.0
        %5452 = vmatpush.msra.mxu0 %v4478
        %5453 = vmatmul.f32.gmra.mxu0 %v4595
        %v5454 = vpop.f32.mrf.mxu0
        %v5455 = vadd.f32 %v4593, %v5454
        %5456 = vdwg.mxu0
        %5457 = vmatpush.msra.mxu0 0.0
        %5458 = vmatpush.msra.mxu0 0.0
        %5459 = vmatpush.msra.mxu0 0.0
        %5460 = vmatpush.msra.mxu0 0.0
        %5461 = vmatpush.msra.mxu0 0.0
        %5462 = vmatpush.msra.mxu0 0.0
        %5463 = vmatpush.msra.mxu0 0.0
        %5464 = vmatpush.msra.mxu0 0.0
        %5465 = vmatpush.msra.mxu0 0.0
        %5466 = vmatpush.msra.mxu0 0.0
        %5467 = vmatpush.msra.mxu0 0.0
        %5468 = vmatpush.msra.mxu0 0.0
        %5469 = vmatpush.msra.mxu0 0.0
        %5470 = vmatpush.msra.mxu0 0.0
        %5471 = vmatpush.msra.mxu0 0.0
        %5472 = vmatpush.msra.mxu0 %v4543
        %5473 = vmatmul.f32.gmra.mxu0 %v4595
        %v5474 = vpop.f32.mrf.mxu0
        %v5475 = vadd.f32 %v4593, %v5474
        %5476 = vdwg.mxu0
        %5477 = vmatpush.msra.mxu0 0.0
        %5478 = vmatpush.msra.mxu0 0.0
        %5479 = vmatpush.msra.mxu0 0.0
        %5480 = vmatpush.msra.mxu0 0.0
        %5481 = vmatpush.msra.mxu0 0.0
        %5482 = vmatpush.msra.mxu0 0.0
        %5483 = vmatpush.msra.mxu0 0.0
        %5484 = vmatpush.msra.mxu0 0.0
        %5485 = vmatpush.msra.mxu0 0.0
        %5486 = vmatpush.msra.mxu0 0.0
        %5487 = vmatpush.msra.mxu0 0.0
        %5488 = vmatpush.msra.mxu0 0.0
        %5489 = vmatpush.msra.mxu0 0.0
        %5490 = vmatpush.msra.mxu0 0.0
        %5491 = vmatpush.msra.mxu0 0.0
        %5492 = vmatpush.msra.mxu0 %v4479
        %5493 = vmatmul.f32.gmra.mxu0 %v4595
        %v5494 = vpop.f32.mrf.mxu0
        %v5495 = vadd.f32 %v4593, %v5494
        %5496 = vdwg.mxu0
        %5497 = vmatpush.msra.mxu0 0.0
        %5498 = vmatpush.msra.mxu0 0.0
        %5499 = vmatpush.msra.mxu0 0.0
        %5500 = vmatpush.msra.mxu0 0.0
        %5501 = vmatpush.msra.mxu0 0.0
        %5502 = vmatpush.msra.mxu0 0.0
        %5503 = vmatpush.msra.mxu0 0.0
        %5504 = vmatpush.msra.mxu0 0.0
        %5505 = vmatpush.msra.mxu0 0.0
        %5506 = vmatpush.msra.mxu0 0.0
        %5507 = vmatpush.msra.mxu0 0.0
        %5508 = vmatpush.msra.mxu0 0.0
        %5509 = vmatpush.msra.mxu0 0.0
        %5510 = vmatpush.msra.mxu0 0.0
        %5511 = vmatpush.msra.mxu0 0.0
        %5512 = vmatpush.msra.mxu0 %v4544
        %5513 = vmatmul.f32.gmra.mxu0 %v4595
        %v5514 = vpop.f32.mrf.mxu0
        %v5515 = vadd.f32 %v4593, %v5514
        %5516 = vdwg.mxu0
        %5517 = vmatpush.msra.mxu0 0.0
        %5518 = vmatpush.msra.mxu0 0.0
        %5519 = vmatpush.msra.mxu0 0.0
        %5520 = vmatpush.msra.mxu0 0.0
        %5521 = vmatpush.msra.mxu0 0.0
        %5522 = vmatpush.msra.mxu0 0.0
        %5523 = vmatpush.msra.mxu0 0.0
        %5524 = vmatpush.msra.mxu0 0.0
        %5525 = vmatpush.msra.mxu0 0.0
        %5526 = vmatpush.msra.mxu0 0.0
        %5527 = vmatpush.msra.mxu0 0.0
        %5528 = vmatpush.msra.mxu0 0.0
        %5529 = vmatpush.msra.mxu0 0.0
        %5530 = vmatpush.msra.mxu0 0.0
        %5531 = vmatpush.msra.mxu0 0.0
        %5532 = vmatpush.msra.mxu0 %v4480
        %5533 = vmatmul.f32.gmra.mxu0 %v4595
        %v5534 = vpop.f32.mrf.mxu0
        %v5535 = vadd.f32 %v4593, %v5534
        %5536 = vdwg.mxu0
        %5537 = vmatpush.msra.mxu0 0.0
        %5538 = vmatpush.msra.mxu0 0.0
        %5539 = vmatpush.msra.mxu0 0.0
        %5540 = vmatpush.msra.mxu0 0.0
        %5541 = vmatpush.msra.mxu0 0.0
        %5542 = vmatpush.msra.mxu0 0.0
        %5543 = vmatpush.msra.mxu0 0.0
        %5544 = vmatpush.msra.mxu0 0.0
        %5545 = vmatpush.msra.mxu0 0.0
        %5546 = vmatpush.msra.mxu0 0.0
        %5547 = vmatpush.msra.mxu0 0.0
        %5548 = vmatpush.msra.mxu0 0.0
        %5549 = vmatpush.msra.mxu0 0.0
        %5550 = vmatpush.msra.mxu0 0.0
        %5551 = vmatpush.msra.mxu0 0.0
        %5552 = vmatpush.msra.mxu0 %v4545
        %5553 = vmatmul.f32.gmra.mxu0 %v4595
        %v5554 = vpop.f32.mrf.mxu0
        %v5555 = vadd.f32 %v4593, %v5554
        %5556 = vdwg.mxu0
        %5557 = vmatpush.msra.mxu0 0.0
        %5558 = vmatpush.msra.mxu0 0.0
        %5559 = vmatpush.msra.mxu0 0.0
        %5560 = vmatpush.msra.mxu0 0.0
        %5561 = vmatpush.msra.mxu0 0.0
        %5562 = vmatpush.msra.mxu0 0.0
        %5563 = vmatpush.msra.mxu0 0.0
        %5564 = vmatpush.msra.mxu0 0.0
        %5565 = vmatpush.msra.mxu0 0.0
        %5566 = vmatpush.msra.mxu0 0.0
        %5567 = vmatpush.msra.mxu0 0.0
        %5568 = vmatpush.msra.mxu0 0.0
        %5569 = vmatpush.msra.mxu0 0.0
        %5570 = vmatpush.msra.mxu0 0.0
        %5571 = vmatpush.msra.mxu0 0.0
        %5572 = vmatpush.msra.mxu0 %v4481
        %5573 = vmatmul.f32.gmra.mxu0 %v4595
        %v5574 = vpop.f32.mrf.mxu0
        %v5575 = vadd.f32 %v4593, %v5574
        %5576 = vdwg.mxu0
        %5577 = vmatpush.msra.mxu0 0.0
        %5578 = vmatpush.msra.mxu0 0.0
        %5579 = vmatpush.msra.mxu0 0.0
        %5580 = vmatpush.msra.mxu0 0.0
        %5581 = vmatpush.msra.mxu0 0.0
        %5582 = vmatpush.msra.mxu0 0.0
        %5583 = vmatpush.msra.mxu0 0.0
        %5584 = vmatpush.msra.mxu0 0.0
        %5585 = vmatpush.msra.mxu0 0.0
        %5586 = vmatpush.msra.mxu0 0.0
        %5587 = vmatpush.msra.mxu0 0.0
        %5588 = vmatpush.msra.mxu0 0.0
        %5589 = vmatpush.msra.mxu0 0.0
        %5590 = vmatpush.msra.mxu0 0.0
        %5591 = vmatpush.msra.mxu0 0.0
        %5592 = vmatpush.msra.mxu0 %v4546
        %5593 = vmatmul.f32.gmra.mxu0 %v4595
        %v5594 = vpop.f32.mrf.mxu0
        %v5595 = vadd.f32 %v4593, %v5594
        %5596 = vdwg.mxu0
        %5597 = vmatpush.msra.mxu0 0.0
        %5598 = vmatpush.msra.mxu0 0.0
        %5599 = vmatpush.msra.mxu0 0.0
        %5600 = vmatpush.msra.mxu0 0.0
        %5601 = vmatpush.msra.mxu0 0.0
        %5602 = vmatpush.msra.mxu0 0.0
        %5603 = vmatpush.msra.mxu0 0.0
        %5604 = vmatpush.msra.mxu0 0.0
        %5605 = vmatpush.msra.mxu0 0.0
        %5606 = vmatpush.msra.mxu0 0.0
        %5607 = vmatpush.msra.mxu0 0.0
        %5608 = vmatpush.msra.mxu0 0.0
        %5609 = vmatpush.msra.mxu0 0.0
        %5610 = vmatpush.msra.mxu0 0.0
        %5611 = vmatpush.msra.mxu0 0.0
        %5612 = vmatpush.msra.mxu0 %v4482
        %5613 = vmatmul.f32.gmra.mxu0 %v4595
        %v5614 = vpop.f32.mrf.mxu0
        %v5615 = vadd.f32 %v4593, %v5614
        %5616 = vdwg.mxu0
        %5617 = vmatpush.msra.mxu0 0.0
        %5618 = vmatpush.msra.mxu0 0.0
        %5619 = vmatpush.msra.mxu0 0.0
        %5620 = vmatpush.msra.mxu0 0.0
        %5621 = vmatpush.msra.mxu0 0.0
        %5622 = vmatpush.msra.mxu0 0.0
        %5623 = vmatpush.msra.mxu0 0.0
        %5624 = vmatpush.msra.mxu0 0.0
        %5625 = vmatpush.msra.mxu0 0.0
        %5626 = vmatpush.msra.mxu0 0.0
        %5627 = vmatpush.msra.mxu0 0.0
        %5628 = vmatpush.msra.mxu0 0.0
        %5629 = vmatpush.msra.mxu0 0.0
        %5630 = vmatpush.msra.mxu0 0.0
        %5631 = vmatpush.msra.mxu0 0.0
        %5632 = vmatpush.msra.mxu0 %v4547
        %5633 = vmatmul.f32.gmra.mxu0 %v4595
        %v5634 = vpop.f32.mrf.mxu0
        %v5635 = vadd.f32 %v4593, %v5634
        %5636 = vdwg.mxu0
        %5637 = vmatpush.msra.mxu0 0.0
        %5638 = vmatpush.msra.mxu0 0.0
        %5639 = vmatpush.msra.mxu0 0.0
        %5640 = vmatpush.msra.mxu0 0.0
        %5641 = vmatpush.msra.mxu0 0.0
        %5642 = vmatpush.msra.mxu0 0.0
        %5643 = vmatpush.msra.mxu0 0.0
        %5644 = vmatpush.msra.mxu0 0.0
        %5645 = vmatpush.msra.mxu0 0.0
        %5646 = vmatpush.msra.mxu0 0.0
        %5647 = vmatpush.msra.mxu0 0.0
        %5648 = vmatpush.msra.mxu0 0.0
        %5649 = vmatpush.msra.mxu0 0.0
        %5650 = vmatpush.msra.mxu0 0.0
        %5651 = vmatpush.msra.mxu0 0.0
        %5652 = vmatpush.msra.mxu0 %v4483
        %5653 = vmatmul.f32.gmra.mxu0 %v4595
        %v5654 = vpop.f32.mrf.mxu0
        %v5655 = vadd.f32 %v4593, %v5654
        %5656 = vdwg.mxu0
        %5657 = vmatpush.msra.mxu0 0.0
        %5658 = vmatpush.msra.mxu0 0.0
        %5659 = vmatpush.msra.mxu0 0.0
        %5660 = vmatpush.msra.mxu0 0.0
        %5661 = vmatpush.msra.mxu0 0.0
        %5662 = vmatpush.msra.mxu0 0.0
        %5663 = vmatpush.msra.mxu0 0.0
        %5664 = vmatpush.msra.mxu0 0.0
        %5665 = vmatpush.msra.mxu0 0.0
        %5666 = vmatpush.msra.mxu0 0.0
        %5667 = vmatpush.msra.mxu0 0.0
        %5668 = vmatpush.msra.mxu0 0.0
        %5669 = vmatpush.msra.mxu0 0.0
        %5670 = vmatpush.msra.mxu0 0.0
        %5671 = vmatpush.msra.mxu0 0.0
        %5672 = vmatpush.msra.mxu0 %v4548
        %5673 = vmatmul.f32.gmra.mxu0 %v4595
        %v5674 = vpop.f32.mrf.mxu0
        %v5675 = vadd.f32 %v4593, %v5674
        %5676 = vdwg.mxu0
        %5677 = vmatpush.msra.mxu0 0.0
        %5678 = vmatpush.msra.mxu0 0.0
        %5679 = vmatpush.msra.mxu0 0.0
        %5680 = vmatpush.msra.mxu0 0.0
        %5681 = vmatpush.msra.mxu0 0.0
        %5682 = vmatpush.msra.mxu0 0.0
        %5683 = vmatpush.msra.mxu0 0.0
        %5684 = vmatpush.msra.mxu0 0.0
        %5685 = vmatpush.msra.mxu0 0.0
        %5686 = vmatpush.msra.mxu0 0.0
        %5687 = vmatpush.msra.mxu0 0.0
        %5688 = vmatpush.msra.mxu0 0.0
        %5689 = vmatpush.msra.mxu0 0.0
        %5690 = vmatpush.msra.mxu0 0.0
        %5691 = vmatpush.msra.mxu0 0.0
        %5692 = vmatpush.msra.mxu0 %v4484
        %5693 = vmatmul.f32.gmra.mxu0 %v4595
        %v5694 = vpop.f32.mrf.mxu0
        %v5695 = vadd.f32 %v4593, %v5694
        %5696 = vdwg.mxu0
        %5697 = vmatpush.msra.mxu0 0.0
        %5698 = vmatpush.msra.mxu0 0.0
        %5699 = vmatpush.msra.mxu0 0.0
        %5700 = vmatpush.msra.mxu0 0.0
        %5701 = vmatpush.msra.mxu0 0.0
        %5702 = vmatpush.msra.mxu0 0.0
        %5703 = vmatpush.msra.mxu0 0.0
        %5704 = vmatpush.msra.mxu0 0.0
        %5705 = vmatpush.msra.mxu0 0.0
        %5706 = vmatpush.msra.mxu0 0.0
        %5707 = vmatpush.msra.mxu0 0.0
        %5708 = vmatpush.msra.mxu0 0.0
        %5709 = vmatpush.msra.mxu0 0.0
        %5710 = vmatpush.msra.mxu0 0.0
        %5711 = vmatpush.msra.mxu0 0.0
        %5712 = vmatpush.msra.mxu0 %v4549
        %5713 = vmatmul.f32.gmra.mxu0 %v4595
        %v5714 = vpop.f32.mrf.mxu0
        %v5715 = vadd.f32 %v4593, %v5714
        %5716 = vdwg.mxu0
        %5717 = vmatpush.msra.mxu0 0.0
        %5718 = vmatpush.msra.mxu0 0.0
        %5719 = vmatpush.msra.mxu0 0.0
        %5720 = vmatpush.msra.mxu0 0.0
        %5721 = vmatpush.msra.mxu0 0.0
        %5722 = vmatpush.msra.mxu0 0.0
        %5723 = vmatpush.msra.mxu0 0.0
        %5724 = vmatpush.msra.mxu0 0.0
        %5725 = vmatpush.msra.mxu0 0.0
        %5726 = vmatpush.msra.mxu0 0.0
        %5727 = vmatpush.msra.mxu0 0.0
        %5728 = vmatpush.msra.mxu0 0.0
        %5729 = vmatpush.msra.mxu0 0.0
        %5730 = vmatpush.msra.mxu0 0.0
        %5731 = vmatpush.msra.mxu0 0.0
        %5732 = vmatpush.msra.mxu0 %v4485
        %5733 = vmatmul.f32.gmra.mxu0 %v4595
        %v5734 = vpop.f32.mrf.mxu0
        %v5735 = vadd.f32 %v4593, %v5734
        %5736 = vdwg.mxu0
        %5737 = vmatpush.msra.mxu0 0.0
        %5738 = vmatpush.msra.mxu0 0.0
        %5739 = vmatpush.msra.mxu0 0.0
        %5740 = vmatpush.msra.mxu0 0.0
        %5741 = vmatpush.msra.mxu0 0.0
        %5742 = vmatpush.msra.mxu0 0.0
        %5743 = vmatpush.msra.mxu0 0.0
        %5744 = vmatpush.msra.mxu0 0.0
        %5745 = vmatpush.msra.mxu0 0.0
        %5746 = vmatpush.msra.mxu0 0.0
        %5747 = vmatpush.msra.mxu0 0.0
        %5748 = vmatpush.msra.mxu0 0.0
        %5749 = vmatpush.msra.mxu0 0.0
        %5750 = vmatpush.msra.mxu0 0.0
        %5751 = vmatpush.msra.mxu0 0.0
        %5752 = vmatpush.msra.mxu0 %v4550
        %5753 = vmatmul.f32.gmra.mxu0 %v4595
        %v5754 = vpop.f32.mrf.mxu0
        %v5755 = vadd.f32 %v4593, %v5754
        %5756 = vdwg.mxu0
        %5757 = vmatpush.msra.mxu0 0.0
        %5758 = vmatpush.msra.mxu0 0.0
        %5759 = vmatpush.msra.mxu0 0.0
        %5760 = vmatpush.msra.mxu0 0.0
        %5761 = vmatpush.msra.mxu0 0.0
        %5762 = vmatpush.msra.mxu0 0.0
        %5763 = vmatpush.msra.mxu0 0.0
        %5764 = vmatpush.msra.mxu0 0.0
        %5765 = vmatpush.msra.mxu0 0.0
        %5766 = vmatpush.msra.mxu0 0.0
        %5767 = vmatpush.msra.mxu0 0.0
        %5768 = vmatpush.msra.mxu0 0.0
        %5769 = vmatpush.msra.mxu0 0.0
        %5770 = vmatpush.msra.mxu0 0.0
        %5771 = vmatpush.msra.mxu0 0.0
        %5772 = vmatpush.msra.mxu0 %v4486
        %5773 = vmatmul.f32.gmra.mxu0 %v4595
        %v5774 = vpop.f32.mrf.mxu0
        %v5775 = vadd.f32 %v4593, %v5774
        %5776 = vdwg.mxu0
        %5777 = vmatpush.msra.mxu0 0.0
        %5778 = vmatpush.msra.mxu0 0.0
        %5779 = vmatpush.msra.mxu0 0.0
        %5780 = vmatpush.msra.mxu0 0.0
        %5781 = vmatpush.msra.mxu0 0.0
        %5782 = vmatpush.msra.mxu0 0.0
        %5783 = vmatpush.msra.mxu0 0.0
        %5784 = vmatpush.msra.mxu0 0.0
        %5785 = vmatpush.msra.mxu0 0.0
        %5786 = vmatpush.msra.mxu0 0.0
        %5787 = vmatpush.msra.mxu0 0.0
        %5788 = vmatpush.msra.mxu0 0.0
        %5789 = vmatpush.msra.mxu0 0.0
        %5790 = vmatpush.msra.mxu0 0.0
        %5791 = vmatpush.msra.mxu0 0.0
        %5792 = vmatpush.msra.mxu0 %v4551
        %5793 = vmatmul.f32.gmra.mxu0 %v4595
        %v5794 = vpop.f32.mrf.mxu0
        %v5795 = vadd.f32 %v4593, %v5794
        %5796 = vdwg.mxu0
        %5797 = vmatpush.msra.mxu0 0.0
        %5798 = vmatpush.msra.mxu0 0.0
        %5799 = vmatpush.msra.mxu0 0.0
        %5800 = vmatpush.msra.mxu0 0.0
        %5801 = vmatpush.msra.mxu0 0.0
        %5802 = vmatpush.msra.mxu0 0.0
        %5803 = vmatpush.msra.mxu0 0.0
        %5804 = vmatpush.msra.mxu0 0.0
        %5805 = vmatpush.msra.mxu0 0.0
        %5806 = vmatpush.msra.mxu0 0.0
        %5807 = vmatpush.msra.mxu0 0.0
        %5808 = vmatpush.msra.mxu0 0.0
        %5809 = vmatpush.msra.mxu0 0.0
        %5810 = vmatpush.msra.mxu0 0.0
        %5811 = vmatpush.msra.mxu0 0.0
        %5812 = vmatpush.msra.mxu0 %v4487
        %5813 = vmatmul.f32.gmra.mxu0 %v4595
        %v5814 = vpop.f32.mrf.mxu0
        %v5815 = vadd.f32 %v4593, %v5814
        %5816 = vdwg.mxu0
        %5817 = vmatpush.msra.mxu0 0.0
        %5818 = vmatpush.msra.mxu0 0.0
        %5819 = vmatpush.msra.mxu0 0.0
        %5820 = vmatpush.msra.mxu0 0.0
        %5821 = vmatpush.msra.mxu0 0.0
        %5822 = vmatpush.msra.mxu0 0.0
        %5823 = vmatpush.msra.mxu0 0.0
        %5824 = vmatpush.msra.mxu0 0.0
        %5825 = vmatpush.msra.mxu0 0.0
        %5826 = vmatpush.msra.mxu0 0.0
        %5827 = vmatpush.msra.mxu0 0.0
        %5828 = vmatpush.msra.mxu0 0.0
        %5829 = vmatpush.msra.mxu0 0.0
        %5830 = vmatpush.msra.mxu0 0.0
        %5831 = vmatpush.msra.mxu0 0.0
        %5832 = vmatpush.msra.mxu0 %v4552
        %5833 = vmatmul.f32.gmra.mxu0 %v4595
        %v5834 = vpop.f32.mrf.mxu0
        %v5835 = vadd.f32 %v4593, %v5834
        %5836 = vdwg.mxu0
        %5837 = vmatpush.msra.mxu0 0.0
        %5838 = vmatpush.msra.mxu0 0.0
        %5839 = vmatpush.msra.mxu0 0.0
        %5840 = vmatpush.msra.mxu0 0.0
        %5841 = vmatpush.msra.mxu0 0.0
        %5842 = vmatpush.msra.mxu0 0.0
        %5843 = vmatpush.msra.mxu0 0.0
        %5844 = vmatpush.msra.mxu0 0.0
        %5845 = vmatpush.msra.mxu0 0.0
        %5846 = vmatpush.msra.mxu0 0.0
        %5847 = vmatpush.msra.mxu0 0.0
        %5848 = vmatpush.msra.mxu0 0.0
        %5849 = vmatpush.msra.mxu0 0.0
        %5850 = vmatpush.msra.mxu0 0.0
        %5851 = vmatpush.msra.mxu0 0.0
        %5852 = vmatpush.msra.mxu0 %v4488
        %5853 = vmatmul.f32.gmra.mxu0 %v4595
        %v5854 = vpop.f32.mrf.mxu0
        %v5855 = vadd.f32 %v4593, %v5854
        %5856 = vdwg.mxu0
        %5857 = vmatpush.msra.mxu0 0.0
        %5858 = vmatpush.msra.mxu0 0.0
        %5859 = vmatpush.msra.mxu0 0.0
        %5860 = vmatpush.msra.mxu0 0.0
        %5861 = vmatpush.msra.mxu0 0.0
        %5862 = vmatpush.msra.mxu0 0.0
        %5863 = vmatpush.msra.mxu0 0.0
        %5864 = vmatpush.msra.mxu0 0.0
        %5865 = vmatpush.msra.mxu0 0.0
        %5866 = vmatpush.msra.mxu0 0.0
        %5867 = vmatpush.msra.mxu0 0.0
        %5868 = vmatpush.msra.mxu0 0.0
        %5869 = vmatpush.msra.mxu0 0.0
        %5870 = vmatpush.msra.mxu0 0.0
        %5871 = vmatpush.msra.mxu0 0.0
        %5872 = vmatpush.msra.mxu0 %v4553
        %5873 = vmatmul.f32.gmra.mxu0 %v4595
        %v5874 = vpop.f32.mrf.mxu0
        %v5875 = vadd.f32 %v4593, %v5874
        %5876 = vdwg.mxu0
        %5877 = vmatpush.msra.mxu0 0.0
        %5878 = vmatpush.msra.mxu0 0.0
        %5879 = vmatpush.msra.mxu0 0.0
        %5880 = vmatpush.msra.mxu0 0.0
        %5881 = vmatpush.msra.mxu0 0.0
        %5882 = vmatpush.msra.mxu0 0.0
        %5883 = vmatpush.msra.mxu0 0.0
        %5884 = vmatpush.msra.mxu0 0.0
        %5885 = vmatpush.msra.mxu0 0.0
        %5886 = vmatpush.msra.mxu0 0.0
        %5887 = vmatpush.msra.mxu0 0.0
        %5888 = vmatpush.msra.mxu0 0.0
        %5889 = vmatpush.msra.mxu0 0.0
        %5890 = vmatpush.msra.mxu0 0.0
        %5891 = vmatpush.msra.mxu0 0.0
        %5892 = vmatpush.msra.mxu0 %v4489
        %5893 = vmatmul.f32.gmra.mxu0 %v4595
        %v5894 = vpop.f32.mrf.mxu0
        %v5895 = vadd.f32 %v4593, %v5894
        %5896 = vdwg.mxu0
        %5897 = vmatpush.msra.mxu0 0.0
        %5898 = vmatpush.msra.mxu0 0.0
        %5899 = vmatpush.msra.mxu0 0.0
        %5900 = vmatpush.msra.mxu0 0.0
        %5901 = vmatpush.msra.mxu0 0.0
        %5902 = vmatpush.msra.mxu0 0.0
        %5903 = vmatpush.msra.mxu0 0.0
        %5904 = vmatpush.msra.mxu0 0.0
        %5905 = vmatpush.msra.mxu0 0.0
        %5906 = vmatpush.msra.mxu0 0.0
        %5907 = vmatpush.msra.mxu0 0.0
        %5908 = vmatpush.msra.mxu0 0.0
        %5909 = vmatpush.msra.mxu0 0.0
        %5910 = vmatpush.msra.mxu0 0.0
        %5911 = vmatpush.msra.mxu0 0.0
        %5912 = vmatpush.msra.mxu0 %v4554
        %5913 = vmatmul.f32.gmra.mxu0 %v4595
        %v5914 = vpop.f32.mrf.mxu0
        %v5915 = vadd.f32 %v4593, %v5914
        %5916 = vdwg.mxu0
        %5917 = vmatpush.msra.mxu0 0.0
        %5918 = vmatpush.msra.mxu0 0.0
        %5919 = vmatpush.msra.mxu0 0.0
        %5920 = vmatpush.msra.mxu0 0.0
        %5921 = vmatpush.msra.mxu0 0.0
        %5922 = vmatpush.msra.mxu0 0.0
        %5923 = vmatpush.msra.mxu0 0.0
        %5924 = vmatpush.msra.mxu0 0.0
        %5925 = vmatpush.msra.mxu0 0.0
        %5926 = vmatpush.msra.mxu0 0.0
        %5927 = vmatpush.msra.mxu0 0.0
        %5928 = vmatpush.msra.mxu0 0.0
        %5929 = vmatpush.msra.mxu0 0.0
        %5930 = vmatpush.msra.mxu0 0.0
        %5931 = vmatpush.msra.mxu0 0.0
        %5932 = vmatpush.msra.mxu0 %v4490
        %5933 = vmatmul.f32.gmra.mxu0 %v4595
        %v5934 = vpop.f32.mrf.mxu0
        %v5935 = vadd.f32 %v4593, %v5934
        %5936 = vdwg.mxu0
        %5937 = vmatpush.msra.mxu0 0.0
        %5938 = vmatpush.msra.mxu0 0.0
        %5939 = vmatpush.msra.mxu0 0.0
        %5940 = vmatpush.msra.mxu0 0.0
        %5941 = vmatpush.msra.mxu0 0.0
        %5942 = vmatpush.msra.mxu0 0.0
        %5943 = vmatpush.msra.mxu0 0.0
        %5944 = vmatpush.msra.mxu0 0.0
        %5945 = vmatpush.msra.mxu0 0.0
        %5946 = vmatpush.msra.mxu0 0.0
        %5947 = vmatpush.msra.mxu0 0.0
        %5948 = vmatpush.msra.mxu0 0.0
        %5949 = vmatpush.msra.mxu0 0.0
        %5950 = vmatpush.msra.mxu0 0.0
        %5951 = vmatpush.msra.mxu0 0.0
        %5952 = vmatpush.msra.mxu0 %v4555
        %5953 = vmatmul.f32.gmra.mxu0 %v4595
        %v5954 = vpop.f32.mrf.mxu0
        %v5955 = vadd.f32 %v4593, %v5954
        %5956 = vdwg.mxu0
        %5957 = vmatpush.msra.mxu0 0.0
        %5958 = vmatpush.msra.mxu0 0.0
        %5959 = vmatpush.msra.mxu0 0.0
        %5960 = vmatpush.msra.mxu0 0.0
        %5961 = vmatpush.msra.mxu0 0.0
        %5962 = vmatpush.msra.mxu0 0.0
        %5963 = vmatpush.msra.mxu0 0.0
        %5964 = vmatpush.msra.mxu0 0.0
        %5965 = vmatpush.msra.mxu0 0.0
        %5966 = vmatpush.msra.mxu0 0.0
        %5967 = vmatpush.msra.mxu0 0.0
        %5968 = vmatpush.msra.mxu0 0.0
        %5969 = vmatpush.msra.mxu0 0.0
        %5970 = vmatpush.msra.mxu0 0.0
        %5971 = vmatpush.msra.mxu0 0.0
        %5972 = vmatpush.msra.mxu0 %v4491
        %5973 = vmatmul.f32.gmra.mxu0 %v4595
        %v5974 = vpop.f32.mrf.mxu0
        %v5975 = vadd.f32 %v4593, %v5974
        %5976 = vdwg.mxu0
        %5977 = vmatpush.msra.mxu0 0.0
        %5978 = vmatpush.msra.mxu0 0.0
        %5979 = vmatpush.msra.mxu0 0.0
        %5980 = vmatpush.msra.mxu0 0.0
        %5981 = vmatpush.msra.mxu0 0.0
        %5982 = vmatpush.msra.mxu0 0.0
        %5983 = vmatpush.msra.mxu0 0.0
        %5984 = vmatpush.msra.mxu0 0.0
        %5985 = vmatpush.msra.mxu0 0.0
        %5986 = vmatpush.msra.mxu0 0.0
        %5987 = vmatpush.msra.mxu0 0.0
        %5988 = vmatpush.msra.mxu0 0.0
        %5989 = vmatpush.msra.mxu0 0.0
        %5990 = vmatpush.msra.mxu0 0.0
        %5991 = vmatpush.msra.mxu0 0.0
        %5992 = vmatpush.msra.mxu0 %v4556
        %5993 = vmatmul.f32.gmra.mxu0 %v4595
        %v5994 = vpop.f32.mrf.mxu0
        %v5995 = vadd.f32 %v4593, %v5994
        %5996 = vdwg.mxu0
        %5997 = vmatpush.msra.mxu0 0.0
        %5998 = vmatpush.msra.mxu0 0.0
        %5999 = vmatpush.msra.mxu0 0.0
        %6000 = vmatpush.msra.mxu0 0.0
        %6001 = vmatpush.msra.mxu0 0.0
        %6002 = vmatpush.msra.mxu0 0.0
        %6003 = vmatpush.msra.mxu0 0.0
        %6004 = vmatpush.msra.mxu0 0.0
        %6005 = vmatpush.msra.mxu0 0.0
        %6006 = vmatpush.msra.mxu0 0.0
        %6007 = vmatpush.msra.mxu0 0.0
        %6008 = vmatpush.msra.mxu0 0.0
        %6009 = vmatpush.msra.mxu0 0.0
        %6010 = vmatpush.msra.mxu0 0.0
        %6011 = vmatpush.msra.mxu0 0.0
        %6012 = vmatpush.msra.mxu0 %v4492
        %6013 = vmatmul.f32.gmra.mxu0 %v4595
        %v6014 = vpop.f32.mrf.mxu0
        %v6015 = vadd.f32 %v4593, %v6014
        %6016 = vdwg.mxu0
        %6017 = vmatpush.msra.mxu0 0.0
        %6018 = vmatpush.msra.mxu0 0.0
        %6019 = vmatpush.msra.mxu0 0.0
        %6020 = vmatpush.msra.mxu0 0.0
        %6021 = vmatpush.msra.mxu0 0.0
        %6022 = vmatpush.msra.mxu0 0.0
        %6023 = vmatpush.msra.mxu0 0.0
        %6024 = vmatpush.msra.mxu0 0.0
        %6025 = vmatpush.msra.mxu0 0.0
        %6026 = vmatpush.msra.mxu0 0.0
        %6027 = vmatpush.msra.mxu0 0.0
        %6028 = vmatpush.msra.mxu0 0.0
        %6029 = vmatpush.msra.mxu0 0.0
        %6030 = vmatpush.msra.mxu0 0.0
        %6031 = vmatpush.msra.mxu0 0.0
        %6032 = vmatpush.msra.mxu0 %v4557
        %6033 = vmatmul.f32.gmra.mxu0 %v4595
        %v6034 = vpop.f32.mrf.mxu0
        %v6035 = vadd.f32 %v4593, %v6034
        %6036 = vdwg.mxu0
        %6037 = vmatpush.msra.mxu0 0.0
        %6038 = vmatpush.msra.mxu0 0.0
        %6039 = vmatpush.msra.mxu0 0.0
        %6040 = vmatpush.msra.mxu0 0.0
        %6041 = vmatpush.msra.mxu0 0.0
        %6042 = vmatpush.msra.mxu0 0.0
        %6043 = vmatpush.msra.mxu0 0.0
        %6044 = vmatpush.msra.mxu0 0.0
        %6045 = vmatpush.msra.mxu0 0.0
        %6046 = vmatpush.msra.mxu0 0.0
        %6047 = vmatpush.msra.mxu0 0.0
        %6048 = vmatpush.msra.mxu0 0.0
        %6049 = vmatpush.msra.mxu0 0.0
        %6050 = vmatpush.msra.mxu0 0.0
        %6051 = vmatpush.msra.mxu0 0.0
        %6052 = vmatpush.msra.mxu0 %v4493
        %6053 = vmatmul.f32.gmra.mxu0 %v4595
        %v6054 = vpop.f32.mrf.mxu0
        %v6055 = vadd.f32 %v4593, %v6054
        %6056 = vdwg.mxu0
        %6057 = vmatpush.msra.mxu0 0.0
        %6058 = vmatpush.msra.mxu0 0.0
        %6059 = vmatpush.msra.mxu0 0.0
        %6060 = vmatpush.msra.mxu0 0.0
        %6061 = vmatpush.msra.mxu0 0.0
        %6062 = vmatpush.msra.mxu0 0.0
        %6063 = vmatpush.msra.mxu0 0.0
        %6064 = vmatpush.msra.mxu0 0.0
        %6065 = vmatpush.msra.mxu0 0.0
        %6066 = vmatpush.msra.mxu0 0.0
        %6067 = vmatpush.msra.mxu0 0.0
        %6068 = vmatpush.msra.mxu0 0.0
        %6069 = vmatpush.msra.mxu0 0.0
        %6070 = vmatpush.msra.mxu0 0.0
        %6071 = vmatpush.msra.mxu0 0.0
        %6072 = vmatpush.msra.mxu0 %v4558
        %6073 = vmatmul.f32.gmra.mxu0 %v4595
        %v6074 = vpop.f32.mrf.mxu0
        %v6075 = vadd.f32 %v4593, %v6074
        %6076 = vdwg.mxu0
        %6077 = vmatpush.msra.mxu0 0.0
        %6078 = vmatpush.msra.mxu0 0.0
        %6079 = vmatpush.msra.mxu0 0.0
        %6080 = vmatpush.msra.mxu0 0.0
        %6081 = vmatpush.msra.mxu0 0.0
        %6082 = vmatpush.msra.mxu0 0.0
        %6083 = vmatpush.msra.mxu0 0.0
        %6084 = vmatpush.msra.mxu0 0.0
        %6085 = vmatpush.msra.mxu0 0.0
        %6086 = vmatpush.msra.mxu0 0.0
        %6087 = vmatpush.msra.mxu0 0.0
        %6088 = vmatpush.msra.mxu0 0.0
        %6089 = vmatpush.msra.mxu0 0.0
        %6090 = vmatpush.msra.mxu0 0.0
        %6091 = vmatpush.msra.mxu0 0.0
        %6092 = vmatpush.msra.mxu0 %v4494
        %6093 = vmatmul.f32.gmra.mxu0 %v4595
        %v6094 = vpop.f32.mrf.mxu0
        %v6095 = vadd.f32 %v4593, %v6094
        %6096 = vdwg.mxu0
        %6097 = vmatpush.msra.mxu0 0.0
        %6098 = vmatpush.msra.mxu0 0.0
        %6099 = vmatpush.msra.mxu0 0.0
        %6100 = vmatpush.msra.mxu0 0.0
        %6101 = vmatpush.msra.mxu0 0.0
        %6102 = vmatpush.msra.mxu0 0.0
        %6103 = vmatpush.msra.mxu0 0.0
        %6104 = vmatpush.msra.mxu0 0.0
        %6105 = vmatpush.msra.mxu0 0.0
        %6106 = vmatpush.msra.mxu0 0.0
        %6107 = vmatpush.msra.mxu0 0.0
        %6108 = vmatpush.msra.mxu0 0.0
        %6109 = vmatpush.msra.mxu0 0.0
        %6110 = vmatpush.msra.mxu0 0.0
        %6111 = vmatpush.msra.mxu0 0.0
        %6112 = vmatpush.msra.mxu0 %v4559
        %6113 = vmatmul.f32.gmra.mxu0 %v4595
        %v6114 = vpop.f32.mrf.mxu0
        %v6115 = vadd.f32 %v4593, %v6114
        %6116 = vdwg.mxu0
        %6117 = vmatpush.msra.mxu0 0.0
        %6118 = vmatpush.msra.mxu0 0.0
        %6119 = vmatpush.msra.mxu0 0.0
        %6120 = vmatpush.msra.mxu0 0.0
        %6121 = vmatpush.msra.mxu0 0.0
        %6122 = vmatpush.msra.mxu0 0.0
        %6123 = vmatpush.msra.mxu0 0.0
        %6124 = vmatpush.msra.mxu0 0.0
        %6125 = vmatpush.msra.mxu0 0.0
        %6126 = vmatpush.msra.mxu0 0.0
        %6127 = vmatpush.msra.mxu0 0.0
        %6128 = vmatpush.msra.mxu0 0.0
        %6129 = vmatpush.msra.mxu0 0.0
        %6130 = vmatpush.msra.mxu0 0.0
        %6131 = vmatpush.msra.mxu0 0.0
        %6132 = vmatpush.msra.mxu0 %v4495
        %6133 = vmatmul.f32.gmra.mxu0 %v4595
        %v6134 = vpop.f32.mrf.mxu0
        %v6135 = vadd.f32 %v4593, %v6134
        %6136 = vdwg.mxu0
        %6137 = vmatpush.msra.mxu0 0.0
        %6138 = vmatpush.msra.mxu0 0.0
        %6139 = vmatpush.msra.mxu0 0.0
        %6140 = vmatpush.msra.mxu0 0.0
        %6141 = vmatpush.msra.mxu0 0.0
        %6142 = vmatpush.msra.mxu0 0.0
        %6143 = vmatpush.msra.mxu0 0.0
        %6144 = vmatpush.msra.mxu0 0.0
        %6145 = vmatpush.msra.mxu0 0.0
        %6146 = vmatpush.msra.mxu0 0.0
        %6147 = vmatpush.msra.mxu0 0.0
        %6148 = vmatpush.msra.mxu0 0.0
        %6149 = vmatpush.msra.mxu0 0.0
        %6150 = vmatpush.msra.mxu0 0.0
        %6151 = vmatpush.msra.mxu0 0.0
        %6152 = vmatpush.msra.mxu0 %v4560
        %6153 = vmatmul.f32.gmra.mxu0 %v4595
        %v6154 = vpop.f32.mrf.mxu0
        %v6155 = vadd.f32 %v4593, %v6154
        %6156 = vdwg.mxu0
        %6157 = vmatpush.msra.mxu0 0.0
        %6158 = vmatpush.msra.mxu0 0.0
        %6159 = vmatpush.msra.mxu0 0.0
        %6160 = vmatpush.msra.mxu0 0.0
        %6161 = vmatpush.msra.mxu0 0.0
        %6162 = vmatpush.msra.mxu0 0.0
        %6163 = vmatpush.msra.mxu0 0.0
        %6164 = vmatpush.msra.mxu0 0.0
        %6165 = vmatpush.msra.mxu0 0.0
        %6166 = vmatpush.msra.mxu0 0.0
        %6167 = vmatpush.msra.mxu0 0.0
        %6168 = vmatpush.msra.mxu0 0.0
        %6169 = vmatpush.msra.mxu0 0.0
        %6170 = vmatpush.msra.mxu0 0.0
        %6171 = vmatpush.msra.mxu0 0.0
        %6172 = vmatpush.msra.mxu0 %v4496
        %6173 = vmatmul.f32.gmra.mxu0 %v4595
        %v6174 = vpop.f32.mrf.mxu0
        %v6175 = vadd.f32 %v4593, %v6174
        %6176 = vdwg.mxu0
        %6177 = vmatpush.msra.mxu0 0.0
        %6178 = vmatpush.msra.mxu0 0.0
        %6179 = vmatpush.msra.mxu0 0.0
        %6180 = vmatpush.msra.mxu0 0.0
        %6181 = vmatpush.msra.mxu0 0.0
        %6182 = vmatpush.msra.mxu0 0.0
        %6183 = vmatpush.msra.mxu0 0.0
        %6184 = vmatpush.msra.mxu0 0.0
        %6185 = vmatpush.msra.mxu0 0.0
        %6186 = vmatpush.msra.mxu0 0.0
        %6187 = vmatpush.msra.mxu0 0.0
        %6188 = vmatpush.msra.mxu0 0.0
        %6189 = vmatpush.msra.mxu0 0.0
        %6190 = vmatpush.msra.mxu0 0.0
        %6191 = vmatpush.msra.mxu0 0.0
        %6192 = vmatpush.msra.mxu0 %v4561
        %6193 = vmatmul.f32.gmra.mxu0 %v4595
        %v6194 = vpop.f32.mrf.mxu0
        %v6195 = vadd.f32 %v4593, %v6194
        %6196 = vdwg.mxu0
        %6197 = vmatpush.msra.mxu0 0.0
        %6198 = vmatpush.msra.mxu0 0.0
        %6199 = vmatpush.msra.mxu0 0.0
        %6200 = vmatpush.msra.mxu0 0.0
        %6201 = vmatpush.msra.mxu0 0.0
        %6202 = vmatpush.msra.mxu0 0.0
        %6203 = vmatpush.msra.mxu0 0.0
        %6204 = vmatpush.msra.mxu0 0.0
        %6205 = vmatpush.msra.mxu0 0.0
        %6206 = vmatpush.msra.mxu0 0.0
        %6207 = vmatpush.msra.mxu0 0.0
        %6208 = vmatpush.msra.mxu0 0.0
        %6209 = vmatpush.msra.mxu0 0.0
        %6210 = vmatpush.msra.mxu0 0.0
        %6211 = vmatpush.msra.mxu0 0.0
        %6212 = vmatpush.msra.mxu0 %v4497
        %6213 = vmatmul.f32.gmra.mxu0 %v4595
        %v6214 = vpop.f32.mrf.mxu0
        %v6215 = vadd.f32 %v4593, %v6214
        %6216 = vdwg.mxu0
        %6217 = vmatpush.msra.mxu0 0.0
        %6218 = vmatpush.msra.mxu0 0.0
        %6219 = vmatpush.msra.mxu0 0.0
        %6220 = vmatpush.msra.mxu0 0.0
        %6221 = vmatpush.msra.mxu0 0.0
        %6222 = vmatpush.msra.mxu0 0.0
        %6223 = vmatpush.msra.mxu0 0.0
        %6224 = vmatpush.msra.mxu0 0.0
        %6225 = vmatpush.msra.mxu0 0.0
        %6226 = vmatpush.msra.mxu0 0.0
        %6227 = vmatpush.msra.mxu0 0.0
        %6228 = vmatpush.msra.mxu0 0.0
        %6229 = vmatpush.msra.mxu0 0.0
        %6230 = vmatpush.msra.mxu0 0.0
        %6231 = vmatpush.msra.mxu0 0.0
        %6232 = vmatpush.msra.mxu0 %v4562
        %6233 = vmatmul.f32.gmra.mxu0 %v4595
        %v6234 = vpop.f32.mrf.mxu0
        %v6235 = vadd.f32 %v4593, %v6234
        %6236 = vdwg.mxu0
        %6237 = vmatpush.msra.mxu0 0.0
        %6238 = vmatpush.msra.mxu0 0.0
        %6239 = vmatpush.msra.mxu0 0.0
        %6240 = vmatpush.msra.mxu0 0.0
        %6241 = vmatpush.msra.mxu0 0.0
        %6242 = vmatpush.msra.mxu0 0.0
        %6243 = vmatpush.msra.mxu0 0.0
        %6244 = vmatpush.msra.mxu0 0.0
        %6245 = vmatpush.msra.mxu0 0.0
        %6246 = vmatpush.msra.mxu0 0.0
        %6247 = vmatpush.msra.mxu0 0.0
        %6248 = vmatpush.msra.mxu0 0.0
        %6249 = vmatpush.msra.mxu0 0.0
        %6250 = vmatpush.msra.mxu0 0.0
        %6251 = vmatpush.msra.mxu0 0.0
        %6252 = vmatpush.msra.mxu0 %v4498
        %6253 = vmatmul.f32.gmra.mxu0 %v4595
        %v6254 = vpop.f32.mrf.mxu0
        %v6255 = vadd.f32 %v4593, %v6254
        %6256 = vdwg.mxu0
        %6257 = vmatpush.msra.mxu0 0.0
        %6258 = vmatpush.msra.mxu0 0.0
        %6259 = vmatpush.msra.mxu0 0.0
        %6260 = vmatpush.msra.mxu0 0.0
        %6261 = vmatpush.msra.mxu0 0.0
        %6262 = vmatpush.msra.mxu0 0.0
        %6263 = vmatpush.msra.mxu0 0.0
        %6264 = vmatpush.msra.mxu0 0.0
        %6265 = vmatpush.msra.mxu0 0.0
        %6266 = vmatpush.msra.mxu0 0.0
        %6267 = vmatpush.msra.mxu0 0.0
        %6268 = vmatpush.msra.mxu0 0.0
        %6269 = vmatpush.msra.mxu0 0.0
        %6270 = vmatpush.msra.mxu0 0.0
        %6271 = vmatpush.msra.mxu0 0.0
        %6272 = vmatpush.msra.mxu0 %v4563
        %6273 = vmatmul.f32.gmra.mxu0 %v4595
        %v6274 = vpop.f32.mrf.mxu0
        %v6275 = vadd.f32 %v4593, %v6274
        %6276 = vdwg.mxu0
        %6277 = vmatpush.msra.mxu0 0.0
        %6278 = vmatpush.msra.mxu0 0.0
        %6279 = vmatpush.msra.mxu0 0.0
        %6280 = vmatpush.msra.mxu0 0.0
        %6281 = vmatpush.msra.mxu0 0.0
        %6282 = vmatpush.msra.mxu0 0.0
        %6283 = vmatpush.msra.mxu0 0.0
        %6284 = vmatpush.msra.mxu0 0.0
        %6285 = vmatpush.msra.mxu0 0.0
        %6286 = vmatpush.msra.mxu0 0.0
        %6287 = vmatpush.msra.mxu0 0.0
        %6288 = vmatpush.msra.mxu0 0.0
        %6289 = vmatpush.msra.mxu0 0.0
        %6290 = vmatpush.msra.mxu0 0.0
        %6291 = vmatpush.msra.mxu0 0.0
        %6292 = vmatpush.msra.mxu0 %v4499
        %6293 = vmatmul.f32.gmra.mxu0 %v4595
        %v6294 = vpop.f32.mrf.mxu0
        %v6295 = vadd.f32 %v4593, %v6294
        %6296 = vdwg.mxu0
        %6297 = vmatpush.msra.mxu0 0.0
        %6298 = vmatpush.msra.mxu0 0.0
        %6299 = vmatpush.msra.mxu0 0.0
        %6300 = vmatpush.msra.mxu0 0.0
        %6301 = vmatpush.msra.mxu0 0.0
        %6302 = vmatpush.msra.mxu0 0.0
        %6303 = vmatpush.msra.mxu0 0.0
        %6304 = vmatpush.msra.mxu0 0.0
        %6305 = vmatpush.msra.mxu0 0.0
        %6306 = vmatpush.msra.mxu0 0.0
        %6307 = vmatpush.msra.mxu0 0.0
        %6308 = vmatpush.msra.mxu0 0.0
        %6309 = vmatpush.msra.mxu0 0.0
        %6310 = vmatpush.msra.mxu0 0.0
        %6311 = vmatpush.msra.mxu0 0.0
        %6312 = vmatpush.msra.mxu0 %v4564
        %6313 = vmatmul.f32.gmra.mxu0 %v4595
        %v6314 = vpop.f32.mrf.mxu0
        %v6315 = vadd.f32 %v4593, %v6314
        %6316 = vdwg.mxu0
        %6317 = vmatpush.msra.mxu0 0.0
        %6318 = vmatpush.msra.mxu0 0.0
        %6319 = vmatpush.msra.mxu0 0.0
        %6320 = vmatpush.msra.mxu0 0.0
        %6321 = vmatpush.msra.mxu0 0.0
        %6322 = vmatpush.msra.mxu0 0.0
        %6323 = vmatpush.msra.mxu0 0.0
        %6324 = vmatpush.msra.mxu0 0.0
        %6325 = vmatpush.msra.mxu0 0.0
        %6326 = vmatpush.msra.mxu0 0.0
        %6327 = vmatpush.msra.mxu0 0.0
        %6328 = vmatpush.msra.mxu0 0.0
        %6329 = vmatpush.msra.mxu0 0.0
        %6330 = vmatpush.msra.mxu0 0.0
        %6331 = vmatpush.msra.mxu0 0.0
        %6332 = vmatpush.msra.mxu0 %v4500
        %6333 = vmatmul.f32.gmra.mxu0 %v4595
        %v6334 = vpop.f32.mrf.mxu0
        %v6335 = vadd.f32 %v4593, %v6334
        %6336 = vdwg.mxu0
        %6337 = vmatpush.msra.mxu0 0.0
        %6338 = vmatpush.msra.mxu0 0.0
        %6339 = vmatpush.msra.mxu0 0.0
        %6340 = vmatpush.msra.mxu0 0.0
        %6341 = vmatpush.msra.mxu0 0.0
        %6342 = vmatpush.msra.mxu0 0.0
        %6343 = vmatpush.msra.mxu0 0.0
        %6344 = vmatpush.msra.mxu0 0.0
        %6345 = vmatpush.msra.mxu0 0.0
        %6346 = vmatpush.msra.mxu0 0.0
        %6347 = vmatpush.msra.mxu0 0.0
        %6348 = vmatpush.msra.mxu0 0.0
        %6349 = vmatpush.msra.mxu0 0.0
        %6350 = vmatpush.msra.mxu0 0.0
        %6351 = vmatpush.msra.mxu0 0.0
        %6352 = vmatpush.msra.mxu0 %v4565
        %6353 = vmatmul.f32.gmra.mxu0 %v4595
        %v6354 = vpop.f32.mrf.mxu0
        %v6355 = vadd.f32 %v4593, %v6354
        %6356 = vdwg.mxu0
        %6357 = vmatpush.msra.mxu0 0.0
        %6358 = vmatpush.msra.mxu0 0.0
        %6359 = vmatpush.msra.mxu0 0.0
        %6360 = vmatpush.msra.mxu0 0.0
        %6361 = vmatpush.msra.mxu0 0.0
        %6362 = vmatpush.msra.mxu0 0.0
        %6363 = vmatpush.msra.mxu0 0.0
        %6364 = vmatpush.msra.mxu0 0.0
        %6365 = vmatpush.msra.mxu0 0.0
        %6366 = vmatpush.msra.mxu0 0.0
        %6367 = vmatpush.msra.mxu0 0.0
        %6368 = vmatpush.msra.mxu0 0.0
        %6369 = vmatpush.msra.mxu0 0.0
        %6370 = vmatpush.msra.mxu0 0.0
        %6371 = vmatpush.msra.mxu0 0.0
        %6372 = vmatpush.msra.mxu0 %v4501
        %6373 = vmatmul.f32.gmra.mxu0 %v4595
        %v6374 = vpop.f32.mrf.mxu0
        %v6375 = vadd.f32 %v4593, %v6374
        %6376 = vdwg.mxu0
        %6377 = vmatpush.msra.mxu0 0.0
        %6378 = vmatpush.msra.mxu0 0.0
        %6379 = vmatpush.msra.mxu0 0.0
        %6380 = vmatpush.msra.mxu0 0.0
        %6381 = vmatpush.msra.mxu0 0.0
        %6382 = vmatpush.msra.mxu0 0.0
        %6383 = vmatpush.msra.mxu0 0.0
        %6384 = vmatpush.msra.mxu0 0.0
        %6385 = vmatpush.msra.mxu0 0.0
        %6386 = vmatpush.msra.mxu0 0.0
        %6387 = vmatpush.msra.mxu0 0.0
        %6388 = vmatpush.msra.mxu0 0.0
        %6389 = vmatpush.msra.mxu0 0.0
        %6390 = vmatpush.msra.mxu0 0.0
        %6391 = vmatpush.msra.mxu0 0.0
        %6392 = vmatpush.msra.mxu0 %v4566
        %6393 = vmatmul.f32.gmra.mxu0 %v4595
        %v6394 = vpop.f32.mrf.mxu0
        %v6395 = vadd.f32 %v4593, %v6394
        %6396 = vdwg.mxu0
        %6397 = vmatpush.msra.mxu0 0.0
        %6398 = vmatpush.msra.mxu0 0.0
        %6399 = vmatpush.msra.mxu0 0.0
        %6400 = vmatpush.msra.mxu0 0.0
        %6401 = vmatpush.msra.mxu0 0.0
        %6402 = vmatpush.msra.mxu0 0.0
        %6403 = vmatpush.msra.mxu0 0.0
        %6404 = vmatpush.msra.mxu0 0.0
        %6405 = vmatpush.msra.mxu0 0.0
        %6406 = vmatpush.msra.mxu0 0.0
        %6407 = vmatpush.msra.mxu0 0.0
        %6408 = vmatpush.msra.mxu0 0.0
        %6409 = vmatpush.msra.mxu0 0.0
        %6410 = vmatpush.msra.mxu0 0.0
        %6411 = vmatpush.msra.mxu0 0.0
        %6412 = vmatpush.msra.mxu0 %v4502
        %6413 = vmatmul.f32.gmra.mxu0 %v4595
        %v6414 = vpop.f32.mrf.mxu0
        %v6415 = vadd.f32 %v4593, %v6414
        %6416 = vdwg.mxu0
        %6417 = vmatpush.msra.mxu0 0.0
        %6418 = vmatpush.msra.mxu0 0.0
        %6419 = vmatpush.msra.mxu0 0.0
        %6420 = vmatpush.msra.mxu0 0.0
        %6421 = vmatpush.msra.mxu0 0.0
        %6422 = vmatpush.msra.mxu0 0.0
        %6423 = vmatpush.msra.mxu0 0.0
        %6424 = vmatpush.msra.mxu0 0.0
        %6425 = vmatpush.msra.mxu0 0.0
        %6426 = vmatpush.msra.mxu0 0.0
        %6427 = vmatpush.msra.mxu0 0.0
        %6428 = vmatpush.msra.mxu0 0.0
        %6429 = vmatpush.msra.mxu0 0.0
        %6430 = vmatpush.msra.mxu0 0.0
        %6431 = vmatpush.msra.mxu0 0.0
        %6432 = vmatpush.msra.mxu0 %v4567
        %6433 = vmatmul.f32.gmra.mxu0 %v4595
        %v6434 = vpop.f32.mrf.mxu0
        %v6435 = vadd.f32 %v4593, %v6434
        %6436 = vdwg.mxu0
        %6437 = vmatpush.msra.mxu0 0.0
        %6438 = vmatpush.msra.mxu0 0.0
        %6439 = vmatpush.msra.mxu0 0.0
        %6440 = vmatpush.msra.mxu0 0.0
        %6441 = vmatpush.msra.mxu0 0.0
        %6442 = vmatpush.msra.mxu0 0.0
        %6443 = vmatpush.msra.mxu0 0.0
        %6444 = vmatpush.msra.mxu0 0.0
        %6445 = vmatpush.msra.mxu0 0.0
        %6446 = vmatpush.msra.mxu0 0.0
        %6447 = vmatpush.msra.mxu0 0.0
        %6448 = vmatpush.msra.mxu0 0.0
        %6449 = vmatpush.msra.mxu0 0.0
        %6450 = vmatpush.msra.mxu0 0.0
        %6451 = vmatpush.msra.mxu0 0.0
        %6452 = vmatpush.msra.mxu0 %v4503
        %6453 = vmatmul.f32.gmra.mxu0 %v4595
        %v6454 = vpop.f32.mrf.mxu0
        %v6455 = vadd.f32 %v4593, %v6454
        %6456 = vdwg.mxu0
        %6457 = vmatpush.msra.mxu0 0.0
        %6458 = vmatpush.msra.mxu0 0.0
        %6459 = vmatpush.msra.mxu0 0.0
        %6460 = vmatpush.msra.mxu0 0.0
        %6461 = vmatpush.msra.mxu0 0.0
        %6462 = vmatpush.msra.mxu0 0.0
        %6463 = vmatpush.msra.mxu0 0.0
        %6464 = vmatpush.msra.mxu0 0.0
        %6465 = vmatpush.msra.mxu0 0.0
        %6466 = vmatpush.msra.mxu0 0.0
        %6467 = vmatpush.msra.mxu0 0.0
        %6468 = vmatpush.msra.mxu0 0.0
        %6469 = vmatpush.msra.mxu0 0.0
        %6470 = vmatpush.msra.mxu0 0.0
        %6471 = vmatpush.msra.mxu0 0.0
        %6472 = vmatpush.msra.mxu0 %v4568
        %6473 = vmatmul.f32.gmra.mxu0 %v4595
        %v6474 = vpop.f32.mrf.mxu0
        %v6475 = vadd.f32 %v4593, %v6474
        %6476 = vdwg.mxu0
        %6477 = vmatpush.msra.mxu0 0.0
        %6478 = vmatpush.msra.mxu0 0.0
        %6479 = vmatpush.msra.mxu0 0.0
        %6480 = vmatpush.msra.mxu0 0.0
        %6481 = vmatpush.msra.mxu0 0.0
        %6482 = vmatpush.msra.mxu0 0.0
        %6483 = vmatpush.msra.mxu0 0.0
        %6484 = vmatpush.msra.mxu0 0.0
        %6485 = vmatpush.msra.mxu0 0.0
        %6486 = vmatpush.msra.mxu0 0.0
        %6487 = vmatpush.msra.mxu0 0.0
        %6488 = vmatpush.msra.mxu0 0.0
        %6489 = vmatpush.msra.mxu0 0.0
        %6490 = vmatpush.msra.mxu0 0.0
        %6491 = vmatpush.msra.mxu0 0.0
        %6492 = vmatpush.msra.mxu0 %v4504
        %6493 = vmatmul.f32.gmra.mxu0 %v4595
        %v6494 = vpop.f32.mrf.mxu0
        %v6495 = vadd.f32 %v4593, %v6494
        %6496 = vdwg.mxu0
        %6497 = vmatpush.msra.mxu0 0.0
        %6498 = vmatpush.msra.mxu0 0.0
        %6499 = vmatpush.msra.mxu0 0.0
        %6500 = vmatpush.msra.mxu0 0.0
        %6501 = vmatpush.msra.mxu0 0.0
        %6502 = vmatpush.msra.mxu0 0.0
        %6503 = vmatpush.msra.mxu0 0.0
        %6504 = vmatpush.msra.mxu0 0.0
        %6505 = vmatpush.msra.mxu0 0.0
        %6506 = vmatpush.msra.mxu0 0.0
        %6507 = vmatpush.msra.mxu0 0.0
        %6508 = vmatpush.msra.mxu0 0.0
        %6509 = vmatpush.msra.mxu0 0.0
        %6510 = vmatpush.msra.mxu0 0.0
        %6511 = vmatpush.msra.mxu0 0.0
        %6512 = vmatpush.msra.mxu0 %v4569
        %6513 = vmatmul.f32.gmra.mxu0 %v4595
        %v6514 = vpop.f32.mrf.mxu0
        %v6515 = vadd.f32 %v4593, %v6514
        %6516 = vdwg.mxu0
        %6517 = vmatpush.msra.mxu0 0.0
        %6518 = vmatpush.msra.mxu0 0.0
        %6519 = vmatpush.msra.mxu0 0.0
        %6520 = vmatpush.msra.mxu0 0.0
        %6521 = vmatpush.msra.mxu0 0.0
        %6522 = vmatpush.msra.mxu0 0.0
        %6523 = vmatpush.msra.mxu0 0.0
        %6524 = vmatpush.msra.mxu0 0.0
        %6525 = vmatpush.msra.mxu0 0.0
        %6526 = vmatpush.msra.mxu0 0.0
        %6527 = vmatpush.msra.mxu0 0.0
        %6528 = vmatpush.msra.mxu0 0.0
        %6529 = vmatpush.msra.mxu0 0.0
        %6530 = vmatpush.msra.mxu0 0.0
        %6531 = vmatpush.msra.mxu0 0.0
        %6532 = vmatpush.msra.mxu0 %v4505
        %6533 = vmatmul.f32.gmra.mxu0 %v4595
        %v6534 = vpop.f32.mrf.mxu0
        %v6535 = vadd.f32 %v4593, %v6534
        %6536 = vdwg.mxu0
        %6537 = vmatpush.msra.mxu0 0.0
        %6538 = vmatpush.msra.mxu0 0.0
        %6539 = vmatpush.msra.mxu0 0.0
        %6540 = vmatpush.msra.mxu0 0.0
        %6541 = vmatpush.msra.mxu0 0.0
        %6542 = vmatpush.msra.mxu0 0.0
        %6543 = vmatpush.msra.mxu0 0.0
        %6544 = vmatpush.msra.mxu0 0.0
        %6545 = vmatpush.msra.mxu0 0.0
        %6546 = vmatpush.msra.mxu0 0.0
        %6547 = vmatpush.msra.mxu0 0.0
        %6548 = vmatpush.msra.mxu0 0.0
        %6549 = vmatpush.msra.mxu0 0.0
        %6550 = vmatpush.msra.mxu0 0.0
        %6551 = vmatpush.msra.mxu0 0.0
        %6552 = vmatpush.msra.mxu0 %v4570
        %6553 = vmatmul.f32.gmra.mxu0 %v4595
        %v6554 = vpop.f32.mrf.mxu0
        %v6555 = vadd.f32 %v4593, %v6554
        %6556 = vdwg.mxu0
        %6557 = vmatpush.msra.mxu0 0.0
        %6558 = vmatpush.msra.mxu0 0.0
        %6559 = vmatpush.msra.mxu0 0.0
        %6560 = vmatpush.msra.mxu0 0.0
        %6561 = vmatpush.msra.mxu0 0.0
        %6562 = vmatpush.msra.mxu0 0.0
        %6563 = vmatpush.msra.mxu0 0.0
        %6564 = vmatpush.msra.mxu0 0.0
        %6565 = vmatpush.msra.mxu0 0.0
        %6566 = vmatpush.msra.mxu0 0.0
        %6567 = vmatpush.msra.mxu0 0.0
        %6568 = vmatpush.msra.mxu0 0.0
        %6569 = vmatpush.msra.mxu0 0.0
        %6570 = vmatpush.msra.mxu0 0.0
        %6571 = vmatpush.msra.mxu0 0.0
        %6572 = vmatpush.msra.mxu0 %v4506
        %6573 = vmatmul.f32.gmra.mxu0 %v4595
        %v6574 = vpop.f32.mrf.mxu0
        %v6575 = vadd.f32 %v4593, %v6574
        %6576 = vdwg.mxu0
        %6577 = vmatpush.msra.mxu0 0.0
        %6578 = vmatpush.msra.mxu0 0.0
        %6579 = vmatpush.msra.mxu0 0.0
        %6580 = vmatpush.msra.mxu0 0.0
        %6581 = vmatpush.msra.mxu0 0.0
        %6582 = vmatpush.msra.mxu0 0.0
        %6583 = vmatpush.msra.mxu0 0.0
        %6584 = vmatpush.msra.mxu0 0.0
        %6585 = vmatpush.msra.mxu0 0.0
        %6586 = vmatpush.msra.mxu0 0.0
        %6587 = vmatpush.msra.mxu0 0.0
        %6588 = vmatpush.msra.mxu0 0.0
        %6589 = vmatpush.msra.mxu0 0.0
        %6590 = vmatpush.msra.mxu0 0.0
        %6591 = vmatpush.msra.mxu0 0.0
        %6592 = vmatpush.msra.mxu0 %v4571
        %6593 = vmatmul.f32.gmra.mxu0 %v4595
        %v6594 = vpop.f32.mrf.mxu0
        %v6595 = vadd.f32 %v4593, %v6594
        %6596 = vdwg.mxu0
        %6597 = vmatpush.msra.mxu0 0.0
        %6598 = vmatpush.msra.mxu0 0.0
        %6599 = vmatpush.msra.mxu0 0.0
        %6600 = vmatpush.msra.mxu0 0.0
        %6601 = vmatpush.msra.mxu0 0.0
        %6602 = vmatpush.msra.mxu0 0.0
        %6603 = vmatpush.msra.mxu0 0.0
        %6604 = vmatpush.msra.mxu0 0.0
        %6605 = vmatpush.msra.mxu0 0.0
        %6606 = vmatpush.msra.mxu0 0.0
        %6607 = vmatpush.msra.mxu0 0.0
        %6608 = vmatpush.msra.mxu0 0.0
        %6609 = vmatpush.msra.mxu0 0.0
        %6610 = vmatpush.msra.mxu0 0.0
        %6611 = vmatpush.msra.mxu0 0.0
        %6612 = vmatpush.msra.mxu0 %v4507
        %6613 = vmatmul.f32.gmra.mxu0 %v4595
        %v6614 = vpop.f32.mrf.mxu0
        %v6615 = vadd.f32 %v4593, %v6614
        %6616 = vdwg.mxu0
        %6617 = vmatpush.msra.mxu0 0.0
        %6618 = vmatpush.msra.mxu0 0.0
        %6619 = vmatpush.msra.mxu0 0.0
        %6620 = vmatpush.msra.mxu0 0.0
        %6621 = vmatpush.msra.mxu0 0.0
        %6622 = vmatpush.msra.mxu0 0.0
        %6623 = vmatpush.msra.mxu0 0.0
        %6624 = vmatpush.msra.mxu0 0.0
        %6625 = vmatpush.msra.mxu0 0.0
        %6626 = vmatpush.msra.mxu0 0.0
        %6627 = vmatpush.msra.mxu0 0.0
        %6628 = vmatpush.msra.mxu0 0.0
        %6629 = vmatpush.msra.mxu0 0.0
        %6630 = vmatpush.msra.mxu0 0.0
        %6631 = vmatpush.msra.mxu0 0.0
        %6632 = vmatpush.msra.mxu0 %v4572
        %6633 = vmatmul.f32.gmra.mxu0 %v4595
        %v6634 = vpop.f32.mrf.mxu0
        %v6635 = vadd.f32 %v4593, %v6634
        %6636 = vdwg.mxu0
        %6637 = vmatpush.msra.mxu0 0.0
        %6638 = vmatpush.msra.mxu0 0.0
        %6639 = vmatpush.msra.mxu0 0.0
        %6640 = vmatpush.msra.mxu0 0.0
        %6641 = vmatpush.msra.mxu0 0.0
        %6642 = vmatpush.msra.mxu0 0.0
        %6643 = vmatpush.msra.mxu0 0.0
        %6644 = vmatpush.msra.mxu0 0.0
        %6645 = vmatpush.msra.mxu0 0.0
        %6646 = vmatpush.msra.mxu0 0.0
        %6647 = vmatpush.msra.mxu0 0.0
        %6648 = vmatpush.msra.mxu0 0.0
        %6649 = vmatpush.msra.mxu0 0.0
        %6650 = vmatpush.msra.mxu0 0.0
        %6651 = vmatpush.msra.mxu0 0.0
        %6652 = vmatpush.msra.mxu0 %v4508
        %6653 = vmatmul.f32.gmra.mxu0 %v4595
        %v6654 = vpop.f32.mrf.mxu0
        %v6655 = vadd.f32 %v4593, %v6654
        %6656 = vdwg.mxu0
        %6657 = vmatpush.msra.mxu0 0.0
        %6658 = vmatpush.msra.mxu0 0.0
        %6659 = vmatpush.msra.mxu0 0.0
        %6660 = vmatpush.msra.mxu0 0.0
        %6661 = vmatpush.msra.mxu0 0.0
        %6662 = vmatpush.msra.mxu0 0.0
        %6663 = vmatpush.msra.mxu0 0.0
        %6664 = vmatpush.msra.mxu0 0.0
        %6665 = vmatpush.msra.mxu0 0.0
        %6666 = vmatpush.msra.mxu0 0.0
        %6667 = vmatpush.msra.mxu0 0.0
        %6668 = vmatpush.msra.mxu0 0.0
        %6669 = vmatpush.msra.mxu0 0.0
        %6670 = vmatpush.msra.mxu0 0.0
        %6671 = vmatpush.msra.mxu0 0.0
        %6672 = vmatpush.msra.mxu0 %v4573
        %6673 = vmatmul.f32.gmra.mxu0 %v4595
        %v6674 = vpop.f32.mrf.mxu0
        %v6675 = vadd.f32 %v4593, %v6674
        %6676 = vdwg.mxu0
        %6677 = vmatpush.msra.mxu0 0.0
        %6678 = vmatpush.msra.mxu0 0.0
        %6679 = vmatpush.msra.mxu0 0.0
        %6680 = vmatpush.msra.mxu0 0.0
        %6681 = vmatpush.msra.mxu0 0.0
        %6682 = vmatpush.msra.mxu0 0.0
        %6683 = vmatpush.msra.mxu0 0.0
        %6684 = vmatpush.msra.mxu0 0.0
        %6685 = vmatpush.msra.mxu0 0.0
        %6686 = vmatpush.msra.mxu0 0.0
        %6687 = vmatpush.msra.mxu0 0.0
        %6688 = vmatpush.msra.mxu0 0.0
        %6689 = vmatpush.msra.mxu0 0.0
        %6690 = vmatpush.msra.mxu0 0.0
        %6691 = vmatpush.msra.mxu0 0.0
        %6692 = vmatpush.msra.mxu0 %v4509
        %6693 = vmatmul.f32.gmra.mxu0 %v4595
        %v6694 = vpop.f32.mrf.mxu0
        %v6695 = vadd.f32 %v4593, %v6694
        %6696 = vdwg.mxu0
        %6697 = vmatpush.msra.mxu0 0.0
        %6698 = vmatpush.msra.mxu0 0.0
        %6699 = vmatpush.msra.mxu0 0.0
        %6700 = vmatpush.msra.mxu0 0.0
        %6701 = vmatpush.msra.mxu0 0.0
        %6702 = vmatpush.msra.mxu0 0.0
        %6703 = vmatpush.msra.mxu0 0.0
        %6704 = vmatpush.msra.mxu0 0.0
        %6705 = vmatpush.msra.mxu0 0.0
        %6706 = vmatpush.msra.mxu0 0.0
        %6707 = vmatpush.msra.mxu0 0.0
        %6708 = vmatpush.msra.mxu0 0.0
        %6709 = vmatpush.msra.mxu0 0.0
        %6710 = vmatpush.msra.mxu0 0.0
        %6711 = vmatpush.msra.mxu0 0.0
        %6712 = vmatpush.msra.mxu0 %v4574
        %6713 = vmatmul.f32.gmra.mxu0 %v4595
        %v6714 = vpop.f32.mrf.mxu0
        %v6715 = vadd.f32 %v4593, %v6714
        %6716 = vdwg.mxu0
        %6717 = vmatpush.msra.mxu0 0.0
        %6718 = vmatpush.msra.mxu0 0.0
        %6719 = vmatpush.msra.mxu0 0.0
        %6720 = vmatpush.msra.mxu0 0.0
        %6721 = vmatpush.msra.mxu0 0.0
        %6722 = vmatpush.msra.mxu0 0.0
        %6723 = vmatpush.msra.mxu0 0.0
        %6724 = vmatpush.msra.mxu0 0.0
        %6725 = vmatpush.msra.mxu0 0.0
        %6726 = vmatpush.msra.mxu0 0.0
        %6727 = vmatpush.msra.mxu0 0.0
        %6728 = vmatpush.msra.mxu0 0.0
        %6729 = vmatpush.msra.mxu0 0.0
        %6730 = vmatpush.msra.mxu0 0.0
        %6731 = vmatpush.msra.mxu0 0.0
        %6732 = vmatpush.msra.mxu0 %v4510
        %6733 = vmatmul.f32.gmra.mxu0 %v4595
        %v6734 = vpop.f32.mrf.mxu0
        %v6735 = vadd.f32 %v4593, %v6734
        %6736 = vdwg.mxu0
        %6737 = vmatpush.msra.mxu0 0.0
        %6738 = vmatpush.msra.mxu0 0.0
        %6739 = vmatpush.msra.mxu0 0.0
        %6740 = vmatpush.msra.mxu0 0.0
        %6741 = vmatpush.msra.mxu0 0.0
        %6742 = vmatpush.msra.mxu0 0.0
        %6743 = vmatpush.msra.mxu0 0.0
        %6744 = vmatpush.msra.mxu0 0.0
        %6745 = vmatpush.msra.mxu0 0.0
        %6746 = vmatpush.msra.mxu0 0.0
        %6747 = vmatpush.msra.mxu0 0.0
        %6748 = vmatpush.msra.mxu0 0.0
        %6749 = vmatpush.msra.mxu0 0.0
        %6750 = vmatpush.msra.mxu0 0.0
        %6751 = vmatpush.msra.mxu0 0.0
        %6752 = vmatpush.msra.mxu0 %v4575
        %6753 = vmatmul.f32.gmra.mxu0 %v4595
        %v6754 = vpop.f32.mrf.mxu0
        %v6755 = vadd.f32 %v4593, %v6754
        %6756 = vdwg.mxu0
        %6757 = vmatpush.msra.mxu0 0.0
        %6758 = vmatpush.msra.mxu0 0.0
        %6759 = vmatpush.msra.mxu0 0.0
        %6760 = vmatpush.msra.mxu0 0.0
        %6761 = vmatpush.msra.mxu0 0.0
        %6762 = vmatpush.msra.mxu0 0.0
        %6763 = vmatpush.msra.mxu0 0.0
        %6764 = vmatpush.msra.mxu0 0.0
        %6765 = vmatpush.msra.mxu0 0.0
        %6766 = vmatpush.msra.mxu0 0.0
        %6767 = vmatpush.msra.mxu0 0.0
        %6768 = vmatpush.msra.mxu0 0.0
        %6769 = vmatpush.msra.mxu0 0.0
        %6770 = vmatpush.msra.mxu0 0.0
        %6771 = vmatpush.msra.mxu0 0.0
        %6772 = vmatpush.msra.mxu0 %v4511
        %6773 = vmatmul.f32.gmra.mxu0 %v4595
        %v6774 = vpop.f32.mrf.mxu0
        %v6775 = vadd.f32 %v4593, %v6774
        %6776 = vdwg.mxu0
        %6777 = vmatpush.msra.mxu0 0.0
        %6778 = vmatpush.msra.mxu0 0.0
        %6779 = vmatpush.msra.mxu0 0.0
        %6780 = vmatpush.msra.mxu0 0.0
        %6781 = vmatpush.msra.mxu0 0.0
        %6782 = vmatpush.msra.mxu0 0.0
        %6783 = vmatpush.msra.mxu0 0.0
        %6784 = vmatpush.msra.mxu0 0.0
        %6785 = vmatpush.msra.mxu0 0.0
        %6786 = vmatpush.msra.mxu0 0.0
        %6787 = vmatpush.msra.mxu0 0.0
        %6788 = vmatpush.msra.mxu0 0.0
        %6789 = vmatpush.msra.mxu0 0.0
        %6790 = vmatpush.msra.mxu0 0.0
        %6791 = vmatpush.msra.mxu0 0.0
        %6792 = vmatpush.msra.mxu0 %v4576
        %6793 = vmatmul.f32.gmra.mxu0 %v4595
        %v6794 = vpop.f32.mrf.mxu0
        %v6795 = vadd.f32 %v4593, %v6794
        %6796 = vdwg.mxu0
        %6797 = vmatpush.msra.mxu0 0.0
        %6798 = vmatpush.msra.mxu0 0.0
        %6799 = vmatpush.msra.mxu0 0.0
        %6800 = vmatpush.msra.mxu0 0.0
        %6801 = vmatpush.msra.mxu0 0.0
        %6802 = vmatpush.msra.mxu0 0.0
        %6803 = vmatpush.msra.mxu0 0.0
        %6804 = vmatpush.msra.mxu0 0.0
        %6805 = vmatpush.msra.mxu0 0.0
        %6806 = vmatpush.msra.mxu0 0.0
        %6807 = vmatpush.msra.mxu0 0.0
        %6808 = vmatpush.msra.mxu0 0.0
        %6809 = vmatpush.msra.mxu0 0.0
        %6810 = vmatpush.msra.mxu0 0.0
        %6811 = vmatpush.msra.mxu0 0.0
        %6812 = vmatpush.msra.mxu0 %v4512
        %6813 = vmatmul.f32.gmra.mxu0 %v4595
        %v6814 = vpop.f32.mrf.mxu0
        %v6815 = vadd.f32 %v4593, %v6814
        %6816 = vdwg.mxu0
        %6817 = vmatpush.msra.mxu0 0.0
        %6818 = vmatpush.msra.mxu0 0.0
        %6819 = vmatpush.msra.mxu0 0.0
        %6820 = vmatpush.msra.mxu0 0.0
        %6821 = vmatpush.msra.mxu0 0.0
        %6822 = vmatpush.msra.mxu0 0.0
        %6823 = vmatpush.msra.mxu0 0.0
        %6824 = vmatpush.msra.mxu0 0.0
        %6825 = vmatpush.msra.mxu0 0.0
        %6826 = vmatpush.msra.mxu0 0.0
        %6827 = vmatpush.msra.mxu0 0.0
        %6828 = vmatpush.msra.mxu0 0.0
        %6829 = vmatpush.msra.mxu0 0.0
        %6830 = vmatpush.msra.mxu0 0.0
        %6831 = vmatpush.msra.mxu0 0.0
        %6832 = vmatpush.msra.mxu0 %v4577
        %6833 = vmatmul.f32.gmra.mxu0 %v4595
        %v6834 = vpop.f32.mrf.mxu0
        %v6835 = vadd.f32 %v4593, %v6834
        %6836 = vdwg.mxu0
        %6837 = vmatpush.msra.mxu0 0.0
        %6838 = vmatpush.msra.mxu0 0.0
        %6839 = vmatpush.msra.mxu0 0.0
        %6840 = vmatpush.msra.mxu0 0.0
        %6841 = vmatpush.msra.mxu0 0.0
        %6842 = vmatpush.msra.mxu0 0.0
        %6843 = vmatpush.msra.mxu0 0.0
        %6844 = vmatpush.msra.mxu0 0.0
        %6845 = vmatpush.msra.mxu0 0.0
        %6846 = vmatpush.msra.mxu0 0.0
        %6847 = vmatpush.msra.mxu0 0.0
        %6848 = vmatpush.msra.mxu0 0.0
        %6849 = vmatpush.msra.mxu0 0.0
        %6850 = vmatpush.msra.mxu0 0.0
        %6851 = vmatpush.msra.mxu0 0.0
        %6852 = vmatpush.msra.mxu0 %v4513
        %6853 = vmatmul.f32.gmra.mxu0 %v4595
        %v6854 = vpop.f32.mrf.mxu0
        %v6855 = vadd.f32 %v4593, %v6854
        %6856 = vdwg.mxu0
        %6857 = vmatpush.msra.mxu0 0.0
        %6858 = vmatpush.msra.mxu0 0.0
        %6859 = vmatpush.msra.mxu0 0.0
        %6860 = vmatpush.msra.mxu0 0.0
        %6861 = vmatpush.msra.mxu0 0.0
        %6862 = vmatpush.msra.mxu0 0.0
        %6863 = vmatpush.msra.mxu0 0.0
        %6864 = vmatpush.msra.mxu0 0.0
        %6865 = vmatpush.msra.mxu0 0.0
        %6866 = vmatpush.msra.mxu0 0.0
        %6867 = vmatpush.msra.mxu0 0.0
        %6868 = vmatpush.msra.mxu0 0.0
        %6869 = vmatpush.msra.mxu0 0.0
        %6870 = vmatpush.msra.mxu0 0.0
        %6871 = vmatpush.msra.mxu0 0.0
        %6872 = vmatpush.msra.mxu0 %v4578
        %6873 = vmatmul.f32.gmra.mxu0 %v4595
        %v6874 = vpop.f32.mrf.mxu0
        %v6875 = vadd.f32 %v4593, %v6874
        %6876 = vdwg.mxu0
        %6877 = vmatpush.msra.mxu0 0.0
        %6878 = vmatpush.msra.mxu0 0.0
        %6879 = vmatpush.msra.mxu0 0.0
        %6880 = vmatpush.msra.mxu0 0.0
        %6881 = vmatpush.msra.mxu0 0.0
        %6882 = vmatpush.msra.mxu0 0.0
        %6883 = vmatpush.msra.mxu0 0.0
        %6884 = vmatpush.msra.mxu0 0.0
        %6885 = vmatpush.msra.mxu0 0.0
        %6886 = vmatpush.msra.mxu0 0.0
        %6887 = vmatpush.msra.mxu0 0.0
        %6888 = vmatpush.msra.mxu0 0.0
        %6889 = vmatpush.msra.mxu0 0.0
        %6890 = vmatpush.msra.mxu0 0.0
        %6891 = vmatpush.msra.mxu0 0.0
        %6892 = vmatpush.msra.mxu0 %v4514
        %6893 = vmatmul.f32.gmra.mxu0 %v4595
        %v6894 = vpop.f32.mrf.mxu0
        %v6895 = vadd.f32 %v4593, %v6894
        %6896 = vdwg.mxu0
        %6897 = vmatpush.msra.mxu0 0.0
        %6898 = vmatpush.msra.mxu0 0.0
        %6899 = vmatpush.msra.mxu0 0.0
        %6900 = vmatpush.msra.mxu0 0.0
        %6901 = vmatpush.msra.mxu0 0.0
        %6902 = vmatpush.msra.mxu0 0.0
        %6903 = vmatpush.msra.mxu0 0.0
        %6904 = vmatpush.msra.mxu0 0.0
        %6905 = vmatpush.msra.mxu0 0.0
        %6906 = vmatpush.msra.mxu0 0.0
        %6907 = vmatpush.msra.mxu0 0.0
        %6908 = vmatpush.msra.mxu0 0.0
        %6909 = vmatpush.msra.mxu0 0.0
        %6910 = vmatpush.msra.mxu0 0.0
        %6911 = vmatpush.msra.mxu0 0.0
        %6912 = vmatpush.msra.mxu0 %v4579
        %6913 = vmatmul.f32.gmra.mxu0 %v4595
        %v6914 = vpop.f32.mrf.mxu0
        %v6915 = vadd.f32 %v4593, %v6914
        %6916 = vdwg.mxu0
        %6917 = vmatpush.msra.mxu0 0.0
        %6918 = vmatpush.msra.mxu0 0.0
        %6919 = vmatpush.msra.mxu0 0.0
        %6920 = vmatpush.msra.mxu0 0.0
        %6921 = vmatpush.msra.mxu0 0.0
        %6922 = vmatpush.msra.mxu0 0.0
        %6923 = vmatpush.msra.mxu0 0.0
        %6924 = vmatpush.msra.mxu0 0.0
        %6925 = vmatpush.msra.mxu0 0.0
        %6926 = vmatpush.msra.mxu0 0.0
        %6927 = vmatpush.msra.mxu0 0.0
        %6928 = vmatpush.msra.mxu0 0.0
        %6929 = vmatpush.msra.mxu0 0.0
        %6930 = vmatpush.msra.mxu0 0.0
        %6931 = vmatpush.msra.mxu0 0.0
        %6932 = vmatpush.msra.mxu0 %v4515
        %6933 = vmatmul.f32.gmra.mxu0 %v4595
        %v6934 = vpop.f32.mrf.mxu0
        %v6935 = vadd.f32 %v4593, %v6934
        %6936 = vdwg.mxu0
        %6937 = vmatpush.msra.mxu0 0.0
        %6938 = vmatpush.msra.mxu0 0.0
        %6939 = vmatpush.msra.mxu0 0.0
        %6940 = vmatpush.msra.mxu0 0.0
        %6941 = vmatpush.msra.mxu0 0.0
        %6942 = vmatpush.msra.mxu0 0.0
        %6943 = vmatpush.msra.mxu0 0.0
        %6944 = vmatpush.msra.mxu0 0.0
        %6945 = vmatpush.msra.mxu0 0.0
        %6946 = vmatpush.msra.mxu0 0.0
        %6947 = vmatpush.msra.mxu0 0.0
        %6948 = vmatpush.msra.mxu0 0.0
        %6949 = vmatpush.msra.mxu0 0.0
        %6950 = vmatpush.msra.mxu0 0.0
        %6951 = vmatpush.msra.mxu0 0.0
        %6952 = vmatpush.msra.mxu0 %v4580
        %6953 = vmatmul.f32.gmra.mxu0 %v4595
        %v6954 = vpop.f32.mrf.mxu0
        %v6955 = vadd.f32 %v4593, %v6954
        %6956 = vdwg.mxu0
        %6957 = vmatpush.msra.mxu0 0.0
        %6958 = vmatpush.msra.mxu0 0.0
        %6959 = vmatpush.msra.mxu0 0.0
        %6960 = vmatpush.msra.mxu0 0.0
        %6961 = vmatpush.msra.mxu0 0.0
        %6962 = vmatpush.msra.mxu0 0.0
        %6963 = vmatpush.msra.mxu0 0.0
        %6964 = vmatpush.msra.mxu0 0.0
        %6965 = vmatpush.msra.mxu0 0.0
        %6966 = vmatpush.msra.mxu0 0.0
        %6967 = vmatpush.msra.mxu0 0.0
        %6968 = vmatpush.msra.mxu0 0.0
        %6969 = vmatpush.msra.mxu0 0.0
        %6970 = vmatpush.msra.mxu0 0.0
        %6971 = vmatpush.msra.mxu0 0.0
        %6972 = vmatpush.msra.mxu0 %v4516
        %6973 = vmatmul.f32.gmra.mxu0 %v4595
        %v6974 = vpop.f32.mrf.mxu0
        %v6975 = vadd.f32 %v4593, %v6974
        %6976 = vdwg.mxu0
        %6977 = vmatpush.msra.mxu0 0.0
        %6978 = vmatpush.msra.mxu0 0.0
        %6979 = vmatpush.msra.mxu0 0.0
        %6980 = vmatpush.msra.mxu0 0.0
        %6981 = vmatpush.msra.mxu0 0.0
        %6982 = vmatpush.msra.mxu0 0.0
        %6983 = vmatpush.msra.mxu0 0.0
        %6984 = vmatpush.msra.mxu0 0.0
        %6985 = vmatpush.msra.mxu0 0.0
        %6986 = vmatpush.msra.mxu0 0.0
        %6987 = vmatpush.msra.mxu0 0.0
        %6988 = vmatpush.msra.mxu0 0.0
        %6989 = vmatpush.msra.mxu0 0.0
        %6990 = vmatpush.msra.mxu0 0.0
        %6991 = vmatpush.msra.mxu0 0.0
        %6992 = vmatpush.msra.mxu0 %v4581
        %6993 = vmatmul.f32.gmra.mxu0 %v4595
        %v6994 = vpop.f32.mrf.mxu0
        %v6995 = vadd.f32 %v4593, %v6994
        %6996 = vdwg.mxu0
        %6997 = vmatpush.msra.mxu0 0.0
        %6998 = vmatpush.msra.mxu0 0.0
        %6999 = vmatpush.msra.mxu0 0.0
        %7000 = vmatpush.msra.mxu0 0.0
        %7001 = vmatpush.msra.mxu0 0.0
        %7002 = vmatpush.msra.mxu0 0.0
        %7003 = vmatpush.msra.mxu0 0.0
        %7004 = vmatpush.msra.mxu0 0.0
        %7005 = vmatpush.msra.mxu0 0.0
        %7006 = vmatpush.msra.mxu0 0.0
        %7007 = vmatpush.msra.mxu0 0.0
        %7008 = vmatpush.msra.mxu0 0.0
        %7009 = vmatpush.msra.mxu0 0.0
        %7010 = vmatpush.msra.mxu0 0.0
        %7011 = vmatpush.msra.mxu0 0.0
        %7012 = vmatpush.msra.mxu0 %v4517
        %7013 = vmatmul.f32.gmra.mxu0 %v4595
        %v7014 = vpop.f32.mrf.mxu0
        %v7015 = vadd.f32 %v4593, %v7014
        %7016 = vdwg.mxu0
        %7017 = vmatpush.msra.mxu0 0.0
        %7018 = vmatpush.msra.mxu0 0.0
        %7019 = vmatpush.msra.mxu0 0.0
        %7020 = vmatpush.msra.mxu0 0.0
        %7021 = vmatpush.msra.mxu0 0.0
        %7022 = vmatpush.msra.mxu0 0.0
        %7023 = vmatpush.msra.mxu0 0.0
        %7024 = vmatpush.msra.mxu0 0.0
        %7025 = vmatpush.msra.mxu0 0.0
        %7026 = vmatpush.msra.mxu0 0.0
        %7027 = vmatpush.msra.mxu0 0.0
        %7028 = vmatpush.msra.mxu0 0.0
        %7029 = vmatpush.msra.mxu0 0.0
        %7030 = vmatpush.msra.mxu0 0.0
        %7031 = vmatpush.msra.mxu0 0.0
        %7032 = vmatpush.msra.mxu0 %v4582
        %7033 = vmatmul.f32.gmra.mxu0 %v4595
        %v7034 = vpop.f32.mrf.mxu0
        %v7035 = vadd.f32 %v4593, %v7034
        %7036 = vdwg.mxu0
        %7037 = vmatpush.msra.mxu0 0.0
        %7038 = vmatpush.msra.mxu0 0.0
        %7039 = vmatpush.msra.mxu0 0.0
        %7040 = vmatpush.msra.mxu0 0.0
        %7041 = vmatpush.msra.mxu0 0.0
        %7042 = vmatpush.msra.mxu0 0.0
        %7043 = vmatpush.msra.mxu0 0.0
        %7044 = vmatpush.msra.mxu0 0.0
        %7045 = vmatpush.msra.mxu0 0.0
        %7046 = vmatpush.msra.mxu0 0.0
        %7047 = vmatpush.msra.mxu0 0.0
        %7048 = vmatpush.msra.mxu0 0.0
        %7049 = vmatpush.msra.mxu0 0.0
        %7050 = vmatpush.msra.mxu0 0.0
        %7051 = vmatpush.msra.mxu0 0.0
        %7052 = vmatpush.msra.mxu0 %v4518
        %7053 = vmatmul.f32.gmra.mxu0 %v4595
        %v7054 = vpop.f32.mrf.mxu0
        %v7055 = vadd.f32 %v4593, %v7054
        %7056 = vdwg.mxu0
        %7057 = vmatpush.msra.mxu0 0.0
        %7058 = vmatpush.msra.mxu0 0.0
        %7059 = vmatpush.msra.mxu0 0.0
        %7060 = vmatpush.msra.mxu0 0.0
        %7061 = vmatpush.msra.mxu0 0.0
        %7062 = vmatpush.msra.mxu0 0.0
        %7063 = vmatpush.msra.mxu0 0.0
        %7064 = vmatpush.msra.mxu0 0.0
        %7065 = vmatpush.msra.mxu0 0.0
        %7066 = vmatpush.msra.mxu0 0.0
        %7067 = vmatpush.msra.mxu0 0.0
        %7068 = vmatpush.msra.mxu0 0.0
        %7069 = vmatpush.msra.mxu0 0.0
        %7070 = vmatpush.msra.mxu0 0.0
        %7071 = vmatpush.msra.mxu0 0.0
        %7072 = vmatpush.msra.mxu0 %v4583
        %7073 = vmatmul.f32.gmra.mxu0 %v4595
        %v7074 = vpop.f32.mrf.mxu0
        %v7075 = vadd.f32 %v4593, %v7074
        %7076 = vdwg.mxu0
        %7077 = vmatpush.msra.mxu0 0.0
        %7078 = vmatpush.msra.mxu0 0.0
        %7079 = vmatpush.msra.mxu0 0.0
        %7080 = vmatpush.msra.mxu0 0.0
        %7081 = vmatpush.msra.mxu0 0.0
        %7082 = vmatpush.msra.mxu0 0.0
        %7083 = vmatpush.msra.mxu0 0.0
        %7084 = vmatpush.msra.mxu0 0.0
        %7085 = vmatpush.msra.mxu0 0.0
        %7086 = vmatpush.msra.mxu0 0.0
        %7087 = vmatpush.msra.mxu0 0.0
        %7088 = vmatpush.msra.mxu0 0.0
        %7089 = vmatpush.msra.mxu0 0.0
        %7090 = vmatpush.msra.mxu0 0.0
        %7091 = vmatpush.msra.mxu0 0.0
        %7092 = vmatpush.msra.mxu0 %v4519
        %7093 = vmatmul.f32.gmra.mxu0 %v4595
        %v7094 = vpop.f32.mrf.mxu0
        %v7095 = vadd.f32 %v4593, %v7094
        %7096 = vdwg.mxu0
        %7097 = vmatpush.msra.mxu0 0.0
        %7098 = vmatpush.msra.mxu0 0.0
        %7099 = vmatpush.msra.mxu0 0.0
        %7100 = vmatpush.msra.mxu0 0.0
        %7101 = vmatpush.msra.mxu0 0.0
        %7102 = vmatpush.msra.mxu0 0.0
        %7103 = vmatpush.msra.mxu0 0.0
        %7104 = vmatpush.msra.mxu0 0.0
        %7105 = vmatpush.msra.mxu0 0.0
        %7106 = vmatpush.msra.mxu0 0.0
        %7107 = vmatpush.msra.mxu0 0.0
        %7108 = vmatpush.msra.mxu0 0.0
        %7109 = vmatpush.msra.mxu0 0.0
        %7110 = vmatpush.msra.mxu0 0.0
        %7111 = vmatpush.msra.mxu0 0.0
        %7112 = vmatpush.msra.mxu0 %v4584
        %7113 = vmatmul.f32.gmra.mxu0 %v4595
        %v7114 = vpop.f32.mrf.mxu0
        %v7115 = vadd.f32 %v4593, %v7114
        %7116 = vdwg.mxu0
        %7117 = vmatpush.msra.mxu0 0.0
        %7118 = vmatpush.msra.mxu0 0.0
        %7119 = vmatpush.msra.mxu0 0.0
        %7120 = vmatpush.msra.mxu0 0.0
        %7121 = vmatpush.msra.mxu0 0.0
        %7122 = vmatpush.msra.mxu0 0.0
        %7123 = vmatpush.msra.mxu0 0.0
        %7124 = vmatpush.msra.mxu0 0.0
        %7125 = vmatpush.msra.mxu0 0.0
        %7126 = vmatpush.msra.mxu0 0.0
        %7127 = vmatpush.msra.mxu0 0.0
        %7128 = vmatpush.msra.mxu0 0.0
        %7129 = vmatpush.msra.mxu0 0.0
        %7130 = vmatpush.msra.mxu0 0.0
        %7131 = vmatpush.msra.mxu0 0.0
        %7132 = vmatpush.msra.mxu0 %v4520
        %7133 = vmatmul.f32.gmra.mxu0 %v4595
        %v7134 = vpop.f32.mrf.mxu0
        %v7135 = vadd.f32 %v4593, %v7134
        %7136 = vdwg.mxu0
        %7137 = vmatpush.msra.mxu0 0.0
        %7138 = vmatpush.msra.mxu0 0.0
        %7139 = vmatpush.msra.mxu0 0.0
        %7140 = vmatpush.msra.mxu0 0.0
        %7141 = vmatpush.msra.mxu0 0.0
        %7142 = vmatpush.msra.mxu0 0.0
        %7143 = vmatpush.msra.mxu0 0.0
        %7144 = vmatpush.msra.mxu0 0.0
        %7145 = vmatpush.msra.mxu0 0.0
        %7146 = vmatpush.msra.mxu0 0.0
        %7147 = vmatpush.msra.mxu0 0.0
        %7148 = vmatpush.msra.mxu0 0.0
        %7149 = vmatpush.msra.mxu0 0.0
        %7150 = vmatpush.msra.mxu0 0.0
        %7151 = vmatpush.msra.mxu0 0.0
        %7152 = vmatpush.msra.mxu0 %v4585
        %7153 = vmatmul.f32.gmra.mxu0 %v4595
        %v7154 = vpop.f32.mrf.mxu0
        %v7155 = vadd.f32 %v4593, %v7154
        %7156 = vdwg.mxu0
        %v7285 = vrot.slane %v4635, 7
        %vm7286 = vcmask 1041409
        %v7287 = vsel %vm7286, %v7285, %v4615
        %v7288 = vrot.slane %v4655, 6
        %vm7289 = vcmask 1042434
        %v7290 = vsel %vm7289, %v7288, %v7287
        %v7291 = vrot.slane %v4675, 5
        %vm7292 = vcmask 1043459
        %v7293 = vsel %vm7292, %v7291, %v7290
        %v7294 = vrot.slane %v4695, 4
        %vm7295 = vcmask 1044484
        %v7296 = vsel %vm7295, %v7294, %v7293
        %v7297 = vrot.slane %v4715, 3
        %vm7298 = vcmask 1045509
        %v7299 = vsel %vm7298, %v7297, %v7296
        %v7300 = vrot.slane %v4735, 2
        %vm7301 = vcmask 1046534
        %v7302 = vsel %vm7301, %v7300, %v7299
        %v7303 = vrot.slane %v4755, 1
        %vm7304 = vcmask 1047559
        %v7305 = vsel %vm7304, %v7303, %v7302
        %v7306 = vrot.slane %v4795, 7
        %v7307 = vsel %vm7286, %v7306, %v4775
        %v7308 = vrot.slane %v4815, 6
        %v7309 = vsel %vm7289, %v7308, %v7307
        %v7310 = vrot.slane %v4835, 5
        %v7311 = vsel %vm7292, %v7310, %v7309
        %v7312 = vrot.slane %v4855, 4
        %v7313 = vsel %vm7295, %v7312, %v7311
        %v7314 = vrot.slane %v4875, 3
        %v7315 = vsel %vm7298, %v7314, %v7313
        %v7316 = vrot.slane %v4895, 2
        %v7317 = vsel %vm7301, %v7316, %v7315
        %v7318 = vrot.slane %v4915, 1
        %v7319 = vsel %vm7304, %v7318, %v7317
        %v7320 = vrot.slane %v4955, 7
        %v7321 = vsel %vm7286, %v7320, %v4935
        %v7322 = vrot.slane %v4975, 6
        %v7323 = vsel %vm7289, %v7322, %v7321
        %v7324 = vrot.slane %v4995, 5
        %v7325 = vsel %vm7292, %v7324, %v7323
        %v7326 = vrot.slane %v5015, 4
        %v7327 = vsel %vm7295, %v7326, %v7325
        %v7328 = vrot.slane %v5035, 3
        %v7329 = vsel %vm7298, %v7328, %v7327
        %v7330 = vrot.slane %v5055, 2
        %v7331 = vsel %vm7301, %v7330, %v7329
        %v7332 = vrot.slane %v5075, 1
        %v7333 = vsel %vm7304, %v7332, %v7331
        %v7334 = vrot.slane %v5115, 7
        %v7335 = vsel %vm7286, %v7334, %v5095
        %v7336 = vrot.slane %v5135, 6
        %v7337 = vsel %vm7289, %v7336, %v7335
        %v7338 = vrot.slane %v5155, 5
        %v7339 = vsel %vm7292, %v7338, %v7337
        %v7340 = vrot.slane %v5175, 4
        %v7341 = vsel %vm7295, %v7340, %v7339
        %v7342 = vrot.slane %v5195, 3
        %v7343 = vsel %vm7298, %v7342, %v7341
        %v7344 = vrot.slane %v5215, 2
        %v7345 = vsel %vm7301, %v7344, %v7343
        %v7346 = vrot.slane %v5235, 1
        %v7347 = vsel %vm7304, %v7346, %v7345
        %v7348 = vrot.slane %v5275, 7
        %v7349 = vsel %vm7286, %v7348, %v5255
        %v7350 = vrot.slane %v5295, 6
        %v7351 = vsel %vm7289, %v7350, %v7349
        %v7352 = vrot.slane %v5315, 5
        %v7353 = vsel %vm7292, %v7352, %v7351
        %v7354 = vrot.slane %v5335, 4
        %v7355 = vsel %vm7295, %v7354, %v7353
        %v7356 = vrot.slane %v5355, 3
        %v7357 = vsel %vm7298, %v7356, %v7355
        %v7358 = vrot.slane %v5375, 2
        %v7359 = vsel %vm7301, %v7358, %v7357
        %v7360 = vrot.slane %v5395, 1
        %v7361 = vsel %vm7304, %v7360, %v7359
        %v7362 = vrot.slane %v5435, 7
        %v7363 = vsel %vm7286, %v7362, %v5415
        %v7364 = vrot.slane %v5455, 6
        %v7365 = vsel %vm7289, %v7364, %v7363
        %v7366 = vrot.slane %v5475, 5
        %v7367 = vsel %vm7292, %v7366, %v7365
        %v7368 = vrot.slane %v5495, 4
        %v7369 = vsel %vm7295, %v7368, %v7367
        %v7370 = vrot.slane %v5515, 3
        %v7371 = vsel %vm7298, %v7370, %v7369
        %v7372 = vrot.slane %v5535, 2
        %v7373 = vsel %vm7301, %v7372, %v7371
        %v7374 = vrot.slane %v5555, 1
        %v7375 = vsel %vm7304, %v7374, %v7373
        %v7376 = vrot.slane %v5595, 7
        %v7377 = vsel %vm7286, %v7376, %v5575
        %v7378 = vrot.slane %v5615, 6
        %v7379 = vsel %vm7289, %v7378, %v7377
        %v7380 = vrot.slane %v5635, 5
        %v7381 = vsel %vm7292, %v7380, %v7379
        %v7382 = vrot.slane %v5655, 4
        %v7383 = vsel %vm7295, %v7382, %v7381
        %v7384 = vrot.slane %v5675, 3
        %v7385 = vsel %vm7298, %v7384, %v7383
        %v7386 = vrot.slane %v5695, 2
        %v7387 = vsel %vm7301, %v7386, %v7385
        %v7388 = vrot.slane %v5715, 1
        %v7389 = vsel %vm7304, %v7388, %v7387
        %v7390 = vrot.slane %v5755, 7
        %v7391 = vsel %vm7286, %v7390, %v5735
        %v7392 = vrot.slane %v5775, 6
        %v7393 = vsel %vm7289, %v7392, %v7391
        %v7394 = vrot.slane %v5795, 5
        %v7395 = vsel %vm7292, %v7394, %v7393
        %v7396 = vrot.slane %v5815, 4
        %v7397 = vsel %vm7295, %v7396, %v7395
        %v7398 = vrot.slane %v5835, 3
        %v7399 = vsel %vm7298, %v7398, %v7397
        %v7400 = vrot.slane %v5855, 2
        %v7401 = vsel %vm7301, %v7400, %v7399
        %v7402 = vrot.slane %v5875, 1
        %v7403 = vsel %vm7304, %v7402, %v7401
        %v7404 = vrot.slane %v5915, 7
        %v7405 = vsel %vm7286, %v7404, %v5895
        %v7406 = vrot.slane %v5935, 6
        %v7407 = vsel %vm7289, %v7406, %v7405
        %v7408 = vrot.slane %v5955, 5
        %v7409 = vsel %vm7292, %v7408, %v7407
        %v7410 = vrot.slane %v5975, 4
        %v7411 = vsel %vm7295, %v7410, %v7409
        %v7412 = vrot.slane %v5995, 3
        %v7413 = vsel %vm7298, %v7412, %v7411
        %v7414 = vrot.slane %v6015, 2
        %v7415 = vsel %vm7301, %v7414, %v7413
        %v7416 = vrot.slane %v6035, 1
        %v7417 = vsel %vm7304, %v7416, %v7415
        %v7418 = vrot.slane %v6075, 7
        %v7419 = vsel %vm7286, %v7418, %v6055
        %v7420 = vrot.slane %v6095, 6
        %v7421 = vsel %vm7289, %v7420, %v7419
        %v7422 = vrot.slane %v6115, 5
        %v7423 = vsel %vm7292, %v7422, %v7421
        %v7424 = vrot.slane %v6135, 4
        %v7425 = vsel %vm7295, %v7424, %v7423
        %v7426 = vrot.slane %v6155, 3
        %v7427 = vsel %vm7298, %v7426, %v7425
        %v7428 = vrot.slane %v6175, 2
        %v7429 = vsel %vm7301, %v7428, %v7427
        %v7430 = vrot.slane %v6195, 1
        %v7431 = vsel %vm7304, %v7430, %v7429
        %v7432 = vrot.slane %v6235, 7
        %v7433 = vsel %vm7286, %v7432, %v6215
        %v7434 = vrot.slane %v6255, 6
        %v7435 = vsel %vm7289, %v7434, %v7433
        %v7436 = vrot.slane %v6275, 5
        %v7437 = vsel %vm7292, %v7436, %v7435
        %v7438 = vrot.slane %v6295, 4
        %v7439 = vsel %vm7295, %v7438, %v7437
        %v7440 = vrot.slane %v6315, 3
        %v7441 = vsel %vm7298, %v7440, %v7439
        %v7442 = vrot.slane %v6335, 2
        %v7443 = vsel %vm7301, %v7442, %v7441
        %v7444 = vrot.slane %v6355, 1
        %v7445 = vsel %vm7304, %v7444, %v7443
        %v7446 = vrot.slane %v6395, 7
        %v7447 = vsel %vm7286, %v7446, %v6375
        %v7448 = vrot.slane %v6415, 6
        %v7449 = vsel %vm7289, %v7448, %v7447
        %v7450 = vrot.slane %v6435, 5
        %v7451 = vsel %vm7292, %v7450, %v7449
        %v7452 = vrot.slane %v6455, 4
        %v7453 = vsel %vm7295, %v7452, %v7451
        %v7454 = vrot.slane %v6475, 3
        %v7455 = vsel %vm7298, %v7454, %v7453
        %v7456 = vrot.slane %v6495, 2
        %v7457 = vsel %vm7301, %v7456, %v7455
        %v7458 = vrot.slane %v6515, 1
        %v7459 = vsel %vm7304, %v7458, %v7457
        %v7460 = vrot.slane %v6555, 7
        %v7461 = vsel %vm7286, %v7460, %v6535
        %v7462 = vrot.slane %v6575, 6
        %v7463 = vsel %vm7289, %v7462, %v7461
        %v7464 = vrot.slane %v6595, 5
        %v7465 = vsel %vm7292, %v7464, %v7463
        %v7466 = vrot.slane %v6615, 4
        %v7467 = vsel %vm7295, %v7466, %v7465
        %v7468 = vrot.slane %v6635, 3
        %v7469 = vsel %vm7298, %v7468, %v7467
        %v7470 = vrot.slane %v6655, 2
        %v7471 = vsel %vm7301, %v7470, %v7469
        %v7472 = vrot.slane %v6675, 1
        %v7473 = vsel %vm7304, %v7472, %v7471
        %v7474 = vrot.slane %v6715, 7
        %v7475 = vsel %vm7286, %v7474, %v6695
        %v7476 = vrot.slane %v6735, 6
        %v7477 = vsel %vm7289, %v7476, %v7475
        %v7478 = vrot.slane %v6755, 5
        %v7479 = vsel %vm7292, %v7478, %v7477
        %v7480 = vrot.slane %v6775, 4
        %v7481 = vsel %vm7295, %v7480, %v7479
        %v7482 = vrot.slane %v6795, 3
        %v7483 = vsel %vm7298, %v7482, %v7481
        %v7484 = vrot.slane %v6815, 2
        %v7485 = vsel %vm7301, %v7484, %v7483
        %v7486 = vrot.slane %v6835, 1
        %v7487 = vsel %vm7304, %v7486, %v7485
        %v7488 = vrot.slane %v6875, 7
        %v7489 = vsel %vm7286, %v7488, %v6855
        %v7490 = vrot.slane %v6895, 6
        %v7491 = vsel %vm7289, %v7490, %v7489
        %v7492 = vrot.slane %v6915, 5
        %v7493 = vsel %vm7292, %v7492, %v7491
        %v7494 = vrot.slane %v6935, 4
        %v7495 = vsel %vm7295, %v7494, %v7493
        %v7496 = vrot.slane %v6955, 3
        %v7497 = vsel %vm7298, %v7496, %v7495
        %v7498 = vrot.slane %v6975, 2
        %v7499 = vsel %vm7301, %v7498, %v7497
        %v7500 = vrot.slane %v6995, 1
        %v7501 = vsel %vm7304, %v7500, %v7499
        %v7502 = vrot.slane %v7035, 7
        %v7503 = vsel %vm7286, %v7502, %v7015
        %v7504 = vrot.slane %v7055, 6
        %v7505 = vsel %vm7289, %v7504, %v7503
        %v7506 = vrot.slane %v7075, 5
        %v7507 = vsel %vm7292, %v7506, %v7505
        %v7508 = vrot.slane %v7095, 4
        %v7509 = vsel %vm7295, %v7508, %v7507
        %v7510 = vrot.slane %v7115, 3
        %v7511 = vsel %vm7298, %v7510, %v7509
        %v7512 = vrot.slane %v7135, 2
        %v7513 = vsel %vm7301, %v7512, %v7511
        %v7514 = vrot.slane %v7155, 1
        %v7515 = vsel %vm7304, %v7514, %v7513
        %7532 = vst [vmem:[%s489] sm:$0xff] %v7305
        %7533 = vst [vmem:[%s489 + $0x8] sm:$0xff] %v7319
        %7534 = vst [vmem:[%s489 + $0x10] sm:$0xff] %v7333
        %7535 = vst [vmem:[%s489 + $0x18] sm:$0xff] %v7347
        %7536 = vst [vmem:[%s489 + $0x20] sm:$0xff] %v7361
        %7537 = vst [vmem:[%s489 + $0x28] sm:$0xff] %v7375
        %7538 = vst [vmem:[%s489 + $0x30] sm:$0xff] %v7389
        %7539 = vst [vmem:[%s489 + $0x38] sm:$0xff] %v7403
        %7540 = vst [vmem:[%s489 + $0x40] sm:$0xff] %v7417
        %7541 = vst [vmem:[%s489 + $0x48] sm:$0xff] %v7431
        %7542 = vst [vmem:[%s489 + $0x50] sm:$0xff] %v7445
        %7543 = vst [vmem:[%s489 + $0x58] sm:$0xff] %v7459
        %7544 = vst [vmem:[%s489 + $0x60] sm:$0xff] %v7473
        %7545 = vst [vmem:[%s489 + $0x68] sm:$0xff] %v7487
        %7546 = vst [vmem:[%s489 + $0x70] sm:$0xff] %v7501
        %7547 = vst [vmem:[%s489 + $0x78] sm:$0xff] %v7515
        %s7548 = sand.u32 %s359, 1
        %s7549 = scalar_lea.sflag [#allocation4], %s7548
        %s7550 = sand.u32 %s359, 1
        %s7551 = smul.addr %s7550, 128
        %s7552 = scalar_lea.vmem [#allocation3], %s7551
        // Predicated region
        $region81: #{conv_decoder_forward.1} parent=79 // pred_check
          %p7553 = pneg %p369
        $region82: #{conv_decoder_forward.1} parent=79 // pred_check_branch
          %7555 = sbr.rel (%p7553) target = $region84
        $region83: #{conv_decoder_forward.1} parent=79 // pred_region
          %7557 = vsyncadd %s7549, 0
          %s7558 = smul.addr %s31, 16
          %s7559 = smul.addr %s7558, 8
          %s7560 = scalar_lea.hbm %s15, %s7559
          %s7561 = sshll.u32 %s7552, 4
          %s7562 = int_to_ptr.vmem [resolvable:$true] %s7561
          %s7563 = sshll.u32 %s7560, 4
          %s7564 = int_to_ptr.hbm [resolvable:$true] %s7563
          %7569 = dma.vmem_to_hbm [thread:$0]  %s7562, 2048, %s7564, %s7549, 128, 128, 8
        $region84: #{conv_decoder_forward.1} parent=79 // pred_fallthru
          _
      $region80: #{conv_decoder_forward.1} parent=5 // pred_fallthru
        _
      %p7570 = scmp.le.s32.totalorder 2, %s26
      // Predicated region
      $region85: #{conv_decoder_forward.1} parent=5 // pred_check
        %p7571 = pneg %p7570
      $region86: #{conv_decoder_forward.1} parent=5 // pred_check_branch
        %7573 = sbr.rel (%p7571) target = $region88
      $region87: #{conv_decoder_forward.1} parent=5 // pred_region
        %s7574 = ssub.s32 %s26, 2
        // Predicated region
        $region89: #{conv_decoder_forward.1} parent=87 // pred_check
          %p7575 = pneg %p375
        $region90: #{conv_decoder_forward.1} parent=87 // pred_check_branch
          %7577 = sbr.rel (%p7575) target = $region92
        $region91: #{conv_decoder_forward.1} parent=87 // pred_region
          %s7578 = sand.u32 %s360, 1
          %s7579 = scalar_lea.sflag [#allocation4], %s7578
          %s7580 = sand.u32 %s360, 1
          %s7581 = smul.addr %s7580, 128
          %s7582 = scalar_lea.vmem [#allocation3], %s7581
          %7584 = dma.done %s7579, 2048
        $region92: #{conv_decoder_forward.1} parent=87 // pred_fallthru
          _
      $region88: #{conv_decoder_forward.1} parent=5 // pred_fallthru
        _
    $region6: #{conv_decoder_forward.1} parent=1 // loop_footer
      %s30 = sadd.s32 1, %s26
    $region7: #{conv_decoder_forward.1} parent=1 // loop_footer_branch
      %25 = sbr.rel target = $region3
    $region8: #{conv_decoder_forward.1} parent=1 // loop_exit
      _
    %7585 = vsyncpa [#allocation4], 1
    %s7586 = scalar_lea.sflag [#allocation4], 1
    %7587 = vsyncpa %s7586, 1

</llo_original>
